<compile_context>
chip_gen: v5e
topology: v5e:2x2
jax: 0.10.0
libtpu: 0.0.40
codegen_flags: <defaults>
</compile_context>

<pallas_src>
import jax
import jax.numpy as jnp
from jax.experimental import pallas as pl
from jax.experimental.pallas import tpu as pltpu

BN_EPS = 1e-5
VMEM_SPEC = pl.BlockSpec(memory_space=pltpu.MemorySpace.VMEM)


def audio_tcn_forward(x_ncl, p):
    """AudioTCN forward (training-mode BN) as a single fused Pallas TPU kernel."""
    x = x_ncl.astype(jnp.float32)
    B, cin, L = x.shape
    assert cin == 1, "AudioTCN conv1 expects n_input == 1"
    NC = p["w1"].shape[0]          # n_channel
    C2 = 2 * NC
    NO = p["wf"].shape[1]          # n_output

    # conv1 has kernel_size=80 == 5 * stride(16): frame the signal into
    # non-overlapping 16-sample frames (free reshape since Cin == 1); conv1 then
    # becomes a single matmul on 5 lane-concatenated frame shifts.
    F = L // 16
    frames = x[:, 0, : F * 16].reshape(B, F, 16)

    # Static length chain (MaxPool1d floor mode); every stage must stay non-empty.
    L1 = F - 4
    L2 = L1 // 4 - 2
    L3 = L2 // 4 - 2
    L4 = L3 // 4 - 2
    assert L4 >= 1 and L4 // 4 >= 1, "input too short for AudioTCN (need ~L >= 6848)"

    # ---- pack parameters into two slabs (3 input DMAs total) -----------------
    # Conv weights (Cout, Cin, K) -> (K*Cin, Cout) with (k, ci) row order so the
    # shift-k operand columns line up with rows [k*Cin, (k+1)*Cin).  Conv biases
    # are intentionally dropped (cancelled by training-mode BN mean subtraction).
    def flat(w):
        co, ci, k = w.shape
        return jnp.transpose(w, (2, 1, 0)).reshape(k * ci, co)

    WID = max(C2, NO)

    def padc(a):
        return jnp.pad(a, ((0, 0), (0, WID - a.shape[1])))

    blocks = [flat(p["w1"]), flat(p["w2"]), flat(p["w3"]), flat(p["w4"]), p["wf"]]
    offs, r = [], 0
    for blk in blocks:
        offs.append(r)
        r += blk.shape[0]
    R1, R2, R3, R4, RF = offs
    wpack = jnp.concatenate([padc(b) for b in blocks], axis=0).astype(jnp.bfloat16)

    bnpack = jnp.concatenate(
        [padc(p[name].reshape(1, -1).astype(jnp.float32))
         for name in ("g1", "bt1", "g2", "bt2", "g3", "bt3", "g4", "bt4", "bf")],
        axis=0)                                                   # (9, WID) f32

    # ---- fused kernel: conv1..4 (+BN+ReLU+MaxPool4) + global max + fc1 --------
    def kernel(frames_ref, w_ref, bn_ref, o_ref):
        bf16, f32 = jnp.bfloat16, jnp.float32

        def bn_relu(y, idx, c):
            # Training-mode BatchNorm1d over all stacked batch*length rows,
            # folded into one scale/shift, fused with the ReLU.
            # (Single-pass variance; switch to two-pass if strict parity needed.)
            n = y.shape[0]
            mean = jnp.sum(y, axis=0, keepdims=True) * (1.0 / n)
            var = jnp.sum(y * y, axis=0, keepdims=True) * (1.0 / n) - mean * mean
            gamma = bn_ref[2 * idx:2 * idx + 1, 0:c]
            beta = bn_ref[2 * idx + 1:2 * idx + 2, 0:c]
            scale = gamma * jax.lax.rsqrt(var + BN_EPS)
            shift = beta - mean * scale
            return jnp.maximum(y * scale + shift, 0.0)

        def pool4(y, lout, c):
            # MaxPool1d(4), floor mode, applied per batch segment of the stacked
            # rows; returns per-batch slabs for the next stage's shifted windows.
            lp = lout // 4
            return [jnp.max(y[b * lout: b * lout + lp * 4, :].reshape(lp, 4, c),
                            axis=1) for b in range(B)], lp

        def conv_k3(xs, cin_, cout, wrow):
            # kernel_size=3, stride=1 conv as ONE wide-K bf16 matmul: concat the
            # 3 shifted views along the contraction axis, stack batch along M.
            lout = xs[0].shape[0] - 2
            ops = [jnp.concatenate([xb[s:s + lout, :] for s in range(3)], axis=1)
                   for xb in xs]
            X = jnp.concatenate(ops, axis=0).astype(bf16)          # (B*lout, 3*cin)
            W = w_ref[wrow:wrow + 3 * cin_, 0:cout]                # bf16
            return jnp.dot(X, W, preferred_element_type=f32), lout

        # conv1: K=80, stride=16  ==  5 consecutive 16-sample frames, one matmul.
        ops = []
        for b in range(B):
            fb = frames_ref[b]                                     # (F, 16) f32
            ops.append(jnp.concatenate([fb[j:j + L1, :] for j in range(5)], axis=1))
        X1 = jnp.concatenate(ops, axis=0).astype(bf16)             # (B*L1, 80)
        y = jnp.dot(X1, w_ref[R1:R1 + 80, 0:NC], preferred_element_type=f32)
        xs, _ = pool4(bn_relu(y, 0, NC), L1, NC)

        y, lo = conv_k3(xs, NC, NC, R2)
        xs, _ = pool4(bn_relu(y, 1, NC), lo, NC)

        y, lo = conv_k3(xs, NC, C2, R3)
        xs, _ = pool4(bn_relu(y, 2, C2), lo, C2)

        y, lo = conv_k3(xs, C2, C2, R4)
        xs, _ = pool4(bn_relu(y, 3, C2), lo, C2)

        # F.max_pool1d(x, x.shape[-1]) -> permute -> squeeze -> fc1
        feat = jnp.concatenate([jnp.max(xb, axis=0, keepdims=True) for xb in xs],
                               axis=0).astype(bf16)                # (B, 2*NC)
        logits = jnp.dot(feat, w_ref[RF:RF + C2, 0:NO], preferred_element_type=f32)
        o_ref[...] = logits + bn_ref[8:9, 0:NO]

    # TODO(synk): for large batches add a batch grid (dimension_semantics=
    # ("parallel",)) with a two-pass BN-stat exchange so v7x's second TensorCore
    # is used; at B=2 the single resident call is latency-optimal.
    return pl.pallas_call(
        kernel,
        out_shape=jax.ShapeDtypeStruct((B, NO), jnp.float32),
        in_specs=[VMEM_SPEC] * 3,
        out_specs=VMEM_SPEC,
        compiler_params=pltpu.CompilerParams(vmem_limit_bytes=32 * 1024 * 1024),
    )(frames, wpack, bnpack)


def make_params(key, n_input=1, n_output=35, n_channel=32):
    ks = jax.random.split(key, 6)

    def conv_w(k, cout, cin, ksz):
        scale = 1.0 / jnp.sqrt(cin * ksz)
        return jax.random.normal(k, (cout, cin, ksz), jnp.float32) * scale

    p = {}
    # Conv weights (PyTorch layout).  Conv biases are omitted: under training-mode
    # BatchNorm they have no effect on the forward output.
    p["w1"] = conv_w(ks[0], n_channel, n_input, 80)
    p["w2"] = conv_w(ks[1], n_channel, n_channel, 3)
    p["w3"] = conv_w(ks[2], 2 * n_channel, n_channel, 3)
    p["w4"] = conv_w(ks[3], 2 * n_channel, 2 * n_channel, 3)
    # BatchNorm affine params (fresh-module defaults: gamma=1, beta=0).
    for i, c in zip((1, 2, 3, 4), (n_channel, n_channel, 2 * n_channel, 2 * n_channel)):
        p[f"g{i}"] = jnp.ones((c,), jnp.float32)
        p[f"bt{i}"] = jnp.zeros((c,), jnp.float32)
    # fc1: PyTorch weight is (n_output, 2*n_channel); stored transposed (in, out).
    fscale = 1.0 / jnp.sqrt(2 * n_channel)
    p["wf"] = jax.random.normal(ks[4], (2 * n_channel, n_output), jnp.float32) * fscale
    p["bf"] = jax.random.normal(ks[5], (n_output,), jnp.float32) * fscale
    return p


if __name__ == "__main__":
    key = jax.random.PRNGKey(0)
    k_in, k_p = jax.random.split(key)

    # Smallest length with a non-empty output through all four pool stages is
    # ~6848; 8000 matches SpeechCommands-at-8kHz usage of this model.
    B, L = 2, 8000
    x = jax.random.normal(k_in, (B, 1, L), jnp.float32)  # NCL, like PyTorch
    params = make_params(k_p)

    fwd = jax.jit(audio_tcn_forward)
    out = fwd(x, params)
    jax.block_until_ready(out)
    assert out.shape == (B, 35), out.shape
    print("KERNEL_OK")
</pallas_src>

<mosaic_0001>
module attributes {stable_mosaic.version = 11 : i64} {
  func.func @kernel(%arg0: memref<2x500x16xf32, #tpu.memory_space<vmem>>, %arg1: memref<528x64xbf16, #tpu.memory_space<vmem>>, %arg2: memref<9x64xf32, #tpu.memory_space<vmem>>, %arg3: memref<2x35xf32, #tpu.memory_space<vmem>>) attributes {dimension_semantics = [], scalar_prefetch = 0 : i64, scratch_operands = 0 : i64, tpu.core_type = #tpu.core_type<tc>} {
    %c0 = arith.constant 0 : index
    %c0_0 = arith.constant 0 : index
    %c0_1 = arith.constant 0 : index
    %0 = vector.load %arg0[%c0, %c0_0, %c0_1] : memref<2x500x16xf32, #tpu.memory_space<vmem>>, vector<1x500x16xf32>
    %1 = vector.shape_cast %0 : vector<1x500x16xf32> to vector<500x16xf32>
    %2 = vector.extract_strided_slice %1 {offsets = [0, 0], sizes = [496, 16], strides = [1, 1]} : vector<500x16xf32> to vector<496x16xf32>
    %3 = vector.extract_strided_slice %1 {offsets = [1, 0], sizes = [496, 16], strides = [1, 1]} : vector<500x16xf32> to vector<496x16xf32>
    %4 = vector.extract_strided_slice %1 {offsets = [2, 0], sizes = [496, 16], strides = [1, 1]} : vector<500x16xf32> to vector<496x16xf32>
    %5 = vector.extract_strided_slice %1 {offsets = [3, 0], sizes = [496, 16], strides = [1, 1]} : vector<500x16xf32> to vector<496x16xf32>
    %6 = vector.extract_strided_slice %1 {offsets = [4, 0], sizes = [496, 16], strides = [1, 1]} : vector<500x16xf32> to vector<496x16xf32>
    %7 = tpu.concatenate %2, %3, %4, %5, %6 in 1 : vector<496x16xf32>, vector<496x16xf32>, vector<496x16xf32>, vector<496x16xf32>, vector<496x16xf32> -> vector<496x80xf32>
    %c1 = arith.constant 1 : index
    %c0_2 = arith.constant 0 : index
    %c0_3 = arith.constant 0 : index
    %8 = vector.load %arg0[%c1, %c0_2, %c0_3] : memref<2x500x16xf32, #tpu.memory_space<vmem>>, vector<1x500x16xf32>
    %9 = vector.shape_cast %8 : vector<1x500x16xf32> to vector<500x16xf32>
    %10 = vector.extract_strided_slice %9 {offsets = [0, 0], sizes = [496, 16], strides = [1, 1]} : vector<500x16xf32> to vector<496x16xf32>
    %11 = vector.extract_strided_slice %9 {offsets = [1, 0], sizes = [496, 16], strides = [1, 1]} : vector<500x16xf32> to vector<496x16xf32>
    %12 = vector.extract_strided_slice %9 {offsets = [2, 0], sizes = [496, 16], strides = [1, 1]} : vector<500x16xf32> to vector<496x16xf32>
    %13 = vector.extract_strided_slice %9 {offsets = [3, 0], sizes = [496, 16], strides = [1, 1]} : vector<500x16xf32> to vector<496x16xf32>
    %14 = vector.extract_strided_slice %9 {offsets = [4, 0], sizes = [496, 16], strides = [1, 1]} : vector<500x16xf32> to vector<496x16xf32>
    %15 = tpu.concatenate %10, %11, %12, %13, %14 in 1 : vector<496x16xf32>, vector<496x16xf32>, vector<496x16xf32>, vector<496x16xf32>, vector<496x16xf32> -> vector<496x80xf32>
    %16 = tpu.concatenate %7, %15 in 0 : vector<496x80xf32>, vector<496x80xf32> -> vector<992x80xf32>
    %17 = arith.truncf %16 : vector<992x80xf32> to vector<992x80xbf16>
    %c0_4 = arith.constant 0 : index
    %c0_5 = arith.constant 0 : index
    %18 = vector.load %arg1[%c0_4, %c0_5] : memref<528x64xbf16, #tpu.memory_space<vmem>>, vector<80x32xbf16>
    %cst = arith.constant dense<0.000000e+00> : vector<992x32xf32>
    %19 = tpu.matmul %17, %18, %cst {dimension_numbers = #tpu.dot_dimension_numbers<[1], [0], [0], [1], [0, 0, 1, 1], [], []>} : vector<992x80xbf16>, vector<80x32xbf16>, vector<992x32xf32> -> vector<992x32xf32>
    %cst_6 = arith.constant dense<0.000000e+00> : vector<32xf32>
    %20 = vector.multi_reduction <add>, %19, %cst_6 [0] : vector<992x32xf32> to vector<32xf32>
    %21 = vector.shape_cast %20 : vector<32xf32> to vector<1x32xf32>
    %cst_7 = arith.constant 0.00100806449 : f32
    %22 = vector.broadcast %cst_7 : f32 to vector<1x32xf32>
    %23 = arith.mulf %21, %22 : vector<1x32xf32>
    %24 = arith.mulf %19, %19 : vector<992x32xf32>
    %cst_8 = arith.constant dense<0.000000e+00> : vector<32xf32>
    %25 = vector.multi_reduction <add>, %24, %cst_8 [0] : vector<992x32xf32> to vector<32xf32>
    %26 = vector.shape_cast %25 : vector<32xf32> to vector<1x32xf32>
    %cst_9 = arith.constant 0.00100806449 : f32
    %27 = vector.broadcast %cst_9 : f32 to vector<1x32xf32>
    %28 = arith.mulf %26, %27 : vector<1x32xf32>
    %29 = arith.mulf %23, %23 : vector<1x32xf32>
    %30 = arith.subf %28, %29 : vector<1x32xf32>
    %c0_10 = arith.constant 0 : index
    %c0_11 = arith.constant 0 : index
    %31 = vector.load %arg2[%c0_10, %c0_11] : memref<9x64xf32, #tpu.memory_space<vmem>>, vector<1x32xf32>
    %c1_12 = arith.constant 1 : index
    %c0_13 = arith.constant 0 : index
    %32 = vector.load %arg2[%c1_12, %c0_13] : memref<9x64xf32, #tpu.memory_space<vmem>>, vector<1x32xf32>
    %cst_14 = arith.constant 9.99999974E-6 : f32
    %33 = vector.broadcast %cst_14 : f32 to vector<1x32xf32>
    %34 = arith.addf %30, %33 : vector<1x32xf32>
    %35 = math.rsqrt %34 : vector<1x32xf32>
    %36 = arith.mulf %31, %35 : vector<1x32xf32>
    %37 = arith.mulf %23, %36 : vector<1x32xf32>
    %38 = arith.subf %32, %37 : vector<1x32xf32>
    %39 = vector.broadcast %36 : vector<1x32xf32> to vector<992x32xf32>
    %40 = arith.mulf %19, %39 : vector<992x32xf32>
    %41 = vector.broadcast %38 : vector<1x32xf32> to vector<992x32xf32>
    %42 = arith.addf %40, %41 : vector<992x32xf32>
    %cst_15 = arith.constant 0.000000e+00 : f32
    %43 = vector.broadcast %cst_15 : f32 to vector<992x32xf32>
    %44 = arith.maximumf %42, %43 : vector<992x32xf32>
    %45 = vector.extract_strided_slice %44 {offsets = [0, 0], sizes = [496, 32], strides = [1, 1]} : vector<992x32xf32> to vector<496x32xf32>
    %46 = vector.shape_cast %45 : vector<496x32xf32> to vector<124x4x32xf32>
    %cst_16 = arith.constant dense<0xFF800000> : vector<124x32xf32>
    %47 = vector.multi_reduction <maximumf>, %46, %cst_16 [1] : vector<124x4x32xf32> to vector<124x32xf32>
    %48 = vector.extract_strided_slice %44 {offsets = [496, 0], sizes = [496, 32], strides = [1, 1]} : vector<992x32xf32> to vector<496x32xf32>
    %49 = vector.shape_cast %48 : vector<496x32xf32> to vector<124x4x32xf32>
    %cst_17 = arith.constant dense<0xFF800000> : vector<124x32xf32>
    %50 = vector.multi_reduction <maximumf>, %49, %cst_17 [1] : vector<124x4x32xf32> to vector<124x32xf32>
    %51 = vector.extract_strided_slice %47 {offsets = [0, 0], sizes = [122, 32], strides = [1, 1]} : vector<124x32xf32> to vector<122x32xf32>
    %52 = vector.extract_strided_slice %47 {offsets = [1, 0], sizes = [122, 32], strides = [1, 1]} : vector<124x32xf32> to vector<122x32xf32>
    %53 = vector.extract_strided_slice %47 {offsets = [2, 0], sizes = [122, 32], strides = [1, 1]} : vector<124x32xf32> to vector<122x32xf32>
    %54 = tpu.concatenate %51, %52, %53 in 1 : vector<122x32xf32>, vector<122x32xf32>, vector<122x32xf32> -> vector<122x96xf32>
    %55 = vector.extract_strided_slice %50 {offsets = [0, 0], sizes = [122, 32], strides = [1, 1]} : vector<124x32xf32> to vector<122x32xf32>
    %56 = vector.extract_strided_slice %50 {offsets = [1, 0], sizes = [122, 32], strides = [1, 1]} : vector<124x32xf32> to vector<122x32xf32>
    %57 = vector.extract_strided_slice %50 {offsets = [2, 0], sizes = [122, 32], strides = [1, 1]} : vector<124x32xf32> to vector<122x32xf32>
    %58 = tpu.concatenate %55, %56, %57 in 1 : vector<122x32xf32>, vector<122x32xf32>, vector<122x32xf32> -> vector<122x96xf32>
    %59 = tpu.concatenate %54, %58 in 0 : vector<122x96xf32>, vector<122x96xf32> -> vector<244x96xf32>
    %60 = arith.truncf %59 : vector<244x96xf32> to vector<244x96xbf16>
    %c80 = arith.constant 80 : index
    %c0_18 = arith.constant 0 : index
    %61 = vector.load %arg1[%c80, %c0_18] : memref<528x64xbf16, #tpu.memory_space<vmem>>, vector<96x32xbf16>
    %cst_19 = arith.constant dense<0.000000e+00> : vector<244x32xf32>
    %62 = tpu.matmul %60, %61, %cst_19 {dimension_numbers = #tpu.dot_dimension_numbers<[1], [0], [0], [1], [0, 0, 1, 1], [], []>} : vector<244x96xbf16>, vector<96x32xbf16>, vector<244x32xf32> -> vector<244x32xf32>
    %cst_20 = arith.constant dense<0.000000e+00> : vector<32xf32>
    %63 = vector.multi_reduction <add>, %62, %cst_20 [0] : vector<244x32xf32> to vector<32xf32>
    %64 = vector.shape_cast %63 : vector<32xf32> to vector<1x32xf32>
    %cst_21 = arith.constant 0.00409836043 : f32
    %65 = vector.broadcast %cst_21 : f32 to vector<1x32xf32>
    %66 = arith.mulf %64, %65 : vector<1x32xf32>
    %67 = arith.mulf %62, %62 : vector<244x32xf32>
    %cst_22 = arith.constant dense<0.000000e+00> : vector<32xf32>
    %68 = vector.multi_reduction <add>, %67, %cst_22 [0] : vector<244x32xf32> to vector<32xf32>
    %69 = vector.shape_cast %68 : vector<32xf32> to vector<1x32xf32>
    %cst_23 = arith.constant 0.00409836043 : f32
    %70 = vector.broadcast %cst_23 : f32 to vector<1x32xf32>
    %71 = arith.mulf %69, %70 : vector<1x32xf32>
    %72 = arith.mulf %66, %66 : vector<1x32xf32>
    %73 = arith.subf %71, %72 : vector<1x32xf32>
    %c2 = arith.constant 2 : index
    %c0_24 = arith.constant 0 : index
    %74 = vector.load %arg2[%c2, %c0_24] : memref<9x64xf32, #tpu.memory_space<vmem>>, vector<1x32xf32>
    %c3 = arith.constant 3 : index
    %c0_25 = arith.constant 0 : index
    %75 = vector.load %arg2[%c3, %c0_25] : memref<9x64xf32, #tpu.memory_space<vmem>>, vector<1x32xf32>
    %cst_26 = arith.constant 9.99999974E-6 : f32
    %76 = vector.broadcast %cst_26 : f32 to vector<1x32xf32>
    %77 = arith.addf %73, %76 : vector<1x32xf32>
    %78 = math.rsqrt %77 : vector<1x32xf32>
    %79 = arith.mulf %74, %78 : vector<1x32xf32>
    %80 = arith.mulf %66, %79 : vector<1x32xf32>
    %81 = arith.subf %75, %80 : vector<1x32xf32>
    %82 = vector.broadcast %79 : vector<1x32xf32> to vector<244x32xf32>
    %83 = arith.mulf %62, %82 : vector<244x32xf32>
    %84 = vector.broadcast %81 : vector<1x32xf32> to vector<244x32xf32>
    %85 = arith.addf %83, %84 : vector<244x32xf32>
    %cst_27 = arith.constant 0.000000e+00 : f32
    %86 = vector.broadcast %cst_27 : f32 to vector<244x32xf32>
    %87 = arith.maximumf %85, %86 : vector<244x32xf32>
    %88 = vector.extract_strided_slice %87 {offsets = [0, 0], sizes = [120, 32], strides = [1, 1]} : vector<244x32xf32> to vector<120x32xf32>
    %89 = vector.shape_cast %88 : vector<120x32xf32> to vector<30x4x32xf32>
    %cst_28 = arith.constant dense<0xFF800000> : vector<30x32xf32>
    %90 = vector.multi_reduction <maximumf>, %89, %cst_28 [1] : vector<30x4x32xf32> to vector<30x32xf32>
    %91 = vector.extract_strided_slice %87 {offsets = [122, 0], sizes = [120, 32], strides = [1, 1]} : vector<244x32xf32> to vector<120x32xf32>
    %92 = vector.shape_cast %91 : vector<120x32xf32> to vector<30x4x32xf32>
    %cst_29 = arith.constant dense<0xFF800000> : vector<30x32xf32>
    %93 = vector.multi_reduction <maximumf>, %92, %cst_29 [1] : vector<30x4x32xf32> to vector<30x32xf32>
    %94 = vector.extract_strided_slice %90 {offsets = [0, 0], sizes = [28, 32], strides = [1, 1]} : vector<30x32xf32> to vector<28x32xf32>
    %95 = vector.extract_strided_slice %90 {offsets = [1, 0], sizes = [28, 32], strides = [1, 1]} : vector<30x32xf32> to vector<28x32xf32>
    %96 = vector.extract_strided_slice %90 {offsets = [2, 0], sizes = [28, 32], strides = [1, 1]} : vector<30x32xf32> to vector<28x32xf32>
    %97 = tpu.concatenate %94, %95, %96 in 1 : vector<28x32xf32>, vector<28x32xf32>, vector<28x32xf32> -> vector<28x96xf32>
    %98 = vector.extract_strided_slice %93 {offsets = [0, 0], sizes = [28, 32], strides = [1, 1]} : vector<30x32xf32> to vector<28x32xf32>
    %99 = vector.extract_strided_slice %93 {offsets = [1, 0], sizes = [28, 32], strides = [1, 1]} : vector<30x32xf32> to vector<28x32xf32>
    %100 = vector.extract_strided_slice %93 {offsets = [2, 0], sizes = [28, 32], strides = [1, 1]} : vector<30x32xf32> to vector<28x32xf32>
    %101 = tpu.concatenate %98, %99, %100 in 1 : vector<28x32xf32>, vector<28x32xf32>, vector<28x32xf32> -> vector<28x96xf32>
    %102 = tpu.concatenate %97, %101 in 0 : vector<28x96xf32>, vector<28x96xf32> -> vector<56x96xf32>
    %103 = arith.truncf %102 : vector<56x96xf32> to vector<56x96xbf16>
    %c176 = arith.constant 176 : index
    %c0_30 = arith.constant 0 : index
    %104 = vector.load %arg1[%c176, %c0_30] : memref<528x64xbf16, #tpu.memory_space<vmem>>, vector<96x64xbf16>
    %cst_31 = arith.constant dense<0.000000e+00> : vector<56x64xf32>
    %105 = tpu.matmul %103, %104, %cst_31 {dimension_numbers = #tpu.dot_dimension_numbers<[1], [0], [0], [1], [0, 0, 1, 1], [], []>} : vector<56x96xbf16>, vector<96x64xbf16>, vector<56x64xf32> -> vector<56x64xf32>
    %cst_32 = arith.constant dense<0.000000e+00> : vector<64xf32>
    %106 = vector.multi_reduction <add>, %105, %cst_32 [0] : vector<56x64xf32> to vector<64xf32>
    %107 = vector.shape_cast %106 : vector<64xf32> to vector<1x64xf32>
    %cst_33 = arith.constant 0.0178571437 : f32
    %108 = vector.broadcast %cst_33 : f32 to vector<1x64xf32>
    %109 = arith.mulf %107, %108 : vector<1x64xf32>
    %110 = arith.mulf %105, %105 : vector<56x64xf32>
    %cst_34 = arith.constant dense<0.000000e+00> : vector<64xf32>
    %111 = vector.multi_reduction <add>, %110, %cst_34 [0] : vector<56x64xf32> to vector<64xf32>
    %112 = vector.shape_cast %111 : vector<64xf32> to vector<1x64xf32>
    %cst_35 = arith.constant 0.0178571437 : f32
    %113 = vector.broadcast %cst_35 : f32 to vector<1x64xf32>
    %114 = arith.mulf %112, %113 : vector<1x64xf32>
    %115 = arith.mulf %109, %109 : vector<1x64xf32>
    %116 = arith.subf %114, %115 : vector<1x64xf32>
    %c4 = arith.constant 4 : index
    %c0_36 = arith.constant 0 : index
    %117 = vector.load %arg2[%c4, %c0_36] : memref<9x64xf32, #tpu.memory_space<vmem>>, vector<1x64xf32>
    %c5 = arith.constant 5 : index
    %c0_37 = arith.constant 0 : index
    %118 = vector.load %arg2[%c5, %c0_37] : memref<9x64xf32, #tpu.memory_space<vmem>>, vector<1x64xf32>
    %cst_38 = arith.constant 9.99999974E-6 : f32
    %119 = vector.broadcast %cst_38 : f32 to vector<1x64xf32>
    %120 = arith.addf %116, %119 : vector<1x64xf32>
    %121 = math.rsqrt %120 : vector<1x64xf32>
    %122 = arith.mulf %117, %121 : vector<1x64xf32>
    %123 = arith.mulf %109, %122 : vector<1x64xf32>
    %124 = arith.subf %118, %123 : vector<1x64xf32>
    %125 = vector.broadcast %122 : vector<1x64xf32> to vector<56x64xf32>
    %126 = arith.mulf %105, %125 : vector<56x64xf32>
    %127 = vector.broadcast %124 : vector<1x64xf32> to vector<56x64xf32>
    %128 = arith.addf %126, %127 : vector<56x64xf32>
    %cst_39 = arith.constant 0.000000e+00 : f32
    %129 = vector.broadcast %cst_39 : f32 to vector<56x64xf32>
    %130 = arith.maximumf %128, %129 : vector<56x64xf32>
    %131 = vector.extract_strided_slice %130 {offsets = [0, 0], sizes = [28, 64], strides = [1, 1]} : vector<56x64xf32> to vector<28x64xf32>
    %132 = vector.shape_cast %131 : vector<28x64xf32> to vector<7x4x64xf32>
    %cst_40 = arith.constant dense<0xFF800000> : vector<7x64xf32>
    %133 = vector.multi_reduction <maximumf>, %132, %cst_40 [1] : vector<7x4x64xf32> to vector<7x64xf32>
    %134 = vector.extract_strided_slice %130 {offsets = [28, 0], sizes = [28, 64], strides = [1, 1]} : vector<56x64xf32> to vector<28x64xf32>
    %135 = vector.shape_cast %134 : vector<28x64xf32> to vector<7x4x64xf32>
    %cst_41 = arith.constant dense<0xFF800000> : vector<7x64xf32>
    %136 = vector.multi_reduction <maximumf>, %135, %cst_41 [1] : vector<7x4x64xf32> to vector<7x64xf32>
    %137 = vector.extract_strided_slice %133 {offsets = [0, 0], sizes = [5, 64], strides = [1, 1]} : vector<7x64xf32> to vector<5x64xf32>
    %138 = vector.extract_strided_slice %133 {offsets = [1, 0], sizes = [5, 64], strides = [1, 1]} : vector<7x64xf32> to vector<5x64xf32>
    %139 = vector.extract_strided_slice %133 {offsets = [2, 0], sizes = [5, 64], strides = [1, 1]} : vector<7x64xf32> to vector<5x64xf32>
    %140 = tpu.concatenate %137, %138, %139 in 1 : vector<5x64xf32>, vector<5x64xf32>, vector<5x64xf32> -> vector<5x192xf32>
    %141 = vector.extract_strided_slice %136 {offsets = [0, 0], sizes = [5, 64], strides = [1, 1]} : vector<7x64xf32> to vector<5x64xf32>
    %142 = vector.extract_strided_slice %136 {offsets = [1, 0], sizes = [5, 64], strides = [1, 1]} : vector<7x64xf32> to vector<5x64xf32>
    %143 = vector.extract_strided_slice %136 {offsets = [2, 0], sizes = [5, 64], strides = [1, 1]} : vector<7x64xf32> to vector<5x64xf32>
    %144 = tpu.concatenate %141, %142, %143 in 1 : vector<5x64xf32>, vector<5x64xf32>, vector<5x64xf32> -> vector<5x192xf32>
    %145 = tpu.concatenate %140, %144 in 0 : vector<5x192xf32>, vector<5x192xf32> -> vector<10x192xf32>
    %146 = arith.truncf %145 : vector<10x192xf32> to vector<10x192xbf16>
    %c272 = arith.constant 272 : index
    %c0_42 = arith.constant 0 : index
    %147 = vector.load %arg1[%c272, %c0_42] : memref<528x64xbf16, #tpu.memory_space<vmem>>, vector<192x64xbf16>
    %cst_43 = arith.constant dense<0.000000e+00> : vector<10x64xf32>
    %148 = tpu.matmul %146, %147, %cst_43 {dimension_numbers = #tpu.dot_dimension_numbers<[1], [0], [0], [1], [0, 0, 1, 1], [], []>} : vector<10x192xbf16>, vector<192x64xbf16>, vector<10x64xf32> -> vector<10x64xf32>
    %cst_44 = arith.constant dense<0.000000e+00> : vector<64xf32>
    %149 = vector.multi_reduction <add>, %148, %cst_44 [0] : vector<10x64xf32> to vector<64xf32>
    %150 = vector.shape_cast %149 : vector<64xf32> to vector<1x64xf32>
    %cst_45 = arith.constant 1.000000e-01 : f32
    %151 = vector.broadcast %cst_45 : f32 to vector<1x64xf32>
    %152 = arith.mulf %150, %151 : vector<1x64xf32>
    %153 = arith.mulf %148, %148 : vector<10x64xf32>
    %cst_46 = arith.constant dense<0.000000e+00> : vector<64xf32>
    %154 = vector.multi_reduction <add>, %153, %cst_46 [0] : vector<10x64xf32> to vector<64xf32>
    %155 = vector.shape_cast %154 : vector<64xf32> to vector<1x64xf32>
    %cst_47 = arith.constant 1.000000e-01 : f32
    %156 = vector.broadcast %cst_47 : f32 to vector<1x64xf32>
    %157 = arith.mulf %155, %156 : vector<1x64xf32>
    %158 = arith.mulf %152, %152 : vector<1x64xf32>
    %159 = arith.subf %157, %158 : vector<1x64xf32>
    %c6 = arith.constant 6 : index
    %c0_48 = arith.constant 0 : index
    %160 = vector.load %arg2[%c6, %c0_48] : memref<9x64xf32, #tpu.memory_space<vmem>>, vector<1x64xf32>
    %c7 = arith.constant 7 : index
    %c0_49 = arith.constant 0 : index
    %161 = vector.load %arg2[%c7, %c0_49] : memref<9x64xf32, #tpu.memory_space<vmem>>, vector<1x64xf32>
    %cst_50 = arith.constant 9.99999974E-6 : f32
    %162 = vector.broadcast %cst_50 : f32 to vector<1x64xf32>
    %163 = arith.addf %159, %162 : vector<1x64xf32>
    %164 = math.rsqrt %163 : vector<1x64xf32>
    %165 = arith.mulf %160, %164 : vector<1x64xf32>
    %166 = arith.mulf %152, %165 : vector<1x64xf32>
    %167 = arith.subf %161, %166 : vector<1x64xf32>
    %168 = vector.broadcast %165 : vector<1x64xf32> to vector<10x64xf32>
    %169 = arith.mulf %148, %168 : vector<10x64xf32>
    %170 = vector.broadcast %167 : vector<1x64xf32> to vector<10x64xf32>
    %171 = arith.addf %169, %170 : vector<10x64xf32>
    %cst_51 = arith.constant 0.000000e+00 : f32
    %172 = vector.broadcast %cst_51 : f32 to vector<10x64xf32>
    %173 = arith.maximumf %171, %172 : vector<10x64xf32>
    %174 = vector.extract_strided_slice %173 {offsets = [0, 0], sizes = [4, 64], strides = [1, 1]} : vector<10x64xf32> to vector<4x64xf32>
    %175 = vector.shape_cast %174 : vector<4x64xf32> to vector<1x4x64xf32>
    %cst_52 = arith.constant dense<0xFF800000> : vector<1x64xf32>
    %176 = vector.multi_reduction <maximumf>, %175, %cst_52 [1] : vector<1x4x64xf32> to vector<1x64xf32>
    %177 = vector.extract_strided_slice %173 {offsets = [5, 0], sizes = [4, 64], strides = [1, 1]} : vector<10x64xf32> to vector<4x64xf32>
    %178 = vector.shape_cast %177 : vector<4x64xf32> to vector<1x4x64xf32>
    %cst_53 = arith.constant dense<0xFF800000> : vector<1x64xf32>
    %179 = vector.multi_reduction <maximumf>, %178, %cst_53 [1] : vector<1x4x64xf32> to vector<1x64xf32>
    %cst_54 = arith.constant dense<0xFF800000> : vector<64xf32>
    %180 = vector.multi_reduction <maximumf>, %176, %cst_54 [0] : vector<1x64xf32> to vector<64xf32>
    %181 = vector.shape_cast %180 : vector<64xf32> to vector<1x64xf32>
    %cst_55 = arith.constant dense<0xFF800000> : vector<64xf32>
    %182 = vector.multi_reduction <maximumf>, %179, %cst_55 [0] : vector<1x64xf32> to vector<64xf32>
    %183 = vector.shape_cast %182 : vector<64xf32> to vector<1x64xf32>
    %184 = tpu.concatenate %181, %183 in 0 : vector<1x64xf32>, vector<1x64xf32> -> vector<2x64xf32>
    %185 = arith.truncf %184 : vector<2x64xf32> to vector<2x64xbf16>
    %c464 = arith.constant 464 : index
    %c0_56 = arith.constant 0 : index
    %186 = vector.load %arg1[%c464, %c0_56] : memref<528x64xbf16, #tpu.memory_space<vmem>>, vector<64x35xbf16>
    %cst_57 = arith.constant dense<0.000000e+00> : vector<2x35xf32>
    %187 = tpu.matmul %185, %186, %cst_57 {dimension_numbers = #tpu.dot_dimension_numbers<[1], [0], [0], [1], [0, 0, 1, 1], [], []>} : vector<2x64xbf16>, vector<64x35xbf16>, vector<2x35xf32> -> vector<2x35xf32>
    %c8 = arith.constant 8 : index
    %c0_58 = arith.constant 0 : index
    %188 = vector.load %arg2[%c8, %c0_58] : memref<9x64xf32, #tpu.memory_space<vmem>>, vector<1x35xf32>
    %189 = vector.broadcast %188 : vector<1x35xf32> to vector<2x35xf32>
    %190 = arith.addf %187, %189 : vector<2x35xf32>
    %c0_59 = arith.constant 0 : index
    %c0_60 = arith.constant 0 : index
    %191 = vector.load %arg3[%c0_59, %c0_60] : memref<2x35xf32, #tpu.memory_space<vmem>>, vector<2x35xf32>
    tpu.vector_store %arg3[%c0_59, %c0_60], %190 {strides = array<i32>} : memref<2x35xf32, #tpu.memory_space<vmem>>, vector<2x35xf32>,
    return
  }
}

</mosaic_0001>

<llo_original>
// kernel: squeeze.1
$region0: #{squeeze.1}
  %s0 = inlined_call_operand.vmem [shape: f32[2,8000], index: 0, kind: input, shape index: {}]
  %s1 = inlined_call_operand.vmem [shape: f32[2,500,16], index: 1, kind: output, shape index: {}]
  $region1: #{squeeze.1} parent=0
    #allocation0 [shape = 'u8[258048]{0}', space=vmem, size = 0x3f000, scoped, tag = 'scoped mem for input reshape']
    %s3 = ssub.s32 4, 1
    %s4 = scalar_lea.vmem %s0, 124
    %v5 = vld [vmem:[%s4] sm:%s3]
    %s6 = scalar_lea.vmem [#allocation0], 496
    %7 = vst [vmem:[%s6] sm:%s3] %v5
    %s8 = scalar_lea.vmem %s0, 122
    %v9 = vld [vmem:[%s8] sm:%s3]
    %s10 = scalar_lea.vmem [#allocation0], 488
    %11 = vst [vmem:[%s10] sm:%s3] %v9
    %s12 = scalar_lea.vmem %s0, 120
    %v13 = vld [vmem:[%s12] sm:%s3]
    %s14 = scalar_lea.vmem [#allocation0], 480
    %15 = vst [vmem:[%s14] sm:%s3] %v13
    %s16 = scalar_lea.vmem %s0, 118
    %v17 = vld [vmem:[%s16] sm:%s3]
    %s18 = scalar_lea.vmem [#allocation0], 472
    %19 = vst [vmem:[%s18] sm:%s3] %v17
    %s20 = scalar_lea.vmem %s0, 116
    %v21 = vld [vmem:[%s20] sm:%s3]
    %s22 = scalar_lea.vmem [#allocation0], 464
    %23 = vst [vmem:[%s22] sm:%s3] %v21
    %s24 = scalar_lea.vmem %s0, 114
    %v25 = vld [vmem:[%s24] sm:%s3]
    %s26 = scalar_lea.vmem [#allocation0], 456
    %27 = vst [vmem:[%s26] sm:%s3] %v25
    %s28 = scalar_lea.vmem %s0, 112
    %v29 = vld [vmem:[%s28] sm:%s3]
    %s30 = scalar_lea.vmem [#allocation0], 448
    %31 = vst [vmem:[%s30] sm:%s3] %v29
    %s32 = scalar_lea.vmem %s0, 110
    %v33 = vld [vmem:[%s32] sm:%s3]
    %s34 = scalar_lea.vmem [#allocation0], 440
    %35 = vst [vmem:[%s34] sm:%s3] %v33
    %s36 = scalar_lea.vmem %s0, 108
    %v37 = vld [vmem:[%s36] sm:%s3]
    %s38 = scalar_lea.vmem [#allocation0], 432
    %39 = vst [vmem:[%s38] sm:%s3] %v37
    %s40 = scalar_lea.vmem %s0, 106
    %v41 = vld [vmem:[%s40] sm:%s3]
    %s42 = scalar_lea.vmem [#allocation0], 424
    %43 = vst [vmem:[%s42] sm:%s3] %v41
    %s44 = scalar_lea.vmem %s0, 104
    %v45 = vld [vmem:[%s44] sm:%s3]
    %s46 = scalar_lea.vmem [#allocation0], 416
    %47 = vst [vmem:[%s46] sm:%s3] %v45
    %s48 = scalar_lea.vmem %s0, 102
    %v49 = vld [vmem:[%s48] sm:%s3]
    %s50 = scalar_lea.vmem [#allocation0], 408
    %51 = vst [vmem:[%s50] sm:%s3] %v49
    %s52 = scalar_lea.vmem %s0, 100
    %v53 = vld [vmem:[%s52] sm:%s3]
    %s54 = scalar_lea.vmem [#allocation0], 400
    %55 = vst [vmem:[%s54] sm:%s3] %v53
    %s56 = scalar_lea.vmem %s0, 98
    %v57 = vld [vmem:[%s56] sm:%s3]
    %s58 = scalar_lea.vmem [#allocation0], 392
    %59 = vst [vmem:[%s58] sm:%s3] %v57
    %s60 = scalar_lea.vmem %s0, 96
    %v61 = vld [vmem:[%s60] sm:%s3]
    %s62 = scalar_lea.vmem [#allocation0], 384
    %63 = vst [vmem:[%s62] sm:%s3] %v61
    %s64 = scalar_lea.vmem %s0, 94
    %v65 = vld [vmem:[%s64] sm:%s3]
    %s66 = scalar_lea.vmem [#allocation0], 376
    %67 = vst [vmem:[%s66] sm:%s3] %v65
    %s68 = scalar_lea.vmem %s0, 92
    %v69 = vld [vmem:[%s68] sm:%s3]
    %s70 = scalar_lea.vmem [#allocation0], 368
    %71 = vst [vmem:[%s70] sm:%s3] %v69
    %s72 = scalar_lea.vmem %s0, 90
    %v73 = vld [vmem:[%s72] sm:%s3]
    %s74 = scalar_lea.vmem [#allocation0], 360
    %75 = vst [vmem:[%s74] sm:%s3] %v73
    %s76 = scalar_lea.vmem %s0, 88
    %v77 = vld [vmem:[%s76] sm:%s3]
    %s78 = scalar_lea.vmem [#allocation0], 352
    %79 = vst [vmem:[%s78] sm:%s3] %v77
    %s80 = scalar_lea.vmem %s0, 86
    %v81 = vld [vmem:[%s80] sm:%s3]
    %s82 = scalar_lea.vmem [#allocation0], 344
    %83 = vst [vmem:[%s82] sm:%s3] %v81
    %s84 = scalar_lea.vmem %s0, 84
    %v85 = vld [vmem:[%s84] sm:%s3]
    %s86 = scalar_lea.vmem [#allocation0], 336
    %87 = vst [vmem:[%s86] sm:%s3] %v85
    %s88 = scalar_lea.vmem %s0, 82
    %v89 = vld [vmem:[%s88] sm:%s3]
    %s90 = scalar_lea.vmem [#allocation0], 328
    %91 = vst [vmem:[%s90] sm:%s3] %v89
    %s92 = scalar_lea.vmem %s0, 80
    %v93 = vld [vmem:[%s92] sm:%s3]
    %s94 = scalar_lea.vmem [#allocation0], 320
    %95 = vst [vmem:[%s94] sm:%s3] %v93
    %s96 = scalar_lea.vmem %s0, 78
    %v97 = vld [vmem:[%s96] sm:%s3]
    %s98 = scalar_lea.vmem [#allocation0], 312
    %99 = vst [vmem:[%s98] sm:%s3] %v97
    %s100 = scalar_lea.vmem %s0, 76
    %v101 = vld [vmem:[%s100] sm:%s3]
    %s102 = scalar_lea.vmem [#allocation0], 304
    %103 = vst [vmem:[%s102] sm:%s3] %v101
    %s104 = scalar_lea.vmem %s0, 74
    %v105 = vld [vmem:[%s104] sm:%s3]
    %s106 = scalar_lea.vmem [#allocation0], 296
    %107 = vst [vmem:[%s106] sm:%s3] %v105
    %s108 = scalar_lea.vmem %s0, 72
    %v109 = vld [vmem:[%s108] sm:%s3]
    %s110 = scalar_lea.vmem [#allocation0], 288
    %111 = vst [vmem:[%s110] sm:%s3] %v109
    %s112 = scalar_lea.vmem %s0, 70
    %v113 = vld [vmem:[%s112] sm:%s3]
    %s114 = scalar_lea.vmem [#allocation0], 280
    %115 = vst [vmem:[%s114] sm:%s3] %v113
    %s116 = scalar_lea.vmem %s0, 68
    %v117 = vld [vmem:[%s116] sm:%s3]
    %s118 = scalar_lea.vmem [#allocation0], 272
    %119 = vst [vmem:[%s118] sm:%s3] %v117
    %s120 = scalar_lea.vmem %s0, 66
    %v121 = vld [vmem:[%s120] sm:%s3]
    %s122 = scalar_lea.vmem [#allocation0], 264
    %123 = vst [vmem:[%s122] sm:%s3] %v121
    %s124 = scalar_lea.vmem %s0, 64
    %v125 = vld [vmem:[%s124] sm:%s3]
    %s126 = scalar_lea.vmem [#allocation0], 256
    %127 = vst [vmem:[%s126] sm:%s3] %v125
    %s128 = scalar_lea.vmem %s0, 62
    %v129 = vld [vmem:[%s128] sm:%s3]
    %s130 = scalar_lea.vmem [#allocation0], 248
    %131 = vst [vmem:[%s130] sm:%s3] %v129
    %s132 = scalar_lea.vmem %s0, 60
    %v133 = vld [vmem:[%s132] sm:%s3]
    %s134 = scalar_lea.vmem [#allocation0], 240
    %135 = vst [vmem:[%s134] sm:%s3] %v133
    %s136 = scalar_lea.vmem %s0, 58
    %v137 = vld [vmem:[%s136] sm:%s3]
    %s138 = scalar_lea.vmem [#allocation0], 232
    %139 = vst [vmem:[%s138] sm:%s3] %v137
    %s140 = scalar_lea.vmem %s0, 56
    %v141 = vld [vmem:[%s140] sm:%s3]
    %s142 = scalar_lea.vmem [#allocation0], 224
    %143 = vst [vmem:[%s142] sm:%s3] %v141
    %s144 = scalar_lea.vmem %s0, 54
    %v145 = vld [vmem:[%s144] sm:%s3]
    %s146 = scalar_lea.vmem [#allocation0], 216
    %147 = vst [vmem:[%s146] sm:%s3] %v145
    %s148 = scalar_lea.vmem %s0, 52
    %v149 = vld [vmem:[%s148] sm:%s3]
    %s150 = scalar_lea.vmem [#allocation0], 208
    %151 = vst [vmem:[%s150] sm:%s3] %v149
    %s152 = scalar_lea.vmem %s0, 50
    %v153 = vld [vmem:[%s152] sm:%s3]
    %s154 = scalar_lea.vmem [#allocation0], 200
    %155 = vst [vmem:[%s154] sm:%s3] %v153
    %s156 = scalar_lea.vmem %s0, 48
    %v157 = vld [vmem:[%s156] sm:%s3]
    %s158 = scalar_lea.vmem [#allocation0], 192
    %159 = vst [vmem:[%s158] sm:%s3] %v157
    %s160 = scalar_lea.vmem %s0, 46
    %v161 = vld [vmem:[%s160] sm:%s3]
    %s162 = scalar_lea.vmem [#allocation0], 184
    %163 = vst [vmem:[%s162] sm:%s3] %v161
    %s164 = scalar_lea.vmem %s0, 44
    %v165 = vld [vmem:[%s164] sm:%s3]
    %s166 = scalar_lea.vmem [#allocation0], 176
    %167 = vst [vmem:[%s166] sm:%s3] %v165
    %s168 = scalar_lea.vmem %s0, 42
    %v169 = vld [vmem:[%s168] sm:%s3]
    %s170 = scalar_lea.vmem [#allocation0], 168
    %171 = vst [vmem:[%s170] sm:%s3] %v169
    %s172 = scalar_lea.vmem %s0, 40
    %v173 = vld [vmem:[%s172] sm:%s3]
    %s174 = scalar_lea.vmem [#allocation0], 160
    %175 = vst [vmem:[%s174] sm:%s3] %v173
    %s176 = scalar_lea.vmem %s0, 38
    %v177 = vld [vmem:[%s176] sm:%s3]
    %s178 = scalar_lea.vmem [#allocation0], 152
    %179 = vst [vmem:[%s178] sm:%s3] %v177
    %s180 = scalar_lea.vmem %s0, 36
    %v181 = vld [vmem:[%s180] sm:%s3]
    %s182 = scalar_lea.vmem [#allocation0], 144
    %183 = vst [vmem:[%s182] sm:%s3] %v181
    %s184 = scalar_lea.vmem %s0, 34
    %v185 = vld [vmem:[%s184] sm:%s3]
    %s186 = scalar_lea.vmem [#allocation0], 136
    %187 = vst [vmem:[%s186] sm:%s3] %v185
    %s188 = scalar_lea.vmem %s0, 32
    %v189 = vld [vmem:[%s188] sm:%s3]
    %s190 = scalar_lea.vmem [#allocation0], 128
    %191 = vst [vmem:[%s190] sm:%s3] %v189
    %s192 = scalar_lea.vmem %s0, 30
    %v193 = vld [vmem:[%s192] sm:%s3]
    %s194 = scalar_lea.vmem [#allocation0], 120
    %195 = vst [vmem:[%s194] sm:%s3] %v193
    %s196 = scalar_lea.vmem %s0, 28
    %v197 = vld [vmem:[%s196] sm:%s3]
    %s198 = scalar_lea.vmem [#allocation0], 112
    %199 = vst [vmem:[%s198] sm:%s3] %v197
    %s200 = scalar_lea.vmem %s0, 26
    %v201 = vld [vmem:[%s200] sm:%s3]
    %s202 = scalar_lea.vmem [#allocation0], 104
    %203 = vst [vmem:[%s202] sm:%s3] %v201
    %s204 = scalar_lea.vmem %s0, 24
    %v205 = vld [vmem:[%s204] sm:%s3]
    %s206 = scalar_lea.vmem [#allocation0], 96
    %207 = vst [vmem:[%s206] sm:%s3] %v205
    %s208 = scalar_lea.vmem %s0, 22
    %v209 = vld [vmem:[%s208] sm:%s3]
    %s210 = scalar_lea.vmem [#allocation0], 88
    %211 = vst [vmem:[%s210] sm:%s3] %v209
    %s212 = scalar_lea.vmem %s0, 20
    %v213 = vld [vmem:[%s212] sm:%s3]
    %s214 = scalar_lea.vmem [#allocation0], 80
    %215 = vst [vmem:[%s214] sm:%s3] %v213
    %s216 = scalar_lea.vmem %s0, 18
    %v217 = vld [vmem:[%s216] sm:%s3]
    %s218 = scalar_lea.vmem [#allocation0], 72
    %219 = vst [vmem:[%s218] sm:%s3] %v217
    %s220 = scalar_lea.vmem %s0, 16
    %v221 = vld [vmem:[%s220] sm:%s3]
    %s222 = scalar_lea.vmem [#allocation0], 64
    %223 = vst [vmem:[%s222] sm:%s3] %v221
    %s224 = scalar_lea.vmem %s0, 14
    %v225 = vld [vmem:[%s224] sm:%s3]
    %s226 = scalar_lea.vmem [#allocation0], 56
    %227 = vst [vmem:[%s226] sm:%s3] %v225
    %s228 = scalar_lea.vmem %s0, 12
    %v229 = vld [vmem:[%s228] sm:%s3]
    %s230 = scalar_lea.vmem [#allocation0], 48
    %231 = vst [vmem:[%s230] sm:%s3] %v229
    %s232 = scalar_lea.vmem %s0, 10
    %v233 = vld [vmem:[%s232] sm:%s3]
    %s234 = scalar_lea.vmem [#allocation0], 40
    %235 = vst [vmem:[%s234] sm:%s3] %v233
    %s236 = scalar_lea.vmem %s0, 8
    %v237 = vld [vmem:[%s236] sm:%s3]
    %s238 = scalar_lea.vmem [#allocation0], 32
    %239 = vst [vmem:[%s238] sm:%s3] %v237
    %s240 = scalar_lea.vmem %s0, 6
    %v241 = vld [vmem:[%s240] sm:%s3]
    %s242 = scalar_lea.vmem [#allocation0], 24
    %243 = vst [vmem:[%s242] sm:%s3] %v241
    %s244 = scalar_lea.vmem %s0, 4
    %v245 = vld [vmem:[%s244] sm:%s3]
    %s246 = scalar_lea.vmem [#allocation0], 16
    %247 = vst [vmem:[%s246] sm:%s3] %v245
    %s248 = scalar_lea.vmem %s0, 2
    %v249 = vld [vmem:[%s248] sm:%s3]
    %s250 = scalar_lea.vmem [#allocation0], 8
    %251 = vst [vmem:[%s250] sm:%s3] %v249
    %v252 = vld [vmem:[%s0] sm:%s3]
    %253 = vst [vmem:[#allocation0] sm:%s3] %v252
    %v254 = vld [vmem:[#allocation0] sm:$0x3]
    %vm255 = vcmask 130048
    %256 = vst.msk [vmem:[%s1] ss:$504 sm:$0x3] %vm255, %v254
    %s257 = scalar_lea.vmem [#allocation0], 8
    %v258 = vld [vmem:[%s257] sm:$0x3]
    %vm259 = vcmask 130048
    %s260 = scalar_lea.vmem %s1, 8
    %261 = vst.msk [vmem:[%s260] ss:$504 sm:$0x3] %vm259, %v258
    %s262 = scalar_lea.vmem [#allocation0], 16
    %v263 = vld [vmem:[%s262] sm:$0x3]
    %vm264 = vcmask 130048
    %s265 = scalar_lea.vmem %s1, 16
    %266 = vst.msk [vmem:[%s265] ss:$504 sm:$0x3] %vm264, %v263
    %s267 = scalar_lea.vmem [#allocation0], 24
    %v268 = vld [vmem:[%s267] sm:$0x3]
    %vm269 = vcmask 130048
    %s270 = scalar_lea.vmem %s1, 24
    %271 = vst.msk [vmem:[%s270] ss:$504 sm:$0x3] %vm269, %v268
    %s272 = scalar_lea.vmem [#allocation0], 32
    %v273 = vld [vmem:[%s272] sm:$0x3]
    %vm274 = vcmask 130048
    %s275 = scalar_lea.vmem %s1, 32
    %276 = vst.msk [vmem:[%s275] ss:$504 sm:$0x3] %vm274, %v273
    %s277 = scalar_lea.vmem [#allocation0], 40
    %v278 = vld [vmem:[%s277] sm:$0x3]
    %vm279 = vcmask 130048
    %s280 = scalar_lea.vmem %s1, 40
    %281 = vst.msk [vmem:[%s280] ss:$504 sm:$0x3] %vm279, %v278
    %s282 = scalar_lea.vmem [#allocation0], 48
    %v283 = vld [vmem:[%s282] sm:$0x3]
    %vm284 = vcmask 130048
    %s285 = scalar_lea.vmem %s1, 48
    %286 = vst.msk [vmem:[%s285] ss:$504 sm:$0x3] %vm284, %v283
    %s287 = scalar_lea.vmem [#allocation0], 56
    %v288 = vld [vmem:[%s287] sm:$0x3]
    %vm289 = vcmask 130048
    %s290 = scalar_lea.vmem %s1, 56
    %291 = vst.msk [vmem:[%s290] ss:$504 sm:$0x3] %vm289, %v288
    %s292 = scalar_lea.vmem [#allocation0], 64
    %v293 = vld [vmem:[%s292] sm:$0x3]
    %vm294 = vcmask 130048
    %s295 = scalar_lea.vmem %s1, 64
    %296 = vst.msk [vmem:[%s295] ss:$504 sm:$0x3] %vm294, %v293
    %s297 = scalar_lea.vmem [#allocation0], 72
    %v298 = vld [vmem:[%s297] sm:$0x3]
    %vm299 = vcmask 130048
    %s300 = scalar_lea.vmem %s1, 72
    %301 = vst.msk [vmem:[%s300] ss:$504 sm:$0x3] %vm299, %v298
    %s302 = scalar_lea.vmem [#allocation0], 80
    %v303 = vld [vmem:[%s302] sm:$0x3]
    %vm304 = vcmask 130048
    %s305 = scalar_lea.vmem %s1, 80
    %306 = vst.msk [vmem:[%s305] ss:$504 sm:$0x3] %vm304, %v303
    %s307 = scalar_lea.vmem [#allocation0], 88
    %v308 = vld [vmem:[%s307] sm:$0x3]
    %vm309 = vcmask 130048
    %s310 = scalar_lea.vmem %s1, 88
    %311 = vst.msk [vmem:[%s310] ss:$504 sm:$0x3] %vm309, %v308
    %s312 = scalar_lea.vmem [#allocation0], 96
    %v313 = vld [vmem:[%s312] sm:$0x3]
    %vm314 = vcmask 130048
    %s315 = scalar_lea.vmem %s1, 96
    %316 = vst.msk [vmem:[%s315] ss:$504 sm:$0x3] %vm314, %v313
    %s317 = scalar_lea.vmem [#allocation0], 104
    %v318 = vld [vmem:[%s317] sm:$0x3]
    %vm319 = vcmask 130048
    %s320 = scalar_lea.vmem %s1, 104
    %321 = vst.msk [vmem:[%s320] ss:$504 sm:$0x3] %vm319, %v318
    %s322 = scalar_lea.vmem [#allocation0], 112
    %v323 = vld [vmem:[%s322] sm:$0x3]
    %vm324 = vcmask 130048
    %s325 = scalar_lea.vmem %s1, 112
    %326 = vst.msk [vmem:[%s325] ss:$504 sm:$0x3] %vm324, %v323
    %s327 = scalar_lea.vmem [#allocation0], 120
    %v328 = vld [vmem:[%s327] sm:$0x3]
    %vm329 = vcmask 130048
    %s330 = scalar_lea.vmem %s1, 120
    %331 = vst.msk [vmem:[%s330] ss:$504 sm:$0x3] %vm329, %v328
    %s332 = scalar_lea.vmem [#allocation0], 128
    %v333 = vld [vmem:[%s332] sm:$0x3]
    %vm334 = vcmask 130048
    %s335 = scalar_lea.vmem %s1, 128
    %336 = vst.msk [vmem:[%s335] ss:$504 sm:$0x3] %vm334, %v333
    %s337 = scalar_lea.vmem [#allocation0], 136
    %v338 = vld [vmem:[%s337] sm:$0x3]
    %vm339 = vcmask 130048
    %s340 = scalar_lea.vmem %s1, 136
    %341 = vst.msk [vmem:[%s340] ss:$504 sm:$0x3] %vm339, %v338
    %s342 = scalar_lea.vmem [#allocation0], 144
    %v343 = vld [vmem:[%s342] sm:$0x3]
    %vm344 = vcmask 130048
    %s345 = scalar_lea.vmem %s1, 144
    %346 = vst.msk [vmem:[%s345] ss:$504 sm:$0x3] %vm344, %v343
    %s347 = scalar_lea.vmem [#allocation0], 152
    %v348 = vld [vmem:[%s347] sm:$0x3]
    %vm349 = vcmask 130048
    %s350 = scalar_lea.vmem %s1, 152
    %351 = vst.msk [vmem:[%s350] ss:$504 sm:$0x3] %vm349, %v348
    %s352 = scalar_lea.vmem [#allocation0], 160
    %v353 = vld [vmem:[%s352] sm:$0x3]
    %vm354 = vcmask 130048
    %s355 = scalar_lea.vmem %s1, 160
    %356 = vst.msk [vmem:[%s355] ss:$504 sm:$0x3] %vm354, %v353
    %s357 = scalar_lea.vmem [#allocation0], 168
    %v358 = vld [vmem:[%s357] sm:$0x3]
    %vm359 = vcmask 130048
    %s360 = scalar_lea.vmem %s1, 168
    %361 = vst.msk [vmem:[%s360] ss:$504 sm:$0x3] %vm359, %v358
    %s362 = scalar_lea.vmem [#allocation0], 176
    %v363 = vld [vmem:[%s362] sm:$0x3]
    %vm364 = vcmask 130048
    %s365 = scalar_lea.vmem %s1, 176
    %366 = vst.msk [vmem:[%s365] ss:$504 sm:$0x3] %vm364, %v363
    %s367 = scalar_lea.vmem [#allocation0], 184
    %v368 = vld [vmem:[%s367] sm:$0x3]
    %vm369 = vcmask 130048
    %s370 = scalar_lea.vmem %s1, 184
    %371 = vst.msk [vmem:[%s370] ss:$504 sm:$0x3] %vm369, %v368
    %s372 = scalar_lea.vmem [#allocation0], 192
    %v373 = vld [vmem:[%s372] sm:$0x3]
    %vm374 = vcmask 130048
    %s375 = scalar_lea.vmem %s1, 192
    %376 = vst.msk [vmem:[%s375] ss:$504 sm:$0x3] %vm374, %v373
    %s377 = scalar_lea.vmem [#allocation0], 200
    %v378 = vld [vmem:[%s377] sm:$0x3]
    %vm379 = vcmask 130048
    %s380 = scalar_lea.vmem %s1, 200
    %381 = vst.msk [vmem:[%s380] ss:$504 sm:$0x3] %vm379, %v378
    %s382 = scalar_lea.vmem [#allocation0], 208
    %v383 = vld [vmem:[%s382] sm:$0x3]
    %vm384 = vcmask 130048
    %s385 = scalar_lea.vmem %s1, 208
    %386 = vst.msk [vmem:[%s385] ss:$504 sm:$0x3] %vm384, %v383
    %s387 = scalar_lea.vmem [#allocation0], 216
    %v388 = vld [vmem:[%s387] sm:$0x3]
    %vm389 = vcmask 130048
    %s390 = scalar_lea.vmem %s1, 216
    %391 = vst.msk [vmem:[%s390] ss:$504 sm:$0x3] %vm389, %v388
    %s392 = scalar_lea.vmem [#allocation0], 224
    %v393 = vld [vmem:[%s392] sm:$0x3]
    %vm394 = vcmask 130048
    %s395 = scalar_lea.vmem %s1, 224
    %396 = vst.msk [vmem:[%s395] ss:$504 sm:$0x3] %vm394, %v393
    %s397 = scalar_lea.vmem [#allocation0], 232
    %v398 = vld [vmem:[%s397] sm:$0x3]
    %vm399 = vcmask 130048
    %s400 = scalar_lea.vmem %s1, 232
    %401 = vst.msk [vmem:[%s400] ss:$504 sm:$0x3] %vm399, %v398
    %s402 = scalar_lea.vmem [#allocation0], 240
    %v403 = vld [vmem:[%s402] sm:$0x3]
    %vm404 = vcmask 130048
    %s405 = scalar_lea.vmem %s1, 240
    %406 = vst.msk [vmem:[%s405] ss:$504 sm:$0x3] %vm404, %v403
    %s407 = scalar_lea.vmem [#allocation0], 248
    %v408 = vld [vmem:[%s407] sm:$0x3]
    %vm409 = vcmask 130048
    %s410 = scalar_lea.vmem %s1, 248
    %411 = vst.msk [vmem:[%s410] ss:$504 sm:$0x3] %vm409, %v408
    %s412 = scalar_lea.vmem [#allocation0], 256
    %v413 = vld [vmem:[%s412] sm:$0x3]
    %vm414 = vcmask 130048
    %s415 = scalar_lea.vmem %s1, 256
    %416 = vst.msk [vmem:[%s415] ss:$504 sm:$0x3] %vm414, %v413
    %s417 = scalar_lea.vmem [#allocation0], 264
    %v418 = vld [vmem:[%s417] sm:$0x3]
    %vm419 = vcmask 130048
    %s420 = scalar_lea.vmem %s1, 264
    %421 = vst.msk [vmem:[%s420] ss:$504 sm:$0x3] %vm419, %v418
    %s422 = scalar_lea.vmem [#allocation0], 272
    %v423 = vld [vmem:[%s422] sm:$0x3]
    %vm424 = vcmask 130048
    %s425 = scalar_lea.vmem %s1, 272
    %426 = vst.msk [vmem:[%s425] ss:$504 sm:$0x3] %vm424, %v423
    %s427 = scalar_lea.vmem [#allocation0], 280
    %v428 = vld [vmem:[%s427] sm:$0x3]
    %vm429 = vcmask 130048
    %s430 = scalar_lea.vmem %s1, 280
    %431 = vst.msk [vmem:[%s430] ss:$504 sm:$0x3] %vm429, %v428
    %s432 = scalar_lea.vmem [#allocation0], 288
    %v433 = vld [vmem:[%s432] sm:$0x3]
    %vm434 = vcmask 130048
    %s435 = scalar_lea.vmem %s1, 288
    %436 = vst.msk [vmem:[%s435] ss:$504 sm:$0x3] %vm434, %v433
    %s437 = scalar_lea.vmem [#allocation0], 296
    %v438 = vld [vmem:[%s437] sm:$0x3]
    %vm439 = vcmask 130048
    %s440 = scalar_lea.vmem %s1, 296
    %441 = vst.msk [vmem:[%s440] ss:$504 sm:$0x3] %vm439, %v438
    %s442 = scalar_lea.vmem [#allocation0], 304
    %v443 = vld [vmem:[%s442] sm:$0x3]
    %vm444 = vcmask 130048
    %s445 = scalar_lea.vmem %s1, 304
    %446 = vst.msk [vmem:[%s445] ss:$504 sm:$0x3] %vm444, %v443
    %s447 = scalar_lea.vmem [#allocation0], 312
    %v448 = vld [vmem:[%s447] sm:$0x3]
    %vm449 = vcmask 130048
    %s450 = scalar_lea.vmem %s1, 312
    %451 = vst.msk [vmem:[%s450] ss:$504 sm:$0x3] %vm449, %v448
    %s452 = scalar_lea.vmem [#allocation0], 320
    %v453 = vld [vmem:[%s452] sm:$0x3]
    %vm454 = vcmask 130048
    %s455 = scalar_lea.vmem %s1, 320
    %456 = vst.msk [vmem:[%s455] ss:$504 sm:$0x3] %vm454, %v453
    %s457 = scalar_lea.vmem [#allocation0], 328
    %v458 = vld [vmem:[%s457] sm:$0x3]
    %vm459 = vcmask 130048
    %s460 = scalar_lea.vmem %s1, 328
    %461 = vst.msk [vmem:[%s460] ss:$504 sm:$0x3] %vm459, %v458
    %s462 = scalar_lea.vmem [#allocation0], 336
    %v463 = vld [vmem:[%s462] sm:$0x3]
    %vm464 = vcmask 130048
    %s465 = scalar_lea.vmem %s1, 336
    %466 = vst.msk [vmem:[%s465] ss:$504 sm:$0x3] %vm464, %v463
    %s467 = scalar_lea.vmem [#allocation0], 344
    %v468 = vld [vmem:[%s467] sm:$0x3]
    %vm469 = vcmask 130048
    %s470 = scalar_lea.vmem %s1, 344
    %471 = vst.msk [vmem:[%s470] ss:$504 sm:$0x3] %vm469, %v468
    %s472 = scalar_lea.vmem [#allocation0], 352
    %v473 = vld [vmem:[%s472] sm:$0x3]
    %vm474 = vcmask 130048
    %s475 = scalar_lea.vmem %s1, 352
    %476 = vst.msk [vmem:[%s475] ss:$504 sm:$0x3] %vm474, %v473
    %s477 = scalar_lea.vmem [#allocation0], 360
    %v478 = vld [vmem:[%s477] sm:$0x3]
    %vm479 = vcmask 130048
    %s480 = scalar_lea.vmem %s1, 360
    %481 = vst.msk [vmem:[%s480] ss:$504 sm:$0x3] %vm479, %v478
    %s482 = scalar_lea.vmem [#allocation0], 368
    %v483 = vld [vmem:[%s482] sm:$0x3]
    %vm484 = vcmask 130048
    %s485 = scalar_lea.vmem %s1, 368
    %486 = vst.msk [vmem:[%s485] ss:$504 sm:$0x3] %vm484, %v483
    %s487 = scalar_lea.vmem [#allocation0], 376
    %v488 = vld [vmem:[%s487] sm:$0x3]
    %vm489 = vcmask 130048
    %s490 = scalar_lea.vmem %s1, 376
    %491 = vst.msk [vmem:[%s490] ss:$504 sm:$0x3] %vm489, %v488
    %s492 = scalar_lea.vmem [#allocation0], 384
    %v493 = vld [vmem:[%s492] sm:$0x3]
    %vm494 = vcmask 130048
    %s495 = scalar_lea.vmem %s1, 384
    %496 = vst.msk [vmem:[%s495] ss:$504 sm:$0x3] %vm494, %v493
    %s497 = scalar_lea.vmem [#allocation0], 392
    %v498 = vld [vmem:[%s497] sm:$0x3]
    %vm499 = vcmask 130048
    %s500 = scalar_lea.vmem %s1, 392
    %501 = vst.msk [vmem:[%s500] ss:$504 sm:$0x3] %vm499, %v498
    %s502 = scalar_lea.vmem [#allocation0], 400
    %v503 = vld [vmem:[%s502] sm:$0x3]
    %vm504 = vcmask 130048
    %s505 = scalar_lea.vmem %s1, 400
    %506 = vst.msk [vmem:[%s505] ss:$504 sm:$0x3] %vm504, %v503
    %s507 = scalar_lea.vmem [#allocation0], 408
    %v508 = vld [vmem:[%s507] sm:$0x3]
    %vm509 = vcmask 130048
    %s510 = scalar_lea.vmem %s1, 408
    %511 = vst.msk [vmem:[%s510] ss:$504 sm:$0x3] %vm509, %v508
    %s512 = scalar_lea.vmem [#allocation0], 416
    %v513 = vld [vmem:[%s512] sm:$0x3]
    %vm514 = vcmask 130048
    %s515 = scalar_lea.vmem %s1, 416
    %516 = vst.msk [vmem:[%s515] ss:$504 sm:$0x3] %vm514, %v513
    %s517 = scalar_lea.vmem [#allocation0], 424
    %v518 = vld [vmem:[%s517] sm:$0x3]
    %vm519 = vcmask 130048
    %s520 = scalar_lea.vmem %s1, 424
    %521 = vst.msk [vmem:[%s520] ss:$504 sm:$0x3] %vm519, %v518
    %s522 = scalar_lea.vmem [#allocation0], 432
    %v523 = vld [vmem:[%s522] sm:$0x3]
    %vm524 = vcmask 130048
    %s525 = scalar_lea.vmem %s1, 432
    %526 = vst.msk [vmem:[%s525] ss:$504 sm:$0x3] %vm524, %v523
    %s527 = scalar_lea.vmem [#allocation0], 440
    %v528 = vld [vmem:[%s527] sm:$0x3]
    %vm529 = vcmask 130048
    %s530 = scalar_lea.vmem %s1, 440
    %531 = vst.msk [vmem:[%s530] ss:$504 sm:$0x3] %vm529, %v528
    %s532 = scalar_lea.vmem [#allocation0], 448
    %v533 = vld [vmem:[%s532] sm:$0x3]
    %vm534 = vcmask 130048
    %s535 = scalar_lea.vmem %s1, 448
    %536 = vst.msk [vmem:[%s535] ss:$504 sm:$0x3] %vm534, %v533
    %s537 = scalar_lea.vmem [#allocation0], 456
    %v538 = vld [vmem:[%s537] sm:$0x3]
    %vm539 = vcmask 130048
    %s540 = scalar_lea.vmem %s1, 456
    %541 = vst.msk [vmem:[%s540] ss:$504 sm:$0x3] %vm539, %v538
    %s542 = scalar_lea.vmem [#allocation0], 464
    %v543 = vld [vmem:[%s542] sm:$0x3]
    %vm544 = vcmask 130048
    %s545 = scalar_lea.vmem %s1, 464
    %546 = vst.msk [vmem:[%s545] ss:$504 sm:$0x3] %vm544, %v543
    %s547 = scalar_lea.vmem [#allocation0], 472
    %v548 = vld [vmem:[%s547] sm:$0x3]
    %vm549 = vcmask 130048
    %s550 = scalar_lea.vmem %s1, 472
    %551 = vst.msk [vmem:[%s550] ss:$504 sm:$0x3] %vm549, %v548
    %s552 = scalar_lea.vmem [#allocation0], 480
    %v553 = vld [vmem:[%s552] sm:$0x3]
    %vm554 = vcmask 130048
    %s555 = scalar_lea.vmem %s1, 480
    %556 = vst.msk [vmem:[%s555] ss:$504 sm:$0x3] %vm554, %v553
    %s557 = scalar_lea.vmem [#allocation0], 488
    %v558 = vld [vmem:[%s557] sm:$0x3]
    %vm559 = vcmask 130048
    %s560 = scalar_lea.vmem %s1, 488
    %561 = vst.msk [vmem:[%s560] ss:$504 sm:$0x3] %vm559, %v558
    %s562 = scalar_lea.vmem [#allocation0], 496
    %v563 = vld [vmem:[%s562] sm:$0x3]
    %vm564 = vcmask 130048
    %s565 = scalar_lea.vmem %s1, 496
    %566 = vst.msk [vmem:[%s565] ss:$504 sm:$0x3] %vm564, %v563
    %v567 = vld [vmem:[#allocation0] ss:$8 sm:$0x7]
    %s568 = scalar_lea.vmem [#allocation0], 4294967273
    %v569 = vld [vmem:[%s568] ss:$8 sm:$0x78]
    %vm570 = vcmask 1046531
    %v571 = vsel %vm570, %v569, %v567
    %s572 = scalar_lea.vmem [#allocation0], 17
    %v573 = vld [vmem:[%s572] sm:$0x80]
    %vm574 = vcmask 1047559
    %v575 = vsel %vm574, %v573, %v571
    %576 = vrot.lane.b32.xlu0 %v575, 112
    %v577 = vpop.permute.xlu0 %576
    %vm578 = vcmask 130048
    %s579 = scalar_lea.vmem %s1, 1
    %580 = vst.msk [vmem:[%s579] ss:$8 sm:$0x7] %vm578, %v577
    %s581 = scalar_lea.vmem %s1, 481
    %582 = vst.msk [vmem:[%s581] ss:$8 sm:$0x78] %vm578, %v577
    %s583 = scalar_lea.vmem %s1, 18
    %584 = vst.msk [vmem:[%s583] sm:$0x80] %vm578, %v577
    %s585 = scalar_lea.vmem [#allocation0], 32
    %v586 = vld [vmem:[%s585] ss:$8 sm:$0x7]
    %s587 = scalar_lea.vmem [#allocation0], 9
    %v588 = vld [vmem:[%s587] ss:$8 sm:$0x78]
    %vm589 = vcmask 1046531
    %v590 = vsel %vm589, %v588, %v586
    %s591 = scalar_lea.vmem [#allocation0], 49
    %v592 = vld [vmem:[%s591] sm:$0x80]
    %vm593 = vcmask 1047559
    %v594 = vsel %vm593, %v592, %v590
    %595 = vrot.lane.b32.xlu0 %v594, 112
    %v596 = vpop.permute.xlu0 %595
    %vm597 = vcmask 130048
    %s598 = scalar_lea.vmem %s1, 33
    %599 = vst.msk [vmem:[%s598] ss:$8 sm:$0x7] %vm597, %v596
    %s600 = scalar_lea.vmem %s1, 513
    %601 = vst.msk [vmem:[%s600] ss:$8 sm:$0x78] %vm597, %v596
    %s602 = scalar_lea.vmem %s1, 50
    %603 = vst.msk [vmem:[%s602] sm:$0x80] %vm597, %v596
    %s604 = scalar_lea.vmem [#allocation0], 64
    %v605 = vld [vmem:[%s604] ss:$8 sm:$0x7]
    %s606 = scalar_lea.vmem [#allocation0], 41
    %v607 = vld [vmem:[%s606] ss:$8 sm:$0x78]
    %vm608 = vcmask 1046531
    %v609 = vsel %vm608, %v607, %v605
    %s610 = scalar_lea.vmem [#allocation0], 81
    %v611 = vld [vmem:[%s610] sm:$0x80]
    %vm612 = vcmask 1047559
    %v613 = vsel %vm612, %v611, %v609
    %614 = vrot.lane.b32.xlu0 %v613, 112
    %v615 = vpop.permute.xlu0 %614
    %vm616 = vcmask 130048
    %s617 = scalar_lea.vmem %s1, 65
    %618 = vst.msk [vmem:[%s617] ss:$8 sm:$0x7] %vm616, %v615
    %s619 = scalar_lea.vmem %s1, 545
    %620 = vst.msk [vmem:[%s619] ss:$8 sm:$0x78] %vm616, %v615
    %s621 = scalar_lea.vmem %s1, 82
    %622 = vst.msk [vmem:[%s621] sm:$0x80] %vm616, %v615
    %s623 = scalar_lea.vmem [#allocation0], 96
    %v624 = vld [vmem:[%s623] ss:$8 sm:$0x7]
    %s625 = scalar_lea.vmem [#allocation0], 73
    %v626 = vld [vmem:[%s625] ss:$8 sm:$0x78]
    %vm627 = vcmask 1046531
    %v628 = vsel %vm627, %v626, %v624
    %s629 = scalar_lea.vmem [#allocation0], 113
    %v630 = vld [vmem:[%s629] sm:$0x80]
    %vm631 = vcmask 1047559
    %v632 = vsel %vm631, %v630, %v628
    %633 = vrot.lane.b32.xlu0 %v632, 112
    %v634 = vpop.permute.xlu0 %633
    %vm635 = vcmask 130048
    %s636 = scalar_lea.vmem %s1, 97
    %637 = vst.msk [vmem:[%s636] ss:$8 sm:$0x7] %vm635, %v634
    %s638 = scalar_lea.vmem %s1, 577
    %639 = vst.msk [vmem:[%s638] ss:$8 sm:$0x78] %vm635, %v634
    %s640 = scalar_lea.vmem %s1, 114
    %641 = vst.msk [vmem:[%s640] sm:$0x80] %vm635, %v634
    %s642 = scalar_lea.vmem [#allocation0], 128
    %v643 = vld [vmem:[%s642] ss:$8 sm:$0x7]
    %s644 = scalar_lea.vmem [#allocation0], 105
    %v645 = vld [vmem:[%s644] ss:$8 sm:$0x78]
    %vm646 = vcmask 1046531
    %v647 = vsel %vm646, %v645, %v643
    %s648 = scalar_lea.vmem [#allocation0], 145
    %v649 = vld [vmem:[%s648] sm:$0x80]
    %vm650 = vcmask 1047559
    %v651 = vsel %vm650, %v649, %v647
    %652 = vrot.lane.b32.xlu0 %v651, 112
    %v653 = vpop.permute.xlu0 %652
    %vm654 = vcmask 130048
    %s655 = scalar_lea.vmem %s1, 129
    %656 = vst.msk [vmem:[%s655] ss:$8 sm:$0x7] %vm654, %v653
    %s657 = scalar_lea.vmem %s1, 609
    %658 = vst.msk [vmem:[%s657] ss:$8 sm:$0x78] %vm654, %v653
    %s659 = scalar_lea.vmem %s1, 146
    %660 = vst.msk [vmem:[%s659] sm:$0x80] %vm654, %v653
    %s661 = scalar_lea.vmem [#allocation0], 160
    %v662 = vld [vmem:[%s661] ss:$8 sm:$0x7]
    %s663 = scalar_lea.vmem [#allocation0], 137
    %v664 = vld [vmem:[%s663] ss:$8 sm:$0x78]
    %vm665 = vcmask 1046531
    %v666 = vsel %vm665, %v664, %v662
    %s667 = scalar_lea.vmem [#allocation0], 177
    %v668 = vld [vmem:[%s667] sm:$0x80]
    %vm669 = vcmask 1047559
    %v670 = vsel %vm669, %v668, %v666
    %671 = vrot.lane.b32.xlu0 %v670, 112
    %v672 = vpop.permute.xlu0 %671
    %vm673 = vcmask 130048
    %s674 = scalar_lea.vmem %s1, 161
    %675 = vst.msk [vmem:[%s674] ss:$8 sm:$0x7] %vm673, %v672
    %s676 = scalar_lea.vmem %s1, 641
    %677 = vst.msk [vmem:[%s676] ss:$8 sm:$0x78] %vm673, %v672
    %s678 = scalar_lea.vmem %s1, 178
    %679 = vst.msk [vmem:[%s678] sm:$0x80] %vm673, %v672
    %s680 = scalar_lea.vmem [#allocation0], 192
    %v681 = vld [vmem:[%s680] ss:$8 sm:$0x7]
    %s682 = scalar_lea.vmem [#allocation0], 169
    %v683 = vld [vmem:[%s682] ss:$8 sm:$0x78]
    %vm684 = vcmask 1046531
    %v685 = vsel %vm684, %v683, %v681
    %s686 = scalar_lea.vmem [#allocation0], 209
    %v687 = vld [vmem:[%s686] sm:$0x80]
    %vm688 = vcmask 1047559
    %v689 = vsel %vm688, %v687, %v685
    %690 = vrot.lane.b32.xlu0 %v689, 112
    %v691 = vpop.permute.xlu0 %690
    %vm692 = vcmask 130048
    %s693 = scalar_lea.vmem %s1, 193
    %694 = vst.msk [vmem:[%s693] ss:$8 sm:$0x7] %vm692, %v691
    %s695 = scalar_lea.vmem %s1, 673
    %696 = vst.msk [vmem:[%s695] ss:$8 sm:$0x78] %vm692, %v691
    %s697 = scalar_lea.vmem %s1, 210
    %698 = vst.msk [vmem:[%s697] sm:$0x80] %vm692, %v691
    %s699 = scalar_lea.vmem [#allocation0], 224
    %v700 = vld [vmem:[%s699] ss:$8 sm:$0x7]
    %s701 = scalar_lea.vmem [#allocation0], 201
    %v702 = vld [vmem:[%s701] ss:$8 sm:$0x78]
    %vm703 = vcmask 1046531
    %v704 = vsel %vm703, %v702, %v700
    %s705 = scalar_lea.vmem [#allocation0], 241
    %v706 = vld [vmem:[%s705] sm:$0x80]
    %vm707 = vcmask 1047559
    %v708 = vsel %vm707, %v706, %v704
    %709 = vrot.lane.b32.xlu0 %v708, 112
    %v710 = vpop.permute.xlu0 %709
    %vm711 = vcmask 130048
    %s712 = scalar_lea.vmem %s1, 225
    %713 = vst.msk [vmem:[%s712] ss:$8 sm:$0x7] %vm711, %v710
    %s714 = scalar_lea.vmem %s1, 705
    %715 = vst.msk [vmem:[%s714] ss:$8 sm:$0x78] %vm711, %v710
    %s716 = scalar_lea.vmem %s1, 242
    %717 = vst.msk [vmem:[%s716] sm:$0x80] %vm711, %v710
    %s718 = scalar_lea.vmem [#allocation0], 256
    %v719 = vld [vmem:[%s718] ss:$8 sm:$0x7]
    %s720 = scalar_lea.vmem [#allocation0], 233
    %v721 = vld [vmem:[%s720] ss:$8 sm:$0x78]
    %vm722 = vcmask 1046531
    %v723 = vsel %vm722, %v721, %v719
    %s724 = scalar_lea.vmem [#allocation0], 273
    %v725 = vld [vmem:[%s724] sm:$0x80]
    %vm726 = vcmask 1047559
    %v727 = vsel %vm726, %v725, %v723
    %728 = vrot.lane.b32.xlu0 %v727, 112
    %v729 = vpop.permute.xlu0 %728
    %vm730 = vcmask 130048
    %s731 = scalar_lea.vmem %s1, 257
    %732 = vst.msk [vmem:[%s731] ss:$8 sm:$0x7] %vm730, %v729
    %s733 = scalar_lea.vmem %s1, 737
    %734 = vst.msk [vmem:[%s733] ss:$8 sm:$0x78] %vm730, %v729
    %s735 = scalar_lea.vmem %s1, 274
    %736 = vst.msk [vmem:[%s735] sm:$0x80] %vm730, %v729
    %s737 = scalar_lea.vmem [#allocation0], 288
    %v738 = vld [vmem:[%s737] ss:$8 sm:$0x7]
    %s739 = scalar_lea.vmem [#allocation0], 265
    %v740 = vld [vmem:[%s739] ss:$8 sm:$0x78]
    %vm741 = vcmask 1046531
    %v742 = vsel %vm741, %v740, %v738
    %s743 = scalar_lea.vmem [#allocation0], 305
    %v744 = vld [vmem:[%s743] sm:$0x80]
    %vm745 = vcmask 1047559
    %v746 = vsel %vm745, %v744, %v742
    %747 = vrot.lane.b32.xlu0 %v746, 112
    %v748 = vpop.permute.xlu0 %747
    %vm749 = vcmask 130048
    %s750 = scalar_lea.vmem %s1, 289
    %751 = vst.msk [vmem:[%s750] ss:$8 sm:$0x7] %vm749, %v748
    %s752 = scalar_lea.vmem %s1, 769
    %753 = vst.msk [vmem:[%s752] ss:$8 sm:$0x78] %vm749, %v748
    %s754 = scalar_lea.vmem %s1, 306
    %755 = vst.msk [vmem:[%s754] sm:$0x80] %vm749, %v748
    %s756 = scalar_lea.vmem [#allocation0], 320
    %v757 = vld [vmem:[%s756] ss:$8 sm:$0x7]
    %s758 = scalar_lea.vmem [#allocation0], 297
    %v759 = vld [vmem:[%s758] ss:$8 sm:$0x78]
    %vm760 = vcmask 1046531
    %v761 = vsel %vm760, %v759, %v757
    %s762 = scalar_lea.vmem [#allocation0], 337
    %v763 = vld [vmem:[%s762] sm:$0x80]
    %vm764 = vcmask 1047559
    %v765 = vsel %vm764, %v763, %v761
    %766 = vrot.lane.b32.xlu0 %v765, 112
    %v767 = vpop.permute.xlu0 %766
    %vm768 = vcmask 130048
    %s769 = scalar_lea.vmem %s1, 321
    %770 = vst.msk [vmem:[%s769] ss:$8 sm:$0x7] %vm768, %v767
    %s771 = scalar_lea.vmem %s1, 801
    %772 = vst.msk [vmem:[%s771] ss:$8 sm:$0x78] %vm768, %v767
    %s773 = scalar_lea.vmem %s1, 338
    %774 = vst.msk [vmem:[%s773] sm:$0x80] %vm768, %v767
    %s775 = scalar_lea.vmem [#allocation0], 352
    %v776 = vld [vmem:[%s775] ss:$8 sm:$0x7]
    %s777 = scalar_lea.vmem [#allocation0], 329
    %v778 = vld [vmem:[%s777] ss:$8 sm:$0x78]
    %vm779 = vcmask 1046531
    %v780 = vsel %vm779, %v778, %v776
    %s781 = scalar_lea.vmem [#allocation0], 369
    %v782 = vld [vmem:[%s781] sm:$0x80]
    %vm783 = vcmask 1047559
    %v784 = vsel %vm783, %v782, %v780
    %785 = vrot.lane.b32.xlu0 %v784, 112
    %v786 = vpop.permute.xlu0 %785
    %vm787 = vcmask 130048
    %s788 = scalar_lea.vmem %s1, 353
    %789 = vst.msk [vmem:[%s788] ss:$8 sm:$0x7] %vm787, %v786
    %s790 = scalar_lea.vmem %s1, 833
    %791 = vst.msk [vmem:[%s790] ss:$8 sm:$0x78] %vm787, %v786
    %s792 = scalar_lea.vmem %s1, 370
    %793 = vst.msk [vmem:[%s792] sm:$0x80] %vm787, %v786
    %s794 = scalar_lea.vmem [#allocation0], 384
    %v795 = vld [vmem:[%s794] ss:$8 sm:$0x7]
    %s796 = scalar_lea.vmem [#allocation0], 361
    %v797 = vld [vmem:[%s796] ss:$8 sm:$0x78]
    %vm798 = vcmask 1046531
    %v799 = vsel %vm798, %v797, %v795
    %s800 = scalar_lea.vmem [#allocation0], 401
    %v801 = vld [vmem:[%s800] sm:$0x80]
    %vm802 = vcmask 1047559
    %v803 = vsel %vm802, %v801, %v799
    %804 = vrot.lane.b32.xlu0 %v803, 112
    %v805 = vpop.permute.xlu0 %804
    %vm806 = vcmask 130048
    %s807 = scalar_lea.vmem %s1, 385
    %808 = vst.msk [vmem:[%s807] ss:$8 sm:$0x7] %vm806, %v805
    %s809 = scalar_lea.vmem %s1, 865
    %810 = vst.msk [vmem:[%s809] ss:$8 sm:$0x78] %vm806, %v805
    %s811 = scalar_lea.vmem %s1, 402
    %812 = vst.msk [vmem:[%s811] sm:$0x80] %vm806, %v805
    %s813 = scalar_lea.vmem [#allocation0], 416
    %v814 = vld [vmem:[%s813] ss:$8 sm:$0x7]
    %s815 = scalar_lea.vmem [#allocation0], 393
    %v816 = vld [vmem:[%s815] ss:$8 sm:$0x78]
    %vm817 = vcmask 1046531
    %v818 = vsel %vm817, %v816, %v814
    %s819 = scalar_lea.vmem [#allocation0], 433
    %v820 = vld [vmem:[%s819] sm:$0x80]
    %vm821 = vcmask 1047559
    %v822 = vsel %vm821, %v820, %v818
    %823 = vrot.lane.b32.xlu0 %v822, 112
    %v824 = vpop.permute.xlu0 %823
    %vm825 = vcmask 130048
    %s826 = scalar_lea.vmem %s1, 417
    %827 = vst.msk [vmem:[%s826] ss:$8 sm:$0x7] %vm825, %v824
    %s828 = scalar_lea.vmem %s1, 897
    %829 = vst.msk [vmem:[%s828] ss:$8 sm:$0x78] %vm825, %v824
    %s830 = scalar_lea.vmem %s1, 434
    %831 = vst.msk [vmem:[%s830] sm:$0x80] %vm825, %v824
    %s832 = scalar_lea.vmem [#allocation0], 448
    %v833 = vld [vmem:[%s832] ss:$8 sm:$0x7]
    %s834 = scalar_lea.vmem [#allocation0], 425
    %v835 = vld [vmem:[%s834] ss:$8 sm:$0x78]
    %vm836 = vcmask 1046531
    %v837 = vsel %vm836, %v835, %v833
    %s838 = scalar_lea.vmem [#allocation0], 465
    %v839 = vld [vmem:[%s838] sm:$0x80]
    %vm840 = vcmask 1047559
    %v841 = vsel %vm840, %v839, %v837
    %842 = vrot.lane.b32.xlu0 %v841, 112
    %v843 = vpop.permute.xlu0 %842
    %vm844 = vcmask 130048
    %s845 = scalar_lea.vmem %s1, 449
    %846 = vst.msk [vmem:[%s845] ss:$8 sm:$0x7] %vm844, %v843
    %s847 = scalar_lea.vmem %s1, 929
    %848 = vst.msk [vmem:[%s847] ss:$8 sm:$0x78] %vm844, %v843
    %s849 = scalar_lea.vmem %s1, 466
    %850 = vst.msk [vmem:[%s849] sm:$0x80] %vm844, %v843
    %s851 = scalar_lea.vmem [#allocation0], 480
    %v852 = vld [vmem:[%s851] ss:$8 sm:$0x7]
    %s853 = scalar_lea.vmem [#allocation0], 457
    %v854 = vld [vmem:[%s853] ss:$8 sm:$0x38]
    %vm855 = vcmask 1045507
    %v856 = vsel %vm855, %v854, %v852
    %857 = vrot.lane.b32.xlu0 %v856, 112
    %v858 = vpop.permute.xlu0 %857
    %vm859 = vcmask 130048
    %s860 = scalar_lea.vmem %s1, 481
    %861 = vst.msk [vmem:[%s860] ss:$8 sm:$0x7] %vm859, %v858
    %s862 = scalar_lea.vmem %s1, 961
    %863 = vst.msk [vmem:[%s862] ss:$8 sm:$0x38] %vm859, %v858
    %v864 = vld [vmem:[#allocation0] ss:$8 sm:$0x7]
    %s865 = scalar_lea.vmem [#allocation0], 4294967273
    %v866 = vld [vmem:[%s865] ss:$8 sm:$0x78]
    %vm867 = vcmask 1046531
    %v868 = vsel %vm867, %v866, %v864
    %s869 = scalar_lea.vmem [#allocation0], 17
    %v870 = vld [vmem:[%s869] sm:$0x80]
    %vm871 = vcmask 1047559
    %v872 = vsel %vm871, %v870, %v868
    %873 = vrot.lane.b32.xlu0 %v872, 96
    %v874 = vpop.permute.xlu0 %873
    %vm875 = vcmask 130048
    %s876 = scalar_lea.vmem %s1, 2
    %877 = vst.msk [vmem:[%s876] ss:$8 sm:$0x7] %vm875, %v874
    %s878 = scalar_lea.vmem %s1, 482
    %879 = vst.msk [vmem:[%s878] ss:$8 sm:$0x78] %vm875, %v874
    %s880 = scalar_lea.vmem %s1, 19
    %881 = vst.msk [vmem:[%s880] sm:$0x80] %vm875, %v874
    %s882 = scalar_lea.vmem [#allocation0], 32
    %v883 = vld [vmem:[%s882] ss:$8 sm:$0x7]
    %s884 = scalar_lea.vmem [#allocation0], 9
    %v885 = vld [vmem:[%s884] ss:$8 sm:$0x78]
    %vm886 = vcmask 1046531
    %v887 = vsel %vm886, %v885, %v883
    %s888 = scalar_lea.vmem [#allocation0], 49
    %v889 = vld [vmem:[%s888] sm:$0x80]
    %vm890 = vcmask 1047559
    %v891 = vsel %vm890, %v889, %v887
    %892 = vrot.lane.b32.xlu0 %v891, 96
    %v893 = vpop.permute.xlu0 %892
    %vm894 = vcmask 130048
    %s895 = scalar_lea.vmem %s1, 34
    %896 = vst.msk [vmem:[%s895] ss:$8 sm:$0x7] %vm894, %v893
    %s897 = scalar_lea.vmem %s1, 514
    %898 = vst.msk [vmem:[%s897] ss:$8 sm:$0x78] %vm894, %v893
    %s899 = scalar_lea.vmem %s1, 51
    %900 = vst.msk [vmem:[%s899] sm:$0x80] %vm894, %v893
    %s901 = scalar_lea.vmem [#allocation0], 64
    %v902 = vld [vmem:[%s901] ss:$8 sm:$0x7]
    %s903 = scalar_lea.vmem [#allocation0], 41
    %v904 = vld [vmem:[%s903] ss:$8 sm:$0x78]
    %vm905 = vcmask 1046531
    %v906 = vsel %vm905, %v904, %v902
    %s907 = scalar_lea.vmem [#allocation0], 81
    %v908 = vld [vmem:[%s907] sm:$0x80]
    %vm909 = vcmask 1047559
    %v910 = vsel %vm909, %v908, %v906
    %911 = vrot.lane.b32.xlu0 %v910, 96
    %v912 = vpop.permute.xlu0 %911
    %vm913 = vcmask 130048
    %s914 = scalar_lea.vmem %s1, 66
    %915 = vst.msk [vmem:[%s914] ss:$8 sm:$0x7] %vm913, %v912
    %s916 = scalar_lea.vmem %s1, 546
    %917 = vst.msk [vmem:[%s916] ss:$8 sm:$0x78] %vm913, %v912
    %s918 = scalar_lea.vmem %s1, 83
    %919 = vst.msk [vmem:[%s918] sm:$0x80] %vm913, %v912
    %s920 = scalar_lea.vmem [#allocation0], 96
    %v921 = vld [vmem:[%s920] ss:$8 sm:$0x7]
    %s922 = scalar_lea.vmem [#allocation0], 73
    %v923 = vld [vmem:[%s922] ss:$8 sm:$0x78]
    %vm924 = vcmask 1046531
    %v925 = vsel %vm924, %v923, %v921
    %s926 = scalar_lea.vmem [#allocation0], 113
    %v927 = vld [vmem:[%s926] sm:$0x80]
    %vm928 = vcmask 1047559
    %v929 = vsel %vm928, %v927, %v925
    %930 = vrot.lane.b32.xlu0 %v929, 96
    %v931 = vpop.permute.xlu0 %930
    %vm932 = vcmask 130048
    %s933 = scalar_lea.vmem %s1, 98
    %934 = vst.msk [vmem:[%s933] ss:$8 sm:$0x7] %vm932, %v931
    %s935 = scalar_lea.vmem %s1, 578
    %936 = vst.msk [vmem:[%s935] ss:$8 sm:$0x78] %vm932, %v931
    %s937 = scalar_lea.vmem %s1, 115
    %938 = vst.msk [vmem:[%s937] sm:$0x80] %vm932, %v931
    %s939 = scalar_lea.vmem [#allocation0], 128
    %v940 = vld [vmem:[%s939] ss:$8 sm:$0x7]
    %s941 = scalar_lea.vmem [#allocation0], 105
    %v942 = vld [vmem:[%s941] ss:$8 sm:$0x78]
    %vm943 = vcmask 1046531
    %v944 = vsel %vm943, %v942, %v940
    %s945 = scalar_lea.vmem [#allocation0], 145
    %v946 = vld [vmem:[%s945] sm:$0x80]
    %vm947 = vcmask 1047559
    %v948 = vsel %vm947, %v946, %v944
    %949 = vrot.lane.b32.xlu0 %v948, 96
    %v950 = vpop.permute.xlu0 %949
    %vm951 = vcmask 130048
    %s952 = scalar_lea.vmem %s1, 130
    %953 = vst.msk [vmem:[%s952] ss:$8 sm:$0x7] %vm951, %v950
    %s954 = scalar_lea.vmem %s1, 610
    %955 = vst.msk [vmem:[%s954] ss:$8 sm:$0x78] %vm951, %v950
    %s956 = scalar_lea.vmem %s1, 147
    %957 = vst.msk [vmem:[%s956] sm:$0x80] %vm951, %v950
    %s958 = scalar_lea.vmem [#allocation0], 160
    %v959 = vld [vmem:[%s958] ss:$8 sm:$0x7]
    %s960 = scalar_lea.vmem [#allocation0], 137
    %v961 = vld [vmem:[%s960] ss:$8 sm:$0x78]
    %vm962 = vcmask 1046531
    %v963 = vsel %vm962, %v961, %v959
    %s964 = scalar_lea.vmem [#allocation0], 177
    %v965 = vld [vmem:[%s964] sm:$0x80]
    %vm966 = vcmask 1047559
    %v967 = vsel %vm966, %v965, %v963
    %968 = vrot.lane.b32.xlu0 %v967, 96
    %v969 = vpop.permute.xlu0 %968
    %vm970 = vcmask 130048
    %s971 = scalar_lea.vmem %s1, 162
    %972 = vst.msk [vmem:[%s971] ss:$8 sm:$0x7] %vm970, %v969
    %s973 = scalar_lea.vmem %s1, 642
    %974 = vst.msk [vmem:[%s973] ss:$8 sm:$0x78] %vm970, %v969
    %s975 = scalar_lea.vmem %s1, 179
    %976 = vst.msk [vmem:[%s975] sm:$0x80] %vm970, %v969
    %s977 = scalar_lea.vmem [#allocation0], 192
    %v978 = vld [vmem:[%s977] ss:$8 sm:$0x7]
    %s979 = scalar_lea.vmem [#allocation0], 169
    %v980 = vld [vmem:[%s979] ss:$8 sm:$0x78]
    %vm981 = vcmask 1046531
    %v982 = vsel %vm981, %v980, %v978
    %s983 = scalar_lea.vmem [#allocation0], 209
    %v984 = vld [vmem:[%s983] sm:$0x80]
    %vm985 = vcmask 1047559
    %v986 = vsel %vm985, %v984, %v982
    %987 = vrot.lane.b32.xlu0 %v986, 96
    %v988 = vpop.permute.xlu0 %987
    %vm989 = vcmask 130048
    %s990 = scalar_lea.vmem %s1, 194
    %991 = vst.msk [vmem:[%s990] ss:$8 sm:$0x7] %vm989, %v988
    %s992 = scalar_lea.vmem %s1, 674
    %993 = vst.msk [vmem:[%s992] ss:$8 sm:$0x78] %vm989, %v988
    %s994 = scalar_lea.vmem %s1, 211
    %995 = vst.msk [vmem:[%s994] sm:$0x80] %vm989, %v988
    %s996 = scalar_lea.vmem [#allocation0], 224
    %v997 = vld [vmem:[%s996] ss:$8 sm:$0x7]
    %s998 = scalar_lea.vmem [#allocation0], 201
    %v999 = vld [vmem:[%s998] ss:$8 sm:$0x78]
    %vm1000 = vcmask 1046531
    %v1001 = vsel %vm1000, %v999, %v997
    %s1002 = scalar_lea.vmem [#allocation0], 241
    %v1003 = vld [vmem:[%s1002] sm:$0x80]
    %vm1004 = vcmask 1047559
    %v1005 = vsel %vm1004, %v1003, %v1001
    %1006 = vrot.lane.b32.xlu0 %v1005, 96
    %v1007 = vpop.permute.xlu0 %1006
    %vm1008 = vcmask 130048
    %s1009 = scalar_lea.vmem %s1, 226
    %1010 = vst.msk [vmem:[%s1009] ss:$8 sm:$0x7] %vm1008, %v1007
    %s1011 = scalar_lea.vmem %s1, 706
    %1012 = vst.msk [vmem:[%s1011] ss:$8 sm:$0x78] %vm1008, %v1007
    %s1013 = scalar_lea.vmem %s1, 243
    %1014 = vst.msk [vmem:[%s1013] sm:$0x80] %vm1008, %v1007
    %s1015 = scalar_lea.vmem [#allocation0], 256
    %v1016 = vld [vmem:[%s1015] ss:$8 sm:$0x7]
    %s1017 = scalar_lea.vmem [#allocation0], 233
    %v1018 = vld [vmem:[%s1017] ss:$8 sm:$0x78]
    %vm1019 = vcmask 1046531
    %v1020 = vsel %vm1019, %v1018, %v1016
    %s1021 = scalar_lea.vmem [#allocation0], 273
    %v1022 = vld [vmem:[%s1021] sm:$0x80]
    %vm1023 = vcmask 1047559
    %v1024 = vsel %vm1023, %v1022, %v1020
    %1025 = vrot.lane.b32.xlu0 %v1024, 96
    %v1026 = vpop.permute.xlu0 %1025
    %vm1027 = vcmask 130048
    %s1028 = scalar_lea.vmem %s1, 258
    %1029 = vst.msk [vmem:[%s1028] ss:$8 sm:$0x7] %vm1027, %v1026
    %s1030 = scalar_lea.vmem %s1, 738
    %1031 = vst.msk [vmem:[%s1030] ss:$8 sm:$0x78] %vm1027, %v1026
    %s1032 = scalar_lea.vmem %s1, 275
    %1033 = vst.msk [vmem:[%s1032] sm:$0x80] %vm1027, %v1026
    %s1034 = scalar_lea.vmem [#allocation0], 288
    %v1035 = vld [vmem:[%s1034] ss:$8 sm:$0x7]
    %s1036 = scalar_lea.vmem [#allocation0], 265
    %v1037 = vld [vmem:[%s1036] ss:$8 sm:$0x78]
    %vm1038 = vcmask 1046531
    %v1039 = vsel %vm1038, %v1037, %v1035
    %s1040 = scalar_lea.vmem [#allocation0], 305
    %v1041 = vld [vmem:[%s1040] sm:$0x80]
    %vm1042 = vcmask 1047559
    %v1043 = vsel %vm1042, %v1041, %v1039
    %1044 = vrot.lane.b32.xlu0 %v1043, 96
    %v1045 = vpop.permute.xlu0 %1044
    %vm1046 = vcmask 130048
    %s1047 = scalar_lea.vmem %s1, 290
    %1048 = vst.msk [vmem:[%s1047] ss:$8 sm:$0x7] %vm1046, %v1045
    %s1049 = scalar_lea.vmem %s1, 770
    %1050 = vst.msk [vmem:[%s1049] ss:$8 sm:$0x78] %vm1046, %v1045
    %s1051 = scalar_lea.vmem %s1, 307
    %1052 = vst.msk [vmem:[%s1051] sm:$0x80] %vm1046, %v1045
    %s1053 = scalar_lea.vmem [#allocation0], 320
    %v1054 = vld [vmem:[%s1053] ss:$8 sm:$0x7]
    %s1055 = scalar_lea.vmem [#allocation0], 297
    %v1056 = vld [vmem:[%s1055] ss:$8 sm:$0x78]
    %vm1057 = vcmask 1046531
    %v1058 = vsel %vm1057, %v1056, %v1054
    %s1059 = scalar_lea.vmem [#allocation0], 337
    %v1060 = vld [vmem:[%s1059] sm:$0x80]
    %vm1061 = vcmask 1047559
    %v1062 = vsel %vm1061, %v1060, %v1058
    %1063 = vrot.lane.b32.xlu0 %v1062, 96
    %v1064 = vpop.permute.xlu0 %1063
    %vm1065 = vcmask 130048
    %s1066 = scalar_lea.vmem %s1, 322
    %1067 = vst.msk [vmem:[%s1066] ss:$8 sm:$0x7] %vm1065, %v1064
    %s1068 = scalar_lea.vmem %s1, 802
    %1069 = vst.msk [vmem:[%s1068] ss:$8 sm:$0x78] %vm1065, %v1064
    %s1070 = scalar_lea.vmem %s1, 339
    %1071 = vst.msk [vmem:[%s1070] sm:$0x80] %vm1065, %v1064
    %s1072 = scalar_lea.vmem [#allocation0], 352
    %v1073 = vld [vmem:[%s1072] ss:$8 sm:$0x7]
    %s1074 = scalar_lea.vmem [#allocation0], 329
    %v1075 = vld [vmem:[%s1074] ss:$8 sm:$0x78]
    %vm1076 = vcmask 1046531
    %v1077 = vsel %vm1076, %v1075, %v1073
    %s1078 = scalar_lea.vmem [#allocation0], 369
    %v1079 = vld [vmem:[%s1078] sm:$0x80]
    %vm1080 = vcmask 1047559
    %v1081 = vsel %vm1080, %v1079, %v1077
    %1082 = vrot.lane.b32.xlu0 %v1081, 96
    %v1083 = vpop.permute.xlu0 %1082
    %vm1084 = vcmask 130048
    %s1085 = scalar_lea.vmem %s1, 354
    %1086 = vst.msk [vmem:[%s1085] ss:$8 sm:$0x7] %vm1084, %v1083
    %s1087 = scalar_lea.vmem %s1, 834
    %1088 = vst.msk [vmem:[%s1087] ss:$8 sm:$0x78] %vm1084, %v1083
    %s1089 = scalar_lea.vmem %s1, 371
    %1090 = vst.msk [vmem:[%s1089] sm:$0x80] %vm1084, %v1083
    %s1091 = scalar_lea.vmem [#allocation0], 384
    %v1092 = vld [vmem:[%s1091] ss:$8 sm:$0x7]
    %s1093 = scalar_lea.vmem [#allocation0], 361
    %v1094 = vld [vmem:[%s1093] ss:$8 sm:$0x78]
    %vm1095 = vcmask 1046531
    %v1096 = vsel %vm1095, %v1094, %v1092
    %s1097 = scalar_lea.vmem [#allocation0], 401
    %v1098 = vld [vmem:[%s1097] sm:$0x80]
    %vm1099 = vcmask 1047559
    %v1100 = vsel %vm1099, %v1098, %v1096
    %1101 = vrot.lane.b32.xlu0 %v1100, 96
    %v1102 = vpop.permute.xlu0 %1101
    %vm1103 = vcmask 130048
    %s1104 = scalar_lea.vmem %s1, 386
    %1105 = vst.msk [vmem:[%s1104] ss:$8 sm:$0x7] %vm1103, %v1102
    %s1106 = scalar_lea.vmem %s1, 866
    %1107 = vst.msk [vmem:[%s1106] ss:$8 sm:$0x78] %vm1103, %v1102
    %s1108 = scalar_lea.vmem %s1, 403
    %1109 = vst.msk [vmem:[%s1108] sm:$0x80] %vm1103, %v1102
    %s1110 = scalar_lea.vmem [#allocation0], 416
    %v1111 = vld [vmem:[%s1110] ss:$8 sm:$0x7]
    %s1112 = scalar_lea.vmem [#allocation0], 393
    %v1113 = vld [vmem:[%s1112] ss:$8 sm:$0x78]
    %vm1114 = vcmask 1046531
    %v1115 = vsel %vm1114, %v1113, %v1111
    %s1116 = scalar_lea.vmem [#allocation0], 433
    %v1117 = vld [vmem:[%s1116] sm:$0x80]
    %vm1118 = vcmask 1047559
    %v1119 = vsel %vm1118, %v1117, %v1115
    %1120 = vrot.lane.b32.xlu0 %v1119, 96
    %v1121 = vpop.permute.xlu0 %1120
    %vm1122 = vcmask 130048
    %s1123 = scalar_lea.vmem %s1, 418
    %1124 = vst.msk [vmem:[%s1123] ss:$8 sm:$0x7] %vm1122, %v1121
    %s1125 = scalar_lea.vmem %s1, 898
    %1126 = vst.msk [vmem:[%s1125] ss:$8 sm:$0x78] %vm1122, %v1121
    %s1127 = scalar_lea.vmem %s1, 435
    %1128 = vst.msk [vmem:[%s1127] sm:$0x80] %vm1122, %v1121
    %s1129 = scalar_lea.vmem [#allocation0], 448
    %v1130 = vld [vmem:[%s1129] ss:$8 sm:$0x7]
    %s1131 = scalar_lea.vmem [#allocation0], 425
    %v1132 = vld [vmem:[%s1131] ss:$8 sm:$0x78]
    %vm1133 = vcmask 1046531
    %v1134 = vsel %vm1133, %v1132, %v1130
    %s1135 = scalar_lea.vmem [#allocation0], 465
    %v1136 = vld [vmem:[%s1135] sm:$0x80]
    %vm1137 = vcmask 1047559
    %v1138 = vsel %vm1137, %v1136, %v1134
    %1139 = vrot.lane.b32.xlu0 %v1138, 96
    %v1140 = vpop.permute.xlu0 %1139
    %vm1141 = vcmask 130048
    %s1142 = scalar_lea.vmem %s1, 450
    %1143 = vst.msk [vmem:[%s1142] ss:$8 sm:$0x7] %vm1141, %v1140
    %s1144 = scalar_lea.vmem %s1, 930
    %1145 = vst.msk [vmem:[%s1144] ss:$8 sm:$0x78] %vm1141, %v1140
    %s1146 = scalar_lea.vmem %s1, 467
    %1147 = vst.msk [vmem:[%s1146] sm:$0x80] %vm1141, %v1140
    %s1148 = scalar_lea.vmem [#allocation0], 480
    %v1149 = vld [vmem:[%s1148] ss:$8 sm:$0x7]
    %s1150 = scalar_lea.vmem [#allocation0], 457
    %v1151 = vld [vmem:[%s1150] ss:$8 sm:$0x38]
    %vm1152 = vcmask 1045507
    %v1153 = vsel %vm1152, %v1151, %v1149
    %1154 = vrot.lane.b32.xlu0 %v1153, 96
    %v1155 = vpop.permute.xlu0 %1154
    %vm1156 = vcmask 130048
    %s1157 = scalar_lea.vmem %s1, 482
    %1158 = vst.msk [vmem:[%s1157] ss:$8 sm:$0x7] %vm1156, %v1155
    %s1159 = scalar_lea.vmem %s1, 962
    %1160 = vst.msk [vmem:[%s1159] ss:$8 sm:$0x38] %vm1156, %v1155
    %v1161 = vld [vmem:[#allocation0] ss:$8 sm:$0x7]
    %s1162 = scalar_lea.vmem [#allocation0], 4294967273
    %v1163 = vld [vmem:[%s1162] ss:$8 sm:$0x78]
    %vm1164 = vcmask 1046531
    %v1165 = vsel %vm1164, %v1163, %v1161
    %s1166 = scalar_lea.vmem [#allocation0], 17
    %v1167 = vld [vmem:[%s1166] sm:$0x80]
    %vm1168 = vcmask 1047559
    %v1169 = vsel %vm1168, %v1167, %v1165
    %1170 = vrot.lane.b32.xlu0 %v1169, 80
    %v1171 = vpop.permute.xlu0 %1170
    %vm1172 = vcmask 130048
    %s1173 = scalar_lea.vmem %s1, 3
    %1174 = vst.msk [vmem:[%s1173] ss:$8 sm:$0x7] %vm1172, %v1171
    %s1175 = scalar_lea.vmem %s1, 483
    %1176 = vst.msk [vmem:[%s1175] ss:$8 sm:$0x78] %vm1172, %v1171
    %s1177 = scalar_lea.vmem %s1, 20
    %1178 = vst.msk [vmem:[%s1177] sm:$0x80] %vm1172, %v1171
    %s1179 = scalar_lea.vmem [#allocation0], 32
    %v1180 = vld [vmem:[%s1179] ss:$8 sm:$0x7]
    %s1181 = scalar_lea.vmem [#allocation0], 9
    %v1182 = vld [vmem:[%s1181] ss:$8 sm:$0x78]
    %vm1183 = vcmask 1046531
    %v1184 = vsel %vm1183, %v1182, %v1180
    %s1185 = scalar_lea.vmem [#allocation0], 49
    %v1186 = vld [vmem:[%s1185] sm:$0x80]
    %vm1187 = vcmask 1047559
    %v1188 = vsel %vm1187, %v1186, %v1184
    %1189 = vrot.lane.b32.xlu0 %v1188, 80
    %v1190 = vpop.permute.xlu0 %1189
    %vm1191 = vcmask 130048
    %s1192 = scalar_lea.vmem %s1, 35
    %1193 = vst.msk [vmem:[%s1192] ss:$8 sm:$0x7] %vm1191, %v1190
    %s1194 = scalar_lea.vmem %s1, 515
    %1195 = vst.msk [vmem:[%s1194] ss:$8 sm:$0x78] %vm1191, %v1190
    %s1196 = scalar_lea.vmem %s1, 52
    %1197 = vst.msk [vmem:[%s1196] sm:$0x80] %vm1191, %v1190
    %s1198 = scalar_lea.vmem [#allocation0], 64
    %v1199 = vld [vmem:[%s1198] ss:$8 sm:$0x7]
    %s1200 = scalar_lea.vmem [#allocation0], 41
    %v1201 = vld [vmem:[%s1200] ss:$8 sm:$0x78]
    %vm1202 = vcmask 1046531
    %v1203 = vsel %vm1202, %v1201, %v1199
    %s1204 = scalar_lea.vmem [#allocation0], 81
    %v1205 = vld [vmem:[%s1204] sm:$0x80]
    %vm1206 = vcmask 1047559
    %v1207 = vsel %vm1206, %v1205, %v1203
    %1208 = vrot.lane.b32.xlu0 %v1207, 80
    %v1209 = vpop.permute.xlu0 %1208
    %vm1210 = vcmask 130048
    %s1211 = scalar_lea.vmem %s1, 67
    %1212 = vst.msk [vmem:[%s1211] ss:$8 sm:$0x7] %vm1210, %v1209
    %s1213 = scalar_lea.vmem %s1, 547
    %1214 = vst.msk [vmem:[%s1213] ss:$8 sm:$0x78] %vm1210, %v1209
    %s1215 = scalar_lea.vmem %s1, 84
    %1216 = vst.msk [vmem:[%s1215] sm:$0x80] %vm1210, %v1209
    %s1217 = scalar_lea.vmem [#allocation0], 96
    %v1218 = vld [vmem:[%s1217] ss:$8 sm:$0x7]
    %s1219 = scalar_lea.vmem [#allocation0], 73
    %v1220 = vld [vmem:[%s1219] ss:$8 sm:$0x78]
    %vm1221 = vcmask 1046531
    %v1222 = vsel %vm1221, %v1220, %v1218
    %s1223 = scalar_lea.vmem [#allocation0], 113
    %v1224 = vld [vmem:[%s1223] sm:$0x80]
    %vm1225 = vcmask 1047559
    %v1226 = vsel %vm1225, %v1224, %v1222
    %1227 = vrot.lane.b32.xlu0 %v1226, 80
    %v1228 = vpop.permute.xlu0 %1227
    %vm1229 = vcmask 130048
    %s1230 = scalar_lea.vmem %s1, 99
    %1231 = vst.msk [vmem:[%s1230] ss:$8 sm:$0x7] %vm1229, %v1228
    %s1232 = scalar_lea.vmem %s1, 579
    %1233 = vst.msk [vmem:[%s1232] ss:$8 sm:$0x78] %vm1229, %v1228
    %s1234 = scalar_lea.vmem %s1, 116
    %1235 = vst.msk [vmem:[%s1234] sm:$0x80] %vm1229, %v1228
    %s1236 = scalar_lea.vmem [#allocation0], 128
    %v1237 = vld [vmem:[%s1236] ss:$8 sm:$0x7]
    %s1238 = scalar_lea.vmem [#allocation0], 105
    %v1239 = vld [vmem:[%s1238] ss:$8 sm:$0x78]
    %vm1240 = vcmask 1046531
    %v1241 = vsel %vm1240, %v1239, %v1237
    %s1242 = scalar_lea.vmem [#allocation0], 145
    %v1243 = vld [vmem:[%s1242] sm:$0x80]
    %vm1244 = vcmask 1047559
    %v1245 = vsel %vm1244, %v1243, %v1241
    %1246 = vrot.lane.b32.xlu0 %v1245, 80
    %v1247 = vpop.permute.xlu0 %1246
    %vm1248 = vcmask 130048
    %s1249 = scalar_lea.vmem %s1, 131
    %1250 = vst.msk [vmem:[%s1249] ss:$8 sm:$0x7] %vm1248, %v1247
    %s1251 = scalar_lea.vmem %s1, 611
    %1252 = vst.msk [vmem:[%s1251] ss:$8 sm:$0x78] %vm1248, %v1247
    %s1253 = scalar_lea.vmem %s1, 148
    %1254 = vst.msk [vmem:[%s1253] sm:$0x80] %vm1248, %v1247
    %s1255 = scalar_lea.vmem [#allocation0], 160
    %v1256 = vld [vmem:[%s1255] ss:$8 sm:$0x7]
    %s1257 = scalar_lea.vmem [#allocation0], 137
    %v1258 = vld [vmem:[%s1257] ss:$8 sm:$0x78]
    %vm1259 = vcmask 1046531
    %v1260 = vsel %vm1259, %v1258, %v1256
    %s1261 = scalar_lea.vmem [#allocation0], 177
    %v1262 = vld [vmem:[%s1261] sm:$0x80]
    %vm1263 = vcmask 1047559
    %v1264 = vsel %vm1263, %v1262, %v1260
    %1265 = vrot.lane.b32.xlu0 %v1264, 80
    %v1266 = vpop.permute.xlu0 %1265
    %vm1267 = vcmask 130048
    %s1268 = scalar_lea.vmem %s1, 163
    %1269 = vst.msk [vmem:[%s1268] ss:$8 sm:$0x7] %vm1267, %v1266
    %s1270 = scalar_lea.vmem %s1, 643
    %1271 = vst.msk [vmem:[%s1270] ss:$8 sm:$0x78] %vm1267, %v1266
    %s1272 = scalar_lea.vmem %s1, 180
    %1273 = vst.msk [vmem:[%s1272] sm:$0x80] %vm1267, %v1266
    %s1274 = scalar_lea.vmem [#allocation0], 192
    %v1275 = vld [vmem:[%s1274] ss:$8 sm:$0x7]
    %s1276 = scalar_lea.vmem [#allocation0], 169
    %v1277 = vld [vmem:[%s1276] ss:$8 sm:$0x78]
    %vm1278 = vcmask 1046531
    %v1279 = vsel %vm1278, %v1277, %v1275
    %s1280 = scalar_lea.vmem [#allocation0], 209
    %v1281 = vld [vmem:[%s1280] sm:$0x80]
    %vm1282 = vcmask 1047559
    %v1283 = vsel %vm1282, %v1281, %v1279
    %1284 = vrot.lane.b32.xlu0 %v1283, 80
    %v1285 = vpop.permute.xlu0 %1284
    %vm1286 = vcmask 130048
    %s1287 = scalar_lea.vmem %s1, 195
    %1288 = vst.msk [vmem:[%s1287] ss:$8 sm:$0x7] %vm1286, %v1285
    %s1289 = scalar_lea.vmem %s1, 675
    %1290 = vst.msk [vmem:[%s1289] ss:$8 sm:$0x78] %vm1286, %v1285
    %s1291 = scalar_lea.vmem %s1, 212
    %1292 = vst.msk [vmem:[%s1291] sm:$0x80] %vm1286, %v1285
    %s1293 = scalar_lea.vmem [#allocation0], 224
    %v1294 = vld [vmem:[%s1293] ss:$8 sm:$0x7]
    %s1295 = scalar_lea.vmem [#allocation0], 201
    %v1296 = vld [vmem:[%s1295] ss:$8 sm:$0x78]
    %vm1297 = vcmask 1046531
    %v1298 = vsel %vm1297, %v1296, %v1294
    %s1299 = scalar_lea.vmem [#allocation0], 241
    %v1300 = vld [vmem:[%s1299] sm:$0x80]
    %vm1301 = vcmask 1047559
    %v1302 = vsel %vm1301, %v1300, %v1298
    %1303 = vrot.lane.b32.xlu0 %v1302, 80
    %v1304 = vpop.permute.xlu0 %1303
    %vm1305 = vcmask 130048
    %s1306 = scalar_lea.vmem %s1, 227
    %1307 = vst.msk [vmem:[%s1306] ss:$8 sm:$0x7] %vm1305, %v1304
    %s1308 = scalar_lea.vmem %s1, 707
    %1309 = vst.msk [vmem:[%s1308] ss:$8 sm:$0x78] %vm1305, %v1304
    %s1310 = scalar_lea.vmem %s1, 244
    %1311 = vst.msk [vmem:[%s1310] sm:$0x80] %vm1305, %v1304
    %s1312 = scalar_lea.vmem [#allocation0], 256
    %v1313 = vld [vmem:[%s1312] ss:$8 sm:$0x7]
    %s1314 = scalar_lea.vmem [#allocation0], 233
    %v1315 = vld [vmem:[%s1314] ss:$8 sm:$0x78]
    %vm1316 = vcmask 1046531
    %v1317 = vsel %vm1316, %v1315, %v1313
    %s1318 = scalar_lea.vmem [#allocation0], 273
    %v1319 = vld [vmem:[%s1318] sm:$0x80]
    %vm1320 = vcmask 1047559
    %v1321 = vsel %vm1320, %v1319, %v1317
    %1322 = vrot.lane.b32.xlu0 %v1321, 80
    %v1323 = vpop.permute.xlu0 %1322
    %vm1324 = vcmask 130048
    %s1325 = scalar_lea.vmem %s1, 259
    %1326 = vst.msk [vmem:[%s1325] ss:$8 sm:$0x7] %vm1324, %v1323
    %s1327 = scalar_lea.vmem %s1, 739
    %1328 = vst.msk [vmem:[%s1327] ss:$8 sm:$0x78] %vm1324, %v1323
    %s1329 = scalar_lea.vmem %s1, 276
    %1330 = vst.msk [vmem:[%s1329] sm:$0x80] %vm1324, %v1323
    %s1331 = scalar_lea.vmem [#allocation0], 288
    %v1332 = vld [vmem:[%s1331] ss:$8 sm:$0x7]
    %s1333 = scalar_lea.vmem [#allocation0], 265
    %v1334 = vld [vmem:[%s1333] ss:$8 sm:$0x78]
    %vm1335 = vcmask 1046531
    %v1336 = vsel %vm1335, %v1334, %v1332
    %s1337 = scalar_lea.vmem [#allocation0], 305
    %v1338 = vld [vmem:[%s1337] sm:$0x80]
    %vm1339 = vcmask 1047559
    %v1340 = vsel %vm1339, %v1338, %v1336
    %1341 = vrot.lane.b32.xlu0 %v1340, 80
    %v1342 = vpop.permute.xlu0 %1341
    %vm1343 = vcmask 130048
    %s1344 = scalar_lea.vmem %s1, 291
    %1345 = vst.msk [vmem:[%s1344] ss:$8 sm:$0x7] %vm1343, %v1342
    %s1346 = scalar_lea.vmem %s1, 771
    %1347 = vst.msk [vmem:[%s1346] ss:$8 sm:$0x78] %vm1343, %v1342
    %s1348 = scalar_lea.vmem %s1, 308
    %1349 = vst.msk [vmem:[%s1348] sm:$0x80] %vm1343, %v1342
    %s1350 = scalar_lea.vmem [#allocation0], 320
    %v1351 = vld [vmem:[%s1350] ss:$8 sm:$0x7]
    %s1352 = scalar_lea.vmem [#allocation0], 297
    %v1353 = vld [vmem:[%s1352] ss:$8 sm:$0x78]
    %vm1354 = vcmask 1046531
    %v1355 = vsel %vm1354, %v1353, %v1351
    %s1356 = scalar_lea.vmem [#allocation0], 337
    %v1357 = vld [vmem:[%s1356] sm:$0x80]
    %vm1358 = vcmask 1047559
    %v1359 = vsel %vm1358, %v1357, %v1355
    %1360 = vrot.lane.b32.xlu0 %v1359, 80
    %v1361 = vpop.permute.xlu0 %1360
    %vm1362 = vcmask 130048
    %s1363 = scalar_lea.vmem %s1, 323
    %1364 = vst.msk [vmem:[%s1363] ss:$8 sm:$0x7] %vm1362, %v1361
    %s1365 = scalar_lea.vmem %s1, 803
    %1366 = vst.msk [vmem:[%s1365] ss:$8 sm:$0x78] %vm1362, %v1361
    %s1367 = scalar_lea.vmem %s1, 340
    %1368 = vst.msk [vmem:[%s1367] sm:$0x80] %vm1362, %v1361
    %s1369 = scalar_lea.vmem [#allocation0], 352
    %v1370 = vld [vmem:[%s1369] ss:$8 sm:$0x7]
    %s1371 = scalar_lea.vmem [#allocation0], 329
    %v1372 = vld [vmem:[%s1371] ss:$8 sm:$0x78]
    %vm1373 = vcmask 1046531
    %v1374 = vsel %vm1373, %v1372, %v1370
    %s1375 = scalar_lea.vmem [#allocation0], 369
    %v1376 = vld [vmem:[%s1375] sm:$0x80]
    %vm1377 = vcmask 1047559
    %v1378 = vsel %vm1377, %v1376, %v1374
    %1379 = vrot.lane.b32.xlu0 %v1378, 80
    %v1380 = vpop.permute.xlu0 %1379
    %vm1381 = vcmask 130048
    %s1382 = scalar_lea.vmem %s1, 355
    %1383 = vst.msk [vmem:[%s1382] ss:$8 sm:$0x7] %vm1381, %v1380
    %s1384 = scalar_lea.vmem %s1, 835
    %1385 = vst.msk [vmem:[%s1384] ss:$8 sm:$0x78] %vm1381, %v1380
    %s1386 = scalar_lea.vmem %s1, 372
    %1387 = vst.msk [vmem:[%s1386] sm:$0x80] %vm1381, %v1380
    %s1388 = scalar_lea.vmem [#allocation0], 384
    %v1389 = vld [vmem:[%s1388] ss:$8 sm:$0x7]
    %s1390 = scalar_lea.vmem [#allocation0], 361
    %v1391 = vld [vmem:[%s1390] ss:$8 sm:$0x78]
    %vm1392 = vcmask 1046531
    %v1393 = vsel %vm1392, %v1391, %v1389
    %s1394 = scalar_lea.vmem [#allocation0], 401
    %v1395 = vld [vmem:[%s1394] sm:$0x80]
    %vm1396 = vcmask 1047559
    %v1397 = vsel %vm1396, %v1395, %v1393
    %1398 = vrot.lane.b32.xlu0 %v1397, 80
    %v1399 = vpop.permute.xlu0 %1398
    %vm1400 = vcmask 130048
    %s1401 = scalar_lea.vmem %s1, 387
    %1402 = vst.msk [vmem:[%s1401] ss:$8 sm:$0x7] %vm1400, %v1399
    %s1403 = scalar_lea.vmem %s1, 867
    %1404 = vst.msk [vmem:[%s1403] ss:$8 sm:$0x78] %vm1400, %v1399
    %s1405 = scalar_lea.vmem %s1, 404
    %1406 = vst.msk [vmem:[%s1405] sm:$0x80] %vm1400, %v1399
    %s1407 = scalar_lea.vmem [#allocation0], 416
    %v1408 = vld [vmem:[%s1407] ss:$8 sm:$0x7]
    %s1409 = scalar_lea.vmem [#allocation0], 393
    %v1410 = vld [vmem:[%s1409] ss:$8 sm:$0x78]
    %vm1411 = vcmask 1046531
    %v1412 = vsel %vm1411, %v1410, %v1408
    %s1413 = scalar_lea.vmem [#allocation0], 433
    %v1414 = vld [vmem:[%s1413] sm:$0x80]
    %vm1415 = vcmask 1047559
    %v1416 = vsel %vm1415, %v1414, %v1412
    %1417 = vrot.lane.b32.xlu0 %v1416, 80
    %v1418 = vpop.permute.xlu0 %1417
    %vm1419 = vcmask 130048
    %s1420 = scalar_lea.vmem %s1, 419
    %1421 = vst.msk [vmem:[%s1420] ss:$8 sm:$0x7] %vm1419, %v1418
    %s1422 = scalar_lea.vmem %s1, 899
    %1423 = vst.msk [vmem:[%s1422] ss:$8 sm:$0x78] %vm1419, %v1418
    %s1424 = scalar_lea.vmem %s1, 436
    %1425 = vst.msk [vmem:[%s1424] sm:$0x80] %vm1419, %v1418
    %s1426 = scalar_lea.vmem [#allocation0], 448
    %v1427 = vld [vmem:[%s1426] ss:$8 sm:$0x7]
    %s1428 = scalar_lea.vmem [#allocation0], 425
    %v1429 = vld [vmem:[%s1428] ss:$8 sm:$0x78]
    %vm1430 = vcmask 1046531
    %v1431 = vsel %vm1430, %v1429, %v1427
    %s1432 = scalar_lea.vmem [#allocation0], 465
    %v1433 = vld [vmem:[%s1432] sm:$0x80]
    %vm1434 = vcmask 1047559
    %v1435 = vsel %vm1434, %v1433, %v1431
    %1436 = vrot.lane.b32.xlu0 %v1435, 80
    %v1437 = vpop.permute.xlu0 %1436
    %vm1438 = vcmask 130048
    %s1439 = scalar_lea.vmem %s1, 451
    %1440 = vst.msk [vmem:[%s1439] ss:$8 sm:$0x7] %vm1438, %v1437
    %s1441 = scalar_lea.vmem %s1, 931
    %1442 = vst.msk [vmem:[%s1441] ss:$8 sm:$0x78] %vm1438, %v1437
    %s1443 = scalar_lea.vmem %s1, 468
    %1444 = vst.msk [vmem:[%s1443] sm:$0x80] %vm1438, %v1437
    %s1445 = scalar_lea.vmem [#allocation0], 480
    %v1446 = vld [vmem:[%s1445] ss:$8 sm:$0x7]
    %s1447 = scalar_lea.vmem [#allocation0], 457
    %v1448 = vld [vmem:[%s1447] ss:$8 sm:$0x38]
    %vm1449 = vcmask 1045507
    %v1450 = vsel %vm1449, %v1448, %v1446
    %1451 = vrot.lane.b32.xlu0 %v1450, 80
    %v1452 = vpop.permute.xlu0 %1451
    %vm1453 = vcmask 130048
    %s1454 = scalar_lea.vmem %s1, 483
    %1455 = vst.msk [vmem:[%s1454] ss:$8 sm:$0x7] %vm1453, %v1452
    %s1456 = scalar_lea.vmem %s1, 963
    %1457 = vst.msk [vmem:[%s1456] ss:$8 sm:$0x38] %vm1453, %v1452
    %v1458 = vld [vmem:[#allocation0] ss:$8 sm:$0x7]
    %s1459 = scalar_lea.vmem [#allocation0], 4294967273
    %v1460 = vld [vmem:[%s1459] ss:$8 sm:$0x78]
    %vm1461 = vcmask 1046531
    %v1462 = vsel %vm1461, %v1460, %v1458
    %s1463 = scalar_lea.vmem [#allocation0], 17
    %v1464 = vld [vmem:[%s1463] sm:$0x80]
    %vm1465 = vcmask 1047559
    %v1466 = vsel %vm1465, %v1464, %v1462
    %1467 = vrot.lane.b32.xlu0 %v1466, 64
    %v1468 = vpop.permute.xlu0 %1467
    %vm1469 = vcmask 130048
    %s1470 = scalar_lea.vmem %s1, 4
    %1471 = vst.msk [vmem:[%s1470] ss:$8 sm:$0x7] %vm1469, %v1468
    %s1472 = scalar_lea.vmem %s1, 484
    %1473 = vst.msk [vmem:[%s1472] ss:$8 sm:$0x78] %vm1469, %v1468
    %s1474 = scalar_lea.vmem %s1, 21
    %1475 = vst.msk [vmem:[%s1474] sm:$0x80] %vm1469, %v1468
    %s1476 = scalar_lea.vmem [#allocation0], 32
    %v1477 = vld [vmem:[%s1476] ss:$8 sm:$0x7]
    %s1478 = scalar_lea.vmem [#allocation0], 9
    %v1479 = vld [vmem:[%s1478] ss:$8 sm:$0x78]
    %vm1480 = vcmask 1046531
    %v1481 = vsel %vm1480, %v1479, %v1477
    %s1482 = scalar_lea.vmem [#allocation0], 49
    %v1483 = vld [vmem:[%s1482] sm:$0x80]
    %vm1484 = vcmask 1047559
    %v1485 = vsel %vm1484, %v1483, %v1481
    %1486 = vrot.lane.b32.xlu0 %v1485, 64
    %v1487 = vpop.permute.xlu0 %1486
    %vm1488 = vcmask 130048
    %s1489 = scalar_lea.vmem %s1, 36
    %1490 = vst.msk [vmem:[%s1489] ss:$8 sm:$0x7] %vm1488, %v1487
    %s1491 = scalar_lea.vmem %s1, 516
    %1492 = vst.msk [vmem:[%s1491] ss:$8 sm:$0x78] %vm1488, %v1487
    %s1493 = scalar_lea.vmem %s1, 53
    %1494 = vst.msk [vmem:[%s1493] sm:$0x80] %vm1488, %v1487
    %s1495 = scalar_lea.vmem [#allocation0], 64
    %v1496 = vld [vmem:[%s1495] ss:$8 sm:$0x7]
    %s1497 = scalar_lea.vmem [#allocation0], 41
    %v1498 = vld [vmem:[%s1497] ss:$8 sm:$0x78]
    %vm1499 = vcmask 1046531
    %v1500 = vsel %vm1499, %v1498, %v1496
    %s1501 = scalar_lea.vmem [#allocation0], 81
    %v1502 = vld [vmem:[%s1501] sm:$0x80]
    %vm1503 = vcmask 1047559
    %v1504 = vsel %vm1503, %v1502, %v1500
    %1505 = vrot.lane.b32.xlu0 %v1504, 64
    %v1506 = vpop.permute.xlu0 %1505
    %vm1507 = vcmask 130048
    %s1508 = scalar_lea.vmem %s1, 68
    %1509 = vst.msk [vmem:[%s1508] ss:$8 sm:$0x7] %vm1507, %v1506
    %s1510 = scalar_lea.vmem %s1, 548
    %1511 = vst.msk [vmem:[%s1510] ss:$8 sm:$0x78] %vm1507, %v1506
    %s1512 = scalar_lea.vmem %s1, 85
    %1513 = vst.msk [vmem:[%s1512] sm:$0x80] %vm1507, %v1506
    %s1514 = scalar_lea.vmem [#allocation0], 96
    %v1515 = vld [vmem:[%s1514] ss:$8 sm:$0x7]
    %s1516 = scalar_lea.vmem [#allocation0], 73
    %v1517 = vld [vmem:[%s1516] ss:$8 sm:$0x78]
    %vm1518 = vcmask 1046531
    %v1519 = vsel %vm1518, %v1517, %v1515
    %s1520 = scalar_lea.vmem [#allocation0], 113
    %v1521 = vld [vmem:[%s1520] sm:$0x80]
    %vm1522 = vcmask 1047559
    %v1523 = vsel %vm1522, %v1521, %v1519
    %1524 = vrot.lane.b32.xlu0 %v1523, 64
    %v1525 = vpop.permute.xlu0 %1524
    %vm1526 = vcmask 130048
    %s1527 = scalar_lea.vmem %s1, 100
    %1528 = vst.msk [vmem:[%s1527] ss:$8 sm:$0x7] %vm1526, %v1525
    %s1529 = scalar_lea.vmem %s1, 580
    %1530 = vst.msk [vmem:[%s1529] ss:$8 sm:$0x78] %vm1526, %v1525
    %s1531 = scalar_lea.vmem %s1, 117
    %1532 = vst.msk [vmem:[%s1531] sm:$0x80] %vm1526, %v1525
    %s1533 = scalar_lea.vmem [#allocation0], 128
    %v1534 = vld [vmem:[%s1533] ss:$8 sm:$0x7]
    %s1535 = scalar_lea.vmem [#allocation0], 105
    %v1536 = vld [vmem:[%s1535] ss:$8 sm:$0x78]
    %vm1537 = vcmask 1046531
    %v1538 = vsel %vm1537, %v1536, %v1534
    %s1539 = scalar_lea.vmem [#allocation0], 145
    %v1540 = vld [vmem:[%s1539] sm:$0x80]
    %vm1541 = vcmask 1047559
    %v1542 = vsel %vm1541, %v1540, %v1538
    %1543 = vrot.lane.b32.xlu0 %v1542, 64
    %v1544 = vpop.permute.xlu0 %1543
    %vm1545 = vcmask 130048
    %s1546 = scalar_lea.vmem %s1, 132
    %1547 = vst.msk [vmem:[%s1546] ss:$8 sm:$0x7] %vm1545, %v1544
    %s1548 = scalar_lea.vmem %s1, 612
    %1549 = vst.msk [vmem:[%s1548] ss:$8 sm:$0x78] %vm1545, %v1544
    %s1550 = scalar_lea.vmem %s1, 149
    %1551 = vst.msk [vmem:[%s1550] sm:$0x80] %vm1545, %v1544
    %s1552 = scalar_lea.vmem [#allocation0], 160
    %v1553 = vld [vmem:[%s1552] ss:$8 sm:$0x7]
    %s1554 = scalar_lea.vmem [#allocation0], 137
    %v1555 = vld [vmem:[%s1554] ss:$8 sm:$0x78]
    %vm1556 = vcmask 1046531
    %v1557 = vsel %vm1556, %v1555, %v1553
    %s1558 = scalar_lea.vmem [#allocation0], 177
    %v1559 = vld [vmem:[%s1558] sm:$0x80]
    %vm1560 = vcmask 1047559
    %v1561 = vsel %vm1560, %v1559, %v1557
    %1562 = vrot.lane.b32.xlu0 %v1561, 64
    %v1563 = vpop.permute.xlu0 %1562
    %vm1564 = vcmask 130048
    %s1565 = scalar_lea.vmem %s1, 164
    %1566 = vst.msk [vmem:[%s1565] ss:$8 sm:$0x7] %vm1564, %v1563
    %s1567 = scalar_lea.vmem %s1, 644
    %1568 = vst.msk [vmem:[%s1567] ss:$8 sm:$0x78] %vm1564, %v1563
    %s1569 = scalar_lea.vmem %s1, 181
    %1570 = vst.msk [vmem:[%s1569] sm:$0x80] %vm1564, %v1563
    %s1571 = scalar_lea.vmem [#allocation0], 192
    %v1572 = vld [vmem:[%s1571] ss:$8 sm:$0x7]
    %s1573 = scalar_lea.vmem [#allocation0], 169
    %v1574 = vld [vmem:[%s1573] ss:$8 sm:$0x78]
    %vm1575 = vcmask 1046531
    %v1576 = vsel %vm1575, %v1574, %v1572
    %s1577 = scalar_lea.vmem [#allocation0], 209
    %v1578 = vld [vmem:[%s1577] sm:$0x80]
    %vm1579 = vcmask 1047559
    %v1580 = vsel %vm1579, %v1578, %v1576
    %1581 = vrot.lane.b32.xlu0 %v1580, 64
    %v1582 = vpop.permute.xlu0 %1581
    %vm1583 = vcmask 130048
    %s1584 = scalar_lea.vmem %s1, 196
    %1585 = vst.msk [vmem:[%s1584] ss:$8 sm:$0x7] %vm1583, %v1582
    %s1586 = scalar_lea.vmem %s1, 676
    %1587 = vst.msk [vmem:[%s1586] ss:$8 sm:$0x78] %vm1583, %v1582
    %s1588 = scalar_lea.vmem %s1, 213
    %1589 = vst.msk [vmem:[%s1588] sm:$0x80] %vm1583, %v1582
    %s1590 = scalar_lea.vmem [#allocation0], 224
    %v1591 = vld [vmem:[%s1590] ss:$8 sm:$0x7]
    %s1592 = scalar_lea.vmem [#allocation0], 201
    %v1593 = vld [vmem:[%s1592] ss:$8 sm:$0x78]
    %vm1594 = vcmask 1046531
    %v1595 = vsel %vm1594, %v1593, %v1591
    %s1596 = scalar_lea.vmem [#allocation0], 241
    %v1597 = vld [vmem:[%s1596] sm:$0x80]
    %vm1598 = vcmask 1047559
    %v1599 = vsel %vm1598, %v1597, %v1595
    %1600 = vrot.lane.b32.xlu0 %v1599, 64
    %v1601 = vpop.permute.xlu0 %1600
    %vm1602 = vcmask 130048
    %s1603 = scalar_lea.vmem %s1, 228
    %1604 = vst.msk [vmem:[%s1603] ss:$8 sm:$0x7] %vm1602, %v1601
    %s1605 = scalar_lea.vmem %s1, 708
    %1606 = vst.msk [vmem:[%s1605] ss:$8 sm:$0x78] %vm1602, %v1601
    %s1607 = scalar_lea.vmem %s1, 245
    %1608 = vst.msk [vmem:[%s1607] sm:$0x80] %vm1602, %v1601
    %s1609 = scalar_lea.vmem [#allocation0], 256
    %v1610 = vld [vmem:[%s1609] ss:$8 sm:$0x7]
    %s1611 = scalar_lea.vmem [#allocation0], 233
    %v1612 = vld [vmem:[%s1611] ss:$8 sm:$0x78]
    %vm1613 = vcmask 1046531
    %v1614 = vsel %vm1613, %v1612, %v1610
    %s1615 = scalar_lea.vmem [#allocation0], 273
    %v1616 = vld [vmem:[%s1615] sm:$0x80]
    %vm1617 = vcmask 1047559
    %v1618 = vsel %vm1617, %v1616, %v1614
    %1619 = vrot.lane.b32.xlu0 %v1618, 64
    %v1620 = vpop.permute.xlu0 %1619
    %vm1621 = vcmask 130048
    %s1622 = scalar_lea.vmem %s1, 260
    %1623 = vst.msk [vmem:[%s1622] ss:$8 sm:$0x7] %vm1621, %v1620
    %s1624 = scalar_lea.vmem %s1, 740
    %1625 = vst.msk [vmem:[%s1624] ss:$8 sm:$0x78] %vm1621, %v1620
    %s1626 = scalar_lea.vmem %s1, 277
    %1627 = vst.msk [vmem:[%s1626] sm:$0x80] %vm1621, %v1620
    %s1628 = scalar_lea.vmem [#allocation0], 288
    %v1629 = vld [vmem:[%s1628] ss:$8 sm:$0x7]
    %s1630 = scalar_lea.vmem [#allocation0], 265
    %v1631 = vld [vmem:[%s1630] ss:$8 sm:$0x78]
    %vm1632 = vcmask 1046531
    %v1633 = vsel %vm1632, %v1631, %v1629
    %s1634 = scalar_lea.vmem [#allocation0], 305
    %v1635 = vld [vmem:[%s1634] sm:$0x80]
    %vm1636 = vcmask 1047559
    %v1637 = vsel %vm1636, %v1635, %v1633
    %1638 = vrot.lane.b32.xlu0 %v1637, 64
    %v1639 = vpop.permute.xlu0 %1638
    %vm1640 = vcmask 130048
    %s1641 = scalar_lea.vmem %s1, 292
    %1642 = vst.msk [vmem:[%s1641] ss:$8 sm:$0x7] %vm1640, %v1639
    %s1643 = scalar_lea.vmem %s1, 772
    %1644 = vst.msk [vmem:[%s1643] ss:$8 sm:$0x78] %vm1640, %v1639
    %s1645 = scalar_lea.vmem %s1, 309
    %1646 = vst.msk [vmem:[%s1645] sm:$0x80] %vm1640, %v1639
    %s1647 = scalar_lea.vmem [#allocation0], 320
    %v1648 = vld [vmem:[%s1647] ss:$8 sm:$0x7]
    %s1649 = scalar_lea.vmem [#allocation0], 297
    %v1650 = vld [vmem:[%s1649] ss:$8 sm:$0x78]
    %vm1651 = vcmask 1046531
    %v1652 = vsel %vm1651, %v1650, %v1648
    %s1653 = scalar_lea.vmem [#allocation0], 337
    %v1654 = vld [vmem:[%s1653] sm:$0x80]
    %vm1655 = vcmask 1047559
    %v1656 = vsel %vm1655, %v1654, %v1652
    %1657 = vrot.lane.b32.xlu0 %v1656, 64
    %v1658 = vpop.permute.xlu0 %1657
    %vm1659 = vcmask 130048
    %s1660 = scalar_lea.vmem %s1, 324
    %1661 = vst.msk [vmem:[%s1660] ss:$8 sm:$0x7] %vm1659, %v1658
    %s1662 = scalar_lea.vmem %s1, 804
    %1663 = vst.msk [vmem:[%s1662] ss:$8 sm:$0x78] %vm1659, %v1658
    %s1664 = scalar_lea.vmem %s1, 341
    %1665 = vst.msk [vmem:[%s1664] sm:$0x80] %vm1659, %v1658
    %s1666 = scalar_lea.vmem [#allocation0], 352
    %v1667 = vld [vmem:[%s1666] ss:$8 sm:$0x7]
    %s1668 = scalar_lea.vmem [#allocation0], 329
    %v1669 = vld [vmem:[%s1668] ss:$8 sm:$0x78]
    %vm1670 = vcmask 1046531
    %v1671 = vsel %vm1670, %v1669, %v1667
    %s1672 = scalar_lea.vmem [#allocation0], 369
    %v1673 = vld [vmem:[%s1672] sm:$0x80]
    %vm1674 = vcmask 1047559
    %v1675 = vsel %vm1674, %v1673, %v1671
    %1676 = vrot.lane.b32.xlu0 %v1675, 64
    %v1677 = vpop.permute.xlu0 %1676
    %vm1678 = vcmask 130048
    %s1679 = scalar_lea.vmem %s1, 356
    %1680 = vst.msk [vmem:[%s1679] ss:$8 sm:$0x7] %vm1678, %v1677
    %s1681 = scalar_lea.vmem %s1, 836
    %1682 = vst.msk [vmem:[%s1681] ss:$8 sm:$0x78] %vm1678, %v1677
    %s1683 = scalar_lea.vmem %s1, 373
    %1684 = vst.msk [vmem:[%s1683] sm:$0x80] %vm1678, %v1677
    %s1685 = scalar_lea.vmem [#allocation0], 384
    %v1686 = vld [vmem:[%s1685] ss:$8 sm:$0x7]
    %s1687 = scalar_lea.vmem [#allocation0], 361
    %v1688 = vld [vmem:[%s1687] ss:$8 sm:$0x78]
    %vm1689 = vcmask 1046531
    %v1690 = vsel %vm1689, %v1688, %v1686
    %s1691 = scalar_lea.vmem [#allocation0], 401
    %v1692 = vld [vmem:[%s1691] sm:$0x80]
    %vm1693 = vcmask 1047559
    %v1694 = vsel %vm1693, %v1692, %v1690
    %1695 = vrot.lane.b32.xlu0 %v1694, 64
    %v1696 = vpop.permute.xlu0 %1695
    %vm1697 = vcmask 130048
    %s1698 = scalar_lea.vmem %s1, 388
    %1699 = vst.msk [vmem:[%s1698] ss:$8 sm:$0x7] %vm1697, %v1696
    %s1700 = scalar_lea.vmem %s1, 868
    %1701 = vst.msk [vmem:[%s1700] ss:$8 sm:$0x78] %vm1697, %v1696
    %s1702 = scalar_lea.vmem %s1, 405
    %1703 = vst.msk [vmem:[%s1702] sm:$0x80] %vm1697, %v1696
    %s1704 = scalar_lea.vmem [#allocation0], 416
    %v1705 = vld [vmem:[%s1704] ss:$8 sm:$0x7]
    %s1706 = scalar_lea.vmem [#allocation0], 393
    %v1707 = vld [vmem:[%s1706] ss:$8 sm:$0x78]
    %vm1708 = vcmask 1046531
    %v1709 = vsel %vm1708, %v1707, %v1705
    %s1710 = scalar_lea.vmem [#allocation0], 433
    %v1711 = vld [vmem:[%s1710] sm:$0x80]
    %vm1712 = vcmask 1047559
    %v1713 = vsel %vm1712, %v1711, %v1709
    %1714 = vrot.lane.b32.xlu0 %v1713, 64
    %v1715 = vpop.permute.xlu0 %1714
    %vm1716 = vcmask 130048
    %s1717 = scalar_lea.vmem %s1, 420
    %1718 = vst.msk [vmem:[%s1717] ss:$8 sm:$0x7] %vm1716, %v1715
    %s1719 = scalar_lea.vmem %s1, 900
    %1720 = vst.msk [vmem:[%s1719] ss:$8 sm:$0x78] %vm1716, %v1715
    %s1721 = scalar_lea.vmem %s1, 437
    %1722 = vst.msk [vmem:[%s1721] sm:$0x80] %vm1716, %v1715
    %s1723 = scalar_lea.vmem [#allocation0], 448
    %v1724 = vld [vmem:[%s1723] ss:$8 sm:$0x7]
    %s1725 = scalar_lea.vmem [#allocation0], 425
    %v1726 = vld [vmem:[%s1725] ss:$8 sm:$0x78]
    %vm1727 = vcmask 1046531
    %v1728 = vsel %vm1727, %v1726, %v1724
    %s1729 = scalar_lea.vmem [#allocation0], 465
    %v1730 = vld [vmem:[%s1729] sm:$0x80]
    %vm1731 = vcmask 1047559
    %v1732 = vsel %vm1731, %v1730, %v1728
    %1733 = vrot.lane.b32.xlu0 %v1732, 64
    %v1734 = vpop.permute.xlu0 %1733
    %vm1735 = vcmask 130048
    %s1736 = scalar_lea.vmem %s1, 452
    %1737 = vst.msk [vmem:[%s1736] ss:$8 sm:$0x7] %vm1735, %v1734
    %s1738 = scalar_lea.vmem %s1, 932
    %1739 = vst.msk [vmem:[%s1738] ss:$8 sm:$0x78] %vm1735, %v1734
    %s1740 = scalar_lea.vmem %s1, 469
    %1741 = vst.msk [vmem:[%s1740] sm:$0x80] %vm1735, %v1734
    %s1742 = scalar_lea.vmem [#allocation0], 480
    %v1743 = vld.sshfl [vmem:[%s1742] sm:$0xff pattern:$0x99999180]
    %1744 = vrot.lane.b32.xlu0 %v1743, 64
    %v1745 = vpop.permute.xlu0 %1744
    %vm1746 = vcmask 130048
    %s1747 = scalar_lea.vmem %s1, 484
    %1748 = vst.msk [vmem:[%s1747] ss:$8 sm:$0x3] %vm1746, %v1745
    %s1749 = scalar_lea.vmem %s1, 972
    %1750 = vst.msk [vmem:[%s1749] ss:$8 sm:$0xc] %vm1746, %v1745
    %v1751 = vld [vmem:[#allocation0] ss:$8 sm:$0x7]
    %s1752 = scalar_lea.vmem [#allocation0], 4294967273
    %v1753 = vld [vmem:[%s1752] ss:$8 sm:$0x78]
    %vm1754 = vcmask 1046531
    %v1755 = vsel %vm1754, %v1753, %v1751
    %s1756 = scalar_lea.vmem [#allocation0], 17
    %v1757 = vld [vmem:[%s1756] sm:$0x80]
    %vm1758 = vcmask 1047559
    %v1759 = vsel %vm1758, %v1757, %v1755
    %1760 = vrot.lane.b32.xlu0 %v1759, 48
    %v1761 = vpop.permute.xlu0 %1760
    %vm1762 = vcmask 130048
    %s1763 = scalar_lea.vmem %s1, 5
    %1764 = vst.msk [vmem:[%s1763] ss:$8 sm:$0x7] %vm1762, %v1761
    %s1765 = scalar_lea.vmem %s1, 485
    %1766 = vst.msk [vmem:[%s1765] ss:$8 sm:$0x78] %vm1762, %v1761
    %s1767 = scalar_lea.vmem %s1, 22
    %1768 = vst.msk [vmem:[%s1767] sm:$0x80] %vm1762, %v1761
    %s1769 = scalar_lea.vmem [#allocation0], 32
    %v1770 = vld [vmem:[%s1769] ss:$8 sm:$0x7]
    %s1771 = scalar_lea.vmem [#allocation0], 9
    %v1772 = vld [vmem:[%s1771] ss:$8 sm:$0x78]
    %vm1773 = vcmask 1046531
    %v1774 = vsel %vm1773, %v1772, %v1770
    %s1775 = scalar_lea.vmem [#allocation0], 49
    %v1776 = vld [vmem:[%s1775] sm:$0x80]
    %vm1777 = vcmask 1047559
    %v1778 = vsel %vm1777, %v1776, %v1774
    %1779 = vrot.lane.b32.xlu0 %v1778, 48
    %v1780 = vpop.permute.xlu0 %1779
    %vm1781 = vcmask 130048
    %s1782 = scalar_lea.vmem %s1, 37
    %1783 = vst.msk [vmem:[%s1782] ss:$8 sm:$0x7] %vm1781, %v1780
    %s1784 = scalar_lea.vmem %s1, 517
    %1785 = vst.msk [vmem:[%s1784] ss:$8 sm:$0x78] %vm1781, %v1780
    %s1786 = scalar_lea.vmem %s1, 54
    %1787 = vst.msk [vmem:[%s1786] sm:$0x80] %vm1781, %v1780
    %s1788 = scalar_lea.vmem [#allocation0], 64
    %v1789 = vld [vmem:[%s1788] ss:$8 sm:$0x7]
    %s1790 = scalar_lea.vmem [#allocation0], 41
    %v1791 = vld [vmem:[%s1790] ss:$8 sm:$0x78]
    %vm1792 = vcmask 1046531
    %v1793 = vsel %vm1792, %v1791, %v1789
    %s1794 = scalar_lea.vmem [#allocation0], 81
    %v1795 = vld [vmem:[%s1794] sm:$0x80]
    %vm1796 = vcmask 1047559
    %v1797 = vsel %vm1796, %v1795, %v1793
    %1798 = vrot.lane.b32.xlu0 %v1797, 48
    %v1799 = vpop.permute.xlu0 %1798
    %vm1800 = vcmask 130048
    %s1801 = scalar_lea.vmem %s1, 69
    %1802 = vst.msk [vmem:[%s1801] ss:$8 sm:$0x7] %vm1800, %v1799
    %s1803 = scalar_lea.vmem %s1, 549
    %1804 = vst.msk [vmem:[%s1803] ss:$8 sm:$0x78] %vm1800, %v1799
    %s1805 = scalar_lea.vmem %s1, 86
    %1806 = vst.msk [vmem:[%s1805] sm:$0x80] %vm1800, %v1799
    %s1807 = scalar_lea.vmem [#allocation0], 96
    %v1808 = vld [vmem:[%s1807] ss:$8 sm:$0x7]
    %s1809 = scalar_lea.vmem [#allocation0], 73
    %v1810 = vld [vmem:[%s1809] ss:$8 sm:$0x78]
    %vm1811 = vcmask 1046531
    %v1812 = vsel %vm1811, %v1810, %v1808
    %s1813 = scalar_lea.vmem [#allocation0], 113
    %v1814 = vld [vmem:[%s1813] sm:$0x80]
    %vm1815 = vcmask 1047559
    %v1816 = vsel %vm1815, %v1814, %v1812
    %1817 = vrot.lane.b32.xlu0 %v1816, 48
    %v1818 = vpop.permute.xlu0 %1817
    %vm1819 = vcmask 130048
    %s1820 = scalar_lea.vmem %s1, 101
    %1821 = vst.msk [vmem:[%s1820] ss:$8 sm:$0x7] %vm1819, %v1818
    %s1822 = scalar_lea.vmem %s1, 581
    %1823 = vst.msk [vmem:[%s1822] ss:$8 sm:$0x78] %vm1819, %v1818
    %s1824 = scalar_lea.vmem %s1, 118
    %1825 = vst.msk [vmem:[%s1824] sm:$0x80] %vm1819, %v1818
    %s1826 = scalar_lea.vmem [#allocation0], 128
    %v1827 = vld [vmem:[%s1826] ss:$8 sm:$0x7]
    %s1828 = scalar_lea.vmem [#allocation0], 105
    %v1829 = vld [vmem:[%s1828] ss:$8 sm:$0x78]
    %vm1830 = vcmask 1046531
    %v1831 = vsel %vm1830, %v1829, %v1827
    %s1832 = scalar_lea.vmem [#allocation0], 145
    %v1833 = vld [vmem:[%s1832] sm:$0x80]
    %vm1834 = vcmask 1047559
    %v1835 = vsel %vm1834, %v1833, %v1831
    %1836 = vrot.lane.b32.xlu0 %v1835, 48
    %v1837 = vpop.permute.xlu0 %1836
    %vm1838 = vcmask 130048
    %s1839 = scalar_lea.vmem %s1, 133
    %1840 = vst.msk [vmem:[%s1839] ss:$8 sm:$0x7] %vm1838, %v1837
    %s1841 = scalar_lea.vmem %s1, 613
    %1842 = vst.msk [vmem:[%s1841] ss:$8 sm:$0x78] %vm1838, %v1837
    %s1843 = scalar_lea.vmem %s1, 150
    %1844 = vst.msk [vmem:[%s1843] sm:$0x80] %vm1838, %v1837
    %s1845 = scalar_lea.vmem [#allocation0], 160
    %v1846 = vld [vmem:[%s1845] ss:$8 sm:$0x7]
    %s1847 = scalar_lea.vmem [#allocation0], 137
    %v1848 = vld [vmem:[%s1847] ss:$8 sm:$0x78]
    %vm1849 = vcmask 1046531
    %v1850 = vsel %vm1849, %v1848, %v1846
    %s1851 = scalar_lea.vmem [#allocation0], 177
    %v1852 = vld [vmem:[%s1851] sm:$0x80]
    %vm1853 = vcmask 1047559
    %v1854 = vsel %vm1853, %v1852, %v1850
    %1855 = vrot.lane.b32.xlu0 %v1854, 48
    %v1856 = vpop.permute.xlu0 %1855
    %vm1857 = vcmask 130048
    %s1858 = scalar_lea.vmem %s1, 165
    %1859 = vst.msk [vmem:[%s1858] ss:$8 sm:$0x7] %vm1857, %v1856
    %s1860 = scalar_lea.vmem %s1, 645
    %1861 = vst.msk [vmem:[%s1860] ss:$8 sm:$0x78] %vm1857, %v1856
    %s1862 = scalar_lea.vmem %s1, 182
    %1863 = vst.msk [vmem:[%s1862] sm:$0x80] %vm1857, %v1856
    %s1864 = scalar_lea.vmem [#allocation0], 192
    %v1865 = vld [vmem:[%s1864] ss:$8 sm:$0x7]
    %s1866 = scalar_lea.vmem [#allocation0], 169
    %v1867 = vld [vmem:[%s1866] ss:$8 sm:$0x78]
    %vm1868 = vcmask 1046531
    %v1869 = vsel %vm1868, %v1867, %v1865
    %s1870 = scalar_lea.vmem [#allocation0], 209
    %v1871 = vld [vmem:[%s1870] sm:$0x80]
    %vm1872 = vcmask 1047559
    %v1873 = vsel %vm1872, %v1871, %v1869
    %1874 = vrot.lane.b32.xlu0 %v1873, 48
    %v1875 = vpop.permute.xlu0 %1874
    %vm1876 = vcmask 130048
    %s1877 = scalar_lea.vmem %s1, 197
    %1878 = vst.msk [vmem:[%s1877] ss:$8 sm:$0x7] %vm1876, %v1875
    %s1879 = scalar_lea.vmem %s1, 677
    %1880 = vst.msk [vmem:[%s1879] ss:$8 sm:$0x78] %vm1876, %v1875
    %s1881 = scalar_lea.vmem %s1, 214
    %1882 = vst.msk [vmem:[%s1881] sm:$0x80] %vm1876, %v1875
    %s1883 = scalar_lea.vmem [#allocation0], 224
    %v1884 = vld [vmem:[%s1883] ss:$8 sm:$0x7]
    %s1885 = scalar_lea.vmem [#allocation0], 201
    %v1886 = vld [vmem:[%s1885] ss:$8 sm:$0x78]
    %vm1887 = vcmask 1046531
    %v1888 = vsel %vm1887, %v1886, %v1884
    %s1889 = scalar_lea.vmem [#allocation0], 241
    %v1890 = vld [vmem:[%s1889] sm:$0x80]
    %vm1891 = vcmask 1047559
    %v1892 = vsel %vm1891, %v1890, %v1888
    %1893 = vrot.lane.b32.xlu0 %v1892, 48
    %v1894 = vpop.permute.xlu0 %1893
    %vm1895 = vcmask 130048
    %s1896 = scalar_lea.vmem %s1, 229
    %1897 = vst.msk [vmem:[%s1896] ss:$8 sm:$0x7] %vm1895, %v1894
    %s1898 = scalar_lea.vmem %s1, 709
    %1899 = vst.msk [vmem:[%s1898] ss:$8 sm:$0x78] %vm1895, %v1894
    %s1900 = scalar_lea.vmem %s1, 246
    %1901 = vst.msk [vmem:[%s1900] sm:$0x80] %vm1895, %v1894
    %s1902 = scalar_lea.vmem [#allocation0], 256
    %v1903 = vld [vmem:[%s1902] ss:$8 sm:$0x7]
    %s1904 = scalar_lea.vmem [#allocation0], 233
    %v1905 = vld [vmem:[%s1904] ss:$8 sm:$0x78]
    %vm1906 = vcmask 1046531
    %v1907 = vsel %vm1906, %v1905, %v1903
    %s1908 = scalar_lea.vmem [#allocation0], 273
    %v1909 = vld [vmem:[%s1908] sm:$0x80]
    %vm1910 = vcmask 1047559
    %v1911 = vsel %vm1910, %v1909, %v1907
    %1912 = vrot.lane.b32.xlu0 %v1911, 48
    %v1913 = vpop.permute.xlu0 %1912
    %vm1914 = vcmask 130048
    %s1915 = scalar_lea.vmem %s1, 261
    %1916 = vst.msk [vmem:[%s1915] ss:$8 sm:$0x7] %vm1914, %v1913
    %s1917 = scalar_lea.vmem %s1, 741
    %1918 = vst.msk [vmem:[%s1917] ss:$8 sm:$0x78] %vm1914, %v1913
    %s1919 = scalar_lea.vmem %s1, 278
    %1920 = vst.msk [vmem:[%s1919] sm:$0x80] %vm1914, %v1913
    %s1921 = scalar_lea.vmem [#allocation0], 288
    %v1922 = vld [vmem:[%s1921] ss:$8 sm:$0x7]
    %s1923 = scalar_lea.vmem [#allocation0], 265
    %v1924 = vld [vmem:[%s1923] ss:$8 sm:$0x78]
    %vm1925 = vcmask 1046531
    %v1926 = vsel %vm1925, %v1924, %v1922
    %s1927 = scalar_lea.vmem [#allocation0], 305
    %v1928 = vld [vmem:[%s1927] sm:$0x80]
    %vm1929 = vcmask 1047559
    %v1930 = vsel %vm1929, %v1928, %v1926
    %1931 = vrot.lane.b32.xlu0 %v1930, 48
    %v1932 = vpop.permute.xlu0 %1931
    %vm1933 = vcmask 130048
    %s1934 = scalar_lea.vmem %s1, 293
    %1935 = vst.msk [vmem:[%s1934] ss:$8 sm:$0x7] %vm1933, %v1932
    %s1936 = scalar_lea.vmem %s1, 773
    %1937 = vst.msk [vmem:[%s1936] ss:$8 sm:$0x78] %vm1933, %v1932
    %s1938 = scalar_lea.vmem %s1, 310
    %1939 = vst.msk [vmem:[%s1938] sm:$0x80] %vm1933, %v1932
    %s1940 = scalar_lea.vmem [#allocation0], 320
    %v1941 = vld [vmem:[%s1940] ss:$8 sm:$0x7]
    %s1942 = scalar_lea.vmem [#allocation0], 297
    %v1943 = vld [vmem:[%s1942] ss:$8 sm:$0x78]
    %vm1944 = vcmask 1046531
    %v1945 = vsel %vm1944, %v1943, %v1941
    %s1946 = scalar_lea.vmem [#allocation0], 337
    %v1947 = vld [vmem:[%s1946] sm:$0x80]
    %vm1948 = vcmask 1047559
    %v1949 = vsel %vm1948, %v1947, %v1945
    %1950 = vrot.lane.b32.xlu0 %v1949, 48
    %v1951 = vpop.permute.xlu0 %1950
    %vm1952 = vcmask 130048
    %s1953 = scalar_lea.vmem %s1, 325
    %1954 = vst.msk [vmem:[%s1953] ss:$8 sm:$0x7] %vm1952, %v1951
    %s1955 = scalar_lea.vmem %s1, 805
    %1956 = vst.msk [vmem:[%s1955] ss:$8 sm:$0x78] %vm1952, %v1951
    %s1957 = scalar_lea.vmem %s1, 342
    %1958 = vst.msk [vmem:[%s1957] sm:$0x80] %vm1952, %v1951
    %s1959 = scalar_lea.vmem [#allocation0], 352
    %v1960 = vld [vmem:[%s1959] ss:$8 sm:$0x7]
    %s1961 = scalar_lea.vmem [#allocation0], 329
    %v1962 = vld [vmem:[%s1961] ss:$8 sm:$0x78]
    %vm1963 = vcmask 1046531
    %v1964 = vsel %vm1963, %v1962, %v1960
    %s1965 = scalar_lea.vmem [#allocation0], 369
    %v1966 = vld [vmem:[%s1965] sm:$0x80]
    %vm1967 = vcmask 1047559
    %v1968 = vsel %vm1967, %v1966, %v1964
    %1969 = vrot.lane.b32.xlu0 %v1968, 48
    %v1970 = vpop.permute.xlu0 %1969
    %vm1971 = vcmask 130048
    %s1972 = scalar_lea.vmem %s1, 357
    %1973 = vst.msk [vmem:[%s1972] ss:$8 sm:$0x7] %vm1971, %v1970
    %s1974 = scalar_lea.vmem %s1, 837
    %1975 = vst.msk [vmem:[%s1974] ss:$8 sm:$0x78] %vm1971, %v1970
    %s1976 = scalar_lea.vmem %s1, 374
    %1977 = vst.msk [vmem:[%s1976] sm:$0x80] %vm1971, %v1970
    %s1978 = scalar_lea.vmem [#allocation0], 384
    %v1979 = vld [vmem:[%s1978] ss:$8 sm:$0x7]
    %s1980 = scalar_lea.vmem [#allocation0], 361
    %v1981 = vld [vmem:[%s1980] ss:$8 sm:$0x78]
    %vm1982 = vcmask 1046531
    %v1983 = vsel %vm1982, %v1981, %v1979
    %s1984 = scalar_lea.vmem [#allocation0], 401
    %v1985 = vld [vmem:[%s1984] sm:$0x80]
    %vm1986 = vcmask 1047559
    %v1987 = vsel %vm1986, %v1985, %v1983
    %1988 = vrot.lane.b32.xlu0 %v1987, 48
    %v1989 = vpop.permute.xlu0 %1988
    %vm1990 = vcmask 130048
    %s1991 = scalar_lea.vmem %s1, 389
    %1992 = vst.msk [vmem:[%s1991] ss:$8 sm:$0x7] %vm1990, %v1989
    %s1993 = scalar_lea.vmem %s1, 869
    %1994 = vst.msk [vmem:[%s1993] ss:$8 sm:$0x78] %vm1990, %v1989
    %s1995 = scalar_lea.vmem %s1, 406
    %1996 = vst.msk [vmem:[%s1995] sm:$0x80] %vm1990, %v1989
    %s1997 = scalar_lea.vmem [#allocation0], 416
    %v1998 = vld [vmem:[%s1997] ss:$8 sm:$0x7]
    %s1999 = scalar_lea.vmem [#allocation0], 393
    %v2000 = vld [vmem:[%s1999] ss:$8 sm:$0x78]
    %vm2001 = vcmask 1046531
    %v2002 = vsel %vm2001, %v2000, %v1998
    %s2003 = scalar_lea.vmem [#allocation0], 433
    %v2004 = vld [vmem:[%s2003] sm:$0x80]
    %vm2005 = vcmask 1047559
    %v2006 = vsel %vm2005, %v2004, %v2002
    %2007 = vrot.lane.b32.xlu0 %v2006, 48
    %v2008 = vpop.permute.xlu0 %2007
    %vm2009 = vcmask 130048
    %s2010 = scalar_lea.vmem %s1, 421
    %2011 = vst.msk [vmem:[%s2010] ss:$8 sm:$0x7] %vm2009, %v2008
    %s2012 = scalar_lea.vmem %s1, 901
    %2013 = vst.msk [vmem:[%s2012] ss:$8 sm:$0x78] %vm2009, %v2008
    %s2014 = scalar_lea.vmem %s1, 438
    %2015 = vst.msk [vmem:[%s2014] sm:$0x80] %vm2009, %v2008
    %s2016 = scalar_lea.vmem [#allocation0], 448
    %v2017 = vld [vmem:[%s2016] ss:$8 sm:$0x7]
    %s2018 = scalar_lea.vmem [#allocation0], 425
    %v2019 = vld [vmem:[%s2018] ss:$8 sm:$0x78]
    %vm2020 = vcmask 1046531
    %v2021 = vsel %vm2020, %v2019, %v2017
    %s2022 = scalar_lea.vmem [#allocation0], 465
    %v2023 = vld [vmem:[%s2022] sm:$0x80]
    %vm2024 = vcmask 1047559
    %v2025 = vsel %vm2024, %v2023, %v2021
    %2026 = vrot.lane.b32.xlu0 %v2025, 48
    %v2027 = vpop.permute.xlu0 %2026
    %vm2028 = vcmask 130048
    %s2029 = scalar_lea.vmem %s1, 453
    %2030 = vst.msk [vmem:[%s2029] ss:$8 sm:$0x7] %vm2028, %v2027
    %s2031 = scalar_lea.vmem %s1, 933
    %2032 = vst.msk [vmem:[%s2031] ss:$8 sm:$0x78] %vm2028, %v2027
    %s2033 = scalar_lea.vmem %s1, 470
    %2034 = vst.msk [vmem:[%s2033] sm:$0x80] %vm2028, %v2027
    %s2035 = scalar_lea.vmem [#allocation0], 480
    %v2036 = vld.sshfl [vmem:[%s2035] sm:$0xff pattern:$0x99999180]
    %2037 = vrot.lane.b32.xlu0 %v2036, 48
    %v2038 = vpop.permute.xlu0 %2037
    %vm2039 = vcmask 130048
    %s2040 = scalar_lea.vmem %s1, 485
    %2041 = vst.msk [vmem:[%s2040] ss:$8 sm:$0x3] %vm2039, %v2038
    %s2042 = scalar_lea.vmem %s1, 973
    %2043 = vst.msk [vmem:[%s2042] ss:$8 sm:$0xc] %vm2039, %v2038
    %v2044 = vld [vmem:[#allocation0] ss:$8 sm:$0x7]
    %s2045 = scalar_lea.vmem [#allocation0], 4294967273
    %v2046 = vld [vmem:[%s2045] ss:$8 sm:$0x78]
    %vm2047 = vcmask 1046531
    %v2048 = vsel %vm2047, %v2046, %v2044
    %s2049 = scalar_lea.vmem [#allocation0], 17
    %v2050 = vld [vmem:[%s2049] sm:$0x80]
    %vm2051 = vcmask 1047559
    %v2052 = vsel %vm2051, %v2050, %v2048
    %2053 = vrot.lane.b32.xlu0 %v2052, 32
    %v2054 = vpop.permute.xlu0 %2053
    %vm2055 = vcmask 130048
    %s2056 = scalar_lea.vmem %s1, 6
    %2057 = vst.msk [vmem:[%s2056] ss:$8 sm:$0x7] %vm2055, %v2054
    %s2058 = scalar_lea.vmem %s1, 486
    %2059 = vst.msk [vmem:[%s2058] ss:$8 sm:$0x78] %vm2055, %v2054
    %s2060 = scalar_lea.vmem %s1, 23
    %2061 = vst.msk [vmem:[%s2060] sm:$0x80] %vm2055, %v2054
    %s2062 = scalar_lea.vmem [#allocation0], 32
    %v2063 = vld [vmem:[%s2062] ss:$8 sm:$0x7]
    %s2064 = scalar_lea.vmem [#allocation0], 9
    %v2065 = vld [vmem:[%s2064] ss:$8 sm:$0x78]
    %vm2066 = vcmask 1046531
    %v2067 = vsel %vm2066, %v2065, %v2063
    %s2068 = scalar_lea.vmem [#allocation0], 49
    %v2069 = vld [vmem:[%s2068] sm:$0x80]
    %vm2070 = vcmask 1047559
    %v2071 = vsel %vm2070, %v2069, %v2067
    %2072 = vrot.lane.b32.xlu0 %v2071, 32
    %v2073 = vpop.permute.xlu0 %2072
    %vm2074 = vcmask 130048
    %s2075 = scalar_lea.vmem %s1, 38
    %2076 = vst.msk [vmem:[%s2075] ss:$8 sm:$0x7] %vm2074, %v2073
    %s2077 = scalar_lea.vmem %s1, 518
    %2078 = vst.msk [vmem:[%s2077] ss:$8 sm:$0x78] %vm2074, %v2073
    %s2079 = scalar_lea.vmem %s1, 55
    %2080 = vst.msk [vmem:[%s2079] sm:$0x80] %vm2074, %v2073
    %s2081 = scalar_lea.vmem [#allocation0], 64
    %v2082 = vld [vmem:[%s2081] ss:$8 sm:$0x7]
    %s2083 = scalar_lea.vmem [#allocation0], 41
    %v2084 = vld [vmem:[%s2083] ss:$8 sm:$0x78]
    %vm2085 = vcmask 1046531
    %v2086 = vsel %vm2085, %v2084, %v2082
    %s2087 = scalar_lea.vmem [#allocation0], 81
    %v2088 = vld [vmem:[%s2087] sm:$0x80]
    %vm2089 = vcmask 1047559
    %v2090 = vsel %vm2089, %v2088, %v2086
    %2091 = vrot.lane.b32.xlu0 %v2090, 32
    %v2092 = vpop.permute.xlu0 %2091
    %vm2093 = vcmask 130048
    %s2094 = scalar_lea.vmem %s1, 70
    %2095 = vst.msk [vmem:[%s2094] ss:$8 sm:$0x7] %vm2093, %v2092
    %s2096 = scalar_lea.vmem %s1, 550
    %2097 = vst.msk [vmem:[%s2096] ss:$8 sm:$0x78] %vm2093, %v2092
    %s2098 = scalar_lea.vmem %s1, 87
    %2099 = vst.msk [vmem:[%s2098] sm:$0x80] %vm2093, %v2092
    %s2100 = scalar_lea.vmem [#allocation0], 96
    %v2101 = vld [vmem:[%s2100] ss:$8 sm:$0x7]
    %s2102 = scalar_lea.vmem [#allocation0], 73
    %v2103 = vld [vmem:[%s2102] ss:$8 sm:$0x78]
    %vm2104 = vcmask 1046531
    %v2105 = vsel %vm2104, %v2103, %v2101
    %s2106 = scalar_lea.vmem [#allocation0], 113
    %v2107 = vld [vmem:[%s2106] sm:$0x80]
    %vm2108 = vcmask 1047559
    %v2109 = vsel %vm2108, %v2107, %v2105
    %2110 = vrot.lane.b32.xlu0 %v2109, 32
    %v2111 = vpop.permute.xlu0 %2110
    %vm2112 = vcmask 130048
    %s2113 = scalar_lea.vmem %s1, 102
    %2114 = vst.msk [vmem:[%s2113] ss:$8 sm:$0x7] %vm2112, %v2111
    %s2115 = scalar_lea.vmem %s1, 582
    %2116 = vst.msk [vmem:[%s2115] ss:$8 sm:$0x78] %vm2112, %v2111
    %s2117 = scalar_lea.vmem %s1, 119
    %2118 = vst.msk [vmem:[%s2117] sm:$0x80] %vm2112, %v2111
    %s2119 = scalar_lea.vmem [#allocation0], 128
    %v2120 = vld [vmem:[%s2119] ss:$8 sm:$0x7]
    %s2121 = scalar_lea.vmem [#allocation0], 105
    %v2122 = vld [vmem:[%s2121] ss:$8 sm:$0x78]
    %vm2123 = vcmask 1046531
    %v2124 = vsel %vm2123, %v2122, %v2120
    %s2125 = scalar_lea.vmem [#allocation0], 145
    %v2126 = vld [vmem:[%s2125] sm:$0x80]
    %vm2127 = vcmask 1047559
    %v2128 = vsel %vm2127, %v2126, %v2124
    %2129 = vrot.lane.b32.xlu0 %v2128, 32
    %v2130 = vpop.permute.xlu0 %2129
    %vm2131 = vcmask 130048
    %s2132 = scalar_lea.vmem %s1, 134
    %2133 = vst.msk [vmem:[%s2132] ss:$8 sm:$0x7] %vm2131, %v2130
    %s2134 = scalar_lea.vmem %s1, 614
    %2135 = vst.msk [vmem:[%s2134] ss:$8 sm:$0x78] %vm2131, %v2130
    %s2136 = scalar_lea.vmem %s1, 151
    %2137 = vst.msk [vmem:[%s2136] sm:$0x80] %vm2131, %v2130
    %s2138 = scalar_lea.vmem [#allocation0], 160
    %v2139 = vld [vmem:[%s2138] ss:$8 sm:$0x7]
    %s2140 = scalar_lea.vmem [#allocation0], 137
    %v2141 = vld [vmem:[%s2140] ss:$8 sm:$0x78]
    %vm2142 = vcmask 1046531
    %v2143 = vsel %vm2142, %v2141, %v2139
    %s2144 = scalar_lea.vmem [#allocation0], 177
    %v2145 = vld [vmem:[%s2144] sm:$0x80]
    %vm2146 = vcmask 1047559
    %v2147 = vsel %vm2146, %v2145, %v2143
    %2148 = vrot.lane.b32.xlu0 %v2147, 32
    %v2149 = vpop.permute.xlu0 %2148
    %vm2150 = vcmask 130048
    %s2151 = scalar_lea.vmem %s1, 166
    %2152 = vst.msk [vmem:[%s2151] ss:$8 sm:$0x7] %vm2150, %v2149
    %s2153 = scalar_lea.vmem %s1, 646
    %2154 = vst.msk [vmem:[%s2153] ss:$8 sm:$0x78] %vm2150, %v2149
    %s2155 = scalar_lea.vmem %s1, 183
    %2156 = vst.msk [vmem:[%s2155] sm:$0x80] %vm2150, %v2149
    %s2157 = scalar_lea.vmem [#allocation0], 192
    %v2158 = vld [vmem:[%s2157] ss:$8 sm:$0x7]
    %s2159 = scalar_lea.vmem [#allocation0], 169
    %v2160 = vld [vmem:[%s2159] ss:$8 sm:$0x78]
    %vm2161 = vcmask 1046531
    %v2162 = vsel %vm2161, %v2160, %v2158
    %s2163 = scalar_lea.vmem [#allocation0], 209
    %v2164 = vld [vmem:[%s2163] sm:$0x80]
    %vm2165 = vcmask 1047559
    %v2166 = vsel %vm2165, %v2164, %v2162
    %2167 = vrot.lane.b32.xlu0 %v2166, 32
    %v2168 = vpop.permute.xlu0 %2167
    %vm2169 = vcmask 130048
    %s2170 = scalar_lea.vmem %s1, 198
    %2171 = vst.msk [vmem:[%s2170] ss:$8 sm:$0x7] %vm2169, %v2168
    %s2172 = scalar_lea.vmem %s1, 678
    %2173 = vst.msk [vmem:[%s2172] ss:$8 sm:$0x78] %vm2169, %v2168
    %s2174 = scalar_lea.vmem %s1, 215
    %2175 = vst.msk [vmem:[%s2174] sm:$0x80] %vm2169, %v2168
    %s2176 = scalar_lea.vmem [#allocation0], 224
    %v2177 = vld [vmem:[%s2176] ss:$8 sm:$0x7]
    %s2178 = scalar_lea.vmem [#allocation0], 201
    %v2179 = vld [vmem:[%s2178] ss:$8 sm:$0x78]
    %vm2180 = vcmask 1046531
    %v2181 = vsel %vm2180, %v2179, %v2177
    %s2182 = scalar_lea.vmem [#allocation0], 241
    %v2183 = vld [vmem:[%s2182] sm:$0x80]
    %vm2184 = vcmask 1047559
    %v2185 = vsel %vm2184, %v2183, %v2181
    %2186 = vrot.lane.b32.xlu0 %v2185, 32
    %v2187 = vpop.permute.xlu0 %2186
    %vm2188 = vcmask 130048
    %s2189 = scalar_lea.vmem %s1, 230
    %2190 = vst.msk [vmem:[%s2189] ss:$8 sm:$0x7] %vm2188, %v2187
    %s2191 = scalar_lea.vmem %s1, 710
    %2192 = vst.msk [vmem:[%s2191] ss:$8 sm:$0x78] %vm2188, %v2187
    %s2193 = scalar_lea.vmem %s1, 247
    %2194 = vst.msk [vmem:[%s2193] sm:$0x80] %vm2188, %v2187
    %s2195 = scalar_lea.vmem [#allocation0], 256
    %v2196 = vld [vmem:[%s2195] ss:$8 sm:$0x7]
    %s2197 = scalar_lea.vmem [#allocation0], 233
    %v2198 = vld [vmem:[%s2197] ss:$8 sm:$0x78]
    %vm2199 = vcmask 1046531
    %v2200 = vsel %vm2199, %v2198, %v2196
    %s2201 = scalar_lea.vmem [#allocation0], 273
    %v2202 = vld [vmem:[%s2201] sm:$0x80]
    %vm2203 = vcmask 1047559
    %v2204 = vsel %vm2203, %v2202, %v2200
    %2205 = vrot.lane.b32.xlu0 %v2204, 32
    %v2206 = vpop.permute.xlu0 %2205
    %vm2207 = vcmask 130048
    %s2208 = scalar_lea.vmem %s1, 262
    %2209 = vst.msk [vmem:[%s2208] ss:$8 sm:$0x7] %vm2207, %v2206
    %s2210 = scalar_lea.vmem %s1, 742
    %2211 = vst.msk [vmem:[%s2210] ss:$8 sm:$0x78] %vm2207, %v2206
    %s2212 = scalar_lea.vmem %s1, 279
    %2213 = vst.msk [vmem:[%s2212] sm:$0x80] %vm2207, %v2206
    %s2214 = scalar_lea.vmem [#allocation0], 288
    %v2215 = vld [vmem:[%s2214] ss:$8 sm:$0x7]
    %s2216 = scalar_lea.vmem [#allocation0], 265
    %v2217 = vld [vmem:[%s2216] ss:$8 sm:$0x78]
    %vm2218 = vcmask 1046531
    %v2219 = vsel %vm2218, %v2217, %v2215
    %s2220 = scalar_lea.vmem [#allocation0], 305
    %v2221 = vld [vmem:[%s2220] sm:$0x80]
    %vm2222 = vcmask 1047559
    %v2223 = vsel %vm2222, %v2221, %v2219
    %2224 = vrot.lane.b32.xlu0 %v2223, 32
    %v2225 = vpop.permute.xlu0 %2224
    %vm2226 = vcmask 130048
    %s2227 = scalar_lea.vmem %s1, 294
    %2228 = vst.msk [vmem:[%s2227] ss:$8 sm:$0x7] %vm2226, %v2225
    %s2229 = scalar_lea.vmem %s1, 774
    %2230 = vst.msk [vmem:[%s2229] ss:$8 sm:$0x78] %vm2226, %v2225
    %s2231 = scalar_lea.vmem %s1, 311
    %2232 = vst.msk [vmem:[%s2231] sm:$0x80] %vm2226, %v2225
    %s2233 = scalar_lea.vmem [#allocation0], 320
    %v2234 = vld [vmem:[%s2233] ss:$8 sm:$0x7]
    %s2235 = scalar_lea.vmem [#allocation0], 297
    %v2236 = vld [vmem:[%s2235] ss:$8 sm:$0x78]
    %vm2237 = vcmask 1046531
    %v2238 = vsel %vm2237, %v2236, %v2234
    %s2239 = scalar_lea.vmem [#allocation0], 337
    %v2240 = vld [vmem:[%s2239] sm:$0x80]
    %vm2241 = vcmask 1047559
    %v2242 = vsel %vm2241, %v2240, %v2238
    %2243 = vrot.lane.b32.xlu0 %v2242, 32
    %v2244 = vpop.permute.xlu0 %2243
    %vm2245 = vcmask 130048
    %s2246 = scalar_lea.vmem %s1, 326
    %2247 = vst.msk [vmem:[%s2246] ss:$8 sm:$0x7] %vm2245, %v2244
    %s2248 = scalar_lea.vmem %s1, 806
    %2249 = vst.msk [vmem:[%s2248] ss:$8 sm:$0x78] %vm2245, %v2244
    %s2250 = scalar_lea.vmem %s1, 343
    %2251 = vst.msk [vmem:[%s2250] sm:$0x80] %vm2245, %v2244
    %s2252 = scalar_lea.vmem [#allocation0], 352
    %v2253 = vld [vmem:[%s2252] ss:$8 sm:$0x7]
    %s2254 = scalar_lea.vmem [#allocation0], 329
    %v2255 = vld [vmem:[%s2254] ss:$8 sm:$0x78]
    %vm2256 = vcmask 1046531
    %v2257 = vsel %vm2256, %v2255, %v2253
    %s2258 = scalar_lea.vmem [#allocation0], 369
    %v2259 = vld [vmem:[%s2258] sm:$0x80]
    %vm2260 = vcmask 1047559
    %v2261 = vsel %vm2260, %v2259, %v2257
    %2262 = vrot.lane.b32.xlu0 %v2261, 32
    %v2263 = vpop.permute.xlu0 %2262
    %vm2264 = vcmask 130048
    %s2265 = scalar_lea.vmem %s1, 358
    %2266 = vst.msk [vmem:[%s2265] ss:$8 sm:$0x7] %vm2264, %v2263
    %s2267 = scalar_lea.vmem %s1, 838
    %2268 = vst.msk [vmem:[%s2267] ss:$8 sm:$0x78] %vm2264, %v2263
    %s2269 = scalar_lea.vmem %s1, 375
    %2270 = vst.msk [vmem:[%s2269] sm:$0x80] %vm2264, %v2263
    %s2271 = scalar_lea.vmem [#allocation0], 384
    %v2272 = vld [vmem:[%s2271] ss:$8 sm:$0x7]
    %s2273 = scalar_lea.vmem [#allocation0], 361
    %v2274 = vld [vmem:[%s2273] ss:$8 sm:$0x78]
    %vm2275 = vcmask 1046531
    %v2276 = vsel %vm2275, %v2274, %v2272
    %s2277 = scalar_lea.vmem [#allocation0], 401
    %v2278 = vld [vmem:[%s2277] sm:$0x80]
    %vm2279 = vcmask 1047559
    %v2280 = vsel %vm2279, %v2278, %v2276
    %2281 = vrot.lane.b32.xlu0 %v2280, 32
    %v2282 = vpop.permute.xlu0 %2281
    %vm2283 = vcmask 130048
    %s2284 = scalar_lea.vmem %s1, 390
    %2285 = vst.msk [vmem:[%s2284] ss:$8 sm:$0x7] %vm2283, %v2282
    %s2286 = scalar_lea.vmem %s1, 870
    %2287 = vst.msk [vmem:[%s2286] ss:$8 sm:$0x78] %vm2283, %v2282
    %s2288 = scalar_lea.vmem %s1, 407
    %2289 = vst.msk [vmem:[%s2288] sm:$0x80] %vm2283, %v2282
    %s2290 = scalar_lea.vmem [#allocation0], 416
    %v2291 = vld [vmem:[%s2290] ss:$8 sm:$0x7]
    %s2292 = scalar_lea.vmem [#allocation0], 393
    %v2293 = vld [vmem:[%s2292] ss:$8 sm:$0x78]
    %vm2294 = vcmask 1046531
    %v2295 = vsel %vm2294, %v2293, %v2291
    %s2296 = scalar_lea.vmem [#allocation0], 433
    %v2297 = vld [vmem:[%s2296] sm:$0x80]
    %vm2298 = vcmask 1047559
    %v2299 = vsel %vm2298, %v2297, %v2295
    %2300 = vrot.lane.b32.xlu0 %v2299, 32
    %v2301 = vpop.permute.xlu0 %2300
    %vm2302 = vcmask 130048
    %s2303 = scalar_lea.vmem %s1, 422
    %2304 = vst.msk [vmem:[%s2303] ss:$8 sm:$0x7] %vm2302, %v2301
    %s2305 = scalar_lea.vmem %s1, 902
    %2306 = vst.msk [vmem:[%s2305] ss:$8 sm:$0x78] %vm2302, %v2301
    %s2307 = scalar_lea.vmem %s1, 439
    %2308 = vst.msk [vmem:[%s2307] sm:$0x80] %vm2302, %v2301
    %s2309 = scalar_lea.vmem [#allocation0], 448
    %v2310 = vld [vmem:[%s2309] ss:$8 sm:$0x7]
    %s2311 = scalar_lea.vmem [#allocation0], 425
    %v2312 = vld [vmem:[%s2311] ss:$8 sm:$0x78]
    %vm2313 = vcmask 1046531
    %v2314 = vsel %vm2313, %v2312, %v2310
    %s2315 = scalar_lea.vmem [#allocation0], 465
    %v2316 = vld [vmem:[%s2315] sm:$0x80]
    %vm2317 = vcmask 1047559
    %v2318 = vsel %vm2317, %v2316, %v2314
    %2319 = vrot.lane.b32.xlu0 %v2318, 32
    %v2320 = vpop.permute.xlu0 %2319
    %vm2321 = vcmask 130048
    %s2322 = scalar_lea.vmem %s1, 454
    %2323 = vst.msk [vmem:[%s2322] ss:$8 sm:$0x7] %vm2321, %v2320
    %s2324 = scalar_lea.vmem %s1, 934
    %2325 = vst.msk [vmem:[%s2324] ss:$8 sm:$0x78] %vm2321, %v2320
    %s2326 = scalar_lea.vmem %s1, 471
    %2327 = vst.msk [vmem:[%s2326] sm:$0x80] %vm2321, %v2320
    %s2328 = scalar_lea.vmem [#allocation0], 480
    %v2329 = vld.sshfl [vmem:[%s2328] sm:$0xff pattern:$0x99999180]
    %2330 = vrot.lane.b32.xlu0 %v2329, 32
    %v2331 = vpop.permute.xlu0 %2330
    %vm2332 = vcmask 130048
    %s2333 = scalar_lea.vmem %s1, 486
    %2334 = vst.msk [vmem:[%s2333] ss:$8 sm:$0x3] %vm2332, %v2331
    %s2335 = scalar_lea.vmem %s1, 974
    %2336 = vst.msk [vmem:[%s2335] ss:$8 sm:$0xc] %vm2332, %v2331
    %v2337 = vld [vmem:[#allocation0] ss:$8 sm:$0x7]
    %s2338 = scalar_lea.vmem [#allocation0], 4294967273
    %v2339 = vld [vmem:[%s2338] ss:$8 sm:$0x78]
    %vm2340 = vcmask 1046531
    %v2341 = vsel %vm2340, %v2339, %v2337
    %s2342 = scalar_lea.vmem [#allocation0], 17
    %v2343 = vld [vmem:[%s2342] sm:$0x80]
    %vm2344 = vcmask 1047559
    %v2345 = vsel %vm2344, %v2343, %v2341
    %2346 = vrot.lane.b32.xlu0 %v2345, 16
    %v2347 = vpop.permute.xlu0 %2346
    %vm2348 = vcmask 130048
    %s2349 = scalar_lea.vmem %s1, 7
    %2350 = vst.msk [vmem:[%s2349] ss:$8 sm:$0x7] %vm2348, %v2347
    %s2351 = scalar_lea.vmem %s1, 487
    %2352 = vst.msk [vmem:[%s2351] ss:$8 sm:$0x78] %vm2348, %v2347
    %s2353 = scalar_lea.vmem %s1, 24
    %2354 = vst.msk [vmem:[%s2353] sm:$0x80] %vm2348, %v2347
    %s2355 = scalar_lea.vmem [#allocation0], 32
    %v2356 = vld [vmem:[%s2355] ss:$8 sm:$0x7]
    %s2357 = scalar_lea.vmem [#allocation0], 9
    %v2358 = vld [vmem:[%s2357] ss:$8 sm:$0x78]
    %vm2359 = vcmask 1046531
    %v2360 = vsel %vm2359, %v2358, %v2356
    %s2361 = scalar_lea.vmem [#allocation0], 49
    %v2362 = vld [vmem:[%s2361] sm:$0x80]
    %vm2363 = vcmask 1047559
    %v2364 = vsel %vm2363, %v2362, %v2360
    %2365 = vrot.lane.b32.xlu0 %v2364, 16
    %v2366 = vpop.permute.xlu0 %2365
    %vm2367 = vcmask 130048
    %s2368 = scalar_lea.vmem %s1, 39
    %2369 = vst.msk [vmem:[%s2368] ss:$8 sm:$0x7] %vm2367, %v2366
    %s2370 = scalar_lea.vmem %s1, 519
    %2371 = vst.msk [vmem:[%s2370] ss:$8 sm:$0x78] %vm2367, %v2366
    %s2372 = scalar_lea.vmem %s1, 56
    %2373 = vst.msk [vmem:[%s2372] sm:$0x80] %vm2367, %v2366
    %s2374 = scalar_lea.vmem [#allocation0], 64
    %v2375 = vld [vmem:[%s2374] ss:$8 sm:$0x7]
    %s2376 = scalar_lea.vmem [#allocation0], 41
    %v2377 = vld [vmem:[%s2376] ss:$8 sm:$0x78]
    %vm2378 = vcmask 1046531
    %v2379 = vsel %vm2378, %v2377, %v2375
    %s2380 = scalar_lea.vmem [#allocation0], 81
    %v2381 = vld [vmem:[%s2380] sm:$0x80]
    %vm2382 = vcmask 1047559
    %v2383 = vsel %vm2382, %v2381, %v2379
    %2384 = vrot.lane.b32.xlu0 %v2383, 16
    %v2385 = vpop.permute.xlu0 %2384
    %vm2386 = vcmask 130048
    %s2387 = scalar_lea.vmem %s1, 71
    %2388 = vst.msk [vmem:[%s2387] ss:$8 sm:$0x7] %vm2386, %v2385
    %s2389 = scalar_lea.vmem %s1, 551
    %2390 = vst.msk [vmem:[%s2389] ss:$8 sm:$0x78] %vm2386, %v2385
    %s2391 = scalar_lea.vmem %s1, 88
    %2392 = vst.msk [vmem:[%s2391] sm:$0x80] %vm2386, %v2385
    %s2393 = scalar_lea.vmem [#allocation0], 96
    %v2394 = vld [vmem:[%s2393] ss:$8 sm:$0x7]
    %s2395 = scalar_lea.vmem [#allocation0], 73
    %v2396 = vld [vmem:[%s2395] ss:$8 sm:$0x78]
    %vm2397 = vcmask 1046531
    %v2398 = vsel %vm2397, %v2396, %v2394
    %s2399 = scalar_lea.vmem [#allocation0], 113
    %v2400 = vld [vmem:[%s2399] sm:$0x80]
    %vm2401 = vcmask 1047559
    %v2402 = vsel %vm2401, %v2400, %v2398
    %2403 = vrot.lane.b32.xlu0 %v2402, 16
    %v2404 = vpop.permute.xlu0 %2403
    %vm2405 = vcmask 130048
    %s2406 = scalar_lea.vmem %s1, 103
    %2407 = vst.msk [vmem:[%s2406] ss:$8 sm:$0x7] %vm2405, %v2404
    %s2408 = scalar_lea.vmem %s1, 583
    %2409 = vst.msk [vmem:[%s2408] ss:$8 sm:$0x78] %vm2405, %v2404
    %s2410 = scalar_lea.vmem %s1, 120
    %2411 = vst.msk [vmem:[%s2410] sm:$0x80] %vm2405, %v2404
    %s2412 = scalar_lea.vmem [#allocation0], 128
    %v2413 = vld [vmem:[%s2412] ss:$8 sm:$0x7]
    %s2414 = scalar_lea.vmem [#allocation0], 105
    %v2415 = vld [vmem:[%s2414] ss:$8 sm:$0x78]
    %vm2416 = vcmask 1046531
    %v2417 = vsel %vm2416, %v2415, %v2413
    %s2418 = scalar_lea.vmem [#allocation0], 145
    %v2419 = vld [vmem:[%s2418] sm:$0x80]
    %vm2420 = vcmask 1047559
    %v2421 = vsel %vm2420, %v2419, %v2417
    %2422 = vrot.lane.b32.xlu0 %v2421, 16
    %v2423 = vpop.permute.xlu0 %2422
    %vm2424 = vcmask 130048
    %s2425 = scalar_lea.vmem %s1, 135
    %2426 = vst.msk [vmem:[%s2425] ss:$8 sm:$0x7] %vm2424, %v2423
    %s2427 = scalar_lea.vmem %s1, 615
    %2428 = vst.msk [vmem:[%s2427] ss:$8 sm:$0x78] %vm2424, %v2423
    %s2429 = scalar_lea.vmem %s1, 152
    %2430 = vst.msk [vmem:[%s2429] sm:$0x80] %vm2424, %v2423
    %s2431 = scalar_lea.vmem [#allocation0], 160
    %v2432 = vld [vmem:[%s2431] ss:$8 sm:$0x7]
    %s2433 = scalar_lea.vmem [#allocation0], 137
    %v2434 = vld [vmem:[%s2433] ss:$8 sm:$0x78]
    %vm2435 = vcmask 1046531
    %v2436 = vsel %vm2435, %v2434, %v2432
    %s2437 = scalar_lea.vmem [#allocation0], 177
    %v2438 = vld [vmem:[%s2437] sm:$0x80]
    %vm2439 = vcmask 1047559
    %v2440 = vsel %vm2439, %v2438, %v2436
    %2441 = vrot.lane.b32.xlu0 %v2440, 16
    %v2442 = vpop.permute.xlu0 %2441
    %vm2443 = vcmask 130048
    %s2444 = scalar_lea.vmem %s1, 167
    %2445 = vst.msk [vmem:[%s2444] ss:$8 sm:$0x7] %vm2443, %v2442
    %s2446 = scalar_lea.vmem %s1, 647
    %2447 = vst.msk [vmem:[%s2446] ss:$8 sm:$0x78] %vm2443, %v2442
    %s2448 = scalar_lea.vmem %s1, 184
    %2449 = vst.msk [vmem:[%s2448] sm:$0x80] %vm2443, %v2442
    %s2450 = scalar_lea.vmem [#allocation0], 192
    %v2451 = vld [vmem:[%s2450] ss:$8 sm:$0x7]
    %s2452 = scalar_lea.vmem [#allocation0], 169
    %v2453 = vld [vmem:[%s2452] ss:$8 sm:$0x78]
    %vm2454 = vcmask 1046531
    %v2455 = vsel %vm2454, %v2453, %v2451
    %s2456 = scalar_lea.vmem [#allocation0], 209
    %v2457 = vld [vmem:[%s2456] sm:$0x80]
    %vm2458 = vcmask 1047559
    %v2459 = vsel %vm2458, %v2457, %v2455
    %2460 = vrot.lane.b32.xlu0 %v2459, 16
    %v2461 = vpop.permute.xlu0 %2460
    %vm2462 = vcmask 130048
    %s2463 = scalar_lea.vmem %s1, 199
    %2464 = vst.msk [vmem:[%s2463] ss:$8 sm:$0x7] %vm2462, %v2461
    %s2465 = scalar_lea.vmem %s1, 679
    %2466 = vst.msk [vmem:[%s2465] ss:$8 sm:$0x78] %vm2462, %v2461
    %s2467 = scalar_lea.vmem %s1, 216
    %2468 = vst.msk [vmem:[%s2467] sm:$0x80] %vm2462, %v2461
    %s2469 = scalar_lea.vmem [#allocation0], 224
    %v2470 = vld [vmem:[%s2469] ss:$8 sm:$0x7]
    %s2471 = scalar_lea.vmem [#allocation0], 201
    %v2472 = vld [vmem:[%s2471] ss:$8 sm:$0x78]
    %vm2473 = vcmask 1046531
    %v2474 = vsel %vm2473, %v2472, %v2470
    %s2475 = scalar_lea.vmem [#allocation0], 241
    %v2476 = vld [vmem:[%s2475] sm:$0x80]
    %vm2477 = vcmask 1047559
    %v2478 = vsel %vm2477, %v2476, %v2474
    %2479 = vrot.lane.b32.xlu0 %v2478, 16
    %v2480 = vpop.permute.xlu0 %2479
    %vm2481 = vcmask 130048
    %s2482 = scalar_lea.vmem %s1, 231
    %2483 = vst.msk [vmem:[%s2482] ss:$8 sm:$0x7] %vm2481, %v2480
    %s2484 = scalar_lea.vmem %s1, 711
    %2485 = vst.msk [vmem:[%s2484] ss:$8 sm:$0x78] %vm2481, %v2480
    %s2486 = scalar_lea.vmem %s1, 248
    %2487 = vst.msk [vmem:[%s2486] sm:$0x80] %vm2481, %v2480
    %s2488 = scalar_lea.vmem [#allocation0], 256
    %v2489 = vld [vmem:[%s2488] ss:$8 sm:$0x7]
    %s2490 = scalar_lea.vmem [#allocation0], 233
    %v2491 = vld [vmem:[%s2490] ss:$8 sm:$0x78]
    %vm2492 = vcmask 1046531
    %v2493 = vsel %vm2492, %v2491, %v2489
    %s2494 = scalar_lea.vmem [#allocation0], 273
    %v2495 = vld [vmem:[%s2494] sm:$0x80]
    %vm2496 = vcmask 1047559
    %v2497 = vsel %vm2496, %v2495, %v2493
    %2498 = vrot.lane.b32.xlu0 %v2497, 16
    %v2499 = vpop.permute.xlu0 %2498
    %vm2500 = vcmask 130048
    %s2501 = scalar_lea.vmem %s1, 263
    %2502 = vst.msk [vmem:[%s2501] ss:$8 sm:$0x7] %vm2500, %v2499
    %s2503 = scalar_lea.vmem %s1, 743
    %2504 = vst.msk [vmem:[%s2503] ss:$8 sm:$0x78] %vm2500, %v2499
    %s2505 = scalar_lea.vmem %s1, 280
    %2506 = vst.msk [vmem:[%s2505] sm:$0x80] %vm2500, %v2499
    %s2507 = scalar_lea.vmem [#allocation0], 288
    %v2508 = vld [vmem:[%s2507] ss:$8 sm:$0x7]
    %s2509 = scalar_lea.vmem [#allocation0], 265
    %v2510 = vld [vmem:[%s2509] ss:$8 sm:$0x78]
    %vm2511 = vcmask 1046531
    %v2512 = vsel %vm2511, %v2510, %v2508
    %s2513 = scalar_lea.vmem [#allocation0], 305
    %v2514 = vld [vmem:[%s2513] sm:$0x80]
    %vm2515 = vcmask 1047559
    %v2516 = vsel %vm2515, %v2514, %v2512
    %2517 = vrot.lane.b32.xlu0 %v2516, 16
    %v2518 = vpop.permute.xlu0 %2517
    %vm2519 = vcmask 130048
    %s2520 = scalar_lea.vmem %s1, 295
    %2521 = vst.msk [vmem:[%s2520] ss:$8 sm:$0x7] %vm2519, %v2518
    %s2522 = scalar_lea.vmem %s1, 775
    %2523 = vst.msk [vmem:[%s2522] ss:$8 sm:$0x78] %vm2519, %v2518
    %s2524 = scalar_lea.vmem %s1, 312
    %2525 = vst.msk [vmem:[%s2524] sm:$0x80] %vm2519, %v2518
    %s2526 = scalar_lea.vmem [#allocation0], 320
    %v2527 = vld [vmem:[%s2526] ss:$8 sm:$0x7]
    %s2528 = scalar_lea.vmem [#allocation0], 297
    %v2529 = vld [vmem:[%s2528] ss:$8 sm:$0x78]
    %vm2530 = vcmask 1046531
    %v2531 = vsel %vm2530, %v2529, %v2527
    %s2532 = scalar_lea.vmem [#allocation0], 337
    %v2533 = vld [vmem:[%s2532] sm:$0x80]
    %vm2534 = vcmask 1047559
    %v2535 = vsel %vm2534, %v2533, %v2531
    %2536 = vrot.lane.b32.xlu0 %v2535, 16
    %v2537 = vpop.permute.xlu0 %2536
    %vm2538 = vcmask 130048
    %s2539 = scalar_lea.vmem %s1, 327
    %2540 = vst.msk [vmem:[%s2539] ss:$8 sm:$0x7] %vm2538, %v2537
    %s2541 = scalar_lea.vmem %s1, 807
    %2542 = vst.msk [vmem:[%s2541] ss:$8 sm:$0x78] %vm2538, %v2537
    %s2543 = scalar_lea.vmem %s1, 344
    %2544 = vst.msk [vmem:[%s2543] sm:$0x80] %vm2538, %v2537
    %s2545 = scalar_lea.vmem [#allocation0], 352
    %v2546 = vld [vmem:[%s2545] ss:$8 sm:$0x7]
    %s2547 = scalar_lea.vmem [#allocation0], 329
    %v2548 = vld [vmem:[%s2547] ss:$8 sm:$0x78]
    %vm2549 = vcmask 1046531
    %v2550 = vsel %vm2549, %v2548, %v2546
    %s2551 = scalar_lea.vmem [#allocation0], 369
    %v2552 = vld [vmem:[%s2551] sm:$0x80]
    %vm2553 = vcmask 1047559
    %v2554 = vsel %vm2553, %v2552, %v2550
    %2555 = vrot.lane.b32.xlu0 %v2554, 16
    %v2556 = vpop.permute.xlu0 %2555
    %vm2557 = vcmask 130048
    %s2558 = scalar_lea.vmem %s1, 359
    %2559 = vst.msk [vmem:[%s2558] ss:$8 sm:$0x7] %vm2557, %v2556
    %s2560 = scalar_lea.vmem %s1, 839
    %2561 = vst.msk [vmem:[%s2560] ss:$8 sm:$0x78] %vm2557, %v2556
    %s2562 = scalar_lea.vmem %s1, 376
    %2563 = vst.msk [vmem:[%s2562] sm:$0x80] %vm2557, %v2556
    %s2564 = scalar_lea.vmem [#allocation0], 384
    %v2565 = vld [vmem:[%s2564] ss:$8 sm:$0x7]
    %s2566 = scalar_lea.vmem [#allocation0], 361
    %v2567 = vld [vmem:[%s2566] ss:$8 sm:$0x78]
    %vm2568 = vcmask 1046531
    %v2569 = vsel %vm2568, %v2567, %v2565
    %s2570 = scalar_lea.vmem [#allocation0], 401
    %v2571 = vld [vmem:[%s2570] sm:$0x80]
    %vm2572 = vcmask 1047559
    %v2573 = vsel %vm2572, %v2571, %v2569
    %2574 = vrot.lane.b32.xlu0 %v2573, 16
    %v2575 = vpop.permute.xlu0 %2574
    %vm2576 = vcmask 130048
    %s2577 = scalar_lea.vmem %s1, 391
    %2578 = vst.msk [vmem:[%s2577] ss:$8 sm:$0x7] %vm2576, %v2575
    %s2579 = scalar_lea.vmem %s1, 871
    %2580 = vst.msk [vmem:[%s2579] ss:$8 sm:$0x78] %vm2576, %v2575
    %s2581 = scalar_lea.vmem %s1, 408
    %2582 = vst.msk [vmem:[%s2581] sm:$0x80] %vm2576, %v2575
    %s2583 = scalar_lea.vmem [#allocation0], 416
    %v2584 = vld [vmem:[%s2583] ss:$8 sm:$0x7]
    %s2585 = scalar_lea.vmem [#allocation0], 393
    %v2586 = vld [vmem:[%s2585] ss:$8 sm:$0x78]
    %vm2587 = vcmask 1046531
    %v2588 = vsel %vm2587, %v2586, %v2584
    %s2589 = scalar_lea.vmem [#allocation0], 433
    %v2590 = vld [vmem:[%s2589] sm:$0x80]
    %vm2591 = vcmask 1047559
    %v2592 = vsel %vm2591, %v2590, %v2588
    %2593 = vrot.lane.b32.xlu0 %v2592, 16
    %v2594 = vpop.permute.xlu0 %2593
    %vm2595 = vcmask 130048
    %s2596 = scalar_lea.vmem %s1, 423
    %2597 = vst.msk [vmem:[%s2596] ss:$8 sm:$0x7] %vm2595, %v2594
    %s2598 = scalar_lea.vmem %s1, 903
    %2599 = vst.msk [vmem:[%s2598] ss:$8 sm:$0x78] %vm2595, %v2594
    %s2600 = scalar_lea.vmem %s1, 440
    %2601 = vst.msk [vmem:[%s2600] sm:$0x80] %vm2595, %v2594
    %s2602 = scalar_lea.vmem [#allocation0], 448
    %v2603 = vld [vmem:[%s2602] ss:$8 sm:$0x7]
    %s2604 = scalar_lea.vmem [#allocation0], 425
    %v2605 = vld [vmem:[%s2604] ss:$8 sm:$0x78]
    %vm2606 = vcmask 1046531
    %v2607 = vsel %vm2606, %v2605, %v2603
    %s2608 = scalar_lea.vmem [#allocation0], 465
    %v2609 = vld [vmem:[%s2608] sm:$0x80]
    %vm2610 = vcmask 1047559
    %v2611 = vsel %vm2610, %v2609, %v2607
    %2612 = vrot.lane.b32.xlu0 %v2611, 16
    %v2613 = vpop.permute.xlu0 %2612
    %vm2614 = vcmask 130048
    %s2615 = scalar_lea.vmem %s1, 455
    %2616 = vst.msk [vmem:[%s2615] ss:$8 sm:$0x7] %vm2614, %v2613
    %s2617 = scalar_lea.vmem %s1, 935
    %2618 = vst.msk [vmem:[%s2617] ss:$8 sm:$0x78] %vm2614, %v2613
    %s2619 = scalar_lea.vmem %s1, 472
    %2620 = vst.msk [vmem:[%s2619] sm:$0x80] %vm2614, %v2613
    %s2621 = scalar_lea.vmem [#allocation0], 480
    %v2622 = vld.sshfl [vmem:[%s2621] sm:$0xff pattern:$0x99999180]
    %2623 = vrot.lane.b32.xlu0 %v2622, 16
    %v2624 = vpop.permute.xlu0 %2623
    %vm2625 = vcmask 130048
    %s2626 = scalar_lea.vmem %s1, 487
    %2627 = vst.msk [vmem:[%s2626] ss:$8 sm:$0x3] %vm2625, %v2624
    %s2628 = scalar_lea.vmem %s1, 975
    %2629 = vst.msk [vmem:[%s2628] ss:$8 sm:$0xc] %vm2625, %v2624

// kernel: audio_tcn_forward.1
$region0: #{audio_tcn_forward.1}
  #allocation0 [shape = 'u32[]', space=smem, size = 0x4, offset = 0x4, fixed_abs, tag = 'smem constant byte address 0x4 - core index']
  #allocation1 [shape = 'u32[72,128]{1,0:T(1,128)}', space=vmem, size = 0x9000, scoped, tag = 'internal scratch']
  %s0 = inlined_call_operand.vmem [shape: f32[2,500,16], index: 0, kind: input, shape index: {}]
  %s1 = inlined_call_operand.vmem [shape: bf16[528,64], index: 1, kind: input, shape index: {}]
  %s2 = inlined_call_operand.vmem [shape: f32[9,64], index: 2, kind: input, shape index: {}]
  %s3 = inlined_call_operand.hbm [shape: f32[2,35], index: 3, kind: output, shape index: {}]
  %s4 = sld [smem:[#allocation0]]
  $region22: #{audio_tcn_forward.1} parent=0
    _
  %s6 = ssub.s32 1, %s4
  %s7 = scalar_select 0, %s6, %s4
  $region1: #{audio_tcn_forward.1} parent=0
    #allocation2 [shape = 'u8[1024]{0}', space=vmem, size = 0x400, scoped, tag = 'output window, operand 0, single buffered']
    #allocation3 [shape = 's32[1]{0}', space=sflag, size = 0x4, scoped, tag = 'scoped memory for audio_tcn_forward.1']
    %8 = vsyncpa [#allocation3], 0
    // Predicated region
    $region2: #{audio_tcn_forward.1} parent=1 // pred_check
      _
    $region3: #{audio_tcn_forward.1} parent=1 // pred_check_branch
      %10 = sbr.rel (0) target = $region5
    $region4: #{audio_tcn_forward.1} parent=1 // pred_region
      _
    $region5: #{audio_tcn_forward.1} parent=1 // pred_fallthru
      _
    // Predicated region
    $region6: #{audio_tcn_forward.1} parent=1 // pred_check
      _
    $region7: #{audio_tcn_forward.1} parent=1 // pred_check_branch
      %12 = sbr.rel (0) target = $region9
    $region8: #{audio_tcn_forward.1} parent=1 // pred_region
      _
    $region9: #{audio_tcn_forward.1} parent=1 // pred_fallthru
      _
    // Predicated region
    $region10: #{audio_tcn_forward.1} parent=1 // pred_check
      _
    $region11: #{audio_tcn_forward.1} parent=1 // pred_check_branch
      %14 = sbr.rel (0) target = $region13
    $region12: #{audio_tcn_forward.1} parent=1 // pred_region
      _
    $region13: #{audio_tcn_forward.1} parent=1 // pred_fallthru
      _
    %v16 = vld [vmem:[%s0] sm:$0xff]
    %v17 = vld [vmem:[%s0 + $0x8] sm:$0xff]
    %v18 = vld [vmem:[%s0 + $0x10] sm:$0xff]
    %v19 = vld [vmem:[%s0 + $0x18] sm:$0xff]
    %v20 = vld [vmem:[%s0 + $0x20] sm:$0xff]
    %v21 = vld [vmem:[%s0 + $0x28] sm:$0xff]
    %v22 = vld [vmem:[%s0 + $0x30] sm:$0xff]
    %v23 = vld [vmem:[%s0 + $0x38] sm:$0xff]
    %v24 = vld [vmem:[%s0 + $0x40] sm:$0xff]
    %v25 = vld [vmem:[%s0 + $0x48] sm:$0xff]
    %v26 = vld [vmem:[%s0 + $0x50] sm:$0xff]
    %v27 = vld [vmem:[%s0 + $0x58] sm:$0xff]
    %v28 = vld [vmem:[%s0 + $0x60] sm:$0xff]
    %v29 = vld [vmem:[%s0 + $0x68] sm:$0xff]
    %v30 = vld [vmem:[%s0 + $0x70] sm:$0xff]
    %v31 = vld [vmem:[%s0 + $0x78] sm:$0xff]
    %v32 = vld [vmem:[%s0 + $0x80] sm:$0xff]
    %v33 = vld [vmem:[%s0 + $0x88] sm:$0xff]
    %v34 = vld [vmem:[%s0 + $0x90] sm:$0xff]
    %v35 = vld [vmem:[%s0 + $0x98] sm:$0xff]
    %v36 = vld [vmem:[%s0 + $0xa0] sm:$0xff]
    %v37 = vld [vmem:[%s0 + $0xa8] sm:$0xff]
    %v38 = vld [vmem:[%s0 + $0xb0] sm:$0xff]
    %v39 = vld [vmem:[%s0 + $0xb8] sm:$0xff]
    %v40 = vld [vmem:[%s0 + $0xc0] sm:$0xff]
    %v41 = vld [vmem:[%s0 + $0xc8] sm:$0xff]
    %v42 = vld [vmem:[%s0 + $0xd0] sm:$0xff]
    %v43 = vld [vmem:[%s0 + $0xd8] sm:$0xff]
    %v44 = vld [vmem:[%s0 + $0xe0] sm:$0xff]
    %v45 = vld [vmem:[%s0 + $0xe8] sm:$0xff]
    %v46 = vld [vmem:[%s0 + $0xf0] sm:$0xff]
    %v47 = vld [vmem:[%s0 + $0xf8] sm:$0xff]
    %v48 = vld [vmem:[%s0 + $0x100] sm:$0xff]
    %v49 = vld [vmem:[%s0 + $0x108] sm:$0xff]
    %v50 = vld [vmem:[%s0 + $0x110] sm:$0xff]
    %v51 = vld [vmem:[%s0 + $0x118] sm:$0xff]
    %v52 = vld [vmem:[%s0 + $0x120] sm:$0xff]
    %v53 = vld [vmem:[%s0 + $0x128] sm:$0xff]
    %v54 = vld [vmem:[%s0 + $0x130] sm:$0xff]
    %v55 = vld [vmem:[%s0 + $0x138] sm:$0xff]
    %v56 = vld [vmem:[%s0 + $0x140] sm:$0xff]
    %v57 = vld [vmem:[%s0 + $0x148] sm:$0xff]
    %v58 = vld [vmem:[%s0 + $0x150] sm:$0xff]
    %v59 = vld [vmem:[%s0 + $0x158] sm:$0xff]
    %v60 = vld [vmem:[%s0 + $0x160] sm:$0xff]
    %v61 = vld [vmem:[%s0 + $0x168] sm:$0xff]
    %v62 = vld [vmem:[%s0 + $0x170] sm:$0xff]
    %v63 = vld [vmem:[%s0 + $0x178] sm:$0xff]
    %v64 = vld [vmem:[%s0 + $0x180] sm:$0xff]
    %v65 = vld [vmem:[%s0 + $0x188] sm:$0xff]
    %v66 = vld [vmem:[%s0 + $0x190] sm:$0xff]
    %v67 = vld [vmem:[%s0 + $0x198] sm:$0xff]
    %v68 = vld [vmem:[%s0 + $0x1a0] sm:$0xff]
    %v69 = vld [vmem:[%s0 + $0x1a8] sm:$0xff]
    %v70 = vld [vmem:[%s0 + $0x1b0] sm:$0xff]
    %v71 = vld [vmem:[%s0 + $0x1b8] sm:$0xff]
    %v72 = vld [vmem:[%s0 + $0x1c0] sm:$0xff]
    %v73 = vld [vmem:[%s0 + $0x1c8] sm:$0xff]
    %v74 = vld [vmem:[%s0 + $0x1d0] sm:$0xff]
    %v75 = vld [vmem:[%s0 + $0x1d8] sm:$0xff]
    %v76 = vld [vmem:[%s0 + $0x1e0] sm:$0xff]
    %v77 = vld [vmem:[%s0 + $0x1e8] sm:$0xff]
    %v78 = vld [vmem:[%s0 + $0x1f0] sm:$0xf]
    %vm142 = vcmask 1046528
    %v143 = vrot.slane %v16, 1
    %v144 = vrot.slane %v17, 1
    %v145 = vsel %vm142, %v143, %v144
    %v146 = vrot.slane %v18, 1
    %v147 = vsel %vm142, %v144, %v146
    %v148 = vrot.slane %v19, 1
    %v149 = vsel %vm142, %v146, %v148
    %v150 = vrot.slane %v20, 1
    %v151 = vsel %vm142, %v148, %v150
    %v152 = vrot.slane %v21, 1
    %v153 = vsel %vm142, %v150, %v152
    %v154 = vrot.slane %v22, 1
    %v155 = vsel %vm142, %v152, %v154
    %v156 = vrot.slane %v23, 1
    %v157 = vsel %vm142, %v154, %v156
    %v158 = vrot.slane %v24, 1
    %v159 = vsel %vm142, %v156, %v158
    %v160 = vrot.slane %v25, 1
    %v161 = vsel %vm142, %v158, %v160
    %v162 = vrot.slane %v26, 1
    %v163 = vsel %vm142, %v160, %v162
    %v164 = vrot.slane %v27, 1
    %v165 = vsel %vm142, %v162, %v164
    %v166 = vrot.slane %v28, 1
    %v167 = vsel %vm142, %v164, %v166
    %v168 = vrot.slane %v29, 1
    %v169 = vsel %vm142, %v166, %v168
    %v170 = vrot.slane %v30, 1
    %v171 = vsel %vm142, %v168, %v170
    %v172 = vrot.slane %v31, 1
    %v173 = vsel %vm142, %v170, %v172
    %v174 = vrot.slane %v32, 1
    %v175 = vsel %vm142, %v172, %v174
    %v176 = vrot.slane %v33, 1
    %v177 = vsel %vm142, %v174, %v176
    %v178 = vrot.slane %v34, 1
    %v179 = vsel %vm142, %v176, %v178
    %v180 = vrot.slane %v35, 1
    %v181 = vsel %vm142, %v178, %v180
    %v182 = vrot.slane %v36, 1
    %v183 = vsel %vm142, %v180, %v182
    %v184 = vrot.slane %v37, 1
    %v185 = vsel %vm142, %v182, %v184
    %v186 = vrot.slane %v38, 1
    %v187 = vsel %vm142, %v184, %v186
    %v188 = vrot.slane %v39, 1
    %v189 = vsel %vm142, %v186, %v188
    %v190 = vrot.slane %v40, 1
    %v191 = vsel %vm142, %v188, %v190
    %v192 = vrot.slane %v41, 1
    %v193 = vsel %vm142, %v190, %v192
    %v194 = vrot.slane %v42, 1
    %v195 = vsel %vm142, %v192, %v194
    %v196 = vrot.slane %v43, 1
    %v197 = vsel %vm142, %v194, %v196
    %v198 = vrot.slane %v44, 1
    %v199 = vsel %vm142, %v196, %v198
    %v200 = vrot.slane %v45, 1
    %v201 = vsel %vm142, %v198, %v200
    %v202 = vrot.slane %v46, 1
    %v203 = vsel %vm142, %v200, %v202
    %v204 = vrot.slane %v47, 1
    %v205 = vsel %vm142, %v202, %v204
    %v206 = vrot.slane %v48, 1
    %v207 = vsel %vm142, %v204, %v206
    %v208 = vrot.slane %v49, 1
    %v209 = vsel %vm142, %v206, %v208
    %v210 = vrot.slane %v50, 1
    %v211 = vsel %vm142, %v208, %v210
    %v212 = vrot.slane %v51, 1
    %v213 = vsel %vm142, %v210, %v212
    %v214 = vrot.slane %v52, 1
    %v215 = vsel %vm142, %v212, %v214
    %v216 = vrot.slane %v53, 1
    %v217 = vsel %vm142, %v214, %v216
    %v218 = vrot.slane %v54, 1
    %v219 = vsel %vm142, %v216, %v218
    %v220 = vrot.slane %v55, 1
    %v221 = vsel %vm142, %v218, %v220
    %v222 = vrot.slane %v56, 1
    %v223 = vsel %vm142, %v220, %v222
    %v224 = vrot.slane %v57, 1
    %v225 = vsel %vm142, %v222, %v224
    %v226 = vrot.slane %v58, 1
    %v227 = vsel %vm142, %v224, %v226
    %v228 = vrot.slane %v59, 1
    %v229 = vsel %vm142, %v226, %v228
    %v230 = vrot.slane %v60, 1
    %v231 = vsel %vm142, %v228, %v230
    %v232 = vrot.slane %v61, 1
    %v233 = vsel %vm142, %v230, %v232
    %v234 = vrot.slane %v62, 1
    %v235 = vsel %vm142, %v232, %v234
    %v236 = vrot.slane %v63, 1
    %v237 = vsel %vm142, %v234, %v236
    %v238 = vrot.slane %v64, 1
    %v239 = vsel %vm142, %v236, %v238
    %v240 = vrot.slane %v65, 1
    %v241 = vsel %vm142, %v238, %v240
    %v242 = vrot.slane %v66, 1
    %v243 = vsel %vm142, %v240, %v242
    %v244 = vrot.slane %v67, 1
    %v245 = vsel %vm142, %v242, %v244
    %v246 = vrot.slane %v68, 1
    %v247 = vsel %vm142, %v244, %v246
    %v248 = vrot.slane %v69, 1
    %v249 = vsel %vm142, %v246, %v248
    %v250 = vrot.slane %v70, 1
    %v251 = vsel %vm142, %v248, %v250
    %v252 = vrot.slane %v71, 1
    %v253 = vsel %vm142, %v250, %v252
    %v254 = vrot.slane %v72, 1
    %v255 = vsel %vm142, %v252, %v254
    %v256 = vrot.slane %v73, 1
    %v257 = vsel %vm142, %v254, %v256
    %v258 = vrot.slane %v74, 1
    %v259 = vsel %vm142, %v256, %v258
    %v260 = vrot.slane %v75, 1
    %v261 = vsel %vm142, %v258, %v260
    %v262 = vrot.slane %v76, 1
    %v263 = vsel %vm142, %v260, %v262
    %v264 = vrot.slane %v77, 1
    %v265 = vsel %vm142, %v262, %v264
    %v266 = vrot.slane %v78, 1
    %v267 = vsel %vm142, %v264, %v266
    %268 = vrot.lane.b32.xlu0 %v145, 16
    %v269 = vpop.permute.xlu0 %268
    %270 = vrot.lane.b32.xlu0 %v147, 16
    %v271 = vpop.permute.xlu0 %270
    %272 = vrot.lane.b32.xlu0 %v149, 16
    %v273 = vpop.permute.xlu0 %272
    %274 = vrot.lane.b32.xlu0 %v151, 16
    %v275 = vpop.permute.xlu0 %274
    %276 = vrot.lane.b32.xlu0 %v153, 16
    %v277 = vpop.permute.xlu0 %276
    %278 = vrot.lane.b32.xlu0 %v155, 16
    %v279 = vpop.permute.xlu0 %278
    %280 = vrot.lane.b32.xlu0 %v157, 16
    %v281 = vpop.permute.xlu0 %280
    %282 = vrot.lane.b32.xlu0 %v159, 16
    %v283 = vpop.permute.xlu0 %282
    %284 = vrot.lane.b32.xlu0 %v161, 16
    %v285 = vpop.permute.xlu0 %284
    %286 = vrot.lane.b32.xlu0 %v163, 16
    %v287 = vpop.permute.xlu0 %286
    %288 = vrot.lane.b32.xlu0 %v165, 16
    %v289 = vpop.permute.xlu0 %288
    %290 = vrot.lane.b32.xlu0 %v167, 16
    %v291 = vpop.permute.xlu0 %290
    %292 = vrot.lane.b32.xlu0 %v169, 16
    %v293 = vpop.permute.xlu0 %292
    %294 = vrot.lane.b32.xlu0 %v171, 16
    %v295 = vpop.permute.xlu0 %294
    %296 = vrot.lane.b32.xlu0 %v173, 16
    %v297 = vpop.permute.xlu0 %296
    %298 = vrot.lane.b32.xlu0 %v175, 16
    %v299 = vpop.permute.xlu0 %298
    %300 = vrot.lane.b32.xlu0 %v177, 16
    %v301 = vpop.permute.xlu0 %300
    %302 = vrot.lane.b32.xlu0 %v179, 16
    %v303 = vpop.permute.xlu0 %302
    %304 = vrot.lane.b32.xlu0 %v181, 16
    %v305 = vpop.permute.xlu0 %304
    %306 = vrot.lane.b32.xlu0 %v183, 16
    %v307 = vpop.permute.xlu0 %306
    %308 = vrot.lane.b32.xlu0 %v185, 16
    %v309 = vpop.permute.xlu0 %308
    %310 = vrot.lane.b32.xlu0 %v187, 16
    %v311 = vpop.permute.xlu0 %310
    %312 = vrot.lane.b32.xlu0 %v189, 16
    %v313 = vpop.permute.xlu0 %312
    %314 = vrot.lane.b32.xlu0 %v191, 16
    %v315 = vpop.permute.xlu0 %314
    %316 = vrot.lane.b32.xlu0 %v193, 16
    %v317 = vpop.permute.xlu0 %316
    %318 = vrot.lane.b32.xlu0 %v195, 16
    %v319 = vpop.permute.xlu0 %318
    %320 = vrot.lane.b32.xlu0 %v197, 16
    %v321 = vpop.permute.xlu0 %320
    %322 = vrot.lane.b32.xlu0 %v199, 16
    %v323 = vpop.permute.xlu0 %322
    %324 = vrot.lane.b32.xlu0 %v201, 16
    %v325 = vpop.permute.xlu0 %324
    %326 = vrot.lane.b32.xlu0 %v203, 16
    %v327 = vpop.permute.xlu0 %326
    %328 = vrot.lane.b32.xlu0 %v205, 16
    %v329 = vpop.permute.xlu0 %328
    %330 = vrot.lane.b32.xlu0 %v207, 16
    %v331 = vpop.permute.xlu0 %330
    %332 = vrot.lane.b32.xlu0 %v209, 16
    %v333 = vpop.permute.xlu0 %332
    %334 = vrot.lane.b32.xlu0 %v211, 16
    %v335 = vpop.permute.xlu0 %334
    %336 = vrot.lane.b32.xlu0 %v213, 16
    %v337 = vpop.permute.xlu0 %336
    %338 = vrot.lane.b32.xlu0 %v215, 16
    %v339 = vpop.permute.xlu0 %338
    %340 = vrot.lane.b32.xlu0 %v217, 16
    %v341 = vpop.permute.xlu0 %340
    %342 = vrot.lane.b32.xlu0 %v219, 16
    %v343 = vpop.permute.xlu0 %342
    %344 = vrot.lane.b32.xlu0 %v221, 16
    %v345 = vpop.permute.xlu0 %344
    %346 = vrot.lane.b32.xlu0 %v223, 16
    %v347 = vpop.permute.xlu0 %346
    %348 = vrot.lane.b32.xlu0 %v225, 16
    %v349 = vpop.permute.xlu0 %348
    %350 = vrot.lane.b32.xlu0 %v227, 16
    %v351 = vpop.permute.xlu0 %350
    %352 = vrot.lane.b32.xlu0 %v229, 16
    %v353 = vpop.permute.xlu0 %352
    %354 = vrot.lane.b32.xlu0 %v231, 16
    %v355 = vpop.permute.xlu0 %354
    %356 = vrot.lane.b32.xlu0 %v233, 16
    %v357 = vpop.permute.xlu0 %356
    %358 = vrot.lane.b32.xlu0 %v235, 16
    %v359 = vpop.permute.xlu0 %358
    %360 = vrot.lane.b32.xlu0 %v237, 16
    %v361 = vpop.permute.xlu0 %360
    %362 = vrot.lane.b32.xlu0 %v239, 16
    %v363 = vpop.permute.xlu0 %362
    %364 = vrot.lane.b32.xlu0 %v241, 16
    %v365 = vpop.permute.xlu0 %364
    %366 = vrot.lane.b32.xlu0 %v243, 16
    %v367 = vpop.permute.xlu0 %366
    %368 = vrot.lane.b32.xlu0 %v245, 16
    %v369 = vpop.permute.xlu0 %368
    %370 = vrot.lane.b32.xlu0 %v247, 16
    %v371 = vpop.permute.xlu0 %370
    %372 = vrot.lane.b32.xlu0 %v249, 16
    %v373 = vpop.permute.xlu0 %372
    %374 = vrot.lane.b32.xlu0 %v251, 16
    %v375 = vpop.permute.xlu0 %374
    %376 = vrot.lane.b32.xlu0 %v253, 16
    %v377 = vpop.permute.xlu0 %376
    %378 = vrot.lane.b32.xlu0 %v255, 16
    %v379 = vpop.permute.xlu0 %378
    %380 = vrot.lane.b32.xlu0 %v257, 16
    %v381 = vpop.permute.xlu0 %380
    %382 = vrot.lane.b32.xlu0 %v259, 16
    %v383 = vpop.permute.xlu0 %382
    %384 = vrot.lane.b32.xlu0 %v261, 16
    %v385 = vpop.permute.xlu0 %384
    %386 = vrot.lane.b32.xlu0 %v263, 16
    %v387 = vpop.permute.xlu0 %386
    %388 = vrot.lane.b32.xlu0 %v265, 16
    %v389 = vpop.permute.xlu0 %388
    %390 = vrot.lane.b32.xlu0 %v267, 16
    %v391 = vpop.permute.xlu0 %390
    %vm454 = vcmask 1045504
    %v455 = vrot.slane %v16, 2
    %v456 = vrot.slane %v17, 2
    %v457 = vsel %vm454, %v455, %v456
    %v458 = vrot.slane %v18, 2
    %v459 = vsel %vm454, %v456, %v458
    %v460 = vrot.slane %v19, 2
    %v461 = vsel %vm454, %v458, %v460
    %v462 = vrot.slane %v20, 2
    %v463 = vsel %vm454, %v460, %v462
    %v464 = vrot.slane %v21, 2
    %v465 = vsel %vm454, %v462, %v464
    %v466 = vrot.slane %v22, 2
    %v467 = vsel %vm454, %v464, %v466
    %v468 = vrot.slane %v23, 2
    %v469 = vsel %vm454, %v466, %v468
    %v470 = vrot.slane %v24, 2
    %v471 = vsel %vm454, %v468, %v470
    %v472 = vrot.slane %v25, 2
    %v473 = vsel %vm454, %v470, %v472
    %v474 = vrot.slane %v26, 2
    %v475 = vsel %vm454, %v472, %v474
    %v476 = vrot.slane %v27, 2
    %v477 = vsel %vm454, %v474, %v476
    %v478 = vrot.slane %v28, 2
    %v479 = vsel %vm454, %v476, %v478
    %v480 = vrot.slane %v29, 2
    %v481 = vsel %vm454, %v478, %v480
    %v482 = vrot.slane %v30, 2
    %v483 = vsel %vm454, %v480, %v482
    %v484 = vrot.slane %v31, 2
    %v485 = vsel %vm454, %v482, %v484
    %v486 = vrot.slane %v32, 2
    %v487 = vsel %vm454, %v484, %v486
    %v488 = vrot.slane %v33, 2
    %v489 = vsel %vm454, %v486, %v488
    %v490 = vrot.slane %v34, 2
    %v491 = vsel %vm454, %v488, %v490
    %v492 = vrot.slane %v35, 2
    %v493 = vsel %vm454, %v490, %v492
    %v494 = vrot.slane %v36, 2
    %v495 = vsel %vm454, %v492, %v494
    %v496 = vrot.slane %v37, 2
    %v497 = vsel %vm454, %v494, %v496
    %v498 = vrot.slane %v38, 2
    %v499 = vsel %vm454, %v496, %v498
    %v500 = vrot.slane %v39, 2
    %v501 = vsel %vm454, %v498, %v500
    %v502 = vrot.slane %v40, 2
    %v503 = vsel %vm454, %v500, %v502
    %v504 = vrot.slane %v41, 2
    %v505 = vsel %vm454, %v502, %v504
    %v506 = vrot.slane %v42, 2
    %v507 = vsel %vm454, %v504, %v506
    %v508 = vrot.slane %v43, 2
    %v509 = vsel %vm454, %v506, %v508
    %v510 = vrot.slane %v44, 2
    %v511 = vsel %vm454, %v508, %v510
    %v512 = vrot.slane %v45, 2
    %v513 = vsel %vm454, %v510, %v512
    %v514 = vrot.slane %v46, 2
    %v515 = vsel %vm454, %v512, %v514
    %v516 = vrot.slane %v47, 2
    %v517 = vsel %vm454, %v514, %v516
    %v518 = vrot.slane %v48, 2
    %v519 = vsel %vm454, %v516, %v518
    %v520 = vrot.slane %v49, 2
    %v521 = vsel %vm454, %v518, %v520
    %v522 = vrot.slane %v50, 2
    %v523 = vsel %vm454, %v520, %v522
    %v524 = vrot.slane %v51, 2
    %v525 = vsel %vm454, %v522, %v524
    %v526 = vrot.slane %v52, 2
    %v527 = vsel %vm454, %v524, %v526
    %v528 = vrot.slane %v53, 2
    %v529 = vsel %vm454, %v526, %v528
    %v530 = vrot.slane %v54, 2
    %v531 = vsel %vm454, %v528, %v530
    %v532 = vrot.slane %v55, 2
    %v533 = vsel %vm454, %v530, %v532
    %v534 = vrot.slane %v56, 2
    %v535 = vsel %vm454, %v532, %v534
    %v536 = vrot.slane %v57, 2
    %v537 = vsel %vm454, %v534, %v536
    %v538 = vrot.slane %v58, 2
    %v539 = vsel %vm454, %v536, %v538
    %v540 = vrot.slane %v59, 2
    %v541 = vsel %vm454, %v538, %v540
    %v542 = vrot.slane %v60, 2
    %v543 = vsel %vm454, %v540, %v542
    %v544 = vrot.slane %v61, 2
    %v545 = vsel %vm454, %v542, %v544
    %v546 = vrot.slane %v62, 2
    %v547 = vsel %vm454, %v544, %v546
    %v548 = vrot.slane %v63, 2
    %v549 = vsel %vm454, %v546, %v548
    %v550 = vrot.slane %v64, 2
    %v551 = vsel %vm454, %v548, %v550
    %v552 = vrot.slane %v65, 2
    %v553 = vsel %vm454, %v550, %v552
    %v554 = vrot.slane %v66, 2
    %v555 = vsel %vm454, %v552, %v554
    %v556 = vrot.slane %v67, 2
    %v557 = vsel %vm454, %v554, %v556
    %v558 = vrot.slane %v68, 2
    %v559 = vsel %vm454, %v556, %v558
    %v560 = vrot.slane %v69, 2
    %v561 = vsel %vm454, %v558, %v560
    %v562 = vrot.slane %v70, 2
    %v563 = vsel %vm454, %v560, %v562
    %v564 = vrot.slane %v71, 2
    %v565 = vsel %vm454, %v562, %v564
    %v566 = vrot.slane %v72, 2
    %v567 = vsel %vm454, %v564, %v566
    %v568 = vrot.slane %v73, 2
    %v569 = vsel %vm454, %v566, %v568
    %v570 = vrot.slane %v74, 2
    %v571 = vsel %vm454, %v568, %v570
    %v572 = vrot.slane %v75, 2
    %v573 = vsel %vm454, %v570, %v572
    %v574 = vrot.slane %v76, 2
    %v575 = vsel %vm454, %v572, %v574
    %v576 = vrot.slane %v77, 2
    %v577 = vsel %vm454, %v574, %v576
    %v578 = vrot.slane %v78, 2
    %v579 = vsel %vm454, %v576, %v578
    %580 = vrot.lane.b32.xlu0 %v457, 32
    %v581 = vpop.permute.xlu0 %580
    %582 = vrot.lane.b32.xlu0 %v459, 32
    %v583 = vpop.permute.xlu0 %582
    %584 = vrot.lane.b32.xlu0 %v461, 32
    %v585 = vpop.permute.xlu0 %584
    %586 = vrot.lane.b32.xlu0 %v463, 32
    %v587 = vpop.permute.xlu0 %586
    %588 = vrot.lane.b32.xlu0 %v465, 32
    %v589 = vpop.permute.xlu0 %588
    %590 = vrot.lane.b32.xlu0 %v467, 32
    %v591 = vpop.permute.xlu0 %590
    %592 = vrot.lane.b32.xlu0 %v469, 32
    %v593 = vpop.permute.xlu0 %592
    %594 = vrot.lane.b32.xlu0 %v471, 32
    %v595 = vpop.permute.xlu0 %594
    %596 = vrot.lane.b32.xlu0 %v473, 32
    %v597 = vpop.permute.xlu0 %596
    %598 = vrot.lane.b32.xlu0 %v475, 32
    %v599 = vpop.permute.xlu0 %598
    %600 = vrot.lane.b32.xlu0 %v477, 32
    %v601 = vpop.permute.xlu0 %600
    %602 = vrot.lane.b32.xlu0 %v479, 32
    %v603 = vpop.permute.xlu0 %602
    %604 = vrot.lane.b32.xlu0 %v481, 32
    %v605 = vpop.permute.xlu0 %604
    %606 = vrot.lane.b32.xlu0 %v483, 32
    %v607 = vpop.permute.xlu0 %606
    %608 = vrot.lane.b32.xlu0 %v485, 32
    %v609 = vpop.permute.xlu0 %608
    %610 = vrot.lane.b32.xlu0 %v487, 32
    %v611 = vpop.permute.xlu0 %610
    %612 = vrot.lane.b32.xlu0 %v489, 32
    %v613 = vpop.permute.xlu0 %612
    %614 = vrot.lane.b32.xlu0 %v491, 32
    %v615 = vpop.permute.xlu0 %614
    %616 = vrot.lane.b32.xlu0 %v493, 32
    %v617 = vpop.permute.xlu0 %616
    %618 = vrot.lane.b32.xlu0 %v495, 32
    %v619 = vpop.permute.xlu0 %618
    %620 = vrot.lane.b32.xlu0 %v497, 32
    %v621 = vpop.permute.xlu0 %620
    %622 = vrot.lane.b32.xlu0 %v499, 32
    %v623 = vpop.permute.xlu0 %622
    %624 = vrot.lane.b32.xlu0 %v501, 32
    %v625 = vpop.permute.xlu0 %624
    %626 = vrot.lane.b32.xlu0 %v503, 32
    %v627 = vpop.permute.xlu0 %626
    %628 = vrot.lane.b32.xlu0 %v505, 32
    %v629 = vpop.permute.xlu0 %628
    %630 = vrot.lane.b32.xlu0 %v507, 32
    %v631 = vpop.permute.xlu0 %630
    %632 = vrot.lane.b32.xlu0 %v509, 32
    %v633 = vpop.permute.xlu0 %632
    %634 = vrot.lane.b32.xlu0 %v511, 32
    %v635 = vpop.permute.xlu0 %634
    %636 = vrot.lane.b32.xlu0 %v513, 32
    %v637 = vpop.permute.xlu0 %636
    %638 = vrot.lane.b32.xlu0 %v515, 32
    %v639 = vpop.permute.xlu0 %638
    %640 = vrot.lane.b32.xlu0 %v517, 32
    %v641 = vpop.permute.xlu0 %640
    %642 = vrot.lane.b32.xlu0 %v519, 32
    %v643 = vpop.permute.xlu0 %642
    %644 = vrot.lane.b32.xlu0 %v521, 32
    %v645 = vpop.permute.xlu0 %644
    %646 = vrot.lane.b32.xlu0 %v523, 32
    %v647 = vpop.permute.xlu0 %646
    %648 = vrot.lane.b32.xlu0 %v525, 32
    %v649 = vpop.permute.xlu0 %648
    %650 = vrot.lane.b32.xlu0 %v527, 32
    %v651 = vpop.permute.xlu0 %650
    %652 = vrot.lane.b32.xlu0 %v529, 32
    %v653 = vpop.permute.xlu0 %652
    %654 = vrot.lane.b32.xlu0 %v531, 32
    %v655 = vpop.permute.xlu0 %654
    %656 = vrot.lane.b32.xlu0 %v533, 32
    %v657 = vpop.permute.xlu0 %656
    %658 = vrot.lane.b32.xlu0 %v535, 32
    %v659 = vpop.permute.xlu0 %658
    %660 = vrot.lane.b32.xlu0 %v537, 32
    %v661 = vpop.permute.xlu0 %660
    %662 = vrot.lane.b32.xlu0 %v539, 32
    %v663 = vpop.permute.xlu0 %662
    %664 = vrot.lane.b32.xlu0 %v541, 32
    %v665 = vpop.permute.xlu0 %664
    %666 = vrot.lane.b32.xlu0 %v543, 32
    %v667 = vpop.permute.xlu0 %666
    %668 = vrot.lane.b32.xlu0 %v545, 32
    %v669 = vpop.permute.xlu0 %668
    %670 = vrot.lane.b32.xlu0 %v547, 32
    %v671 = vpop.permute.xlu0 %670
    %672 = vrot.lane.b32.xlu0 %v549, 32
    %v673 = vpop.permute.xlu0 %672
    %674 = vrot.lane.b32.xlu0 %v551, 32
    %v675 = vpop.permute.xlu0 %674
    %676 = vrot.lane.b32.xlu0 %v553, 32
    %v677 = vpop.permute.xlu0 %676
    %678 = vrot.lane.b32.xlu0 %v555, 32
    %v679 = vpop.permute.xlu0 %678
    %680 = vrot.lane.b32.xlu0 %v557, 32
    %v681 = vpop.permute.xlu0 %680
    %682 = vrot.lane.b32.xlu0 %v559, 32
    %v683 = vpop.permute.xlu0 %682
    %684 = vrot.lane.b32.xlu0 %v561, 32
    %v685 = vpop.permute.xlu0 %684
    %686 = vrot.lane.b32.xlu0 %v563, 32
    %v687 = vpop.permute.xlu0 %686
    %688 = vrot.lane.b32.xlu0 %v565, 32
    %v689 = vpop.permute.xlu0 %688
    %690 = vrot.lane.b32.xlu0 %v567, 32
    %v691 = vpop.permute.xlu0 %690
    %692 = vrot.lane.b32.xlu0 %v569, 32
    %v693 = vpop.permute.xlu0 %692
    %694 = vrot.lane.b32.xlu0 %v571, 32
    %v695 = vpop.permute.xlu0 %694
    %696 = vrot.lane.b32.xlu0 %v573, 32
    %v697 = vpop.permute.xlu0 %696
    %698 = vrot.lane.b32.xlu0 %v575, 32
    %v699 = vpop.permute.xlu0 %698
    %700 = vrot.lane.b32.xlu0 %v577, 32
    %v701 = vpop.permute.xlu0 %700
    %702 = vrot.lane.b32.xlu0 %v579, 32
    %v703 = vpop.permute.xlu0 %702
    %vm766 = vcmask 1044480
    %v767 = vrot.slane %v16, 3
    %v768 = vrot.slane %v17, 3
    %v769 = vsel %vm766, %v767, %v768
    %v770 = vrot.slane %v18, 3
    %v771 = vsel %vm766, %v768, %v770
    %v772 = vrot.slane %v19, 3
    %v773 = vsel %vm766, %v770, %v772
    %v774 = vrot.slane %v20, 3
    %v775 = vsel %vm766, %v772, %v774
    %v776 = vrot.slane %v21, 3
    %v777 = vsel %vm766, %v774, %v776
    %v778 = vrot.slane %v22, 3
    %v779 = vsel %vm766, %v776, %v778
    %v780 = vrot.slane %v23, 3
    %v781 = vsel %vm766, %v778, %v780
    %v782 = vrot.slane %v24, 3
    %v783 = vsel %vm766, %v780, %v782
    %v784 = vrot.slane %v25, 3
    %v785 = vsel %vm766, %v782, %v784
    %v786 = vrot.slane %v26, 3
    %v787 = vsel %vm766, %v784, %v786
    %v788 = vrot.slane %v27, 3
    %v789 = vsel %vm766, %v786, %v788
    %v790 = vrot.slane %v28, 3
    %v791 = vsel %vm766, %v788, %v790
    %v792 = vrot.slane %v29, 3
    %v793 = vsel %vm766, %v790, %v792
    %v794 = vrot.slane %v30, 3
    %v795 = vsel %vm766, %v792, %v794
    %v796 = vrot.slane %v31, 3
    %v797 = vsel %vm766, %v794, %v796
    %v798 = vrot.slane %v32, 3
    %v799 = vsel %vm766, %v796, %v798
    %v800 = vrot.slane %v33, 3
    %v801 = vsel %vm766, %v798, %v800
    %v802 = vrot.slane %v34, 3
    %v803 = vsel %vm766, %v800, %v802
    %v804 = vrot.slane %v35, 3
    %v805 = vsel %vm766, %v802, %v804
    %v806 = vrot.slane %v36, 3
    %v807 = vsel %vm766, %v804, %v806
    %v808 = vrot.slane %v37, 3
    %v809 = vsel %vm766, %v806, %v808
    %v810 = vrot.slane %v38, 3
    %v811 = vsel %vm766, %v808, %v810
    %v812 = vrot.slane %v39, 3
    %v813 = vsel %vm766, %v810, %v812
    %v814 = vrot.slane %v40, 3
    %v815 = vsel %vm766, %v812, %v814
    %v816 = vrot.slane %v41, 3
    %v817 = vsel %vm766, %v814, %v816
    %v818 = vrot.slane %v42, 3
    %v819 = vsel %vm766, %v816, %v818
    %v820 = vrot.slane %v43, 3
    %v821 = vsel %vm766, %v818, %v820
    %v822 = vrot.slane %v44, 3
    %v823 = vsel %vm766, %v820, %v822
    %v824 = vrot.slane %v45, 3
    %v825 = vsel %vm766, %v822, %v824
    %v826 = vrot.slane %v46, 3
    %v827 = vsel %vm766, %v824, %v826
    %v828 = vrot.slane %v47, 3
    %v829 = vsel %vm766, %v826, %v828
    %v830 = vrot.slane %v48, 3
    %v831 = vsel %vm766, %v828, %v830
    %v832 = vrot.slane %v49, 3
    %v833 = vsel %vm766, %v830, %v832
    %v834 = vrot.slane %v50, 3
    %v835 = vsel %vm766, %v832, %v834
    %v836 = vrot.slane %v51, 3
    %v837 = vsel %vm766, %v834, %v836
    %v838 = vrot.slane %v52, 3
    %v839 = vsel %vm766, %v836, %v838
    %v840 = vrot.slane %v53, 3
    %v841 = vsel %vm766, %v838, %v840
    %v842 = vrot.slane %v54, 3
    %v843 = vsel %vm766, %v840, %v842
    %v844 = vrot.slane %v55, 3
    %v845 = vsel %vm766, %v842, %v844
    %v846 = vrot.slane %v56, 3
    %v847 = vsel %vm766, %v844, %v846
    %v848 = vrot.slane %v57, 3
    %v849 = vsel %vm766, %v846, %v848
    %v850 = vrot.slane %v58, 3
    %v851 = vsel %vm766, %v848, %v850
    %v852 = vrot.slane %v59, 3
    %v853 = vsel %vm766, %v850, %v852
    %v854 = vrot.slane %v60, 3
    %v855 = vsel %vm766, %v852, %v854
    %v856 = vrot.slane %v61, 3
    %v857 = vsel %vm766, %v854, %v856
    %v858 = vrot.slane %v62, 3
    %v859 = vsel %vm766, %v856, %v858
    %v860 = vrot.slane %v63, 3
    %v861 = vsel %vm766, %v858, %v860
    %v862 = vrot.slane %v64, 3
    %v863 = vsel %vm766, %v860, %v862
    %v864 = vrot.slane %v65, 3
    %v865 = vsel %vm766, %v862, %v864
    %v866 = vrot.slane %v66, 3
    %v867 = vsel %vm766, %v864, %v866
    %v868 = vrot.slane %v67, 3
    %v869 = vsel %vm766, %v866, %v868
    %v870 = vrot.slane %v68, 3
    %v871 = vsel %vm766, %v868, %v870
    %v872 = vrot.slane %v69, 3
    %v873 = vsel %vm766, %v870, %v872
    %v874 = vrot.slane %v70, 3
    %v875 = vsel %vm766, %v872, %v874
    %v876 = vrot.slane %v71, 3
    %v877 = vsel %vm766, %v874, %v876
    %v878 = vrot.slane %v72, 3
    %v879 = vsel %vm766, %v876, %v878
    %v880 = vrot.slane %v73, 3
    %v881 = vsel %vm766, %v878, %v880
    %v882 = vrot.slane %v74, 3
    %v883 = vsel %vm766, %v880, %v882
    %v884 = vrot.slane %v75, 3
    %v885 = vsel %vm766, %v882, %v884
    %v886 = vrot.slane %v76, 3
    %v887 = vsel %vm766, %v884, %v886
    %v888 = vrot.slane %v77, 3
    %v889 = vsel %vm766, %v886, %v888
    %v890 = vrot.slane %v78, 3
    %v891 = vsel %vm766, %v888, %v890
    %892 = vrot.lane.b32.xlu0 %v769, 48
    %v893 = vpop.permute.xlu0 %892
    %894 = vrot.lane.b32.xlu0 %v771, 48
    %v895 = vpop.permute.xlu0 %894
    %896 = vrot.lane.b32.xlu0 %v773, 48
    %v897 = vpop.permute.xlu0 %896
    %898 = vrot.lane.b32.xlu0 %v775, 48
    %v899 = vpop.permute.xlu0 %898
    %900 = vrot.lane.b32.xlu0 %v777, 48
    %v901 = vpop.permute.xlu0 %900
    %902 = vrot.lane.b32.xlu0 %v779, 48
    %v903 = vpop.permute.xlu0 %902
    %904 = vrot.lane.b32.xlu0 %v781, 48
    %v905 = vpop.permute.xlu0 %904
    %906 = vrot.lane.b32.xlu0 %v783, 48
    %v907 = vpop.permute.xlu0 %906
    %908 = vrot.lane.b32.xlu0 %v785, 48
    %v909 = vpop.permute.xlu0 %908
    %910 = vrot.lane.b32.xlu0 %v787, 48
    %v911 = vpop.permute.xlu0 %910
    %912 = vrot.lane.b32.xlu0 %v789, 48
    %v913 = vpop.permute.xlu0 %912
    %914 = vrot.lane.b32.xlu0 %v791, 48
    %v915 = vpop.permute.xlu0 %914
    %916 = vrot.lane.b32.xlu0 %v793, 48
    %v917 = vpop.permute.xlu0 %916
    %918 = vrot.lane.b32.xlu0 %v795, 48
    %v919 = vpop.permute.xlu0 %918
    %920 = vrot.lane.b32.xlu0 %v797, 48
    %v921 = vpop.permute.xlu0 %920
    %922 = vrot.lane.b32.xlu0 %v799, 48
    %v923 = vpop.permute.xlu0 %922
    %924 = vrot.lane.b32.xlu0 %v801, 48
    %v925 = vpop.permute.xlu0 %924
    %926 = vrot.lane.b32.xlu0 %v803, 48
    %v927 = vpop.permute.xlu0 %926
    %928 = vrot.lane.b32.xlu0 %v805, 48
    %v929 = vpop.permute.xlu0 %928
    %930 = vrot.lane.b32.xlu0 %v807, 48
    %v931 = vpop.permute.xlu0 %930
    %932 = vrot.lane.b32.xlu0 %v809, 48
    %v933 = vpop.permute.xlu0 %932
    %934 = vrot.lane.b32.xlu0 %v811, 48
    %v935 = vpop.permute.xlu0 %934
    %936 = vrot.lane.b32.xlu0 %v813, 48
    %v937 = vpop.permute.xlu0 %936
    %938 = vrot.lane.b32.xlu0 %v815, 48
    %v939 = vpop.permute.xlu0 %938
    %940 = vrot.lane.b32.xlu0 %v817, 48
    %v941 = vpop.permute.xlu0 %940
    %942 = vrot.lane.b32.xlu0 %v819, 48
    %v943 = vpop.permute.xlu0 %942
    %944 = vrot.lane.b32.xlu0 %v821, 48
    %v945 = vpop.permute.xlu0 %944
    %946 = vrot.lane.b32.xlu0 %v823, 48
    %v947 = vpop.permute.xlu0 %946
    %948 = vrot.lane.b32.xlu0 %v825, 48
    %v949 = vpop.permute.xlu0 %948
    %950 = vrot.lane.b32.xlu0 %v827, 48
    %v951 = vpop.permute.xlu0 %950
    %952 = vrot.lane.b32.xlu0 %v829, 48
    %v953 = vpop.permute.xlu0 %952
    %954 = vrot.lane.b32.xlu0 %v831, 48
    %v955 = vpop.permute.xlu0 %954
    %956 = vrot.lane.b32.xlu0 %v833, 48
    %v957 = vpop.permute.xlu0 %956
    %958 = vrot.lane.b32.xlu0 %v835, 48
    %v959 = vpop.permute.xlu0 %958
    %960 = vrot.lane.b32.xlu0 %v837, 48
    %v961 = vpop.permute.xlu0 %960
    %962 = vrot.lane.b32.xlu0 %v839, 48
    %v963 = vpop.permute.xlu0 %962
    %964 = vrot.lane.b32.xlu0 %v841, 48
    %v965 = vpop.permute.xlu0 %964
    %966 = vrot.lane.b32.xlu0 %v843, 48
    %v967 = vpop.permute.xlu0 %966
    %968 = vrot.lane.b32.xlu0 %v845, 48
    %v969 = vpop.permute.xlu0 %968
    %970 = vrot.lane.b32.xlu0 %v847, 48
    %v971 = vpop.permute.xlu0 %970
    %972 = vrot.lane.b32.xlu0 %v849, 48
    %v973 = vpop.permute.xlu0 %972
    %974 = vrot.lane.b32.xlu0 %v851, 48
    %v975 = vpop.permute.xlu0 %974
    %976 = vrot.lane.b32.xlu0 %v853, 48
    %v977 = vpop.permute.xlu0 %976
    %978 = vrot.lane.b32.xlu0 %v855, 48
    %v979 = vpop.permute.xlu0 %978
    %980 = vrot.lane.b32.xlu0 %v857, 48
    %v981 = vpop.permute.xlu0 %980
    %982 = vrot.lane.b32.xlu0 %v859, 48
    %v983 = vpop.permute.xlu0 %982
    %984 = vrot.lane.b32.xlu0 %v861, 48
    %v985 = vpop.permute.xlu0 %984
    %986 = vrot.lane.b32.xlu0 %v863, 48
    %v987 = vpop.permute.xlu0 %986
    %988 = vrot.lane.b32.xlu0 %v865, 48
    %v989 = vpop.permute.xlu0 %988
    %990 = vrot.lane.b32.xlu0 %v867, 48
    %v991 = vpop.permute.xlu0 %990
    %992 = vrot.lane.b32.xlu0 %v869, 48
    %v993 = vpop.permute.xlu0 %992
    %994 = vrot.lane.b32.xlu0 %v871, 48
    %v995 = vpop.permute.xlu0 %994
    %996 = vrot.lane.b32.xlu0 %v873, 48
    %v997 = vpop.permute.xlu0 %996
    %998 = vrot.lane.b32.xlu0 %v875, 48
    %v999 = vpop.permute.xlu0 %998
    %1000 = vrot.lane.b32.xlu0 %v877, 48
    %v1001 = vpop.permute.xlu0 %1000
    %1002 = vrot.lane.b32.xlu0 %v879, 48
    %v1003 = vpop.permute.xlu0 %1002
    %1004 = vrot.lane.b32.xlu0 %v881, 48
    %v1005 = vpop.permute.xlu0 %1004
    %1006 = vrot.lane.b32.xlu0 %v883, 48
    %v1007 = vpop.permute.xlu0 %1006
    %1008 = vrot.lane.b32.xlu0 %v885, 48
    %v1009 = vpop.permute.xlu0 %1008
    %1010 = vrot.lane.b32.xlu0 %v887, 48
    %v1011 = vpop.permute.xlu0 %1010
    %1012 = vrot.lane.b32.xlu0 %v889, 48
    %v1013 = vpop.permute.xlu0 %1012
    %1014 = vrot.lane.b32.xlu0 %v891, 48
    %v1015 = vpop.permute.xlu0 %1014
    %vm1078 = vcmask 1043456
    %v1079 = vrot.slane %v16, 4
    %v1080 = vrot.slane %v17, 4
    %v1081 = vsel %vm1078, %v1079, %v1080
    %v1082 = vrot.slane %v18, 4
    %v1083 = vsel %vm1078, %v1080, %v1082
    %v1084 = vrot.slane %v19, 4
    %v1085 = vsel %vm1078, %v1082, %v1084
    %v1086 = vrot.slane %v20, 4
    %v1087 = vsel %vm1078, %v1084, %v1086
    %v1088 = vrot.slane %v21, 4
    %v1089 = vsel %vm1078, %v1086, %v1088
    %v1090 = vrot.slane %v22, 4
    %v1091 = vsel %vm1078, %v1088, %v1090
    %v1092 = vrot.slane %v23, 4
    %v1093 = vsel %vm1078, %v1090, %v1092
    %v1094 = vrot.slane %v24, 4
    %v1095 = vsel %vm1078, %v1092, %v1094
    %v1096 = vrot.slane %v25, 4
    %v1097 = vsel %vm1078, %v1094, %v1096
    %v1098 = vrot.slane %v26, 4
    %v1099 = vsel %vm1078, %v1096, %v1098
    %v1100 = vrot.slane %v27, 4
    %v1101 = vsel %vm1078, %v1098, %v1100
    %v1102 = vrot.slane %v28, 4
    %v1103 = vsel %vm1078, %v1100, %v1102
    %v1104 = vrot.slane %v29, 4
    %v1105 = vsel %vm1078, %v1102, %v1104
    %v1106 = vrot.slane %v30, 4
    %v1107 = vsel %vm1078, %v1104, %v1106
    %v1108 = vrot.slane %v31, 4
    %v1109 = vsel %vm1078, %v1106, %v1108
    %v1110 = vrot.slane %v32, 4
    %v1111 = vsel %vm1078, %v1108, %v1110
    %v1112 = vrot.slane %v33, 4
    %v1113 = vsel %vm1078, %v1110, %v1112
    %v1114 = vrot.slane %v34, 4
    %v1115 = vsel %vm1078, %v1112, %v1114
    %v1116 = vrot.slane %v35, 4
    %v1117 = vsel %vm1078, %v1114, %v1116
    %v1118 = vrot.slane %v36, 4
    %v1119 = vsel %vm1078, %v1116, %v1118
    %v1120 = vrot.slane %v37, 4
    %v1121 = vsel %vm1078, %v1118, %v1120
    %v1122 = vrot.slane %v38, 4
    %v1123 = vsel %vm1078, %v1120, %v1122
    %v1124 = vrot.slane %v39, 4
    %v1125 = vsel %vm1078, %v1122, %v1124
    %v1126 = vrot.slane %v40, 4
    %v1127 = vsel %vm1078, %v1124, %v1126
    %v1128 = vrot.slane %v41, 4
    %v1129 = vsel %vm1078, %v1126, %v1128
    %v1130 = vrot.slane %v42, 4
    %v1131 = vsel %vm1078, %v1128, %v1130
    %v1132 = vrot.slane %v43, 4
    %v1133 = vsel %vm1078, %v1130, %v1132
    %v1134 = vrot.slane %v44, 4
    %v1135 = vsel %vm1078, %v1132, %v1134
    %v1136 = vrot.slane %v45, 4
    %v1137 = vsel %vm1078, %v1134, %v1136
    %v1138 = vrot.slane %v46, 4
    %v1139 = vsel %vm1078, %v1136, %v1138
    %v1140 = vrot.slane %v47, 4
    %v1141 = vsel %vm1078, %v1138, %v1140
    %v1142 = vrot.slane %v48, 4
    %v1143 = vsel %vm1078, %v1140, %v1142
    %v1144 = vrot.slane %v49, 4
    %v1145 = vsel %vm1078, %v1142, %v1144
    %v1146 = vrot.slane %v50, 4
    %v1147 = vsel %vm1078, %v1144, %v1146
    %v1148 = vrot.slane %v51, 4
    %v1149 = vsel %vm1078, %v1146, %v1148
    %v1150 = vrot.slane %v52, 4
    %v1151 = vsel %vm1078, %v1148, %v1150
    %v1152 = vrot.slane %v53, 4
    %v1153 = vsel %vm1078, %v1150, %v1152
    %v1154 = vrot.slane %v54, 4
    %v1155 = vsel %vm1078, %v1152, %v1154
    %v1156 = vrot.slane %v55, 4
    %v1157 = vsel %vm1078, %v1154, %v1156
    %v1158 = vrot.slane %v56, 4
    %v1159 = vsel %vm1078, %v1156, %v1158
    %v1160 = vrot.slane %v57, 4
    %v1161 = vsel %vm1078, %v1158, %v1160
    %v1162 = vrot.slane %v58, 4
    %v1163 = vsel %vm1078, %v1160, %v1162
    %v1164 = vrot.slane %v59, 4
    %v1165 = vsel %vm1078, %v1162, %v1164
    %v1166 = vrot.slane %v60, 4
    %v1167 = vsel %vm1078, %v1164, %v1166
    %v1168 = vrot.slane %v61, 4
    %v1169 = vsel %vm1078, %v1166, %v1168
    %v1170 = vrot.slane %v62, 4
    %v1171 = vsel %vm1078, %v1168, %v1170
    %v1172 = vrot.slane %v63, 4
    %v1173 = vsel %vm1078, %v1170, %v1172
    %v1174 = vrot.slane %v64, 4
    %v1175 = vsel %vm1078, %v1172, %v1174
    %v1176 = vrot.slane %v65, 4
    %v1177 = vsel %vm1078, %v1174, %v1176
    %v1178 = vrot.slane %v66, 4
    %v1179 = vsel %vm1078, %v1176, %v1178
    %v1180 = vrot.slane %v67, 4
    %v1181 = vsel %vm1078, %v1178, %v1180
    %v1182 = vrot.slane %v68, 4
    %v1183 = vsel %vm1078, %v1180, %v1182
    %v1184 = vrot.slane %v69, 4
    %v1185 = vsel %vm1078, %v1182, %v1184
    %v1186 = vrot.slane %v70, 4
    %v1187 = vsel %vm1078, %v1184, %v1186
    %v1188 = vrot.slane %v71, 4
    %v1189 = vsel %vm1078, %v1186, %v1188
    %v1190 = vrot.slane %v72, 4
    %v1191 = vsel %vm1078, %v1188, %v1190
    %v1192 = vrot.slane %v73, 4
    %v1193 = vsel %vm1078, %v1190, %v1192
    %v1194 = vrot.slane %v74, 4
    %v1195 = vsel %vm1078, %v1192, %v1194
    %v1196 = vrot.slane %v75, 4
    %v1197 = vsel %vm1078, %v1194, %v1196
    %v1198 = vrot.slane %v76, 4
    %v1199 = vsel %vm1078, %v1196, %v1198
    %v1200 = vrot.slane %v77, 4
    %v1201 = vsel %vm1078, %v1198, %v1200
    %v1202 = vrot.slane %v78, 4
    %v1203 = vsel %vm1078, %v1200, %v1202
    %1204 = vrot.lane.b32.xlu0 %v1081, 64
    %v1205 = vpop.permute.xlu0 %1204
    %1206 = vrot.lane.b32.xlu0 %v1083, 64
    %v1207 = vpop.permute.xlu0 %1206
    %1208 = vrot.lane.b32.xlu0 %v1085, 64
    %v1209 = vpop.permute.xlu0 %1208
    %1210 = vrot.lane.b32.xlu0 %v1087, 64
    %v1211 = vpop.permute.xlu0 %1210
    %1212 = vrot.lane.b32.xlu0 %v1089, 64
    %v1213 = vpop.permute.xlu0 %1212
    %1214 = vrot.lane.b32.xlu0 %v1091, 64
    %v1215 = vpop.permute.xlu0 %1214
    %1216 = vrot.lane.b32.xlu0 %v1093, 64
    %v1217 = vpop.permute.xlu0 %1216
    %1218 = vrot.lane.b32.xlu0 %v1095, 64
    %v1219 = vpop.permute.xlu0 %1218
    %1220 = vrot.lane.b32.xlu0 %v1097, 64
    %v1221 = vpop.permute.xlu0 %1220
    %1222 = vrot.lane.b32.xlu0 %v1099, 64
    %v1223 = vpop.permute.xlu0 %1222
    %1224 = vrot.lane.b32.xlu0 %v1101, 64
    %v1225 = vpop.permute.xlu0 %1224
    %1226 = vrot.lane.b32.xlu0 %v1103, 64
    %v1227 = vpop.permute.xlu0 %1226
    %1228 = vrot.lane.b32.xlu0 %v1105, 64
    %v1229 = vpop.permute.xlu0 %1228
    %1230 = vrot.lane.b32.xlu0 %v1107, 64
    %v1231 = vpop.permute.xlu0 %1230
    %1232 = vrot.lane.b32.xlu0 %v1109, 64
    %v1233 = vpop.permute.xlu0 %1232
    %1234 = vrot.lane.b32.xlu0 %v1111, 64
    %v1235 = vpop.permute.xlu0 %1234
    %1236 = vrot.lane.b32.xlu0 %v1113, 64
    %v1237 = vpop.permute.xlu0 %1236
    %1238 = vrot.lane.b32.xlu0 %v1115, 64
    %v1239 = vpop.permute.xlu0 %1238
    %1240 = vrot.lane.b32.xlu0 %v1117, 64
    %v1241 = vpop.permute.xlu0 %1240
    %1242 = vrot.lane.b32.xlu0 %v1119, 64
    %v1243 = vpop.permute.xlu0 %1242
    %1244 = vrot.lane.b32.xlu0 %v1121, 64
    %v1245 = vpop.permute.xlu0 %1244
    %1246 = vrot.lane.b32.xlu0 %v1123, 64
    %v1247 = vpop.permute.xlu0 %1246
    %1248 = vrot.lane.b32.xlu0 %v1125, 64
    %v1249 = vpop.permute.xlu0 %1248
    %1250 = vrot.lane.b32.xlu0 %v1127, 64
    %v1251 = vpop.permute.xlu0 %1250
    %1252 = vrot.lane.b32.xlu0 %v1129, 64
    %v1253 = vpop.permute.xlu0 %1252
    %1254 = vrot.lane.b32.xlu0 %v1131, 64
    %v1255 = vpop.permute.xlu0 %1254
    %1256 = vrot.lane.b32.xlu0 %v1133, 64
    %v1257 = vpop.permute.xlu0 %1256
    %1258 = vrot.lane.b32.xlu0 %v1135, 64
    %v1259 = vpop.permute.xlu0 %1258
    %1260 = vrot.lane.b32.xlu0 %v1137, 64
    %v1261 = vpop.permute.xlu0 %1260
    %1262 = vrot.lane.b32.xlu0 %v1139, 64
    %v1263 = vpop.permute.xlu0 %1262
    %1264 = vrot.lane.b32.xlu0 %v1141, 64
    %v1265 = vpop.permute.xlu0 %1264
    %1266 = vrot.lane.b32.xlu0 %v1143, 64
    %v1267 = vpop.permute.xlu0 %1266
    %1268 = vrot.lane.b32.xlu0 %v1145, 64
    %v1269 = vpop.permute.xlu0 %1268
    %1270 = vrot.lane.b32.xlu0 %v1147, 64
    %v1271 = vpop.permute.xlu0 %1270
    %1272 = vrot.lane.b32.xlu0 %v1149, 64
    %v1273 = vpop.permute.xlu0 %1272
    %1274 = vrot.lane.b32.xlu0 %v1151, 64
    %v1275 = vpop.permute.xlu0 %1274
    %1276 = vrot.lane.b32.xlu0 %v1153, 64
    %v1277 = vpop.permute.xlu0 %1276
    %1278 = vrot.lane.b32.xlu0 %v1155, 64
    %v1279 = vpop.permute.xlu0 %1278
    %1280 = vrot.lane.b32.xlu0 %v1157, 64
    %v1281 = vpop.permute.xlu0 %1280
    %1282 = vrot.lane.b32.xlu0 %v1159, 64
    %v1283 = vpop.permute.xlu0 %1282
    %1284 = vrot.lane.b32.xlu0 %v1161, 64
    %v1285 = vpop.permute.xlu0 %1284
    %1286 = vrot.lane.b32.xlu0 %v1163, 64
    %v1287 = vpop.permute.xlu0 %1286
    %1288 = vrot.lane.b32.xlu0 %v1165, 64
    %v1289 = vpop.permute.xlu0 %1288
    %1290 = vrot.lane.b32.xlu0 %v1167, 64
    %v1291 = vpop.permute.xlu0 %1290
    %1292 = vrot.lane.b32.xlu0 %v1169, 64
    %v1293 = vpop.permute.xlu0 %1292
    %1294 = vrot.lane.b32.xlu0 %v1171, 64
    %v1295 = vpop.permute.xlu0 %1294
    %1296 = vrot.lane.b32.xlu0 %v1173, 64
    %v1297 = vpop.permute.xlu0 %1296
    %1298 = vrot.lane.b32.xlu0 %v1175, 64
    %v1299 = vpop.permute.xlu0 %1298
    %1300 = vrot.lane.b32.xlu0 %v1177, 64
    %v1301 = vpop.permute.xlu0 %1300
    %1302 = vrot.lane.b32.xlu0 %v1179, 64
    %v1303 = vpop.permute.xlu0 %1302
    %1304 = vrot.lane.b32.xlu0 %v1181, 64
    %v1305 = vpop.permute.xlu0 %1304
    %1306 = vrot.lane.b32.xlu0 %v1183, 64
    %v1307 = vpop.permute.xlu0 %1306
    %1308 = vrot.lane.b32.xlu0 %v1185, 64
    %v1309 = vpop.permute.xlu0 %1308
    %1310 = vrot.lane.b32.xlu0 %v1187, 64
    %v1311 = vpop.permute.xlu0 %1310
    %1312 = vrot.lane.b32.xlu0 %v1189, 64
    %v1313 = vpop.permute.xlu0 %1312
    %1314 = vrot.lane.b32.xlu0 %v1191, 64
    %v1315 = vpop.permute.xlu0 %1314
    %1316 = vrot.lane.b32.xlu0 %v1193, 64
    %v1317 = vpop.permute.xlu0 %1316
    %1318 = vrot.lane.b32.xlu0 %v1195, 64
    %v1319 = vpop.permute.xlu0 %1318
    %1320 = vrot.lane.b32.xlu0 %v1197, 64
    %v1321 = vpop.permute.xlu0 %1320
    %1322 = vrot.lane.b32.xlu0 %v1199, 64
    %v1323 = vpop.permute.xlu0 %1322
    %1324 = vrot.lane.b32.xlu0 %v1201, 64
    %v1325 = vpop.permute.xlu0 %1324
    %1326 = vrot.lane.b32.xlu0 %v1203, 64
    %v1327 = vpop.permute.xlu0 %1326
    %vm1390 = vcmask 130048
    %v1391 = vsel %vm1390, %v16, %v269
    %v1392 = vsel %vm1390, %v17, %v271
    %v1393 = vsel %vm1390, %v18, %v273
    %v1394 = vsel %vm1390, %v19, %v275
    %v1395 = vsel %vm1390, %v20, %v277
    %v1396 = vsel %vm1390, %v21, %v279
    %v1397 = vsel %vm1390, %v22, %v281
    %v1398 = vsel %vm1390, %v23, %v283
    %v1399 = vsel %vm1390, %v24, %v285
    %v1400 = vsel %vm1390, %v25, %v287
    %v1401 = vsel %vm1390, %v26, %v289
    %v1402 = vsel %vm1390, %v27, %v291
    %v1403 = vsel %vm1390, %v28, %v293
    %v1404 = vsel %vm1390, %v29, %v295
    %v1405 = vsel %vm1390, %v30, %v297
    %v1406 = vsel %vm1390, %v31, %v299
    %v1407 = vsel %vm1390, %v32, %v301
    %v1408 = vsel %vm1390, %v33, %v303
    %v1409 = vsel %vm1390, %v34, %v305
    %v1410 = vsel %vm1390, %v35, %v307
    %v1411 = vsel %vm1390, %v36, %v309
    %v1412 = vsel %vm1390, %v37, %v311
    %v1413 = vsel %vm1390, %v38, %v313
    %v1414 = vsel %vm1390, %v39, %v315
    %v1415 = vsel %vm1390, %v40, %v317
    %v1416 = vsel %vm1390, %v41, %v319
    %v1417 = vsel %vm1390, %v42, %v321
    %v1418 = vsel %vm1390, %v43, %v323
    %v1419 = vsel %vm1390, %v44, %v325
    %v1420 = vsel %vm1390, %v45, %v327
    %v1421 = vsel %vm1390, %v46, %v329
    %v1422 = vsel %vm1390, %v47, %v331
    %v1423 = vsel %vm1390, %v48, %v333
    %v1424 = vsel %vm1390, %v49, %v335
    %v1425 = vsel %vm1390, %v50, %v337
    %v1426 = vsel %vm1390, %v51, %v339
    %v1427 = vsel %vm1390, %v52, %v341
    %v1428 = vsel %vm1390, %v53, %v343
    %v1429 = vsel %vm1390, %v54, %v345
    %v1430 = vsel %vm1390, %v55, %v347
    %v1431 = vsel %vm1390, %v56, %v349
    %v1432 = vsel %vm1390, %v57, %v351
    %v1433 = vsel %vm1390, %v58, %v353
    %v1434 = vsel %vm1390, %v59, %v355
    %v1435 = vsel %vm1390, %v60, %v357
    %v1436 = vsel %vm1390, %v61, %v359
    %v1437 = vsel %vm1390, %v62, %v361
    %v1438 = vsel %vm1390, %v63, %v363
    %v1439 = vsel %vm1390, %v64, %v365
    %v1440 = vsel %vm1390, %v65, %v367
    %v1441 = vsel %vm1390, %v66, %v369
    %v1442 = vsel %vm1390, %v67, %v371
    %v1443 = vsel %vm1390, %v68, %v373
    %v1444 = vsel %vm1390, %v69, %v375
    %v1445 = vsel %vm1390, %v70, %v377
    %v1446 = vsel %vm1390, %v71, %v379
    %v1447 = vsel %vm1390, %v72, %v381
    %v1448 = vsel %vm1390, %v73, %v383
    %v1449 = vsel %vm1390, %v74, %v385
    %v1450 = vsel %vm1390, %v75, %v387
    %v1451 = vsel %vm1390, %v76, %v389
    %v1452 = vsel %vm1390, %v77, %v391
    %vm1453 = vcmask 261120
    %v1454 = vsel %vm1453, %v1391, %v581
    %v1455 = vsel %vm1453, %v1392, %v583
    %v1456 = vsel %vm1453, %v1393, %v585
    %v1457 = vsel %vm1453, %v1394, %v587
    %v1458 = vsel %vm1453, %v1395, %v589
    %v1459 = vsel %vm1453, %v1396, %v591
    %v1460 = vsel %vm1453, %v1397, %v593
    %v1461 = vsel %vm1453, %v1398, %v595
    %v1462 = vsel %vm1453, %v1399, %v597
    %v1463 = vsel %vm1453, %v1400, %v599
    %v1464 = vsel %vm1453, %v1401, %v601
    %v1465 = vsel %vm1453, %v1402, %v603
    %v1466 = vsel %vm1453, %v1403, %v605
    %v1467 = vsel %vm1453, %v1404, %v607
    %v1468 = vsel %vm1453, %v1405, %v609
    %v1469 = vsel %vm1453, %v1406, %v611
    %v1470 = vsel %vm1453, %v1407, %v613
    %v1471 = vsel %vm1453, %v1408, %v615
    %v1472 = vsel %vm1453, %v1409, %v617
    %v1473 = vsel %vm1453, %v1410, %v619
    %v1474 = vsel %vm1453, %v1411, %v621
    %v1475 = vsel %vm1453, %v1412, %v623
    %v1476 = vsel %vm1453, %v1413, %v625
    %v1477 = vsel %vm1453, %v1414, %v627
    %v1478 = vsel %vm1453, %v1415, %v629
    %v1479 = vsel %vm1453, %v1416, %v631
    %v1480 = vsel %vm1453, %v1417, %v633
    %v1481 = vsel %vm1453, %v1418, %v635
    %v1482 = vsel %vm1453, %v1419, %v637
    %v1483 = vsel %vm1453, %v1420, %v639
    %v1484 = vsel %vm1453, %v1421, %v641
    %v1485 = vsel %vm1453, %v1422, %v643
    %v1486 = vsel %vm1453, %v1423, %v645
    %v1487 = vsel %vm1453, %v1424, %v647
    %v1488 = vsel %vm1453, %v1425, %v649
    %v1489 = vsel %vm1453, %v1426, %v651
    %v1490 = vsel %vm1453, %v1427, %v653
    %v1491 = vsel %vm1453, %v1428, %v655
    %v1492 = vsel %vm1453, %v1429, %v657
    %v1493 = vsel %vm1453, %v1430, %v659
    %v1494 = vsel %vm1453, %v1431, %v661
    %v1495 = vsel %vm1453, %v1432, %v663
    %v1496 = vsel %vm1453, %v1433, %v665
    %v1497 = vsel %vm1453, %v1434, %v667
    %v1498 = vsel %vm1453, %v1435, %v669
    %v1499 = vsel %vm1453, %v1436, %v671
    %v1500 = vsel %vm1453, %v1437, %v673
    %v1501 = vsel %vm1453, %v1438, %v675
    %v1502 = vsel %vm1453, %v1439, %v677
    %v1503 = vsel %vm1453, %v1440, %v679
    %v1504 = vsel %vm1453, %v1441, %v681
    %v1505 = vsel %vm1453, %v1442, %v683
    %v1506 = vsel %vm1453, %v1443, %v685
    %v1507 = vsel %vm1453, %v1444, %v687
    %v1508 = vsel %vm1453, %v1445, %v689
    %v1509 = vsel %vm1453, %v1446, %v691
    %v1510 = vsel %vm1453, %v1447, %v693
    %v1511 = vsel %vm1453, %v1448, %v695
    %v1512 = vsel %vm1453, %v1449, %v697
    %v1513 = vsel %vm1453, %v1450, %v699
    %v1514 = vsel %vm1453, %v1451, %v701
    %v1515 = vsel %vm1453, %v1452, %v703
    %vm1516 = vcmask 392192
    %v1517 = vsel %vm1516, %v1454, %v893
    %v1518 = vsel %vm1516, %v1455, %v895
    %v1519 = vsel %vm1516, %v1456, %v897
    %v1520 = vsel %vm1516, %v1457, %v899
    %v1521 = vsel %vm1516, %v1458, %v901
    %v1522 = vsel %vm1516, %v1459, %v903
    %v1523 = vsel %vm1516, %v1460, %v905
    %v1524 = vsel %vm1516, %v1461, %v907
    %v1525 = vsel %vm1516, %v1462, %v909
    %v1526 = vsel %vm1516, %v1463, %v911
    %v1527 = vsel %vm1516, %v1464, %v913
    %v1528 = vsel %vm1516, %v1465, %v915
    %v1529 = vsel %vm1516, %v1466, %v917
    %v1530 = vsel %vm1516, %v1467, %v919
    %v1531 = vsel %vm1516, %v1468, %v921
    %v1532 = vsel %vm1516, %v1469, %v923
    %v1533 = vsel %vm1516, %v1470, %v925
    %v1534 = vsel %vm1516, %v1471, %v927
    %v1535 = vsel %vm1516, %v1472, %v929
    %v1536 = vsel %vm1516, %v1473, %v931
    %v1537 = vsel %vm1516, %v1474, %v933
    %v1538 = vsel %vm1516, %v1475, %v935
    %v1539 = vsel %vm1516, %v1476, %v937
    %v1540 = vsel %vm1516, %v1477, %v939
    %v1541 = vsel %vm1516, %v1478, %v941
    %v1542 = vsel %vm1516, %v1479, %v943
    %v1543 = vsel %vm1516, %v1480, %v945
    %v1544 = vsel %vm1516, %v1481, %v947
    %v1545 = vsel %vm1516, %v1482, %v949
    %v1546 = vsel %vm1516, %v1483, %v951
    %v1547 = vsel %vm1516, %v1484, %v953
    %v1548 = vsel %vm1516, %v1485, %v955
    %v1549 = vsel %vm1516, %v1486, %v957
    %v1550 = vsel %vm1516, %v1487, %v959
    %v1551 = vsel %vm1516, %v1488, %v961
    %v1552 = vsel %vm1516, %v1489, %v963
    %v1553 = vsel %vm1516, %v1490, %v965
    %v1554 = vsel %vm1516, %v1491, %v967
    %v1555 = vsel %vm1516, %v1492, %v969
    %v1556 = vsel %vm1516, %v1493, %v971
    %v1557 = vsel %vm1516, %v1494, %v973
    %v1558 = vsel %vm1516, %v1495, %v975
    %v1559 = vsel %vm1516, %v1496, %v977
    %v1560 = vsel %vm1516, %v1497, %v979
    %v1561 = vsel %vm1516, %v1498, %v981
    %v1562 = vsel %vm1516, %v1499, %v983
    %v1563 = vsel %vm1516, %v1500, %v985
    %v1564 = vsel %vm1516, %v1501, %v987
    %v1565 = vsel %vm1516, %v1502, %v989
    %v1566 = vsel %vm1516, %v1503, %v991
    %v1567 = vsel %vm1516, %v1504, %v993
    %v1568 = vsel %vm1516, %v1505, %v995
    %v1569 = vsel %vm1516, %v1506, %v997
    %v1570 = vsel %vm1516, %v1507, %v999
    %v1571 = vsel %vm1516, %v1508, %v1001
    %v1572 = vsel %vm1516, %v1509, %v1003
    %v1573 = vsel %vm1516, %v1510, %v1005
    %v1574 = vsel %vm1516, %v1511, %v1007
    %v1575 = vsel %vm1516, %v1512, %v1009
    %v1576 = vsel %vm1516, %v1513, %v1011
    %v1577 = vsel %vm1516, %v1514, %v1013
    %v1578 = vsel %vm1516, %v1515, %v1015
    %vm1579 = vcmask 523264
    %v1580 = vsel %vm1579, %v1517, %v1205
    %v1581 = vsel %vm1579, %v1518, %v1207
    %v1582 = vsel %vm1579, %v1519, %v1209
    %v1583 = vsel %vm1579, %v1520, %v1211
    %v1584 = vsel %vm1579, %v1521, %v1213
    %v1585 = vsel %vm1579, %v1522, %v1215
    %v1586 = vsel %vm1579, %v1523, %v1217
    %v1587 = vsel %vm1579, %v1524, %v1219
    %v1588 = vsel %vm1579, %v1525, %v1221
    %v1589 = vsel %vm1579, %v1526, %v1223
    %v1590 = vsel %vm1579, %v1527, %v1225
    %v1591 = vsel %vm1579, %v1528, %v1227
    %v1592 = vsel %vm1579, %v1529, %v1229
    %v1593 = vsel %vm1579, %v1530, %v1231
    %v1594 = vsel %vm1579, %v1531, %v1233
    %v1595 = vsel %vm1579, %v1532, %v1235
    %v1596 = vsel %vm1579, %v1533, %v1237
    %v1597 = vsel %vm1579, %v1534, %v1239
    %v1598 = vsel %vm1579, %v1535, %v1241
    %v1599 = vsel %vm1579, %v1536, %v1243
    %v1600 = vsel %vm1579, %v1537, %v1245
    %v1601 = vsel %vm1579, %v1538, %v1247
    %v1602 = vsel %vm1579, %v1539, %v1249
    %v1603 = vsel %vm1579, %v1540, %v1251
    %v1604 = vsel %vm1579, %v1541, %v1253
    %v1605 = vsel %vm1579, %v1542, %v1255
    %v1606 = vsel %vm1579, %v1543, %v1257
    %v1607 = vsel %vm1579, %v1544, %v1259
    %v1608 = vsel %vm1579, %v1545, %v1261
    %v1609 = vsel %vm1579, %v1546, %v1263
    %v1610 = vsel %vm1579, %v1547, %v1265
    %v1611 = vsel %vm1579, %v1548, %v1267
    %v1612 = vsel %vm1579, %v1549, %v1269
    %v1613 = vsel %vm1579, %v1550, %v1271
    %v1614 = vsel %vm1579, %v1551, %v1273
    %v1615 = vsel %vm1579, %v1552, %v1275
    %v1616 = vsel %vm1579, %v1553, %v1277
    %v1617 = vsel %vm1579, %v1554, %v1279
    %v1618 = vsel %vm1579, %v1555, %v1281
    %v1619 = vsel %vm1579, %v1556, %v1283
    %v1620 = vsel %vm1579, %v1557, %v1285
    %v1621 = vsel %vm1579, %v1558, %v1287
    %v1622 = vsel %vm1579, %v1559, %v1289
    %v1623 = vsel %vm1579, %v1560, %v1291
    %v1624 = vsel %vm1579, %v1561, %v1293
    %v1625 = vsel %vm1579, %v1562, %v1295
    %v1626 = vsel %vm1579, %v1563, %v1297
    %v1627 = vsel %vm1579, %v1564, %v1299
    %v1628 = vsel %vm1579, %v1565, %v1301
    %v1629 = vsel %vm1579, %v1566, %v1303
    %v1630 = vsel %vm1579, %v1567, %v1305
    %v1631 = vsel %vm1579, %v1568, %v1307
    %v1632 = vsel %vm1579, %v1569, %v1309
    %v1633 = vsel %vm1579, %v1570, %v1311
    %v1634 = vsel %vm1579, %v1571, %v1313
    %v1635 = vsel %vm1579, %v1572, %v1315
    %v1636 = vsel %vm1579, %v1573, %v1317
    %v1637 = vsel %vm1579, %v1574, %v1319
    %v1638 = vsel %vm1579, %v1575, %v1321
    %v1639 = vsel %vm1579, %v1576, %v1323
    %v1640 = vsel %vm1579, %v1577, %v1325
    %v1641 = vsel %vm1579, %v1578, %v1327
    %s1642 = scalar_lea.vmem %s0, 504
    %v1643 = vld [vmem:[%s1642] sm:$0xff]
    %v1644 = vld [vmem:[%s1642 + $0x8] sm:$0xff]
    %v1645 = vld [vmem:[%s1642 + $0x10] sm:$0xff]
    %v1646 = vld [vmem:[%s1642 + $0x18] sm:$0xff]
    %v1647 = vld [vmem:[%s1642 + $0x20] sm:$0xff]
    %v1648 = vld [vmem:[%s1642 + $0x28] sm:$0xff]
    %v1649 = vld [vmem:[%s1642 + $0x30] sm:$0xff]
    %v1650 = vld [vmem:[%s1642 + $0x38] sm:$0xff]
    %v1651 = vld [vmem:[%s1642 + $0x40] sm:$0xff]
    %v1652 = vld [vmem:[%s1642 + $0x48] sm:$0xff]
    %v1653 = vld [vmem:[%s1642 + $0x50] sm:$0xff]
    %v1654 = vld [vmem:[%s1642 + $0x58] sm:$0xff]
    %v1655 = vld [vmem:[%s1642 + $0x60] sm:$0xff]
    %v1656 = vld [vmem:[%s1642 + $0x68] sm:$0xff]
    %v1657 = vld [vmem:[%s1642 + $0x70] sm:$0xff]
    %v1658 = vld [vmem:[%s1642 + $0x78] sm:$0xff]
    %v1659 = vld [vmem:[%s1642 + $0x80] sm:$0xff]
    %v1660 = vld [vmem:[%s1642 + $0x88] sm:$0xff]
    %v1661 = vld [vmem:[%s1642 + $0x90] sm:$0xff]
    %v1662 = vld [vmem:[%s1642 + $0x98] sm:$0xff]
    %v1663 = vld [vmem:[%s1642 + $0xa0] sm:$0xff]
    %v1664 = vld [vmem:[%s1642 + $0xa8] sm:$0xff]
    %v1665 = vld [vmem:[%s1642 + $0xb0] sm:$0xff]
    %v1666 = vld [vmem:[%s1642 + $0xb8] sm:$0xff]
    %v1667 = vld [vmem:[%s1642 + $0xc0] sm:$0xff]
    %v1668 = vld [vmem:[%s1642 + $0xc8] sm:$0xff]
    %v1669 = vld [vmem:[%s1642 + $0xd0] sm:$0xff]
    %v1670 = vld [vmem:[%s1642 + $0xd8] sm:$0xff]
    %v1671 = vld [vmem:[%s1642 + $0xe0] sm:$0xff]
    %v1672 = vld [vmem:[%s1642 + $0xe8] sm:$0xff]
    %v1673 = vld [vmem:[%s1642 + $0xf0] sm:$0xff]
    %v1674 = vld [vmem:[%s1642 + $0xf8] sm:$0xff]
    %v1675 = vld [vmem:[%s1642 + $0x100] sm:$0xff]
    %v1676 = vld [vmem:[%s1642 + $0x108] sm:$0xff]
    %v1677 = vld [vmem:[%s1642 + $0x110] sm:$0xff]
    %v1678 = vld [vmem:[%s1642 + $0x118] sm:$0xff]
    %v1679 = vld [vmem:[%s1642 + $0x120] sm:$0xff]
    %v1680 = vld [vmem:[%s1642 + $0x128] sm:$0xff]
    %v1681 = vld [vmem:[%s1642 + $0x130] sm:$0xff]
    %v1682 = vld [vmem:[%s1642 + $0x138] sm:$0xff]
    %v1683 = vld [vmem:[%s1642 + $0x140] sm:$0xff]
    %v1684 = vld [vmem:[%s1642 + $0x148] sm:$0xff]
    %v1685 = vld [vmem:[%s1642 + $0x150] sm:$0xff]
    %v1686 = vld [vmem:[%s1642 + $0x158] sm:$0xff]
    %v1687 = vld [vmem:[%s1642 + $0x160] sm:$0xff]
    %v1688 = vld [vmem:[%s1642 + $0x168] sm:$0xff]
    %v1689 = vld [vmem:[%s1642 + $0x170] sm:$0xff]
    %v1690 = vld [vmem:[%s1642 + $0x178] sm:$0xff]
    %v1691 = vld [vmem:[%s1642 + $0x180] sm:$0xff]
    %v1692 = vld [vmem:[%s1642 + $0x188] sm:$0xff]
    %v1693 = vld [vmem:[%s1642 + $0x190] sm:$0xff]
    %v1694 = vld [vmem:[%s1642 + $0x198] sm:$0xff]
    %v1695 = vld [vmem:[%s1642 + $0x1a0] sm:$0xff]
    %v1696 = vld [vmem:[%s1642 + $0x1a8] sm:$0xff]
    %v1697 = vld [vmem:[%s1642 + $0x1b0] sm:$0xff]
    %v1698 = vld [vmem:[%s1642 + $0x1b8] sm:$0xff]
    %v1699 = vld [vmem:[%s1642 + $0x1c0] sm:$0xff]
    %v1700 = vld [vmem:[%s1642 + $0x1c8] sm:$0xff]
    %v1701 = vld [vmem:[%s1642 + $0x1d0] sm:$0xff]
    %v1702 = vld [vmem:[%s1642 + $0x1d8] sm:$0xff]
    %v1703 = vld [vmem:[%s1642 + $0x1e0] sm:$0xff]
    %v1704 = vld [vmem:[%s1642 + $0x1e8] sm:$0xff]
    %v1705 = vld [vmem:[%s1642 + $0x1f0] sm:$0xf]
    %v1769 = vrot.slane %v1643, 1
    %v1770 = vrot.slane %v1644, 1
    %v1771 = vsel %vm142, %v1769, %v1770
    %v1772 = vrot.slane %v1645, 1
    %v1773 = vsel %vm142, %v1770, %v1772
    %v1774 = vrot.slane %v1646, 1
    %v1775 = vsel %vm142, %v1772, %v1774
    %v1776 = vrot.slane %v1647, 1
    %v1777 = vsel %vm142, %v1774, %v1776
    %v1778 = vrot.slane %v1648, 1
    %v1779 = vsel %vm142, %v1776, %v1778
    %v1780 = vrot.slane %v1649, 1
    %v1781 = vsel %vm142, %v1778, %v1780
    %v1782 = vrot.slane %v1650, 1
    %v1783 = vsel %vm142, %v1780, %v1782
    %v1784 = vrot.slane %v1651, 1
    %v1785 = vsel %vm142, %v1782, %v1784
    %v1786 = vrot.slane %v1652, 1
    %v1787 = vsel %vm142, %v1784, %v1786
    %v1788 = vrot.slane %v1653, 1
    %v1789 = vsel %vm142, %v1786, %v1788
    %v1790 = vrot.slane %v1654, 1
    %v1791 = vsel %vm142, %v1788, %v1790
    %v1792 = vrot.slane %v1655, 1
    %v1793 = vsel %vm142, %v1790, %v1792
    %v1794 = vrot.slane %v1656, 1
    %v1795 = vsel %vm142, %v1792, %v1794
    %v1796 = vrot.slane %v1657, 1
    %v1797 = vsel %vm142, %v1794, %v1796
    %v1798 = vrot.slane %v1658, 1
    %v1799 = vsel %vm142, %v1796, %v1798
    %v1800 = vrot.slane %v1659, 1
    %v1801 = vsel %vm142, %v1798, %v1800
    %v1802 = vrot.slane %v1660, 1
    %v1803 = vsel %vm142, %v1800, %v1802
    %v1804 = vrot.slane %v1661, 1
    %v1805 = vsel %vm142, %v1802, %v1804
    %v1806 = vrot.slane %v1662, 1
    %v1807 = vsel %vm142, %v1804, %v1806
    %v1808 = vrot.slane %v1663, 1
    %v1809 = vsel %vm142, %v1806, %v1808
    %v1810 = vrot.slane %v1664, 1
    %v1811 = vsel %vm142, %v1808, %v1810
    %v1812 = vrot.slane %v1665, 1
    %v1813 = vsel %vm142, %v1810, %v1812
    %v1814 = vrot.slane %v1666, 1
    %v1815 = vsel %vm142, %v1812, %v1814
    %v1816 = vrot.slane %v1667, 1
    %v1817 = vsel %vm142, %v1814, %v1816
    %v1818 = vrot.slane %v1668, 1
    %v1819 = vsel %vm142, %v1816, %v1818
    %v1820 = vrot.slane %v1669, 1
    %v1821 = vsel %vm142, %v1818, %v1820
    %v1822 = vrot.slane %v1670, 1
    %v1823 = vsel %vm142, %v1820, %v1822
    %v1824 = vrot.slane %v1671, 1
    %v1825 = vsel %vm142, %v1822, %v1824
    %v1826 = vrot.slane %v1672, 1
    %v1827 = vsel %vm142, %v1824, %v1826
    %v1828 = vrot.slane %v1673, 1
    %v1829 = vsel %vm142, %v1826, %v1828
    %v1830 = vrot.slane %v1674, 1
    %v1831 = vsel %vm142, %v1828, %v1830
    %v1832 = vrot.slane %v1675, 1
    %v1833 = vsel %vm142, %v1830, %v1832
    %v1834 = vrot.slane %v1676, 1
    %v1835 = vsel %vm142, %v1832, %v1834
    %v1836 = vrot.slane %v1677, 1
    %v1837 = vsel %vm142, %v1834, %v1836
    %v1838 = vrot.slane %v1678, 1
    %v1839 = vsel %vm142, %v1836, %v1838
    %v1840 = vrot.slane %v1679, 1
    %v1841 = vsel %vm142, %v1838, %v1840
    %v1842 = vrot.slane %v1680, 1
    %v1843 = vsel %vm142, %v1840, %v1842
    %v1844 = vrot.slane %v1681, 1
    %v1845 = vsel %vm142, %v1842, %v1844
    %v1846 = vrot.slane %v1682, 1
    %v1847 = vsel %vm142, %v1844, %v1846
    %v1848 = vrot.slane %v1683, 1
    %v1849 = vsel %vm142, %v1846, %v1848
    %v1850 = vrot.slane %v1684, 1
    %v1851 = vsel %vm142, %v1848, %v1850
    %v1852 = vrot.slane %v1685, 1
    %v1853 = vsel %vm142, %v1850, %v1852
    %v1854 = vrot.slane %v1686, 1
    %v1855 = vsel %vm142, %v1852, %v1854
    %v1856 = vrot.slane %v1687, 1
    %v1857 = vsel %vm142, %v1854, %v1856
    %v1858 = vrot.slane %v1688, 1
    %v1859 = vsel %vm142, %v1856, %v1858
    %v1860 = vrot.slane %v1689, 1
    %v1861 = vsel %vm142, %v1858, %v1860
    %v1862 = vrot.slane %v1690, 1
    %v1863 = vsel %vm142, %v1860, %v1862
    %v1864 = vrot.slane %v1691, 1
    %v1865 = vsel %vm142, %v1862, %v1864
    %v1866 = vrot.slane %v1692, 1
    %v1867 = vsel %vm142, %v1864, %v1866
    %v1868 = vrot.slane %v1693, 1
    %v1869 = vsel %vm142, %v1866, %v1868
    %v1870 = vrot.slane %v1694, 1
    %v1871 = vsel %vm142, %v1868, %v1870
    %v1872 = vrot.slane %v1695, 1
    %v1873 = vsel %vm142, %v1870, %v1872
    %v1874 = vrot.slane %v1696, 1
    %v1875 = vsel %vm142, %v1872, %v1874
    %v1876 = vrot.slane %v1697, 1
    %v1877 = vsel %vm142, %v1874, %v1876
    %v1878 = vrot.slane %v1698, 1
    %v1879 = vsel %vm142, %v1876, %v1878
    %v1880 = vrot.slane %v1699, 1
    %v1881 = vsel %vm142, %v1878, %v1880
    %v1882 = vrot.slane %v1700, 1
    %v1883 = vsel %vm142, %v1880, %v1882
    %v1884 = vrot.slane %v1701, 1
    %v1885 = vsel %vm142, %v1882, %v1884
    %v1886 = vrot.slane %v1702, 1
    %v1887 = vsel %vm142, %v1884, %v1886
    %v1888 = vrot.slane %v1703, 1
    %v1889 = vsel %vm142, %v1886, %v1888
    %v1890 = vrot.slane %v1704, 1
    %v1891 = vsel %vm142, %v1888, %v1890
    %v1892 = vrot.slane %v1705, 1
    %v1893 = vsel %vm142, %v1890, %v1892
    %1894 = vrot.lane.b32.xlu0 %v1771, 16
    %v1895 = vpop.permute.xlu0 %1894
    %1896 = vrot.lane.b32.xlu0 %v1773, 16
    %v1897 = vpop.permute.xlu0 %1896
    %1898 = vrot.lane.b32.xlu0 %v1775, 16
    %v1899 = vpop.permute.xlu0 %1898
    %1900 = vrot.lane.b32.xlu0 %v1777, 16
    %v1901 = vpop.permute.xlu0 %1900
    %1902 = vrot.lane.b32.xlu0 %v1779, 16
    %v1903 = vpop.permute.xlu0 %1902
    %1904 = vrot.lane.b32.xlu0 %v1781, 16
    %v1905 = vpop.permute.xlu0 %1904
    %1906 = vrot.lane.b32.xlu0 %v1783, 16
    %v1907 = vpop.permute.xlu0 %1906
    %1908 = vrot.lane.b32.xlu0 %v1785, 16
    %v1909 = vpop.permute.xlu0 %1908
    %1910 = vrot.lane.b32.xlu0 %v1787, 16
    %v1911 = vpop.permute.xlu0 %1910
    %1912 = vrot.lane.b32.xlu0 %v1789, 16
    %v1913 = vpop.permute.xlu0 %1912
    %1914 = vrot.lane.b32.xlu0 %v1791, 16
    %v1915 = vpop.permute.xlu0 %1914
    %1916 = vrot.lane.b32.xlu0 %v1793, 16
    %v1917 = vpop.permute.xlu0 %1916
    %1918 = vrot.lane.b32.xlu0 %v1795, 16
    %v1919 = vpop.permute.xlu0 %1918
    %1920 = vrot.lane.b32.xlu0 %v1797, 16
    %v1921 = vpop.permute.xlu0 %1920
    %1922 = vrot.lane.b32.xlu0 %v1799, 16
    %v1923 = vpop.permute.xlu0 %1922
    %1924 = vrot.lane.b32.xlu0 %v1801, 16
    %v1925 = vpop.permute.xlu0 %1924
    %1926 = vrot.lane.b32.xlu0 %v1803, 16
    %v1927 = vpop.permute.xlu0 %1926
    %1928 = vrot.lane.b32.xlu0 %v1805, 16
    %v1929 = vpop.permute.xlu0 %1928
    %1930 = vrot.lane.b32.xlu0 %v1807, 16
    %v1931 = vpop.permute.xlu0 %1930
    %1932 = vrot.lane.b32.xlu0 %v1809, 16
    %v1933 = vpop.permute.xlu0 %1932
    %1934 = vrot.lane.b32.xlu0 %v1811, 16
    %v1935 = vpop.permute.xlu0 %1934
    %1936 = vrot.lane.b32.xlu0 %v1813, 16
    %v1937 = vpop.permute.xlu0 %1936
    %1938 = vrot.lane.b32.xlu0 %v1815, 16
    %v1939 = vpop.permute.xlu0 %1938
    %1940 = vrot.lane.b32.xlu0 %v1817, 16
    %v1941 = vpop.permute.xlu0 %1940
    %1942 = vrot.lane.b32.xlu0 %v1819, 16
    %v1943 = vpop.permute.xlu0 %1942
    %1944 = vrot.lane.b32.xlu0 %v1821, 16
    %v1945 = vpop.permute.xlu0 %1944
    %1946 = vrot.lane.b32.xlu0 %v1823, 16
    %v1947 = vpop.permute.xlu0 %1946
    %1948 = vrot.lane.b32.xlu0 %v1825, 16
    %v1949 = vpop.permute.xlu0 %1948
    %1950 = vrot.lane.b32.xlu0 %v1827, 16
    %v1951 = vpop.permute.xlu0 %1950
    %1952 = vrot.lane.b32.xlu0 %v1829, 16
    %v1953 = vpop.permute.xlu0 %1952
    %1954 = vrot.lane.b32.xlu0 %v1831, 16
    %v1955 = vpop.permute.xlu0 %1954
    %1956 = vrot.lane.b32.xlu0 %v1833, 16
    %v1957 = vpop.permute.xlu0 %1956
    %1958 = vrot.lane.b32.xlu0 %v1835, 16
    %v1959 = vpop.permute.xlu0 %1958
    %1960 = vrot.lane.b32.xlu0 %v1837, 16
    %v1961 = vpop.permute.xlu0 %1960
    %1962 = vrot.lane.b32.xlu0 %v1839, 16
    %v1963 = vpop.permute.xlu0 %1962
    %1964 = vrot.lane.b32.xlu0 %v1841, 16
    %v1965 = vpop.permute.xlu0 %1964
    %1966 = vrot.lane.b32.xlu0 %v1843, 16
    %v1967 = vpop.permute.xlu0 %1966
    %1968 = vrot.lane.b32.xlu0 %v1845, 16
    %v1969 = vpop.permute.xlu0 %1968
    %1970 = vrot.lane.b32.xlu0 %v1847, 16
    %v1971 = vpop.permute.xlu0 %1970
    %1972 = vrot.lane.b32.xlu0 %v1849, 16
    %v1973 = vpop.permute.xlu0 %1972
    %1974 = vrot.lane.b32.xlu0 %v1851, 16
    %v1975 = vpop.permute.xlu0 %1974
    %1976 = vrot.lane.b32.xlu0 %v1853, 16
    %v1977 = vpop.permute.xlu0 %1976
    %1978 = vrot.lane.b32.xlu0 %v1855, 16
    %v1979 = vpop.permute.xlu0 %1978
    %1980 = vrot.lane.b32.xlu0 %v1857, 16
    %v1981 = vpop.permute.xlu0 %1980
    %1982 = vrot.lane.b32.xlu0 %v1859, 16
    %v1983 = vpop.permute.xlu0 %1982
    %1984 = vrot.lane.b32.xlu0 %v1861, 16
    %v1985 = vpop.permute.xlu0 %1984
    %1986 = vrot.lane.b32.xlu0 %v1863, 16
    %v1987 = vpop.permute.xlu0 %1986
    %1988 = vrot.lane.b32.xlu0 %v1865, 16
    %v1989 = vpop.permute.xlu0 %1988
    %1990 = vrot.lane.b32.xlu0 %v1867, 16
    %v1991 = vpop.permute.xlu0 %1990
    %1992 = vrot.lane.b32.xlu0 %v1869, 16
    %v1993 = vpop.permute.xlu0 %1992
    %1994 = vrot.lane.b32.xlu0 %v1871, 16
    %v1995 = vpop.permute.xlu0 %1994
    %1996 = vrot.lane.b32.xlu0 %v1873, 16
    %v1997 = vpop.permute.xlu0 %1996
    %1998 = vrot.lane.b32.xlu0 %v1875, 16
    %v1999 = vpop.permute.xlu0 %1998
    %2000 = vrot.lane.b32.xlu0 %v1877, 16
    %v2001 = vpop.permute.xlu0 %2000
    %2002 = vrot.lane.b32.xlu0 %v1879, 16
    %v2003 = vpop.permute.xlu0 %2002
    %2004 = vrot.lane.b32.xlu0 %v1881, 16
    %v2005 = vpop.permute.xlu0 %2004
    %2006 = vrot.lane.b32.xlu0 %v1883, 16
    %v2007 = vpop.permute.xlu0 %2006
    %2008 = vrot.lane.b32.xlu0 %v1885, 16
    %v2009 = vpop.permute.xlu0 %2008
    %2010 = vrot.lane.b32.xlu0 %v1887, 16
    %v2011 = vpop.permute.xlu0 %2010
    %2012 = vrot.lane.b32.xlu0 %v1889, 16
    %v2013 = vpop.permute.xlu0 %2012
    %2014 = vrot.lane.b32.xlu0 %v1891, 16
    %v2015 = vpop.permute.xlu0 %2014
    %2016 = vrot.lane.b32.xlu0 %v1893, 16
    %v2017 = vpop.permute.xlu0 %2016
    %v2080 = vrot.slane %v1643, 2
    %v2081 = vrot.slane %v1644, 2
    %v2082 = vsel %vm454, %v2080, %v2081
    %v2083 = vrot.slane %v1645, 2
    %v2084 = vsel %vm454, %v2081, %v2083
    %v2085 = vrot.slane %v1646, 2
    %v2086 = vsel %vm454, %v2083, %v2085
    %v2087 = vrot.slane %v1647, 2
    %v2088 = vsel %vm454, %v2085, %v2087
    %v2089 = vrot.slane %v1648, 2
    %v2090 = vsel %vm454, %v2087, %v2089
    %v2091 = vrot.slane %v1649, 2
    %v2092 = vsel %vm454, %v2089, %v2091
    %v2093 = vrot.slane %v1650, 2
    %v2094 = vsel %vm454, %v2091, %v2093
    %v2095 = vrot.slane %v1651, 2
    %v2096 = vsel %vm454, %v2093, %v2095
    %v2097 = vrot.slane %v1652, 2
    %v2098 = vsel %vm454, %v2095, %v2097
    %v2099 = vrot.slane %v1653, 2
    %v2100 = vsel %vm454, %v2097, %v2099
    %v2101 = vrot.slane %v1654, 2
    %v2102 = vsel %vm454, %v2099, %v2101
    %v2103 = vrot.slane %v1655, 2
    %v2104 = vsel %vm454, %v2101, %v2103
    %v2105 = vrot.slane %v1656, 2
    %v2106 = vsel %vm454, %v2103, %v2105
    %v2107 = vrot.slane %v1657, 2
    %v2108 = vsel %vm454, %v2105, %v2107
    %v2109 = vrot.slane %v1658, 2
    %v2110 = vsel %vm454, %v2107, %v2109
    %v2111 = vrot.slane %v1659, 2
    %v2112 = vsel %vm454, %v2109, %v2111
    %v2113 = vrot.slane %v1660, 2
    %v2114 = vsel %vm454, %v2111, %v2113
    %v2115 = vrot.slane %v1661, 2
    %v2116 = vsel %vm454, %v2113, %v2115
    %v2117 = vrot.slane %v1662, 2
    %v2118 = vsel %vm454, %v2115, %v2117
    %v2119 = vrot.slane %v1663, 2
    %v2120 = vsel %vm454, %v2117, %v2119
    %v2121 = vrot.slane %v1664, 2
    %v2122 = vsel %vm454, %v2119, %v2121
    %v2123 = vrot.slane %v1665, 2
    %v2124 = vsel %vm454, %v2121, %v2123
    %v2125 = vrot.slane %v1666, 2
    %v2126 = vsel %vm454, %v2123, %v2125
    %v2127 = vrot.slane %v1667, 2
    %v2128 = vsel %vm454, %v2125, %v2127
    %v2129 = vrot.slane %v1668, 2
    %v2130 = vsel %vm454, %v2127, %v2129
    %v2131 = vrot.slane %v1669, 2
    %v2132 = vsel %vm454, %v2129, %v2131
    %v2133 = vrot.slane %v1670, 2
    %v2134 = vsel %vm454, %v2131, %v2133
    %v2135 = vrot.slane %v1671, 2
    %v2136 = vsel %vm454, %v2133, %v2135
    %v2137 = vrot.slane %v1672, 2
    %v2138 = vsel %vm454, %v2135, %v2137
    %v2139 = vrot.slane %v1673, 2
    %v2140 = vsel %vm454, %v2137, %v2139
    %v2141 = vrot.slane %v1674, 2
    %v2142 = vsel %vm454, %v2139, %v2141
    %v2143 = vrot.slane %v1675, 2
    %v2144 = vsel %vm454, %v2141, %v2143
    %v2145 = vrot.slane %v1676, 2
    %v2146 = vsel %vm454, %v2143, %v2145
    %v2147 = vrot.slane %v1677, 2
    %v2148 = vsel %vm454, %v2145, %v2147
    %v2149 = vrot.slane %v1678, 2
    %v2150 = vsel %vm454, %v2147, %v2149
    %v2151 = vrot.slane %v1679, 2
    %v2152 = vsel %vm454, %v2149, %v2151
    %v2153 = vrot.slane %v1680, 2
    %v2154 = vsel %vm454, %v2151, %v2153
    %v2155 = vrot.slane %v1681, 2
    %v2156 = vsel %vm454, %v2153, %v2155
    %v2157 = vrot.slane %v1682, 2
    %v2158 = vsel %vm454, %v2155, %v2157
    %v2159 = vrot.slane %v1683, 2
    %v2160 = vsel %vm454, %v2157, %v2159
    %v2161 = vrot.slane %v1684, 2
    %v2162 = vsel %vm454, %v2159, %v2161
    %v2163 = vrot.slane %v1685, 2
    %v2164 = vsel %vm454, %v2161, %v2163
    %v2165 = vrot.slane %v1686, 2
    %v2166 = vsel %vm454, %v2163, %v2165
    %v2167 = vrot.slane %v1687, 2
    %v2168 = vsel %vm454, %v2165, %v2167
    %v2169 = vrot.slane %v1688, 2
    %v2170 = vsel %vm454, %v2167, %v2169
    %v2171 = vrot.slane %v1689, 2
    %v2172 = vsel %vm454, %v2169, %v2171
    %v2173 = vrot.slane %v1690, 2
    %v2174 = vsel %vm454, %v2171, %v2173
    %v2175 = vrot.slane %v1691, 2
    %v2176 = vsel %vm454, %v2173, %v2175
    %v2177 = vrot.slane %v1692, 2
    %v2178 = vsel %vm454, %v2175, %v2177
    %v2179 = vrot.slane %v1693, 2
    %v2180 = vsel %vm454, %v2177, %v2179
    %v2181 = vrot.slane %v1694, 2
    %v2182 = vsel %vm454, %v2179, %v2181
    %v2183 = vrot.slane %v1695, 2
    %v2184 = vsel %vm454, %v2181, %v2183
    %v2185 = vrot.slane %v1696, 2
    %v2186 = vsel %vm454, %v2183, %v2185
    %v2187 = vrot.slane %v1697, 2
    %v2188 = vsel %vm454, %v2185, %v2187
    %v2189 = vrot.slane %v1698, 2
    %v2190 = vsel %vm454, %v2187, %v2189
    %v2191 = vrot.slane %v1699, 2
    %v2192 = vsel %vm454, %v2189, %v2191
    %v2193 = vrot.slane %v1700, 2
    %v2194 = vsel %vm454, %v2191, %v2193
    %v2195 = vrot.slane %v1701, 2
    %v2196 = vsel %vm454, %v2193, %v2195
    %v2197 = vrot.slane %v1702, 2
    %v2198 = vsel %vm454, %v2195, %v2197
    %v2199 = vrot.slane %v1703, 2
    %v2200 = vsel %vm454, %v2197, %v2199
    %v2201 = vrot.slane %v1704, 2
    %v2202 = vsel %vm454, %v2199, %v2201
    %v2203 = vrot.slane %v1705, 2
    %v2204 = vsel %vm454, %v2201, %v2203
    %2205 = vrot.lane.b32.xlu0 %v2082, 32
    %v2206 = vpop.permute.xlu0 %2205
    %2207 = vrot.lane.b32.xlu0 %v2084, 32
    %v2208 = vpop.permute.xlu0 %2207
    %2209 = vrot.lane.b32.xlu0 %v2086, 32
    %v2210 = vpop.permute.xlu0 %2209
    %2211 = vrot.lane.b32.xlu0 %v2088, 32
    %v2212 = vpop.permute.xlu0 %2211
    %2213 = vrot.lane.b32.xlu0 %v2090, 32
    %v2214 = vpop.permute.xlu0 %2213
    %2215 = vrot.lane.b32.xlu0 %v2092, 32
    %v2216 = vpop.permute.xlu0 %2215
    %2217 = vrot.lane.b32.xlu0 %v2094, 32
    %v2218 = vpop.permute.xlu0 %2217
    %2219 = vrot.lane.b32.xlu0 %v2096, 32
    %v2220 = vpop.permute.xlu0 %2219
    %2221 = vrot.lane.b32.xlu0 %v2098, 32
    %v2222 = vpop.permute.xlu0 %2221
    %2223 = vrot.lane.b32.xlu0 %v2100, 32
    %v2224 = vpop.permute.xlu0 %2223
    %2225 = vrot.lane.b32.xlu0 %v2102, 32
    %v2226 = vpop.permute.xlu0 %2225
    %2227 = vrot.lane.b32.xlu0 %v2104, 32
    %v2228 = vpop.permute.xlu0 %2227
    %2229 = vrot.lane.b32.xlu0 %v2106, 32
    %v2230 = vpop.permute.xlu0 %2229
    %2231 = vrot.lane.b32.xlu0 %v2108, 32
    %v2232 = vpop.permute.xlu0 %2231
    %2233 = vrot.lane.b32.xlu0 %v2110, 32
    %v2234 = vpop.permute.xlu0 %2233
    %2235 = vrot.lane.b32.xlu0 %v2112, 32
    %v2236 = vpop.permute.xlu0 %2235
    %2237 = vrot.lane.b32.xlu0 %v2114, 32
    %v2238 = vpop.permute.xlu0 %2237
    %2239 = vrot.lane.b32.xlu0 %v2116, 32
    %v2240 = vpop.permute.xlu0 %2239
    %2241 = vrot.lane.b32.xlu0 %v2118, 32
    %v2242 = vpop.permute.xlu0 %2241
    %2243 = vrot.lane.b32.xlu0 %v2120, 32
    %v2244 = vpop.permute.xlu0 %2243
    %2245 = vrot.lane.b32.xlu0 %v2122, 32
    %v2246 = vpop.permute.xlu0 %2245
    %2247 = vrot.lane.b32.xlu0 %v2124, 32
    %v2248 = vpop.permute.xlu0 %2247
    %2249 = vrot.lane.b32.xlu0 %v2126, 32
    %v2250 = vpop.permute.xlu0 %2249
    %2251 = vrot.lane.b32.xlu0 %v2128, 32
    %v2252 = vpop.permute.xlu0 %2251
    %2253 = vrot.lane.b32.xlu0 %v2130, 32
    %v2254 = vpop.permute.xlu0 %2253
    %2255 = vrot.lane.b32.xlu0 %v2132, 32
    %v2256 = vpop.permute.xlu0 %2255
    %2257 = vrot.lane.b32.xlu0 %v2134, 32
    %v2258 = vpop.permute.xlu0 %2257
    %2259 = vrot.lane.b32.xlu0 %v2136, 32
    %v2260 = vpop.permute.xlu0 %2259
    %2261 = vrot.lane.b32.xlu0 %v2138, 32
    %v2262 = vpop.permute.xlu0 %2261
    %2263 = vrot.lane.b32.xlu0 %v2140, 32
    %v2264 = vpop.permute.xlu0 %2263
    %2265 = vrot.lane.b32.xlu0 %v2142, 32
    %v2266 = vpop.permute.xlu0 %2265
    %2267 = vrot.lane.b32.xlu0 %v2144, 32
    %v2268 = vpop.permute.xlu0 %2267
    %2269 = vrot.lane.b32.xlu0 %v2146, 32
    %v2270 = vpop.permute.xlu0 %2269
    %2271 = vrot.lane.b32.xlu0 %v2148, 32
    %v2272 = vpop.permute.xlu0 %2271
    %2273 = vrot.lane.b32.xlu0 %v2150, 32
    %v2274 = vpop.permute.xlu0 %2273
    %2275 = vrot.lane.b32.xlu0 %v2152, 32
    %v2276 = vpop.permute.xlu0 %2275
    %2277 = vrot.lane.b32.xlu0 %v2154, 32
    %v2278 = vpop.permute.xlu0 %2277
    %2279 = vrot.lane.b32.xlu0 %v2156, 32
    %v2280 = vpop.permute.xlu0 %2279
    %2281 = vrot.lane.b32.xlu0 %v2158, 32
    %v2282 = vpop.permute.xlu0 %2281
    %2283 = vrot.lane.b32.xlu0 %v2160, 32
    %v2284 = vpop.permute.xlu0 %2283
    %2285 = vrot.lane.b32.xlu0 %v2162, 32
    %v2286 = vpop.permute.xlu0 %2285
    %2287 = vrot.lane.b32.xlu0 %v2164, 32
    %v2288 = vpop.permute.xlu0 %2287
    %2289 = vrot.lane.b32.xlu0 %v2166, 32
    %v2290 = vpop.permute.xlu0 %2289
    %2291 = vrot.lane.b32.xlu0 %v2168, 32
    %v2292 = vpop.permute.xlu0 %2291
    %2293 = vrot.lane.b32.xlu0 %v2170, 32
    %v2294 = vpop.permute.xlu0 %2293
    %2295 = vrot.lane.b32.xlu0 %v2172, 32
    %v2296 = vpop.permute.xlu0 %2295
    %2297 = vrot.lane.b32.xlu0 %v2174, 32
    %v2298 = vpop.permute.xlu0 %2297
    %2299 = vrot.lane.b32.xlu0 %v2176, 32
    %v2300 = vpop.permute.xlu0 %2299
    %2301 = vrot.lane.b32.xlu0 %v2178, 32
    %v2302 = vpop.permute.xlu0 %2301
    %2303 = vrot.lane.b32.xlu0 %v2180, 32
    %v2304 = vpop.permute.xlu0 %2303
    %2305 = vrot.lane.b32.xlu0 %v2182, 32
    %v2306 = vpop.permute.xlu0 %2305
    %2307 = vrot.lane.b32.xlu0 %v2184, 32
    %v2308 = vpop.permute.xlu0 %2307
    %2309 = vrot.lane.b32.xlu0 %v2186, 32
    %v2310 = vpop.permute.xlu0 %2309
    %2311 = vrot.lane.b32.xlu0 %v2188, 32
    %v2312 = vpop.permute.xlu0 %2311
    %2313 = vrot.lane.b32.xlu0 %v2190, 32
    %v2314 = vpop.permute.xlu0 %2313
    %2315 = vrot.lane.b32.xlu0 %v2192, 32
    %v2316 = vpop.permute.xlu0 %2315
    %2317 = vrot.lane.b32.xlu0 %v2194, 32
    %v2318 = vpop.permute.xlu0 %2317
    %2319 = vrot.lane.b32.xlu0 %v2196, 32
    %v2320 = vpop.permute.xlu0 %2319
    %2321 = vrot.lane.b32.xlu0 %v2198, 32
    %v2322 = vpop.permute.xlu0 %2321
    %2323 = vrot.lane.b32.xlu0 %v2200, 32
    %v2324 = vpop.permute.xlu0 %2323
    %2325 = vrot.lane.b32.xlu0 %v2202, 32
    %v2326 = vpop.permute.xlu0 %2325
    %2327 = vrot.lane.b32.xlu0 %v2204, 32
    %v2328 = vpop.permute.xlu0 %2327
    %v2391 = vrot.slane %v1643, 3
    %v2392 = vrot.slane %v1644, 3
    %v2393 = vsel %vm766, %v2391, %v2392
    %v2394 = vrot.slane %v1645, 3
    %v2395 = vsel %vm766, %v2392, %v2394
    %v2396 = vrot.slane %v1646, 3
    %v2397 = vsel %vm766, %v2394, %v2396
    %v2398 = vrot.slane %v1647, 3
    %v2399 = vsel %vm766, %v2396, %v2398
    %v2400 = vrot.slane %v1648, 3
    %v2401 = vsel %vm766, %v2398, %v2400
    %v2402 = vrot.slane %v1649, 3
    %v2403 = vsel %vm766, %v2400, %v2402
    %v2404 = vrot.slane %v1650, 3
    %v2405 = vsel %vm766, %v2402, %v2404
    %v2406 = vrot.slane %v1651, 3
    %v2407 = vsel %vm766, %v2404, %v2406
    %v2408 = vrot.slane %v1652, 3
    %v2409 = vsel %vm766, %v2406, %v2408
    %v2410 = vrot.slane %v1653, 3
    %v2411 = vsel %vm766, %v2408, %v2410
    %v2412 = vrot.slane %v1654, 3
    %v2413 = vsel %vm766, %v2410, %v2412
    %v2414 = vrot.slane %v1655, 3
    %v2415 = vsel %vm766, %v2412, %v2414
    %v2416 = vrot.slane %v1656, 3
    %v2417 = vsel %vm766, %v2414, %v2416
    %v2418 = vrot.slane %v1657, 3
    %v2419 = vsel %vm766, %v2416, %v2418
    %v2420 = vrot.slane %v1658, 3
    %v2421 = vsel %vm766, %v2418, %v2420
    %v2422 = vrot.slane %v1659, 3
    %v2423 = vsel %vm766, %v2420, %v2422
    %v2424 = vrot.slane %v1660, 3
    %v2425 = vsel %vm766, %v2422, %v2424
    %v2426 = vrot.slane %v1661, 3
    %v2427 = vsel %vm766, %v2424, %v2426
    %v2428 = vrot.slane %v1662, 3
    %v2429 = vsel %vm766, %v2426, %v2428
    %v2430 = vrot.slane %v1663, 3
    %v2431 = vsel %vm766, %v2428, %v2430
    %v2432 = vrot.slane %v1664, 3
    %v2433 = vsel %vm766, %v2430, %v2432
    %v2434 = vrot.slane %v1665, 3
    %v2435 = vsel %vm766, %v2432, %v2434
    %v2436 = vrot.slane %v1666, 3
    %v2437 = vsel %vm766, %v2434, %v2436
    %v2438 = vrot.slane %v1667, 3
    %v2439 = vsel %vm766, %v2436, %v2438
    %v2440 = vrot.slane %v1668, 3
    %v2441 = vsel %vm766, %v2438, %v2440
    %v2442 = vrot.slane %v1669, 3
    %v2443 = vsel %vm766, %v2440, %v2442
    %v2444 = vrot.slane %v1670, 3
    %v2445 = vsel %vm766, %v2442, %v2444
    %v2446 = vrot.slane %v1671, 3
    %v2447 = vsel %vm766, %v2444, %v2446
    %v2448 = vrot.slane %v1672, 3
    %v2449 = vsel %vm766, %v2446, %v2448
    %v2450 = vrot.slane %v1673, 3
    %v2451 = vsel %vm766, %v2448, %v2450
    %v2452 = vrot.slane %v1674, 3
    %v2453 = vsel %vm766, %v2450, %v2452
    %v2454 = vrot.slane %v1675, 3
    %v2455 = vsel %vm766, %v2452, %v2454
    %v2456 = vrot.slane %v1676, 3
    %v2457 = vsel %vm766, %v2454, %v2456
    %v2458 = vrot.slane %v1677, 3
    %v2459 = vsel %vm766, %v2456, %v2458
    %v2460 = vrot.slane %v1678, 3
    %v2461 = vsel %vm766, %v2458, %v2460
    %v2462 = vrot.slane %v1679, 3
    %v2463 = vsel %vm766, %v2460, %v2462
    %v2464 = vrot.slane %v1680, 3
    %v2465 = vsel %vm766, %v2462, %v2464
    %v2466 = vrot.slane %v1681, 3
    %v2467 = vsel %vm766, %v2464, %v2466
    %v2468 = vrot.slane %v1682, 3
    %v2469 = vsel %vm766, %v2466, %v2468
    %v2470 = vrot.slane %v1683, 3
    %v2471 = vsel %vm766, %v2468, %v2470
    %v2472 = vrot.slane %v1684, 3
    %v2473 = vsel %vm766, %v2470, %v2472
    %v2474 = vrot.slane %v1685, 3
    %v2475 = vsel %vm766, %v2472, %v2474
    %v2476 = vrot.slane %v1686, 3
    %v2477 = vsel %vm766, %v2474, %v2476
    %v2478 = vrot.slane %v1687, 3
    %v2479 = vsel %vm766, %v2476, %v2478
    %v2480 = vrot.slane %v1688, 3
    %v2481 = vsel %vm766, %v2478, %v2480
    %v2482 = vrot.slane %v1689, 3
    %v2483 = vsel %vm766, %v2480, %v2482
    %v2484 = vrot.slane %v1690, 3
    %v2485 = vsel %vm766, %v2482, %v2484
    %v2486 = vrot.slane %v1691, 3
    %v2487 = vsel %vm766, %v2484, %v2486
    %v2488 = vrot.slane %v1692, 3
    %v2489 = vsel %vm766, %v2486, %v2488
    %v2490 = vrot.slane %v1693, 3
    %v2491 = vsel %vm766, %v2488, %v2490
    %v2492 = vrot.slane %v1694, 3
    %v2493 = vsel %vm766, %v2490, %v2492
    %v2494 = vrot.slane %v1695, 3
    %v2495 = vsel %vm766, %v2492, %v2494
    %v2496 = vrot.slane %v1696, 3
    %v2497 = vsel %vm766, %v2494, %v2496
    %v2498 = vrot.slane %v1697, 3
    %v2499 = vsel %vm766, %v2496, %v2498
    %v2500 = vrot.slane %v1698, 3
    %v2501 = vsel %vm766, %v2498, %v2500
    %v2502 = vrot.slane %v1699, 3
    %v2503 = vsel %vm766, %v2500, %v2502
    %v2504 = vrot.slane %v1700, 3
    %v2505 = vsel %vm766, %v2502, %v2504
    %v2506 = vrot.slane %v1701, 3
    %v2507 = vsel %vm766, %v2504, %v2506
    %v2508 = vrot.slane %v1702, 3
    %v2509 = vsel %vm766, %v2506, %v2508
    %v2510 = vrot.slane %v1703, 3
    %v2511 = vsel %vm766, %v2508, %v2510
    %v2512 = vrot.slane %v1704, 3
    %v2513 = vsel %vm766, %v2510, %v2512
    %v2514 = vrot.slane %v1705, 3
    %v2515 = vsel %vm766, %v2512, %v2514
    %2516 = vrot.lane.b32.xlu0 %v2393, 48
    %v2517 = vpop.permute.xlu0 %2516
    %2518 = vrot.lane.b32.xlu0 %v2395, 48
    %v2519 = vpop.permute.xlu0 %2518
    %2520 = vrot.lane.b32.xlu0 %v2397, 48
    %v2521 = vpop.permute.xlu0 %2520
    %2522 = vrot.lane.b32.xlu0 %v2399, 48
    %v2523 = vpop.permute.xlu0 %2522
    %2524 = vrot.lane.b32.xlu0 %v2401, 48
    %v2525 = vpop.permute.xlu0 %2524
    %2526 = vrot.lane.b32.xlu0 %v2403, 48
    %v2527 = vpop.permute.xlu0 %2526
    %2528 = vrot.lane.b32.xlu0 %v2405, 48
    %v2529 = vpop.permute.xlu0 %2528
    %2530 = vrot.lane.b32.xlu0 %v2407, 48
    %v2531 = vpop.permute.xlu0 %2530
    %2532 = vrot.lane.b32.xlu0 %v2409, 48
    %v2533 = vpop.permute.xlu0 %2532
    %2534 = vrot.lane.b32.xlu0 %v2411, 48
    %v2535 = vpop.permute.xlu0 %2534
    %2536 = vrot.lane.b32.xlu0 %v2413, 48
    %v2537 = vpop.permute.xlu0 %2536
    %2538 = vrot.lane.b32.xlu0 %v2415, 48
    %v2539 = vpop.permute.xlu0 %2538
    %2540 = vrot.lane.b32.xlu0 %v2417, 48
    %v2541 = vpop.permute.xlu0 %2540
    %2542 = vrot.lane.b32.xlu0 %v2419, 48
    %v2543 = vpop.permute.xlu0 %2542
    %2544 = vrot.lane.b32.xlu0 %v2421, 48
    %v2545 = vpop.permute.xlu0 %2544
    %2546 = vrot.lane.b32.xlu0 %v2423, 48
    %v2547 = vpop.permute.xlu0 %2546
    %2548 = vrot.lane.b32.xlu0 %v2425, 48
    %v2549 = vpop.permute.xlu0 %2548
    %2550 = vrot.lane.b32.xlu0 %v2427, 48
    %v2551 = vpop.permute.xlu0 %2550
    %2552 = vrot.lane.b32.xlu0 %v2429, 48
    %v2553 = vpop.permute.xlu0 %2552
    %2554 = vrot.lane.b32.xlu0 %v2431, 48
    %v2555 = vpop.permute.xlu0 %2554
    %2556 = vrot.lane.b32.xlu0 %v2433, 48
    %v2557 = vpop.permute.xlu0 %2556
    %2558 = vrot.lane.b32.xlu0 %v2435, 48
    %v2559 = vpop.permute.xlu0 %2558
    %2560 = vrot.lane.b32.xlu0 %v2437, 48
    %v2561 = vpop.permute.xlu0 %2560
    %2562 = vrot.lane.b32.xlu0 %v2439, 48
    %v2563 = vpop.permute.xlu0 %2562
    %2564 = vrot.lane.b32.xlu0 %v2441, 48
    %v2565 = vpop.permute.xlu0 %2564
    %2566 = vrot.lane.b32.xlu0 %v2443, 48
    %v2567 = vpop.permute.xlu0 %2566
    %2568 = vrot.lane.b32.xlu0 %v2445, 48
    %v2569 = vpop.permute.xlu0 %2568
    %2570 = vrot.lane.b32.xlu0 %v2447, 48
    %v2571 = vpop.permute.xlu0 %2570
    %2572 = vrot.lane.b32.xlu0 %v2449, 48
    %v2573 = vpop.permute.xlu0 %2572
    %2574 = vrot.lane.b32.xlu0 %v2451, 48
    %v2575 = vpop.permute.xlu0 %2574
    %2576 = vrot.lane.b32.xlu0 %v2453, 48
    %v2577 = vpop.permute.xlu0 %2576
    %2578 = vrot.lane.b32.xlu0 %v2455, 48
    %v2579 = vpop.permute.xlu0 %2578
    %2580 = vrot.lane.b32.xlu0 %v2457, 48
    %v2581 = vpop.permute.xlu0 %2580
    %2582 = vrot.lane.b32.xlu0 %v2459, 48
    %v2583 = vpop.permute.xlu0 %2582
    %2584 = vrot.lane.b32.xlu0 %v2461, 48
    %v2585 = vpop.permute.xlu0 %2584
    %2586 = vrot.lane.b32.xlu0 %v2463, 48
    %v2587 = vpop.permute.xlu0 %2586
    %2588 = vrot.lane.b32.xlu0 %v2465, 48
    %v2589 = vpop.permute.xlu0 %2588
    %2590 = vrot.lane.b32.xlu0 %v2467, 48
    %v2591 = vpop.permute.xlu0 %2590
    %2592 = vrot.lane.b32.xlu0 %v2469, 48
    %v2593 = vpop.permute.xlu0 %2592
    %2594 = vrot.lane.b32.xlu0 %v2471, 48
    %v2595 = vpop.permute.xlu0 %2594
    %2596 = vrot.lane.b32.xlu0 %v2473, 48
    %v2597 = vpop.permute.xlu0 %2596
    %2598 = vrot.lane.b32.xlu0 %v2475, 48
    %v2599 = vpop.permute.xlu0 %2598
    %2600 = vrot.lane.b32.xlu0 %v2477, 48
    %v2601 = vpop.permute.xlu0 %2600
    %2602 = vrot.lane.b32.xlu0 %v2479, 48
    %v2603 = vpop.permute.xlu0 %2602
    %2604 = vrot.lane.b32.xlu0 %v2481, 48
    %v2605 = vpop.permute.xlu0 %2604
    %2606 = vrot.lane.b32.xlu0 %v2483, 48
    %v2607 = vpop.permute.xlu0 %2606
    %2608 = vrot.lane.b32.xlu0 %v2485, 48
    %v2609 = vpop.permute.xlu0 %2608
    %2610 = vrot.lane.b32.xlu0 %v2487, 48
    %v2611 = vpop.permute.xlu0 %2610
    %2612 = vrot.lane.b32.xlu0 %v2489, 48
    %v2613 = vpop.permute.xlu0 %2612
    %2614 = vrot.lane.b32.xlu0 %v2491, 48
    %v2615 = vpop.permute.xlu0 %2614
    %2616 = vrot.lane.b32.xlu0 %v2493, 48
    %v2617 = vpop.permute.xlu0 %2616
    %2618 = vrot.lane.b32.xlu0 %v2495, 48
    %v2619 = vpop.permute.xlu0 %2618
    %2620 = vrot.lane.b32.xlu0 %v2497, 48
    %v2621 = vpop.permute.xlu0 %2620
    %2622 = vrot.lane.b32.xlu0 %v2499, 48
    %v2623 = vpop.permute.xlu0 %2622
    %2624 = vrot.lane.b32.xlu0 %v2501, 48
    %v2625 = vpop.permute.xlu0 %2624
    %2626 = vrot.lane.b32.xlu0 %v2503, 48
    %v2627 = vpop.permute.xlu0 %2626
    %2628 = vrot.lane.b32.xlu0 %v2505, 48
    %v2629 = vpop.permute.xlu0 %2628
    %2630 = vrot.lane.b32.xlu0 %v2507, 48
    %v2631 = vpop.permute.xlu0 %2630
    %2632 = vrot.lane.b32.xlu0 %v2509, 48
    %v2633 = vpop.permute.xlu0 %2632
    %2634 = vrot.lane.b32.xlu0 %v2511, 48
    %v2635 = vpop.permute.xlu0 %2634
    %2636 = vrot.lane.b32.xlu0 %v2513, 48
    %v2637 = vpop.permute.xlu0 %2636
    %2638 = vrot.lane.b32.xlu0 %v2515, 48
    %v2639 = vpop.permute.xlu0 %2638
    %v2702 = vrot.slane %v1643, 4
    %v2703 = vrot.slane %v1644, 4
    %v2704 = vsel %vm1078, %v2702, %v2703
    %v2705 = vrot.slane %v1645, 4
    %v2706 = vsel %vm1078, %v2703, %v2705
    %v2707 = vrot.slane %v1646, 4
    %v2708 = vsel %vm1078, %v2705, %v2707
    %v2709 = vrot.slane %v1647, 4
    %v2710 = vsel %vm1078, %v2707, %v2709
    %v2711 = vrot.slane %v1648, 4
    %v2712 = vsel %vm1078, %v2709, %v2711
    %v2713 = vrot.slane %v1649, 4
    %v2714 = vsel %vm1078, %v2711, %v2713
    %v2715 = vrot.slane %v1650, 4
    %v2716 = vsel %vm1078, %v2713, %v2715
    %v2717 = vrot.slane %v1651, 4
    %v2718 = vsel %vm1078, %v2715, %v2717
    %v2719 = vrot.slane %v1652, 4
    %v2720 = vsel %vm1078, %v2717, %v2719
    %v2721 = vrot.slane %v1653, 4
    %v2722 = vsel %vm1078, %v2719, %v2721
    %v2723 = vrot.slane %v1654, 4
    %v2724 = vsel %vm1078, %v2721, %v2723
    %v2725 = vrot.slane %v1655, 4
    %v2726 = vsel %vm1078, %v2723, %v2725
    %v2727 = vrot.slane %v1656, 4
    %v2728 = vsel %vm1078, %v2725, %v2727
    %v2729 = vrot.slane %v1657, 4
    %v2730 = vsel %vm1078, %v2727, %v2729
    %v2731 = vrot.slane %v1658, 4
    %v2732 = vsel %vm1078, %v2729, %v2731
    %v2733 = vrot.slane %v1659, 4
    %v2734 = vsel %vm1078, %v2731, %v2733
    %v2735 = vrot.slane %v1660, 4
    %v2736 = vsel %vm1078, %v2733, %v2735
    %v2737 = vrot.slane %v1661, 4
    %v2738 = vsel %vm1078, %v2735, %v2737
    %v2739 = vrot.slane %v1662, 4
    %v2740 = vsel %vm1078, %v2737, %v2739
    %v2741 = vrot.slane %v1663, 4
    %v2742 = vsel %vm1078, %v2739, %v2741
    %v2743 = vrot.slane %v1664, 4
    %v2744 = vsel %vm1078, %v2741, %v2743
    %v2745 = vrot.slane %v1665, 4
    %v2746 = vsel %vm1078, %v2743, %v2745
    %v2747 = vrot.slane %v1666, 4
    %v2748 = vsel %vm1078, %v2745, %v2747
    %v2749 = vrot.slane %v1667, 4
    %v2750 = vsel %vm1078, %v2747, %v2749
    %v2751 = vrot.slane %v1668, 4
    %v2752 = vsel %vm1078, %v2749, %v2751
    %v2753 = vrot.slane %v1669, 4
    %v2754 = vsel %vm1078, %v2751, %v2753
    %v2755 = vrot.slane %v1670, 4
    %v2756 = vsel %vm1078, %v2753, %v2755
    %v2757 = vrot.slane %v1671, 4
    %v2758 = vsel %vm1078, %v2755, %v2757
    %v2759 = vrot.slane %v1672, 4
    %v2760 = vsel %vm1078, %v2757, %v2759
    %v2761 = vrot.slane %v1673, 4
    %v2762 = vsel %vm1078, %v2759, %v2761
    %v2763 = vrot.slane %v1674, 4
    %v2764 = vsel %vm1078, %v2761, %v2763
    %v2765 = vrot.slane %v1675, 4
    %v2766 = vsel %vm1078, %v2763, %v2765
    %v2767 = vrot.slane %v1676, 4
    %v2768 = vsel %vm1078, %v2765, %v2767
    %v2769 = vrot.slane %v1677, 4
    %v2770 = vsel %vm1078, %v2767, %v2769
    %v2771 = vrot.slane %v1678, 4
    %v2772 = vsel %vm1078, %v2769, %v2771
    %v2773 = vrot.slane %v1679, 4
    %v2774 = vsel %vm1078, %v2771, %v2773
    %v2775 = vrot.slane %v1680, 4
    %v2776 = vsel %vm1078, %v2773, %v2775
    %v2777 = vrot.slane %v1681, 4
    %v2778 = vsel %vm1078, %v2775, %v2777
    %v2779 = vrot.slane %v1682, 4
    %v2780 = vsel %vm1078, %v2777, %v2779
    %v2781 = vrot.slane %v1683, 4
    %v2782 = vsel %vm1078, %v2779, %v2781
    %v2783 = vrot.slane %v1684, 4
    %v2784 = vsel %vm1078, %v2781, %v2783
    %v2785 = vrot.slane %v1685, 4
    %v2786 = vsel %vm1078, %v2783, %v2785
    %v2787 = vrot.slane %v1686, 4
    %v2788 = vsel %vm1078, %v2785, %v2787
    %v2789 = vrot.slane %v1687, 4
    %v2790 = vsel %vm1078, %v2787, %v2789
    %v2791 = vrot.slane %v1688, 4
    %v2792 = vsel %vm1078, %v2789, %v2791
    %v2793 = vrot.slane %v1689, 4
    %v2794 = vsel %vm1078, %v2791, %v2793
    %v2795 = vrot.slane %v1690, 4
    %v2796 = vsel %vm1078, %v2793, %v2795
    %v2797 = vrot.slane %v1691, 4
    %v2798 = vsel %vm1078, %v2795, %v2797
    %v2799 = vrot.slane %v1692, 4
    %v2800 = vsel %vm1078, %v2797, %v2799
    %v2801 = vrot.slane %v1693, 4
    %v2802 = vsel %vm1078, %v2799, %v2801
    %v2803 = vrot.slane %v1694, 4
    %v2804 = vsel %vm1078, %v2801, %v2803
    %v2805 = vrot.slane %v1695, 4
    %v2806 = vsel %vm1078, %v2803, %v2805
    %v2807 = vrot.slane %v1696, 4
    %v2808 = vsel %vm1078, %v2805, %v2807
    %v2809 = vrot.slane %v1697, 4
    %v2810 = vsel %vm1078, %v2807, %v2809
    %v2811 = vrot.slane %v1698, 4
    %v2812 = vsel %vm1078, %v2809, %v2811
    %v2813 = vrot.slane %v1699, 4
    %v2814 = vsel %vm1078, %v2811, %v2813
    %v2815 = vrot.slane %v1700, 4
    %v2816 = vsel %vm1078, %v2813, %v2815
    %v2817 = vrot.slane %v1701, 4
    %v2818 = vsel %vm1078, %v2815, %v2817
    %v2819 = vrot.slane %v1702, 4
    %v2820 = vsel %vm1078, %v2817, %v2819
    %v2821 = vrot.slane %v1703, 4
    %v2822 = vsel %vm1078, %v2819, %v2821
    %v2823 = vrot.slane %v1704, 4
    %v2824 = vsel %vm1078, %v2821, %v2823
    %v2825 = vrot.slane %v1705, 4
    %v2826 = vsel %vm1078, %v2823, %v2825
    %2827 = vrot.lane.b32.xlu0 %v2704, 64
    %v2828 = vpop.permute.xlu0 %2827
    %2829 = vrot.lane.b32.xlu0 %v2706, 64
    %v2830 = vpop.permute.xlu0 %2829
    %2831 = vrot.lane.b32.xlu0 %v2708, 64
    %v2832 = vpop.permute.xlu0 %2831
    %2833 = vrot.lane.b32.xlu0 %v2710, 64
    %v2834 = vpop.permute.xlu0 %2833
    %2835 = vrot.lane.b32.xlu0 %v2712, 64
    %v2836 = vpop.permute.xlu0 %2835
    %2837 = vrot.lane.b32.xlu0 %v2714, 64
    %v2838 = vpop.permute.xlu0 %2837
    %2839 = vrot.lane.b32.xlu0 %v2716, 64
    %v2840 = vpop.permute.xlu0 %2839
    %2841 = vrot.lane.b32.xlu0 %v2718, 64
    %v2842 = vpop.permute.xlu0 %2841
    %2843 = vrot.lane.b32.xlu0 %v2720, 64
    %v2844 = vpop.permute.xlu0 %2843
    %2845 = vrot.lane.b32.xlu0 %v2722, 64
    %v2846 = vpop.permute.xlu0 %2845
    %2847 = vrot.lane.b32.xlu0 %v2724, 64
    %v2848 = vpop.permute.xlu0 %2847
    %2849 = vrot.lane.b32.xlu0 %v2726, 64
    %v2850 = vpop.permute.xlu0 %2849
    %2851 = vrot.lane.b32.xlu0 %v2728, 64
    %v2852 = vpop.permute.xlu0 %2851
    %2853 = vrot.lane.b32.xlu0 %v2730, 64
    %v2854 = vpop.permute.xlu0 %2853
    %2855 = vrot.lane.b32.xlu0 %v2732, 64
    %v2856 = vpop.permute.xlu0 %2855
    %2857 = vrot.lane.b32.xlu0 %v2734, 64
    %v2858 = vpop.permute.xlu0 %2857
    %2859 = vrot.lane.b32.xlu0 %v2736, 64
    %v2860 = vpop.permute.xlu0 %2859
    %2861 = vrot.lane.b32.xlu0 %v2738, 64
    %v2862 = vpop.permute.xlu0 %2861
    %2863 = vrot.lane.b32.xlu0 %v2740, 64
    %v2864 = vpop.permute.xlu0 %2863
    %2865 = vrot.lane.b32.xlu0 %v2742, 64
    %v2866 = vpop.permute.xlu0 %2865
    %2867 = vrot.lane.b32.xlu0 %v2744, 64
    %v2868 = vpop.permute.xlu0 %2867
    %2869 = vrot.lane.b32.xlu0 %v2746, 64
    %v2870 = vpop.permute.xlu0 %2869
    %2871 = vrot.lane.b32.xlu0 %v2748, 64
    %v2872 = vpop.permute.xlu0 %2871
    %2873 = vrot.lane.b32.xlu0 %v2750, 64
    %v2874 = vpop.permute.xlu0 %2873
    %2875 = vrot.lane.b32.xlu0 %v2752, 64
    %v2876 = vpop.permute.xlu0 %2875
    %2877 = vrot.lane.b32.xlu0 %v2754, 64
    %v2878 = vpop.permute.xlu0 %2877
    %2879 = vrot.lane.b32.xlu0 %v2756, 64
    %v2880 = vpop.permute.xlu0 %2879
    %2881 = vrot.lane.b32.xlu0 %v2758, 64
    %v2882 = vpop.permute.xlu0 %2881
    %2883 = vrot.lane.b32.xlu0 %v2760, 64
    %v2884 = vpop.permute.xlu0 %2883
    %2885 = vrot.lane.b32.xlu0 %v2762, 64
    %v2886 = vpop.permute.xlu0 %2885
    %2887 = vrot.lane.b32.xlu0 %v2764, 64
    %v2888 = vpop.permute.xlu0 %2887
    %2889 = vrot.lane.b32.xlu0 %v2766, 64
    %v2890 = vpop.permute.xlu0 %2889
    %2891 = vrot.lane.b32.xlu0 %v2768, 64
    %v2892 = vpop.permute.xlu0 %2891
    %2893 = vrot.lane.b32.xlu0 %v2770, 64
    %v2894 = vpop.permute.xlu0 %2893
    %2895 = vrot.lane.b32.xlu0 %v2772, 64
    %v2896 = vpop.permute.xlu0 %2895
    %2897 = vrot.lane.b32.xlu0 %v2774, 64
    %v2898 = vpop.permute.xlu0 %2897
    %2899 = vrot.lane.b32.xlu0 %v2776, 64
    %v2900 = vpop.permute.xlu0 %2899
    %2901 = vrot.lane.b32.xlu0 %v2778, 64
    %v2902 = vpop.permute.xlu0 %2901
    %2903 = vrot.lane.b32.xlu0 %v2780, 64
    %v2904 = vpop.permute.xlu0 %2903
    %2905 = vrot.lane.b32.xlu0 %v2782, 64
    %v2906 = vpop.permute.xlu0 %2905
    %2907 = vrot.lane.b32.xlu0 %v2784, 64
    %v2908 = vpop.permute.xlu0 %2907
    %2909 = vrot.lane.b32.xlu0 %v2786, 64
    %v2910 = vpop.permute.xlu0 %2909
    %2911 = vrot.lane.b32.xlu0 %v2788, 64
    %v2912 = vpop.permute.xlu0 %2911
    %2913 = vrot.lane.b32.xlu0 %v2790, 64
    %v2914 = vpop.permute.xlu0 %2913
    %2915 = vrot.lane.b32.xlu0 %v2792, 64
    %v2916 = vpop.permute.xlu0 %2915
    %2917 = vrot.lane.b32.xlu0 %v2794, 64
    %v2918 = vpop.permute.xlu0 %2917
    %2919 = vrot.lane.b32.xlu0 %v2796, 64
    %v2920 = vpop.permute.xlu0 %2919
    %2921 = vrot.lane.b32.xlu0 %v2798, 64
    %v2922 = vpop.permute.xlu0 %2921
    %2923 = vrot.lane.b32.xlu0 %v2800, 64
    %v2924 = vpop.permute.xlu0 %2923
    %2925 = vrot.lane.b32.xlu0 %v2802, 64
    %v2926 = vpop.permute.xlu0 %2925
    %2927 = vrot.lane.b32.xlu0 %v2804, 64
    %v2928 = vpop.permute.xlu0 %2927
    %2929 = vrot.lane.b32.xlu0 %v2806, 64
    %v2930 = vpop.permute.xlu0 %2929
    %2931 = vrot.lane.b32.xlu0 %v2808, 64
    %v2932 = vpop.permute.xlu0 %2931
    %2933 = vrot.lane.b32.xlu0 %v2810, 64
    %v2934 = vpop.permute.xlu0 %2933
    %2935 = vrot.lane.b32.xlu0 %v2812, 64
    %v2936 = vpop.permute.xlu0 %2935
    %2937 = vrot.lane.b32.xlu0 %v2814, 64
    %v2938 = vpop.permute.xlu0 %2937
    %2939 = vrot.lane.b32.xlu0 %v2816, 64
    %v2940 = vpop.permute.xlu0 %2939
    %2941 = vrot.lane.b32.xlu0 %v2818, 64
    %v2942 = vpop.permute.xlu0 %2941
    %2943 = vrot.lane.b32.xlu0 %v2820, 64
    %v2944 = vpop.permute.xlu0 %2943
    %2945 = vrot.lane.b32.xlu0 %v2822, 64
    %v2946 = vpop.permute.xlu0 %2945
    %2947 = vrot.lane.b32.xlu0 %v2824, 64
    %v2948 = vpop.permute.xlu0 %2947
    %2949 = vrot.lane.b32.xlu0 %v2826, 64
    %v2950 = vpop.permute.xlu0 %2949
    %v3013 = vsel %vm1390, %v1643, %v1895
    %v3014 = vsel %vm1390, %v1644, %v1897
    %v3015 = vsel %vm1390, %v1645, %v1899
    %v3016 = vsel %vm1390, %v1646, %v1901
    %v3017 = vsel %vm1390, %v1647, %v1903
    %v3018 = vsel %vm1390, %v1648, %v1905
    %v3019 = vsel %vm1390, %v1649, %v1907
    %v3020 = vsel %vm1390, %v1650, %v1909
    %v3021 = vsel %vm1390, %v1651, %v1911
    %v3022 = vsel %vm1390, %v1652, %v1913
    %v3023 = vsel %vm1390, %v1653, %v1915
    %v3024 = vsel %vm1390, %v1654, %v1917
    %v3025 = vsel %vm1390, %v1655, %v1919
    %v3026 = vsel %vm1390, %v1656, %v1921
    %v3027 = vsel %vm1390, %v1657, %v1923
    %v3028 = vsel %vm1390, %v1658, %v1925
    %v3029 = vsel %vm1390, %v1659, %v1927
    %v3030 = vsel %vm1390, %v1660, %v1929
    %v3031 = vsel %vm1390, %v1661, %v1931
    %v3032 = vsel %vm1390, %v1662, %v1933
    %v3033 = vsel %vm1390, %v1663, %v1935
    %v3034 = vsel %vm1390, %v1664, %v1937
    %v3035 = vsel %vm1390, %v1665, %v1939
    %v3036 = vsel %vm1390, %v1666, %v1941
    %v3037 = vsel %vm1390, %v1667, %v1943
    %v3038 = vsel %vm1390, %v1668, %v1945
    %v3039 = vsel %vm1390, %v1669, %v1947
    %v3040 = vsel %vm1390, %v1670, %v1949
    %v3041 = vsel %vm1390, %v1671, %v1951
    %v3042 = vsel %vm1390, %v1672, %v1953
    %v3043 = vsel %vm1390, %v1673, %v1955
    %v3044 = vsel %vm1390, %v1674, %v1957
    %v3045 = vsel %vm1390, %v1675, %v1959
    %v3046 = vsel %vm1390, %v1676, %v1961
    %v3047 = vsel %vm1390, %v1677, %v1963
    %v3048 = vsel %vm1390, %v1678, %v1965
    %v3049 = vsel %vm1390, %v1679, %v1967
    %v3050 = vsel %vm1390, %v1680, %v1969
    %v3051 = vsel %vm1390, %v1681, %v1971
    %v3052 = vsel %vm1390, %v1682, %v1973
    %v3053 = vsel %vm1390, %v1683, %v1975
    %v3054 = vsel %vm1390, %v1684, %v1977
    %v3055 = vsel %vm1390, %v1685, %v1979
    %v3056 = vsel %vm1390, %v1686, %v1981
    %v3057 = vsel %vm1390, %v1687, %v1983
    %v3058 = vsel %vm1390, %v1688, %v1985
    %v3059 = vsel %vm1390, %v1689, %v1987
    %v3060 = vsel %vm1390, %v1690, %v1989
    %v3061 = vsel %vm1390, %v1691, %v1991
    %v3062 = vsel %vm1390, %v1692, %v1993
    %v3063 = vsel %vm1390, %v1693, %v1995
    %v3064 = vsel %vm1390, %v1694, %v1997
    %v3065 = vsel %vm1390, %v1695, %v1999
    %v3066 = vsel %vm1390, %v1696, %v2001
    %v3067 = vsel %vm1390, %v1697, %v2003
    %v3068 = vsel %vm1390, %v1698, %v2005
    %v3069 = vsel %vm1390, %v1699, %v2007
    %v3070 = vsel %vm1390, %v1700, %v2009
    %v3071 = vsel %vm1390, %v1701, %v2011
    %v3072 = vsel %vm1390, %v1702, %v2013
    %v3073 = vsel %vm1390, %v1703, %v2015
    %v3074 = vsel %vm1390, %v1704, %v2017
    %v3075 = vsel %vm1453, %v3013, %v2206
    %v3076 = vsel %vm1453, %v3014, %v2208
    %v3077 = vsel %vm1453, %v3015, %v2210
    %v3078 = vsel %vm1453, %v3016, %v2212
    %v3079 = vsel %vm1453, %v3017, %v2214
    %v3080 = vsel %vm1453, %v3018, %v2216
    %v3081 = vsel %vm1453, %v3019, %v2218
    %v3082 = vsel %vm1453, %v3020, %v2220
    %v3083 = vsel %vm1453, %v3021, %v2222
    %v3084 = vsel %vm1453, %v3022, %v2224
    %v3085 = vsel %vm1453, %v3023, %v2226
    %v3086 = vsel %vm1453, %v3024, %v2228
    %v3087 = vsel %vm1453, %v3025, %v2230
    %v3088 = vsel %vm1453, %v3026, %v2232
    %v3089 = vsel %vm1453, %v3027, %v2234
    %v3090 = vsel %vm1453, %v3028, %v2236
    %v3091 = vsel %vm1453, %v3029, %v2238
    %v3092 = vsel %vm1453, %v3030, %v2240
    %v3093 = vsel %vm1453, %v3031, %v2242
    %v3094 = vsel %vm1453, %v3032, %v2244
    %v3095 = vsel %vm1453, %v3033, %v2246
    %v3096 = vsel %vm1453, %v3034, %v2248
    %v3097 = vsel %vm1453, %v3035, %v2250
    %v3098 = vsel %vm1453, %v3036, %v2252
    %v3099 = vsel %vm1453, %v3037, %v2254
    %v3100 = vsel %vm1453, %v3038, %v2256
    %v3101 = vsel %vm1453, %v3039, %v2258
    %v3102 = vsel %vm1453, %v3040, %v2260
    %v3103 = vsel %vm1453, %v3041, %v2262
    %v3104 = vsel %vm1453, %v3042, %v2264
    %v3105 = vsel %vm1453, %v3043, %v2266
    %v3106 = vsel %vm1453, %v3044, %v2268
    %v3107 = vsel %vm1453, %v3045, %v2270
    %v3108 = vsel %vm1453, %v3046, %v2272
    %v3109 = vsel %vm1453, %v3047, %v2274
    %v3110 = vsel %vm1453, %v3048, %v2276
    %v3111 = vsel %vm1453, %v3049, %v2278
    %v3112 = vsel %vm1453, %v3050, %v2280
    %v3113 = vsel %vm1453, %v3051, %v2282
    %v3114 = vsel %vm1453, %v3052, %v2284
    %v3115 = vsel %vm1453, %v3053, %v2286
    %v3116 = vsel %vm1453, %v3054, %v2288
    %v3117 = vsel %vm1453, %v3055, %v2290
    %v3118 = vsel %vm1453, %v3056, %v2292
    %v3119 = vsel %vm1453, %v3057, %v2294
    %v3120 = vsel %vm1453, %v3058, %v2296
    %v3121 = vsel %vm1453, %v3059, %v2298
    %v3122 = vsel %vm1453, %v3060, %v2300
    %v3123 = vsel %vm1453, %v3061, %v2302
    %v3124 = vsel %vm1453, %v3062, %v2304
    %v3125 = vsel %vm1453, %v3063, %v2306
    %v3126 = vsel %vm1453, %v3064, %v2308
    %v3127 = vsel %vm1453, %v3065, %v2310
    %v3128 = vsel %vm1453, %v3066, %v2312
    %v3129 = vsel %vm1453, %v3067, %v2314
    %v3130 = vsel %vm1453, %v3068, %v2316
    %v3131 = vsel %vm1453, %v3069, %v2318
    %v3132 = vsel %vm1453, %v3070, %v2320
    %v3133 = vsel %vm1453, %v3071, %v2322
    %v3134 = vsel %vm1453, %v3072, %v2324
    %v3135 = vsel %vm1453, %v3073, %v2326
    %v3136 = vsel %vm1453, %v3074, %v2328
    %v3137 = vsel %vm1516, %v3075, %v2517
    %v3138 = vsel %vm1516, %v3076, %v2519
    %v3139 = vsel %vm1516, %v3077, %v2521
    %v3140 = vsel %vm1516, %v3078, %v2523
    %v3141 = vsel %vm1516, %v3079, %v2525
    %v3142 = vsel %vm1516, %v3080, %v2527
    %v3143 = vsel %vm1516, %v3081, %v2529
    %v3144 = vsel %vm1516, %v3082, %v2531
    %v3145 = vsel %vm1516, %v3083, %v2533
    %v3146 = vsel %vm1516, %v3084, %v2535
    %v3147 = vsel %vm1516, %v3085, %v2537
    %v3148 = vsel %vm1516, %v3086, %v2539
    %v3149 = vsel %vm1516, %v3087, %v2541
    %v3150 = vsel %vm1516, %v3088, %v2543
    %v3151 = vsel %vm1516, %v3089, %v2545
    %v3152 = vsel %vm1516, %v3090, %v2547
    %v3153 = vsel %vm1516, %v3091, %v2549
    %v3154 = vsel %vm1516, %v3092, %v2551
    %v3155 = vsel %vm1516, %v3093, %v2553
    %v3156 = vsel %vm1516, %v3094, %v2555
    %v3157 = vsel %vm1516, %v3095, %v2557
    %v3158 = vsel %vm1516, %v3096, %v2559
    %v3159 = vsel %vm1516, %v3097, %v2561
    %v3160 = vsel %vm1516, %v3098, %v2563
    %v3161 = vsel %vm1516, %v3099, %v2565
    %v3162 = vsel %vm1516, %v3100, %v2567
    %v3163 = vsel %vm1516, %v3101, %v2569
    %v3164 = vsel %vm1516, %v3102, %v2571
    %v3165 = vsel %vm1516, %v3103, %v2573
    %v3166 = vsel %vm1516, %v3104, %v2575
    %v3167 = vsel %vm1516, %v3105, %v2577
    %v3168 = vsel %vm1516, %v3106, %v2579
    %v3169 = vsel %vm1516, %v3107, %v2581
    %v3170 = vsel %vm1516, %v3108, %v2583
    %v3171 = vsel %vm1516, %v3109, %v2585
    %v3172 = vsel %vm1516, %v3110, %v2587
    %v3173 = vsel %vm1516, %v3111, %v2589
    %v3174 = vsel %vm1516, %v3112, %v2591
    %v3175 = vsel %vm1516, %v3113, %v2593
    %v3176 = vsel %vm1516, %v3114, %v2595
    %v3177 = vsel %vm1516, %v3115, %v2597
    %v3178 = vsel %vm1516, %v3116, %v2599
    %v3179 = vsel %vm1516, %v3117, %v2601
    %v3180 = vsel %vm1516, %v3118, %v2603
    %v3181 = vsel %vm1516, %v3119, %v2605
    %v3182 = vsel %vm1516, %v3120, %v2607
    %v3183 = vsel %vm1516, %v3121, %v2609
    %v3184 = vsel %vm1516, %v3122, %v2611
    %v3185 = vsel %vm1516, %v3123, %v2613
    %v3186 = vsel %vm1516, %v3124, %v2615
    %v3187 = vsel %vm1516, %v3125, %v2617
    %v3188 = vsel %vm1516, %v3126, %v2619
    %v3189 = vsel %vm1516, %v3127, %v2621
    %v3190 = vsel %vm1516, %v3128, %v2623
    %v3191 = vsel %vm1516, %v3129, %v2625
    %v3192 = vsel %vm1516, %v3130, %v2627
    %v3193 = vsel %vm1516, %v3131, %v2629
    %v3194 = vsel %vm1516, %v3132, %v2631
    %v3195 = vsel %vm1516, %v3133, %v2633
    %v3196 = vsel %vm1516, %v3134, %v2635
    %v3197 = vsel %vm1516, %v3135, %v2637
    %v3198 = vsel %vm1516, %v3136, %v2639
    %v3199 = vsel %vm1579, %v3137, %v2828
    %v3200 = vsel %vm1579, %v3138, %v2830
    %v3201 = vsel %vm1579, %v3139, %v2832
    %v3202 = vsel %vm1579, %v3140, %v2834
    %v3203 = vsel %vm1579, %v3141, %v2836
    %v3204 = vsel %vm1579, %v3142, %v2838
    %v3205 = vsel %vm1579, %v3143, %v2840
    %v3206 = vsel %vm1579, %v3144, %v2842
    %v3207 = vsel %vm1579, %v3145, %v2844
    %v3208 = vsel %vm1579, %v3146, %v2846
    %v3209 = vsel %vm1579, %v3147, %v2848
    %v3210 = vsel %vm1579, %v3148, %v2850
    %v3211 = vsel %vm1579, %v3149, %v2852
    %v3212 = vsel %vm1579, %v3150, %v2854
    %v3213 = vsel %vm1579, %v3151, %v2856
    %v3214 = vsel %vm1579, %v3152, %v2858
    %v3215 = vsel %vm1579, %v3153, %v2860
    %v3216 = vsel %vm1579, %v3154, %v2862
    %v3217 = vsel %vm1579, %v3155, %v2864
    %v3218 = vsel %vm1579, %v3156, %v2866
    %v3219 = vsel %vm1579, %v3157, %v2868
    %v3220 = vsel %vm1579, %v3158, %v2870
    %v3221 = vsel %vm1579, %v3159, %v2872
    %v3222 = vsel %vm1579, %v3160, %v2874
    %v3223 = vsel %vm1579, %v3161, %v2876
    %v3224 = vsel %vm1579, %v3162, %v2878
    %v3225 = vsel %vm1579, %v3163, %v2880
    %v3226 = vsel %vm1579, %v3164, %v2882
    %v3227 = vsel %vm1579, %v3165, %v2884
    %v3228 = vsel %vm1579, %v3166, %v2886
    %v3229 = vsel %vm1579, %v3167, %v2888
    %v3230 = vsel %vm1579, %v3168, %v2890
    %v3231 = vsel %vm1579, %v3169, %v2892
    %v3232 = vsel %vm1579, %v3170, %v2894
    %v3233 = vsel %vm1579, %v3171, %v2896
    %v3234 = vsel %vm1579, %v3172, %v2898
    %v3235 = vsel %vm1579, %v3173, %v2900
    %v3236 = vsel %vm1579, %v3174, %v2902
    %v3237 = vsel %vm1579, %v3175, %v2904
    %v3238 = vsel %vm1579, %v3176, %v2906
    %v3239 = vsel %vm1579, %v3177, %v2908
    %v3240 = vsel %vm1579, %v3178, %v2910
    %v3241 = vsel %vm1579, %v3179, %v2912
    %v3242 = vsel %vm1579, %v3180, %v2914
    %v3243 = vsel %vm1579, %v3181, %v2916
    %v3244 = vsel %vm1579, %v3182, %v2918
    %v3245 = vsel %vm1579, %v3183, %v2920
    %v3246 = vsel %vm1579, %v3184, %v2922
    %v3247 = vsel %vm1579, %v3185, %v2924
    %v3248 = vsel %vm1579, %v3186, %v2926
    %v3249 = vsel %vm1579, %v3187, %v2928
    %v3250 = vsel %vm1579, %v3188, %v2930
    %v3251 = vsel %vm1579, %v3189, %v2932
    %v3252 = vsel %vm1579, %v3190, %v2934
    %v3253 = vsel %vm1579, %v3191, %v2936
    %v3254 = vsel %vm1579, %v3192, %v2938
    %v3255 = vsel %vm1579, %v3193, %v2940
    %v3256 = vsel %vm1579, %v3194, %v2942
    %v3257 = vsel %vm1579, %v3195, %v2944
    %v3258 = vsel %vm1579, %v3196, %v2946
    %v3259 = vsel %vm1579, %v3197, %v2948
    %v3260 = vsel %vm1579, %v3198, %v2950
    %v3261 = vpack.c.bf16 %v1581, %v1580
    %v3262 = vpack.c.bf16 %v1583, %v1582
    %v3263 = vpack.c.bf16 %v1585, %v1584
    %v3264 = vpack.c.bf16 %v1587, %v1586
    %v3265 = vpack.c.bf16 %v1589, %v1588
    %v3266 = vpack.c.bf16 %v1591, %v1590
    %v3267 = vpack.c.bf16 %v1593, %v1592
    %v3268 = vpack.c.bf16 %v1595, %v1594
    %v3269 = vpack.c.bf16 %v1597, %v1596
    %v3270 = vpack.c.bf16 %v1599, %v1598
    %v3271 = vpack.c.bf16 %v1601, %v1600
    %v3272 = vpack.c.bf16 %v1603, %v1602
    %v3273 = vpack.c.bf16 %v1605, %v1604
    %v3274 = vpack.c.bf16 %v1607, %v1606
    %v3275 = vpack.c.bf16 %v1609, %v1608
    %v3276 = vpack.c.bf16 %v1611, %v1610
    %v3277 = vpack.c.bf16 %v1613, %v1612
    %v3278 = vpack.c.bf16 %v1615, %v1614
    %v3279 = vpack.c.bf16 %v1617, %v1616
    %v3280 = vpack.c.bf16 %v1619, %v1618
    %v3281 = vpack.c.bf16 %v1621, %v1620
    %v3282 = vpack.c.bf16 %v1623, %v1622
    %v3283 = vpack.c.bf16 %v1625, %v1624
    %v3284 = vpack.c.bf16 %v1627, %v1626
    %v3285 = vpack.c.bf16 %v1629, %v1628
    %v3286 = vpack.c.bf16 %v1631, %v1630
    %v3287 = vpack.c.bf16 %v1633, %v1632
    %v3288 = vpack.c.bf16 %v1635, %v1634
    %v3289 = vpack.c.bf16 %v1637, %v1636
    %v3290 = vpack.c.bf16 %v1639, %v1638
    %v3291 = vpack.c.bf16 %v1641, %v1640
    %v3292 = vpack.c.bf16 %v3200, %v3199
    %v3293 = vpack.c.bf16 %v3202, %v3201
    %v3294 = vpack.c.bf16 %v3204, %v3203
    %v3295 = vpack.c.bf16 %v3206, %v3205
    %v3296 = vpack.c.bf16 %v3208, %v3207
    %v3297 = vpack.c.bf16 %v3210, %v3209
    %v3298 = vpack.c.bf16 %v3212, %v3211
    %v3299 = vpack.c.bf16 %v3214, %v3213
    %v3300 = vpack.c.bf16 %v3216, %v3215
    %v3301 = vpack.c.bf16 %v3218, %v3217
    %v3302 = vpack.c.bf16 %v3220, %v3219
    %v3303 = vpack.c.bf16 %v3222, %v3221
    %v3304 = vpack.c.bf16 %v3224, %v3223
    %v3305 = vpack.c.bf16 %v3226, %v3225
    %v3306 = vpack.c.bf16 %v3228, %v3227
    %v3307 = vpack.c.bf16 %v3230, %v3229
    %v3308 = vpack.c.bf16 %v3232, %v3231
    %v3309 = vpack.c.bf16 %v3234, %v3233
    %v3310 = vpack.c.bf16 %v3236, %v3235
    %v3311 = vpack.c.bf16 %v3238, %v3237
    %v3312 = vpack.c.bf16 %v3240, %v3239
    %v3313 = vpack.c.bf16 %v3242, %v3241
    %v3314 = vpack.c.bf16 %v3244, %v3243
    %v3315 = vpack.c.bf16 %v3246, %v3245
    %v3316 = vpack.c.bf16 %v3248, %v3247
    %v3317 = vpack.c.bf16 %v3250, %v3249
    %v3318 = vpack.c.bf16 %v3252, %v3251
    %v3319 = vpack.c.bf16 %v3254, %v3253
    %v3320 = vpack.c.bf16 %v3256, %v3255
    %v3321 = vpack.c.bf16 %v3258, %v3257
    %v3322 = vpack.c.bf16 %v3260, %v3259
    %v3323 = vld [vmem:[%s1] sm:$0xf]
    %v3324 = vld [vmem:[%s1 + $0x4] sm:$0xf]
    %v3325 = vld [vmem:[%s1 + $0x8] sm:$0xf]
    %v3326 = vld [vmem:[%s1 + $0xc] sm:$0xf]
    %v3327 = vld [vmem:[%s1 + $0x10] sm:$0xf]
    %v3328 = vld [vmem:[%s1 + $0x14] sm:$0xf]
    %v3329 = vld [vmem:[%s1 + $0x18] sm:$0xf]
    %v3330 = vld [vmem:[%s1 + $0x1c] sm:$0xf]
    %v3331 = vld [vmem:[%s1 + $0x20] sm:$0xf]
    %v3332 = vld [vmem:[%s1 + $0x24] sm:$0xf]
    %v3343 = vunpack.c.l.b16 %v3323
    %v3344 = vunpack.c.l.b16 %v3324
    %v3345 = vunpack.c.l.b16 %v3325
    %v3346 = vunpack.c.l.b16 %v3326
    %v3347 = vunpack.c.l.b16 %v3327
    %v3348 = vunpack.c.l.b16 %v3328
    %v3349 = vunpack.c.l.b16 %v3329
    %v3350 = vunpack.c.l.b16 %v3330
    %v3351 = vunpack.c.l.b16 %v3331
    %v3352 = vunpack.c.l.b16 %v3332
    %v3353 = vpack.c.b16 %v3344, %v3343
    %v3354 = vpack.c.b16 %v3346, %v3345
    %v3355 = vpack.c.b16 %v3348, %v3347
    %v3356 = vpack.c.b16 %v3350, %v3349
    %v3357 = vpack.c.b16 %v3352, %v3351
    %vm3363 = vcmask 654336
    %v3365 = vsel %vm3363, %v3261, 0
    %v3368 = vsel %vm3363, %v3262, 0
    %v3371 = vsel %vm3363, %v3263, 0
    %v3374 = vsel %vm3363, %v3264, 0
    %v3377 = vsel %vm3363, %v3265, 0
    %v3380 = vsel %vm3363, %v3266, 0
    %v3383 = vsel %vm3363, %v3267, 0
    %v3386 = vsel %vm3363, %v3268, 0
    %v3389 = vsel %vm3363, %v3269, 0
    %v3392 = vsel %vm3363, %v3270, 0
    %v3395 = vsel %vm3363, %v3271, 0
    %v3398 = vsel %vm3363, %v3272, 0
    %v3401 = vsel %vm3363, %v3273, 0
    %v3404 = vsel %vm3363, %v3274, 0
    %v3407 = vsel %vm3363, %v3275, 0
    %v3410 = vsel %vm3363, %v3276, 0
    %v3413 = vsel %vm3363, %v3277, 0
    %v3416 = vsel %vm3363, %v3278, 0
    %v3419 = vsel %vm3363, %v3279, 0
    %v3422 = vsel %vm3363, %v3280, 0
    %v3425 = vsel %vm3363, %v3281, 0
    %v3428 = vsel %vm3363, %v3282, 0
    %v3431 = vsel %vm3363, %v3283, 0
    %v3434 = vsel %vm3363, %v3284, 0
    %v3437 = vsel %vm3363, %v3285, 0
    %v3440 = vsel %vm3363, %v3286, 0
    %v3443 = vsel %vm3363, %v3287, 0
    %v3446 = vsel %vm3363, %v3288, 0
    %v3449 = vsel %vm3363, %v3289, 0
    %v3452 = vsel %vm3363, %v3290, 0
    %v3455 = vsel %vm3363, %v3291, 0
    %v3458 = vsel %vm3363, %v3292, 0
    %v3461 = vsel %vm3363, %v3293, 0
    %v3464 = vsel %vm3363, %v3294, 0
    %v3467 = vsel %vm3363, %v3295, 0
    %v3470 = vsel %vm3363, %v3296, 0
    %v3473 = vsel %vm3363, %v3297, 0
    %v3476 = vsel %vm3363, %v3298, 0
    %v3479 = vsel %vm3363, %v3299, 0
    %v3482 = vsel %vm3363, %v3300, 0
    %v3485 = vsel %vm3363, %v3301, 0
    %v3488 = vsel %vm3363, %v3302, 0
    %v3491 = vsel %vm3363, %v3303, 0
    %v3494 = vsel %vm3363, %v3304, 0
    %v3497 = vsel %vm3363, %v3305, 0
    %v3500 = vsel %vm3363, %v3306, 0
    %v3503 = vsel %vm3363, %v3307, 0
    %v3506 = vsel %vm3363, %v3308, 0
    %v3509 = vsel %vm3363, %v3309, 0
    %v3512 = vsel %vm3363, %v3310, 0
    %v3515 = vsel %vm3363, %v3311, 0
    %v3518 = vsel %vm3363, %v3312, 0
    %v3521 = vsel %vm3363, %v3313, 0
    %v3524 = vsel %vm3363, %v3314, 0
    %v3527 = vsel %vm3363, %v3315, 0
    %v3530 = vsel %vm3363, %v3316, 0
    %v3533 = vsel %vm3363, %v3317, 0
    %v3536 = vsel %vm3363, %v3318, 0
    %v3539 = vsel %vm3363, %v3319, 0
    %v3542 = vsel %vm3363, %v3320, 0
    %v3545 = vsel %vm3363, %v3321, 0
    %v3548 = vsel %vm3363, %v3322, 0
    %3550 = vmatpush.bf16.msra.mxu0 0
    %3551 = vmatpush.bf16.msra.mxu0 0
    %3552 = vmatpush.bf16.msra.mxu0 0
    %3553 = vmatpush.bf16.msra.mxu0 %v3357
    %3554 = vmatpush.bf16.msra.mxu0 %v3356
    %3555 = vmatpush.bf16.msra.mxu0 %v3355
    %3556 = vmatpush.bf16.msra.mxu0 %v3354
    %3557 = vmatpush.bf16.msra.mxu0 %v3353
    %3558 = vmatmul.bf16.gmra.mxu0 %v3365
    %v3559 = vpop.f32.mrf.mxu0
    %v3560 = vadd.f32 0.0, %v3559
    %v3561 = vpop.f32.mrf.mxu0
    %v3562 = vadd.f32 0.0, %v3561
    %3563 = vmatmul.bf16.gmra.mxu0 %v3368
    %v3564 = vpop.f32.mrf.mxu0
    %v3565 = vadd.f32 0.0, %v3564
    %v3566 = vpop.f32.mrf.mxu0
    %v3567 = vadd.f32 0.0, %v3566
    %3568 = vmatmul.bf16.gmra.mxu0 %v3371
    %v3569 = vpop.f32.mrf.mxu0
    %v3570 = vadd.f32 0.0, %v3569
    %v3571 = vpop.f32.mrf.mxu0
    %v3572 = vadd.f32 0.0, %v3571
    %3573 = vmatmul.bf16.gmra.mxu0 %v3374
    %v3574 = vpop.f32.mrf.mxu0
    %v3575 = vadd.f32 0.0, %v3574
    %v3576 = vpop.f32.mrf.mxu0
    %v3577 = vadd.f32 0.0, %v3576
    %3578 = vmatmul.bf16.gmra.mxu0 %v3377
    %v3579 = vpop.f32.mrf.mxu0
    %v3580 = vadd.f32 0.0, %v3579
    %v3581 = vpop.f32.mrf.mxu0
    %v3582 = vadd.f32 0.0, %v3581
    %3583 = vmatmul.bf16.gmra.mxu0 %v3380
    %v3584 = vpop.f32.mrf.mxu0
    %v3585 = vadd.f32 0.0, %v3584
    %v3586 = vpop.f32.mrf.mxu0
    %v3587 = vadd.f32 0.0, %v3586
    %3588 = vmatmul.bf16.gmra.mxu0 %v3383
    %v3589 = vpop.f32.mrf.mxu0
    %v3590 = vadd.f32 0.0, %v3589
    %v3591 = vpop.f32.mrf.mxu0
    %v3592 = vadd.f32 0.0, %v3591
    %3593 = vmatmul.bf16.gmra.mxu0 %v3386
    %v3594 = vpop.f32.mrf.mxu0
    %v3595 = vadd.f32 0.0, %v3594
    %v3596 = vpop.f32.mrf.mxu0
    %v3597 = vadd.f32 0.0, %v3596
    %3598 = vmatmul.bf16.gmra.mxu0 %v3389
    %v3599 = vpop.f32.mrf.mxu0
    %v3600 = vadd.f32 0.0, %v3599
    %v3601 = vpop.f32.mrf.mxu0
    %v3602 = vadd.f32 0.0, %v3601
    %3603 = vmatmul.bf16.gmra.mxu0 %v3392
    %v3604 = vpop.f32.mrf.mxu0
    %v3605 = vadd.f32 0.0, %v3604
    %v3606 = vpop.f32.mrf.mxu0
    %v3607 = vadd.f32 0.0, %v3606
    %3608 = vmatmul.bf16.gmra.mxu0 %v3395
    %v3609 = vpop.f32.mrf.mxu0
    %v3610 = vadd.f32 0.0, %v3609
    %v3611 = vpop.f32.mrf.mxu0
    %v3612 = vadd.f32 0.0, %v3611
    %3613 = vmatmul.bf16.gmra.mxu0 %v3398
    %v3614 = vpop.f32.mrf.mxu0
    %v3615 = vadd.f32 0.0, %v3614
    %v3616 = vpop.f32.mrf.mxu0
    %v3617 = vadd.f32 0.0, %v3616
    %3618 = vmatmul.bf16.gmra.mxu0 %v3401
    %v3619 = vpop.f32.mrf.mxu0
    %v3620 = vadd.f32 0.0, %v3619
    %v3621 = vpop.f32.mrf.mxu0
    %v3622 = vadd.f32 0.0, %v3621
    %3623 = vmatmul.bf16.gmra.mxu0 %v3404
    %v3624 = vpop.f32.mrf.mxu0
    %v3625 = vadd.f32 0.0, %v3624
    %v3626 = vpop.f32.mrf.mxu0
    %v3627 = vadd.f32 0.0, %v3626
    %3628 = vmatmul.bf16.gmra.mxu0 %v3407
    %v3629 = vpop.f32.mrf.mxu0
    %v3630 = vadd.f32 0.0, %v3629
    %v3631 = vpop.f32.mrf.mxu0
    %v3632 = vadd.f32 0.0, %v3631
    %3633 = vmatmul.bf16.gmra.mxu0 %v3410
    %v3634 = vpop.f32.mrf.mxu0
    %v3635 = vadd.f32 0.0, %v3634
    %v3636 = vpop.f32.mrf.mxu0
    %v3637 = vadd.f32 0.0, %v3636
    %3638 = vmatmul.bf16.gmra.mxu0 %v3413
    %v3639 = vpop.f32.mrf.mxu0
    %v3640 = vadd.f32 0.0, %v3639
    %v3641 = vpop.f32.mrf.mxu0
    %v3642 = vadd.f32 0.0, %v3641
    %3643 = vmatmul.bf16.gmra.mxu0 %v3416
    %v3644 = vpop.f32.mrf.mxu0
    %v3645 = vadd.f32 0.0, %v3644
    %v3646 = vpop.f32.mrf.mxu0
    %v3647 = vadd.f32 0.0, %v3646
    %3648 = vmatmul.bf16.gmra.mxu0 %v3419
    %v3649 = vpop.f32.mrf.mxu0
    %v3650 = vadd.f32 0.0, %v3649
    %v3651 = vpop.f32.mrf.mxu0
    %v3652 = vadd.f32 0.0, %v3651
    %3653 = vmatmul.bf16.gmra.mxu0 %v3422
    %v3654 = vpop.f32.mrf.mxu0
    %v3655 = vadd.f32 0.0, %v3654
    %v3656 = vpop.f32.mrf.mxu0
    %v3657 = vadd.f32 0.0, %v3656
    %3658 = vmatmul.bf16.gmra.mxu0 %v3425
    %v3659 = vpop.f32.mrf.mxu0
    %v3660 = vadd.f32 0.0, %v3659
    %v3661 = vpop.f32.mrf.mxu0
    %v3662 = vadd.f32 0.0, %v3661
    %3663 = vmatmul.bf16.gmra.mxu0 %v3428
    %v3664 = vpop.f32.mrf.mxu0
    %v3665 = vadd.f32 0.0, %v3664
    %v3666 = vpop.f32.mrf.mxu0
    %v3667 = vadd.f32 0.0, %v3666
    %3668 = vmatmul.bf16.gmra.mxu0 %v3431
    %v3669 = vpop.f32.mrf.mxu0
    %v3670 = vadd.f32 0.0, %v3669
    %v3671 = vpop.f32.mrf.mxu0
    %v3672 = vadd.f32 0.0, %v3671
    %3673 = vmatmul.bf16.gmra.mxu0 %v3434
    %v3674 = vpop.f32.mrf.mxu0
    %v3675 = vadd.f32 0.0, %v3674
    %v3676 = vpop.f32.mrf.mxu0
    %v3677 = vadd.f32 0.0, %v3676
    %3678 = vmatmul.bf16.gmra.mxu0 %v3437
    %v3679 = vpop.f32.mrf.mxu0
    %v3680 = vadd.f32 0.0, %v3679
    %v3681 = vpop.f32.mrf.mxu0
    %v3682 = vadd.f32 0.0, %v3681
    %3683 = vmatmul.bf16.gmra.mxu0 %v3440
    %v3684 = vpop.f32.mrf.mxu0
    %v3685 = vadd.f32 0.0, %v3684
    %v3686 = vpop.f32.mrf.mxu0
    %v3687 = vadd.f32 0.0, %v3686
    %3688 = vmatmul.bf16.gmra.mxu0 %v3443
    %v3689 = vpop.f32.mrf.mxu0
    %v3690 = vadd.f32 0.0, %v3689
    %v3691 = vpop.f32.mrf.mxu0
    %v3692 = vadd.f32 0.0, %v3691
    %3693 = vmatmul.bf16.gmra.mxu0 %v3446
    %v3694 = vpop.f32.mrf.mxu0
    %v3695 = vadd.f32 0.0, %v3694
    %v3696 = vpop.f32.mrf.mxu0
    %v3697 = vadd.f32 0.0, %v3696
    %3698 = vmatmul.bf16.gmra.mxu0 %v3449
    %v3699 = vpop.f32.mrf.mxu0
    %v3700 = vadd.f32 0.0, %v3699
    %v3701 = vpop.f32.mrf.mxu0
    %v3702 = vadd.f32 0.0, %v3701
    %3703 = vmatmul.bf16.gmra.mxu0 %v3452
    %v3704 = vpop.f32.mrf.mxu0
    %v3705 = vadd.f32 0.0, %v3704
    %v3706 = vpop.f32.mrf.mxu0
    %v3707 = vadd.f32 0.0, %v3706
    %3708 = vmatmul.bf16.gmra.mxu0 %v3455
    %v3709 = vpop.f32.mrf.mxu0
    %v3710 = vadd.f32 0.0, %v3709
    %v3711 = vpop.f32.mrf.mxu0
    %v3712 = vadd.f32 0.0, %v3711
    %3713 = vmatmul.bf16.gmra.mxu0 %v3458
    %v3714 = vpop.f32.mrf.mxu0
    %v3715 = vadd.f32 0.0, %v3714
    %v3716 = vpop.f32.mrf.mxu0
    %v3717 = vadd.f32 0.0, %v3716
    %3718 = vmatmul.bf16.gmra.mxu0 %v3461
    %v3719 = vpop.f32.mrf.mxu0
    %v3720 = vadd.f32 0.0, %v3719
    %v3721 = vpop.f32.mrf.mxu0
    %v3722 = vadd.f32 0.0, %v3721
    %3723 = vmatmul.bf16.gmra.mxu0 %v3464
    %v3724 = vpop.f32.mrf.mxu0
    %v3725 = vadd.f32 0.0, %v3724
    %v3726 = vpop.f32.mrf.mxu0
    %v3727 = vadd.f32 0.0, %v3726
    %3728 = vmatmul.bf16.gmra.mxu0 %v3467
    %v3729 = vpop.f32.mrf.mxu0
    %v3730 = vadd.f32 0.0, %v3729
    %v3731 = vpop.f32.mrf.mxu0
    %v3732 = vadd.f32 0.0, %v3731
    %3733 = vmatmul.bf16.gmra.mxu0 %v3470
    %v3734 = vpop.f32.mrf.mxu0
    %v3735 = vadd.f32 0.0, %v3734
    %v3736 = vpop.f32.mrf.mxu0
    %v3737 = vadd.f32 0.0, %v3736
    %3738 = vmatmul.bf16.gmra.mxu0 %v3473
    %v3739 = vpop.f32.mrf.mxu0
    %v3740 = vadd.f32 0.0, %v3739
    %v3741 = vpop.f32.mrf.mxu0
    %v3742 = vadd.f32 0.0, %v3741
    %3743 = vmatmul.bf16.gmra.mxu0 %v3476
    %v3744 = vpop.f32.mrf.mxu0
    %v3745 = vadd.f32 0.0, %v3744
    %v3746 = vpop.f32.mrf.mxu0
    %v3747 = vadd.f32 0.0, %v3746
    %3748 = vmatmul.bf16.gmra.mxu0 %v3479
    %v3749 = vpop.f32.mrf.mxu0
    %v3750 = vadd.f32 0.0, %v3749
    %v3751 = vpop.f32.mrf.mxu0
    %v3752 = vadd.f32 0.0, %v3751
    %3753 = vmatmul.bf16.gmra.mxu0 %v3482
    %v3754 = vpop.f32.mrf.mxu0
    %v3755 = vadd.f32 0.0, %v3754
    %v3756 = vpop.f32.mrf.mxu0
    %v3757 = vadd.f32 0.0, %v3756
    %3758 = vmatmul.bf16.gmra.mxu0 %v3485
    %v3759 = vpop.f32.mrf.mxu0
    %v3760 = vadd.f32 0.0, %v3759
    %v3761 = vpop.f32.mrf.mxu0
    %v3762 = vadd.f32 0.0, %v3761
    %3763 = vmatmul.bf16.gmra.mxu0 %v3488
    %v3764 = vpop.f32.mrf.mxu0
    %v3765 = vadd.f32 0.0, %v3764
    %v3766 = vpop.f32.mrf.mxu0
    %v3767 = vadd.f32 0.0, %v3766
    %3768 = vmatmul.bf16.gmra.mxu0 %v3491
    %v3769 = vpop.f32.mrf.mxu0
    %v3770 = vadd.f32 0.0, %v3769
    %v3771 = vpop.f32.mrf.mxu0
    %v3772 = vadd.f32 0.0, %v3771
    %3773 = vmatmul.bf16.gmra.mxu0 %v3494
    %v3774 = vpop.f32.mrf.mxu0
    %v3775 = vadd.f32 0.0, %v3774
    %v3776 = vpop.f32.mrf.mxu0
    %v3777 = vadd.f32 0.0, %v3776
    %3778 = vmatmul.bf16.gmra.mxu0 %v3497
    %v3779 = vpop.f32.mrf.mxu0
    %v3780 = vadd.f32 0.0, %v3779
    %v3781 = vpop.f32.mrf.mxu0
    %v3782 = vadd.f32 0.0, %v3781
    %3783 = vmatmul.bf16.gmra.mxu0 %v3500
    %v3784 = vpop.f32.mrf.mxu0
    %v3785 = vadd.f32 0.0, %v3784
    %v3786 = vpop.f32.mrf.mxu0
    %v3787 = vadd.f32 0.0, %v3786
    %3788 = vmatmul.bf16.gmra.mxu0 %v3503
    %v3789 = vpop.f32.mrf.mxu0
    %v3790 = vadd.f32 0.0, %v3789
    %v3791 = vpop.f32.mrf.mxu0
    %v3792 = vadd.f32 0.0, %v3791
    %3793 = vmatmul.bf16.gmra.mxu0 %v3506
    %v3794 = vpop.f32.mrf.mxu0
    %v3795 = vadd.f32 0.0, %v3794
    %v3796 = vpop.f32.mrf.mxu0
    %v3797 = vadd.f32 0.0, %v3796
    %3798 = vmatmul.bf16.gmra.mxu0 %v3509
    %v3799 = vpop.f32.mrf.mxu0
    %v3800 = vadd.f32 0.0, %v3799
    %v3801 = vpop.f32.mrf.mxu0
    %v3802 = vadd.f32 0.0, %v3801
    %3803 = vmatmul.bf16.gmra.mxu0 %v3512
    %v3804 = vpop.f32.mrf.mxu0
    %v3805 = vadd.f32 0.0, %v3804
    %v3806 = vpop.f32.mrf.mxu0
    %v3807 = vadd.f32 0.0, %v3806
    %3808 = vmatmul.bf16.gmra.mxu0 %v3515
    %v3809 = vpop.f32.mrf.mxu0
    %v3810 = vadd.f32 0.0, %v3809
    %v3811 = vpop.f32.mrf.mxu0
    %v3812 = vadd.f32 0.0, %v3811
    %3813 = vmatmul.bf16.gmra.mxu0 %v3518
    %v3814 = vpop.f32.mrf.mxu0
    %v3815 = vadd.f32 0.0, %v3814
    %v3816 = vpop.f32.mrf.mxu0
    %v3817 = vadd.f32 0.0, %v3816
    %3818 = vmatmul.bf16.gmra.mxu0 %v3521
    %v3819 = vpop.f32.mrf.mxu0
    %v3820 = vadd.f32 0.0, %v3819
    %v3821 = vpop.f32.mrf.mxu0
    %v3822 = vadd.f32 0.0, %v3821
    %3823 = vmatmul.bf16.gmra.mxu0 %v3524
    %v3824 = vpop.f32.mrf.mxu0
    %v3825 = vadd.f32 0.0, %v3824
    %v3826 = vpop.f32.mrf.mxu0
    %v3827 = vadd.f32 0.0, %v3826
    %3828 = vmatmul.bf16.gmra.mxu0 %v3527
    %v3829 = vpop.f32.mrf.mxu0
    %v3830 = vadd.f32 0.0, %v3829
    %v3831 = vpop.f32.mrf.mxu0
    %v3832 = vadd.f32 0.0, %v3831
    %3833 = vmatmul.bf16.gmra.mxu0 %v3530
    %v3834 = vpop.f32.mrf.mxu0
    %v3835 = vadd.f32 0.0, %v3834
    %v3836 = vpop.f32.mrf.mxu0
    %v3837 = vadd.f32 0.0, %v3836
    %3838 = vmatmul.bf16.gmra.mxu0 %v3533
    %v3839 = vpop.f32.mrf.mxu0
    %v3840 = vadd.f32 0.0, %v3839
    %v3841 = vpop.f32.mrf.mxu0
    %v3842 = vadd.f32 0.0, %v3841
    %3843 = vmatmul.bf16.gmra.mxu0 %v3536
    %v3844 = vpop.f32.mrf.mxu0
    %v3845 = vadd.f32 0.0, %v3844
    %v3846 = vpop.f32.mrf.mxu0
    %v3847 = vadd.f32 0.0, %v3846
    %3848 = vmatmul.bf16.gmra.mxu0 %v3539
    %v3849 = vpop.f32.mrf.mxu0
    %v3850 = vadd.f32 0.0, %v3849
    %v3851 = vpop.f32.mrf.mxu0
    %v3852 = vadd.f32 0.0, %v3851
    %3853 = vmatmul.bf16.gmra.mxu0 %v3542
    %v3854 = vpop.f32.mrf.mxu0
    %v3855 = vadd.f32 0.0, %v3854
    %v3856 = vpop.f32.mrf.mxu0
    %v3857 = vadd.f32 0.0, %v3856
    %3858 = vmatmul.bf16.gmra.mxu0 %v3545
    %v3859 = vpop.f32.mrf.mxu0
    %v3860 = vadd.f32 0.0, %v3859
    %v3861 = vpop.f32.mrf.mxu0
    %v3862 = vadd.f32 0.0, %v3861
    %3863 = vmatmul.bf16.gmra.mxu0 %v3548
    %v3864 = vpop.f32.mrf.mxu0
    %v3865 = vadd.f32 0.0, %v3864
    %v3866 = vpop.f32.mrf.mxu0
    %v3867 = vadd.f32 0.0, %v3866
    %3868 = vdwg.mxu0
    %v3869 = vsel %vm1453, %v3560, 0.0
    %v3870 = vsel %vm1453, %v3562, 0.0
    %v3871 = vadd.f32 %v3869, %v3870
    %v3872 = vsel %vm1453, %v3565, 0.0
    %v3873 = vadd.f32 %v3871, %v3872
    %v3874 = vsel %vm1453, %v3567, 0.0
    %v3875 = vadd.f32 %v3873, %v3874
    %v3876 = vsel %vm1453, %v3570, 0.0
    %v3877 = vadd.f32 %v3875, %v3876
    %v3878 = vsel %vm1453, %v3572, 0.0
    %v3879 = vadd.f32 %v3877, %v3878
    %v3880 = vsel %vm1453, %v3575, 0.0
    %v3881 = vadd.f32 %v3879, %v3880
    %v3882 = vsel %vm1453, %v3577, 0.0
    %v3883 = vadd.f32 %v3881, %v3882
    %v3884 = vsel %vm1453, %v3580, 0.0
    %v3885 = vadd.f32 %v3883, %v3884
    %v3886 = vsel %vm1453, %v3582, 0.0
    %v3887 = vadd.f32 %v3885, %v3886
    %v3888 = vsel %vm1453, %v3585, 0.0
    %v3889 = vadd.f32 %v3887, %v3888
    %v3890 = vsel %vm1453, %v3587, 0.0
    %v3891 = vadd.f32 %v3889, %v3890
    %v3892 = vsel %vm1453, %v3590, 0.0
    %v3893 = vadd.f32 %v3891, %v3892
    %v3894 = vsel %vm1453, %v3592, 0.0
    %v3895 = vadd.f32 %v3893, %v3894
    %v3896 = vsel %vm1453, %v3595, 0.0
    %v3897 = vadd.f32 %v3895, %v3896
    %v3898 = vsel %vm1453, %v3597, 0.0
    %v3899 = vadd.f32 %v3897, %v3898
    %v3900 = vsel %vm1453, %v3600, 0.0
    %v3901 = vadd.f32 %v3899, %v3900
    %v3902 = vsel %vm1453, %v3602, 0.0
    %v3903 = vadd.f32 %v3901, %v3902
    %v3904 = vsel %vm1453, %v3605, 0.0
    %v3905 = vadd.f32 %v3903, %v3904
    %v3906 = vsel %vm1453, %v3607, 0.0
    %v3907 = vadd.f32 %v3905, %v3906
    %v3908 = vsel %vm1453, %v3610, 0.0
    %v3909 = vadd.f32 %v3907, %v3908
    %v3910 = vsel %vm1453, %v3612, 0.0
    %v3911 = vadd.f32 %v3909, %v3910
    %v3912 = vsel %vm1453, %v3615, 0.0
    %v3913 = vadd.f32 %v3911, %v3912
    %v3914 = vsel %vm1453, %v3617, 0.0
    %v3915 = vadd.f32 %v3913, %v3914
    %v3916 = vsel %vm1453, %v3620, 0.0
    %v3917 = vadd.f32 %v3915, %v3916
    %v3918 = vsel %vm1453, %v3622, 0.0
    %v3919 = vadd.f32 %v3917, %v3918
    %v3920 = vsel %vm1453, %v3625, 0.0
    %v3921 = vadd.f32 %v3919, %v3920
    %v3922 = vsel %vm1453, %v3627, 0.0
    %v3923 = vadd.f32 %v3921, %v3922
    %v3924 = vsel %vm1453, %v3630, 0.0
    %v3925 = vadd.f32 %v3923, %v3924
    %v3926 = vsel %vm1453, %v3632, 0.0
    %v3927 = vadd.f32 %v3925, %v3926
    %v3928 = vsel %vm1453, %v3635, 0.0
    %v3929 = vadd.f32 %v3927, %v3928
    %v3930 = vsel %vm1453, %v3637, 0.0
    %v3931 = vadd.f32 %v3929, %v3930
    %v3932 = vsel %vm1453, %v3640, 0.0
    %v3933 = vadd.f32 %v3931, %v3932
    %v3934 = vsel %vm1453, %v3642, 0.0
    %v3935 = vadd.f32 %v3933, %v3934
    %v3936 = vsel %vm1453, %v3645, 0.0
    %v3937 = vadd.f32 %v3935, %v3936
    %v3938 = vsel %vm1453, %v3647, 0.0
    %v3939 = vadd.f32 %v3937, %v3938
    %v3940 = vsel %vm1453, %v3650, 0.0
    %v3941 = vadd.f32 %v3939, %v3940
    %v3942 = vsel %vm1453, %v3652, 0.0
    %v3943 = vadd.f32 %v3941, %v3942
    %v3944 = vsel %vm1453, %v3655, 0.0
    %v3945 = vadd.f32 %v3943, %v3944
    %v3946 = vsel %vm1453, %v3657, 0.0
    %v3947 = vadd.f32 %v3945, %v3946
    %v3948 = vsel %vm1453, %v3660, 0.0
    %v3949 = vadd.f32 %v3947, %v3948
    %v3950 = vsel %vm1453, %v3662, 0.0
    %v3951 = vadd.f32 %v3949, %v3950
    %v3952 = vsel %vm1453, %v3665, 0.0
    %v3953 = vadd.f32 %v3951, %v3952
    %v3954 = vsel %vm1453, %v3667, 0.0
    %v3955 = vadd.f32 %v3953, %v3954
    %v3956 = vsel %vm1453, %v3670, 0.0
    %v3957 = vadd.f32 %v3955, %v3956
    %v3958 = vsel %vm1453, %v3672, 0.0
    %v3959 = vadd.f32 %v3957, %v3958
    %v3960 = vsel %vm1453, %v3675, 0.0
    %v3961 = vadd.f32 %v3959, %v3960
    %v3962 = vsel %vm1453, %v3677, 0.0
    %v3963 = vadd.f32 %v3961, %v3962
    %v3964 = vsel %vm1453, %v3680, 0.0
    %v3965 = vadd.f32 %v3963, %v3964
    %v3966 = vsel %vm1453, %v3682, 0.0
    %v3967 = vadd.f32 %v3965, %v3966
    %v3968 = vsel %vm1453, %v3685, 0.0
    %v3969 = vadd.f32 %v3967, %v3968
    %v3970 = vsel %vm1453, %v3687, 0.0
    %v3971 = vadd.f32 %v3969, %v3970
    %v3972 = vsel %vm1453, %v3690, 0.0
    %v3973 = vadd.f32 %v3971, %v3972
    %v3974 = vsel %vm1453, %v3692, 0.0
    %v3975 = vadd.f32 %v3973, %v3974
    %v3976 = vsel %vm1453, %v3695, 0.0
    %v3977 = vadd.f32 %v3975, %v3976
    %v3978 = vsel %vm1453, %v3697, 0.0
    %v3979 = vadd.f32 %v3977, %v3978
    %v3980 = vsel %vm1453, %v3700, 0.0
    %v3981 = vadd.f32 %v3979, %v3980
    %v3982 = vsel %vm1453, %v3702, 0.0
    %v3983 = vadd.f32 %v3981, %v3982
    %v3984 = vsel %vm1453, %v3705, 0.0
    %v3985 = vadd.f32 %v3983, %v3984
    %v3986 = vsel %vm1453, %v3707, 0.0
    %v3987 = vadd.f32 %v3985, %v3986
    %v3988 = vsel %vm1453, %v3710, 0.0
    %v3989 = vadd.f32 %v3987, %v3988
    %v3990 = vsel %vm1453, %v3712, 0.0
    %v3991 = vadd.f32 %v3989, %v3990
    %v3992 = vsel %vm1453, %v3715, 0.0
    %v3993 = vadd.f32 %v3991, %v3992
    %v3994 = vsel %vm1453, %v3717, 0.0
    %v3995 = vadd.f32 %v3993, %v3994
    %v3996 = vsel %vm1453, %v3720, 0.0
    %v3997 = vadd.f32 %v3995, %v3996
    %v3998 = vsel %vm1453, %v3722, 0.0
    %v3999 = vadd.f32 %v3997, %v3998
    %v4000 = vsel %vm1453, %v3725, 0.0
    %v4001 = vadd.f32 %v3999, %v4000
    %v4002 = vsel %vm1453, %v3727, 0.0
    %v4003 = vadd.f32 %v4001, %v4002
    %v4004 = vsel %vm1453, %v3730, 0.0
    %v4005 = vadd.f32 %v4003, %v4004
    %v4006 = vsel %vm1453, %v3732, 0.0
    %v4007 = vadd.f32 %v4005, %v4006
    %v4008 = vsel %vm1453, %v3735, 0.0
    %v4009 = vadd.f32 %v4007, %v4008
    %v4010 = vsel %vm1453, %v3737, 0.0
    %v4011 = vadd.f32 %v4009, %v4010
    %v4012 = vsel %vm1453, %v3740, 0.0
    %v4013 = vadd.f32 %v4011, %v4012
    %v4014 = vsel %vm1453, %v3742, 0.0
    %v4015 = vadd.f32 %v4013, %v4014
    %v4016 = vsel %vm1453, %v3745, 0.0
    %v4017 = vadd.f32 %v4015, %v4016
    %v4018 = vsel %vm1453, %v3747, 0.0
    %v4019 = vadd.f32 %v4017, %v4018
    %v4020 = vsel %vm1453, %v3750, 0.0
    %v4021 = vadd.f32 %v4019, %v4020
    %v4022 = vsel %vm1453, %v3752, 0.0
    %v4023 = vadd.f32 %v4021, %v4022
    %v4024 = vsel %vm1453, %v3755, 0.0
    %v4025 = vadd.f32 %v4023, %v4024
    %v4026 = vsel %vm1453, %v3757, 0.0
    %v4027 = vadd.f32 %v4025, %v4026
    %v4028 = vsel %vm1453, %v3760, 0.0
    %v4029 = vadd.f32 %v4027, %v4028
    %v4030 = vsel %vm1453, %v3762, 0.0
    %v4031 = vadd.f32 %v4029, %v4030
    %v4032 = vsel %vm1453, %v3765, 0.0
    %v4033 = vadd.f32 %v4031, %v4032
    %v4034 = vsel %vm1453, %v3767, 0.0
    %v4035 = vadd.f32 %v4033, %v4034
    %v4036 = vsel %vm1453, %v3770, 0.0
    %v4037 = vadd.f32 %v4035, %v4036
    %v4038 = vsel %vm1453, %v3772, 0.0
    %v4039 = vadd.f32 %v4037, %v4038
    %v4040 = vsel %vm1453, %v3775, 0.0
    %v4041 = vadd.f32 %v4039, %v4040
    %v4042 = vsel %vm1453, %v3777, 0.0
    %v4043 = vadd.f32 %v4041, %v4042
    %v4044 = vsel %vm1453, %v3780, 0.0
    %v4045 = vadd.f32 %v4043, %v4044
    %v4046 = vsel %vm1453, %v3782, 0.0
    %v4047 = vadd.f32 %v4045, %v4046
    %v4048 = vsel %vm1453, %v3785, 0.0
    %v4049 = vadd.f32 %v4047, %v4048
    %v4050 = vsel %vm1453, %v3787, 0.0
    %v4051 = vadd.f32 %v4049, %v4050
    %v4052 = vsel %vm1453, %v3790, 0.0
    %v4053 = vadd.f32 %v4051, %v4052
    %v4054 = vsel %vm1453, %v3792, 0.0
    %v4055 = vadd.f32 %v4053, %v4054
    %v4056 = vsel %vm1453, %v3795, 0.0
    %v4057 = vadd.f32 %v4055, %v4056
    %v4058 = vsel %vm1453, %v3797, 0.0
    %v4059 = vadd.f32 %v4057, %v4058
    %v4060 = vsel %vm1453, %v3800, 0.0
    %v4061 = vadd.f32 %v4059, %v4060
    %v4062 = vsel %vm1453, %v3802, 0.0
    %v4063 = vadd.f32 %v4061, %v4062
    %v4064 = vsel %vm1453, %v3805, 0.0
    %v4065 = vadd.f32 %v4063, %v4064
    %v4066 = vsel %vm1453, %v3807, 0.0
    %v4067 = vadd.f32 %v4065, %v4066
    %v4068 = vsel %vm1453, %v3810, 0.0
    %v4069 = vadd.f32 %v4067, %v4068
    %v4070 = vsel %vm1453, %v3812, 0.0
    %v4071 = vadd.f32 %v4069, %v4070
    %v4072 = vsel %vm1453, %v3815, 0.0
    %v4073 = vadd.f32 %v4071, %v4072
    %v4074 = vsel %vm1453, %v3817, 0.0
    %v4075 = vadd.f32 %v4073, %v4074
    %v4076 = vsel %vm1453, %v3820, 0.0
    %v4077 = vadd.f32 %v4075, %v4076
    %v4078 = vsel %vm1453, %v3822, 0.0
    %v4079 = vadd.f32 %v4077, %v4078
    %v4080 = vsel %vm1453, %v3825, 0.0
    %v4081 = vadd.f32 %v4079, %v4080
    %v4082 = vsel %vm1453, %v3827, 0.0
    %v4083 = vadd.f32 %v4081, %v4082
    %v4084 = vsel %vm1453, %v3830, 0.0
    %v4085 = vadd.f32 %v4083, %v4084
    %v4086 = vsel %vm1453, %v3832, 0.0
    %v4087 = vadd.f32 %v4085, %v4086
    %v4088 = vsel %vm1453, %v3835, 0.0
    %v4089 = vadd.f32 %v4087, %v4088
    %v4090 = vsel %vm1453, %v3837, 0.0
    %v4091 = vadd.f32 %v4089, %v4090
    %v4092 = vsel %vm1453, %v3840, 0.0
    %v4093 = vadd.f32 %v4091, %v4092
    %v4094 = vsel %vm1453, %v3842, 0.0
    %v4095 = vadd.f32 %v4093, %v4094
    %v4096 = vsel %vm1453, %v3845, 0.0
    %v4097 = vadd.f32 %v4095, %v4096
    %v4098 = vsel %vm1453, %v3847, 0.0
    %v4099 = vadd.f32 %v4097, %v4098
    %v4100 = vsel %vm1453, %v3850, 0.0
    %v4101 = vadd.f32 %v4099, %v4100
    %v4102 = vsel %vm1453, %v3852, 0.0
    %v4103 = vadd.f32 %v4101, %v4102
    %v4104 = vsel %vm1453, %v3855, 0.0
    %v4105 = vadd.f32 %v4103, %v4104
    %v4106 = vsel %vm1453, %v3857, 0.0
    %v4107 = vadd.f32 %v4105, %v4106
    %v4108 = vsel %vm1453, %v3860, 0.0
    %v4109 = vadd.f32 %v4107, %v4108
    %v4110 = vsel %vm1453, %v3862, 0.0
    %v4111 = vadd.f32 %v4109, %v4110
    %v4112 = vsel %vm1453, %v3865, 0.0
    %v4113 = vadd.f32 %v4111, %v4112
    %v4114 = vsel %vm1453, %v3867, 0.0
    %v4115 = vadd.f32 %v4113, %v4114
    %v4116 = vrot.slane %v4115, 4
    %v4117 = vadd.f32 %v4115, %v4116
    %v4118 = vrot.slane %v4117, 2
    %v4119 = vadd.f32 %v4117, %v4118
    %v4120 = vrot.slane %v4119, 1
    %v4121 = vadd.f32 %v4119, %v4120
    %v4122 = vmul.f32 %v4121, 0.0010080645
    %v4123 = vmul.f32 %v3560, %v3560
    %v4124 = vmul.f32 %v3562, %v3562
    %v4125 = vmul.f32 %v3565, %v3565
    %v4126 = vmul.f32 %v3567, %v3567
    %v4127 = vmul.f32 %v3570, %v3570
    %v4128 = vmul.f32 %v3572, %v3572
    %v4129 = vmul.f32 %v3575, %v3575
    %v4130 = vmul.f32 %v3577, %v3577
    %v4131 = vmul.f32 %v3580, %v3580
    %v4132 = vmul.f32 %v3582, %v3582
    %v4133 = vmul.f32 %v3585, %v3585
    %v4134 = vmul.f32 %v3587, %v3587
    %v4135 = vmul.f32 %v3590, %v3590
    %v4136 = vmul.f32 %v3592, %v3592
    %v4137 = vmul.f32 %v3595, %v3595
    %v4138 = vmul.f32 %v3597, %v3597
    %v4139 = vmul.f32 %v3600, %v3600
    %v4140 = vmul.f32 %v3602, %v3602
    %v4141 = vmul.f32 %v3605, %v3605
    %v4142 = vmul.f32 %v3607, %v3607
    %v4143 = vmul.f32 %v3610, %v3610
    %v4144 = vmul.f32 %v3612, %v3612
    %v4145 = vmul.f32 %v3615, %v3615
    %v4146 = vmul.f32 %v3617, %v3617
    %v4147 = vmul.f32 %v3620, %v3620
    %v4148 = vmul.f32 %v3622, %v3622
    %v4149 = vmul.f32 %v3625, %v3625
    %v4150 = vmul.f32 %v3627, %v3627
    %v4151 = vmul.f32 %v3630, %v3630
    %v4152 = vmul.f32 %v3632, %v3632
    %v4153 = vmul.f32 %v3635, %v3635
    %v4154 = vmul.f32 %v3637, %v3637
    %v4155 = vmul.f32 %v3640, %v3640
    %v4156 = vmul.f32 %v3642, %v3642
    %v4157 = vmul.f32 %v3645, %v3645
    %v4158 = vmul.f32 %v3647, %v3647
    %v4159 = vmul.f32 %v3650, %v3650
    %v4160 = vmul.f32 %v3652, %v3652
    %v4161 = vmul.f32 %v3655, %v3655
    %v4162 = vmul.f32 %v3657, %v3657
    %v4163 = vmul.f32 %v3660, %v3660
    %v4164 = vmul.f32 %v3662, %v3662
    %v4165 = vmul.f32 %v3665, %v3665
    %v4166 = vmul.f32 %v3667, %v3667
    %v4167 = vmul.f32 %v3670, %v3670
    %v4168 = vmul.f32 %v3672, %v3672
    %v4169 = vmul.f32 %v3675, %v3675
    %v4170 = vmul.f32 %v3677, %v3677
    %v4171 = vmul.f32 %v3680, %v3680
    %v4172 = vmul.f32 %v3682, %v3682
    %v4173 = vmul.f32 %v3685, %v3685
    %v4174 = vmul.f32 %v3687, %v3687
    %v4175 = vmul.f32 %v3690, %v3690
    %v4176 = vmul.f32 %v3692, %v3692
    %v4177 = vmul.f32 %v3695, %v3695
    %v4178 = vmul.f32 %v3697, %v3697
    %v4179 = vmul.f32 %v3700, %v3700
    %v4180 = vmul.f32 %v3702, %v3702
    %v4181 = vmul.f32 %v3705, %v3705
    %v4182 = vmul.f32 %v3707, %v3707
    %v4183 = vmul.f32 %v3710, %v3710
    %v4184 = vmul.f32 %v3712, %v3712
    %v4185 = vmul.f32 %v3715, %v3715
    %v4186 = vmul.f32 %v3717, %v3717
    %v4187 = vmul.f32 %v3720, %v3720
    %v4188 = vmul.f32 %v3722, %v3722
    %v4189 = vmul.f32 %v3725, %v3725
    %v4190 = vmul.f32 %v3727, %v3727
    %v4191 = vmul.f32 %v3730, %v3730
    %v4192 = vmul.f32 %v3732, %v3732
    %v4193 = vmul.f32 %v3735, %v3735
    %v4194 = vmul.f32 %v3737, %v3737
    %v4195 = vmul.f32 %v3740, %v3740
    %v4196 = vmul.f32 %v3742, %v3742
    %v4197 = vmul.f32 %v3745, %v3745
    %v4198 = vmul.f32 %v3747, %v3747
    %v4199 = vmul.f32 %v3750, %v3750
    %v4200 = vmul.f32 %v3752, %v3752
    %v4201 = vmul.f32 %v3755, %v3755
    %v4202 = vmul.f32 %v3757, %v3757
    %v4203 = vmul.f32 %v3760, %v3760
    %v4204 = vmul.f32 %v3762, %v3762
    %v4205 = vmul.f32 %v3765, %v3765
    %v4206 = vmul.f32 %v3767, %v3767
    %v4207 = vmul.f32 %v3770, %v3770
    %v4208 = vmul.f32 %v3772, %v3772
    %v4209 = vmul.f32 %v3775, %v3775
    %v4210 = vmul.f32 %v3777, %v3777
    %v4211 = vmul.f32 %v3780, %v3780
    %v4212 = vmul.f32 %v3782, %v3782
    %v4213 = vmul.f32 %v3785, %v3785
    %v4214 = vmul.f32 %v3787, %v3787
    %v4215 = vmul.f32 %v3790, %v3790
    %v4216 = vmul.f32 %v3792, %v3792
    %v4217 = vmul.f32 %v3795, %v3795
    %v4218 = vmul.f32 %v3797, %v3797
    %v4219 = vmul.f32 %v3800, %v3800
    %v4220 = vmul.f32 %v3802, %v3802
    %v4221 = vmul.f32 %v3805, %v3805
    %v4222 = vmul.f32 %v3807, %v3807
    %v4223 = vmul.f32 %v3810, %v3810
    %v4224 = vmul.f32 %v3812, %v3812
    %v4225 = vmul.f32 %v3815, %v3815
    %v4226 = vmul.f32 %v3817, %v3817
    %v4227 = vmul.f32 %v3820, %v3820
    %v4228 = vmul.f32 %v3822, %v3822
    %v4229 = vmul.f32 %v3825, %v3825
    %v4230 = vmul.f32 %v3827, %v3827
    %v4231 = vmul.f32 %v3830, %v3830
    %v4232 = vmul.f32 %v3832, %v3832
    %v4233 = vmul.f32 %v3835, %v3835
    %v4234 = vmul.f32 %v3837, %v3837
    %v4235 = vmul.f32 %v3840, %v3840
    %v4236 = vmul.f32 %v3842, %v3842
    %v4237 = vmul.f32 %v3845, %v3845
    %v4238 = vmul.f32 %v3847, %v3847
    %v4239 = vmul.f32 %v3850, %v3850
    %v4240 = vmul.f32 %v3852, %v3852
    %v4241 = vmul.f32 %v3855, %v3855
    %v4242 = vmul.f32 %v3857, %v3857
    %v4243 = vmul.f32 %v3860, %v3860
    %v4244 = vmul.f32 %v3862, %v3862
    %v4245 = vmul.f32 %v3865, %v3865
    %v4246 = vmul.f32 %v3867, %v3867
    %v4247 = vsel %vm1453, %v4123, 0.0
    %v4248 = vsel %vm1453, %v4124, 0.0
    %v4249 = vadd.f32 %v4247, %v4248
    %v4250 = vsel %vm1453, %v4125, 0.0
    %v4251 = vadd.f32 %v4249, %v4250
    %v4252 = vsel %vm1453, %v4126, 0.0
    %v4253 = vadd.f32 %v4251, %v4252
    %v4254 = vsel %vm1453, %v4127, 0.0
    %v4255 = vadd.f32 %v4253, %v4254
    %v4256 = vsel %vm1453, %v4128, 0.0
    %v4257 = vadd.f32 %v4255, %v4256
    %v4258 = vsel %vm1453, %v4129, 0.0
    %v4259 = vadd.f32 %v4257, %v4258
    %v4260 = vsel %vm1453, %v4130, 0.0
    %v4261 = vadd.f32 %v4259, %v4260
    %v4262 = vsel %vm1453, %v4131, 0.0
    %v4263 = vadd.f32 %v4261, %v4262
    %v4264 = vsel %vm1453, %v4132, 0.0
    %v4265 = vadd.f32 %v4263, %v4264
    %v4266 = vsel %vm1453, %v4133, 0.0
    %v4267 = vadd.f32 %v4265, %v4266
    %v4268 = vsel %vm1453, %v4134, 0.0
    %v4269 = vadd.f32 %v4267, %v4268
    %v4270 = vsel %vm1453, %v4135, 0.0
    %v4271 = vadd.f32 %v4269, %v4270
    %v4272 = vsel %vm1453, %v4136, 0.0
    %v4273 = vadd.f32 %v4271, %v4272
    %v4274 = vsel %vm1453, %v4137, 0.0
    %v4275 = vadd.f32 %v4273, %v4274
    %v4276 = vsel %vm1453, %v4138, 0.0
    %v4277 = vadd.f32 %v4275, %v4276
    %v4278 = vsel %vm1453, %v4139, 0.0
    %v4279 = vadd.f32 %v4277, %v4278
    %v4280 = vsel %vm1453, %v4140, 0.0
    %v4281 = vadd.f32 %v4279, %v4280
    %v4282 = vsel %vm1453, %v4141, 0.0
    %v4283 = vadd.f32 %v4281, %v4282
    %v4284 = vsel %vm1453, %v4142, 0.0
    %v4285 = vadd.f32 %v4283, %v4284
    %v4286 = vsel %vm1453, %v4143, 0.0
    %v4287 = vadd.f32 %v4285, %v4286
    %v4288 = vsel %vm1453, %v4144, 0.0
    %v4289 = vadd.f32 %v4287, %v4288
    %v4290 = vsel %vm1453, %v4145, 0.0
    %v4291 = vadd.f32 %v4289, %v4290
    %v4292 = vsel %vm1453, %v4146, 0.0
    %v4293 = vadd.f32 %v4291, %v4292
    %v4294 = vsel %vm1453, %v4147, 0.0
    %v4295 = vadd.f32 %v4293, %v4294
    %v4296 = vsel %vm1453, %v4148, 0.0
    %v4297 = vadd.f32 %v4295, %v4296
    %v4298 = vsel %vm1453, %v4149, 0.0
    %v4299 = vadd.f32 %v4297, %v4298
    %v4300 = vsel %vm1453, %v4150, 0.0
    %v4301 = vadd.f32 %v4299, %v4300
    %v4302 = vsel %vm1453, %v4151, 0.0
    %v4303 = vadd.f32 %v4301, %v4302
    %v4304 = vsel %vm1453, %v4152, 0.0
    %v4305 = vadd.f32 %v4303, %v4304
    %v4306 = vsel %vm1453, %v4153, 0.0
    %v4307 = vadd.f32 %v4305, %v4306
    %v4308 = vsel %vm1453, %v4154, 0.0
    %v4309 = vadd.f32 %v4307, %v4308
    %v4310 = vsel %vm1453, %v4155, 0.0
    %v4311 = vadd.f32 %v4309, %v4310
    %v4312 = vsel %vm1453, %v4156, 0.0
    %v4313 = vadd.f32 %v4311, %v4312
    %v4314 = vsel %vm1453, %v4157, 0.0
    %v4315 = vadd.f32 %v4313, %v4314
    %v4316 = vsel %vm1453, %v4158, 0.0
    %v4317 = vadd.f32 %v4315, %v4316
    %v4318 = vsel %vm1453, %v4159, 0.0
    %v4319 = vadd.f32 %v4317, %v4318
    %v4320 = vsel %vm1453, %v4160, 0.0
    %v4321 = vadd.f32 %v4319, %v4320
    %v4322 = vsel %vm1453, %v4161, 0.0
    %v4323 = vadd.f32 %v4321, %v4322
    %v4324 = vsel %vm1453, %v4162, 0.0
    %v4325 = vadd.f32 %v4323, %v4324
    %v4326 = vsel %vm1453, %v4163, 0.0
    %v4327 = vadd.f32 %v4325, %v4326
    %v4328 = vsel %vm1453, %v4164, 0.0
    %v4329 = vadd.f32 %v4327, %v4328
    %v4330 = vsel %vm1453, %v4165, 0.0
    %v4331 = vadd.f32 %v4329, %v4330
    %v4332 = vsel %vm1453, %v4166, 0.0
    %v4333 = vadd.f32 %v4331, %v4332
    %v4334 = vsel %vm1453, %v4167, 0.0
    %v4335 = vadd.f32 %v4333, %v4334
    %v4336 = vsel %vm1453, %v4168, 0.0
    %v4337 = vadd.f32 %v4335, %v4336
    %v4338 = vsel %vm1453, %v4169, 0.0
    %v4339 = vadd.f32 %v4337, %v4338
    %v4340 = vsel %vm1453, %v4170, 0.0
    %v4341 = vadd.f32 %v4339, %v4340
    %v4342 = vsel %vm1453, %v4171, 0.0
    %v4343 = vadd.f32 %v4341, %v4342
    %v4344 = vsel %vm1453, %v4172, 0.0
    %v4345 = vadd.f32 %v4343, %v4344
    %v4346 = vsel %vm1453, %v4173, 0.0
    %v4347 = vadd.f32 %v4345, %v4346
    %v4348 = vsel %vm1453, %v4174, 0.0
    %v4349 = vadd.f32 %v4347, %v4348
    %v4350 = vsel %vm1453, %v4175, 0.0
    %v4351 = vadd.f32 %v4349, %v4350
    %v4352 = vsel %vm1453, %v4176, 0.0
    %v4353 = vadd.f32 %v4351, %v4352
    %v4354 = vsel %vm1453, %v4177, 0.0
    %v4355 = vadd.f32 %v4353, %v4354
    %v4356 = vsel %vm1453, %v4178, 0.0
    %v4357 = vadd.f32 %v4355, %v4356
    %v4358 = vsel %vm1453, %v4179, 0.0
    %v4359 = vadd.f32 %v4357, %v4358
    %v4360 = vsel %vm1453, %v4180, 0.0
    %v4361 = vadd.f32 %v4359, %v4360
    %v4362 = vsel %vm1453, %v4181, 0.0
    %v4363 = vadd.f32 %v4361, %v4362
    %v4364 = vsel %vm1453, %v4182, 0.0
    %v4365 = vadd.f32 %v4363, %v4364
    %v4366 = vsel %vm1453, %v4183, 0.0
    %v4367 = vadd.f32 %v4365, %v4366
    %v4368 = vsel %vm1453, %v4184, 0.0
    %v4369 = vadd.f32 %v4367, %v4368
    %v4370 = vsel %vm1453, %v4185, 0.0
    %v4371 = vadd.f32 %v4369, %v4370
    %v4372 = vsel %vm1453, %v4186, 0.0
    %v4373 = vadd.f32 %v4371, %v4372
    %v4374 = vsel %vm1453, %v4187, 0.0
    %v4375 = vadd.f32 %v4373, %v4374
    %v4376 = vsel %vm1453, %v4188, 0.0
    %v4377 = vadd.f32 %v4375, %v4376
    %v4378 = vsel %vm1453, %v4189, 0.0
    %v4379 = vadd.f32 %v4377, %v4378
    %v4380 = vsel %vm1453, %v4190, 0.0
    %v4381 = vadd.f32 %v4379, %v4380
    %v4382 = vsel %vm1453, %v4191, 0.0
    %v4383 = vadd.f32 %v4381, %v4382
    %v4384 = vsel %vm1453, %v4192, 0.0
    %v4385 = vadd.f32 %v4383, %v4384
    %v4386 = vsel %vm1453, %v4193, 0.0
    %v4387 = vadd.f32 %v4385, %v4386
    %v4388 = vsel %vm1453, %v4194, 0.0
    %v4389 = vadd.f32 %v4387, %v4388
    %v4390 = vsel %vm1453, %v4195, 0.0
    %v4391 = vadd.f32 %v4389, %v4390
    %v4392 = vsel %vm1453, %v4196, 0.0
    %v4393 = vadd.f32 %v4391, %v4392
    %v4394 = vsel %vm1453, %v4197, 0.0
    %v4395 = vadd.f32 %v4393, %v4394
    %v4396 = vsel %vm1453, %v4198, 0.0
    %v4397 = vadd.f32 %v4395, %v4396
    %v4398 = vsel %vm1453, %v4199, 0.0
    %v4399 = vadd.f32 %v4397, %v4398
    %v4400 = vsel %vm1453, %v4200, 0.0
    %v4401 = vadd.f32 %v4399, %v4400
    %v4402 = vsel %vm1453, %v4201, 0.0
    %v4403 = vadd.f32 %v4401, %v4402
    %v4404 = vsel %vm1453, %v4202, 0.0
    %v4405 = vadd.f32 %v4403, %v4404
    %v4406 = vsel %vm1453, %v4203, 0.0
    %v4407 = vadd.f32 %v4405, %v4406
    %v4408 = vsel %vm1453, %v4204, 0.0
    %v4409 = vadd.f32 %v4407, %v4408
    %v4410 = vsel %vm1453, %v4205, 0.0
    %v4411 = vadd.f32 %v4409, %v4410
    %v4412 = vsel %vm1453, %v4206, 0.0
    %v4413 = vadd.f32 %v4411, %v4412
    %v4414 = vsel %vm1453, %v4207, 0.0
    %v4415 = vadd.f32 %v4413, %v4414
    %v4416 = vsel %vm1453, %v4208, 0.0
    %v4417 = vadd.f32 %v4415, %v4416
    %v4418 = vsel %vm1453, %v4209, 0.0
    %v4419 = vadd.f32 %v4417, %v4418
    %v4420 = vsel %vm1453, %v4210, 0.0
    %v4421 = vadd.f32 %v4419, %v4420
    %v4422 = vsel %vm1453, %v4211, 0.0
    %v4423 = vadd.f32 %v4421, %v4422
    %v4424 = vsel %vm1453, %v4212, 0.0
    %v4425 = vadd.f32 %v4423, %v4424
    %v4426 = vsel %vm1453, %v4213, 0.0
    %v4427 = vadd.f32 %v4425, %v4426
    %v4428 = vsel %vm1453, %v4214, 0.0
    %v4429 = vadd.f32 %v4427, %v4428
    %v4430 = vsel %vm1453, %v4215, 0.0
    %v4431 = vadd.f32 %v4429, %v4430
    %v4432 = vsel %vm1453, %v4216, 0.0
    %v4433 = vadd.f32 %v4431, %v4432
    %v4434 = vsel %vm1453, %v4217, 0.0
    %v4435 = vadd.f32 %v4433, %v4434
    %v4436 = vsel %vm1453, %v4218, 0.0
    %v4437 = vadd.f32 %v4435, %v4436
    %v4438 = vsel %vm1453, %v4219, 0.0
    %v4439 = vadd.f32 %v4437, %v4438
    %v4440 = vsel %vm1453, %v4220, 0.0
    %v4441 = vadd.f32 %v4439, %v4440
    %v4442 = vsel %vm1453, %v4221, 0.0
    %v4443 = vadd.f32 %v4441, %v4442
    %v4444 = vsel %vm1453, %v4222, 0.0
    %v4445 = vadd.f32 %v4443, %v4444
    %v4446 = vsel %vm1453, %v4223, 0.0
    %v4447 = vadd.f32 %v4445, %v4446
    %v4448 = vsel %vm1453, %v4224, 0.0
    %v4449 = vadd.f32 %v4447, %v4448
    %v4450 = vsel %vm1453, %v4225, 0.0
    %v4451 = vadd.f32 %v4449, %v4450
    %v4452 = vsel %vm1453, %v4226, 0.0
    %v4453 = vadd.f32 %v4451, %v4452
    %v4454 = vsel %vm1453, %v4227, 0.0
    %v4455 = vadd.f32 %v4453, %v4454
    %v4456 = vsel %vm1453, %v4228, 0.0
    %v4457 = vadd.f32 %v4455, %v4456
    %v4458 = vsel %vm1453, %v4229, 0.0
    %v4459 = vadd.f32 %v4457, %v4458
    %v4460 = vsel %vm1453, %v4230, 0.0
    %v4461 = vadd.f32 %v4459, %v4460
    %v4462 = vsel %vm1453, %v4231, 0.0
    %v4463 = vadd.f32 %v4461, %v4462
    %v4464 = vsel %vm1453, %v4232, 0.0
    %v4465 = vadd.f32 %v4463, %v4464
    %v4466 = vsel %vm1453, %v4233, 0.0
    %v4467 = vadd.f32 %v4465, %v4466
    %v4468 = vsel %vm1453, %v4234, 0.0
    %v4469 = vadd.f32 %v4467, %v4468
    %v4470 = vsel %vm1453, %v4235, 0.0
    %v4471 = vadd.f32 %v4469, %v4470
    %v4472 = vsel %vm1453, %v4236, 0.0
    %v4473 = vadd.f32 %v4471, %v4472
    %v4474 = vsel %vm1453, %v4237, 0.0
    %v4475 = vadd.f32 %v4473, %v4474
    %v4476 = vsel %vm1453, %v4238, 0.0
    %v4477 = vadd.f32 %v4475, %v4476
    %v4478 = vsel %vm1453, %v4239, 0.0
    %v4479 = vadd.f32 %v4477, %v4478
    %v4480 = vsel %vm1453, %v4240, 0.0
    %v4481 = vadd.f32 %v4479, %v4480
    %v4482 = vsel %vm1453, %v4241, 0.0
    %v4483 = vadd.f32 %v4481, %v4482
    %v4484 = vsel %vm1453, %v4242, 0.0
    %v4485 = vadd.f32 %v4483, %v4484
    %v4486 = vsel %vm1453, %v4243, 0.0
    %v4487 = vadd.f32 %v4485, %v4486
    %v4488 = vsel %vm1453, %v4244, 0.0
    %v4489 = vadd.f32 %v4487, %v4488
    %v4490 = vsel %vm1453, %v4245, 0.0
    %v4491 = vadd.f32 %v4489, %v4490
    %v4492 = vsel %vm1453, %v4246, 0.0
    %v4493 = vadd.f32 %v4491, %v4492
    %v4494 = vrot.slane %v4493, 4
    %v4495 = vadd.f32 %v4493, %v4494
    %v4496 = vrot.slane %v4495, 2
    %v4497 = vadd.f32 %v4495, %v4496
    %v4498 = vrot.slane %v4497, 1
    %v4499 = vadd.f32 %v4497, %v4498
    %v4500 = vmul.f32 %v4499, 0.0010080645
    %v4501 = vmul.f32 %v4122, %v4122
    %v4502 = vsub.f32 %v4500, %v4501
    %v4503 = vld [vmem:[%s2] sm:$0x1]
    %v4504 = vld [vmem:[%s2 + $0x1] sm:$0x1]
    %v4505 = vadd.f32 %v4502, 1e-05
    %v4506 = vrsqrt.pop %v4505
    %v4507 = vmul.f32 %v4506, %v4505
    %v4508 = vmul.f32 %v4507, %v4506
    %v4509 = vmul.f32 0.5, %v4508
    %v4510 = vsub.f32 1.5, %v4509
    %v4511 = vmul.f32 %v4506, %v4510
    %vm4512 = vweird.f32 %v4505
    %vm4513 = vweird.f32 %v4506
    %vm4514 = vmor %vm4512, %vm4513
    %v4515 = vsel %vm4514, %v4506, %v4511
    %v4516 = vmul.f32 %v4503, %v4515
    %v4517 = vmul.f32 %v4122, %v4516
    %v4518 = vsub.f32 %v4504, %v4517
    %v4519 = vperm.slane %v4516, 0
    %v4520 = vmul.f32 %v3560, %v4519
    %v4521 = vmul.f32 %v3562, %v4519
    %v4522 = vmul.f32 %v3565, %v4519
    %v4523 = vmul.f32 %v3567, %v4519
    %v4524 = vmul.f32 %v3570, %v4519
    %v4525 = vmul.f32 %v3572, %v4519
    %v4526 = vmul.f32 %v3575, %v4519
    %v4527 = vmul.f32 %v3577, %v4519
    %v4528 = vmul.f32 %v3580, %v4519
    %v4529 = vmul.f32 %v3582, %v4519
    %v4530 = vmul.f32 %v3585, %v4519
    %v4531 = vmul.f32 %v3587, %v4519
    %v4532 = vmul.f32 %v3590, %v4519
    %v4533 = vmul.f32 %v3592, %v4519
    %v4534 = vmul.f32 %v3595, %v4519
    %v4535 = vmul.f32 %v3597, %v4519
    %v4536 = vmul.f32 %v3600, %v4519
    %v4537 = vmul.f32 %v3602, %v4519
    %v4538 = vmul.f32 %v3605, %v4519
    %v4539 = vmul.f32 %v3607, %v4519
    %v4540 = vmul.f32 %v3610, %v4519
    %v4541 = vmul.f32 %v3612, %v4519
    %v4542 = vmul.f32 %v3615, %v4519
    %v4543 = vmul.f32 %v3617, %v4519
    %v4544 = vmul.f32 %v3620, %v4519
    %v4545 = vmul.f32 %v3622, %v4519
    %v4546 = vmul.f32 %v3625, %v4519
    %v4547 = vmul.f32 %v3627, %v4519
    %v4548 = vmul.f32 %v3630, %v4519
    %v4549 = vmul.f32 %v3632, %v4519
    %v4550 = vmul.f32 %v3635, %v4519
    %v4551 = vmul.f32 %v3637, %v4519
    %v4552 = vmul.f32 %v3640, %v4519
    %v4553 = vmul.f32 %v3642, %v4519
    %v4554 = vmul.f32 %v3645, %v4519
    %v4555 = vmul.f32 %v3647, %v4519
    %v4556 = vmul.f32 %v3650, %v4519
    %v4557 = vmul.f32 %v3652, %v4519
    %v4558 = vmul.f32 %v3655, %v4519
    %v4559 = vmul.f32 %v3657, %v4519
    %v4560 = vmul.f32 %v3660, %v4519
    %v4561 = vmul.f32 %v3662, %v4519
    %v4562 = vmul.f32 %v3665, %v4519
    %v4563 = vmul.f32 %v3667, %v4519
    %v4564 = vmul.f32 %v3670, %v4519
    %v4565 = vmul.f32 %v3672, %v4519
    %v4566 = vmul.f32 %v3675, %v4519
    %v4567 = vmul.f32 %v3677, %v4519
    %v4568 = vmul.f32 %v3680, %v4519
    %v4569 = vmul.f32 %v3682, %v4519
    %v4570 = vmul.f32 %v3685, %v4519
    %v4571 = vmul.f32 %v3687, %v4519
    %v4572 = vmul.f32 %v3690, %v4519
    %v4573 = vmul.f32 %v3692, %v4519
    %v4574 = vmul.f32 %v3695, %v4519
    %v4575 = vmul.f32 %v3697, %v4519
    %v4576 = vmul.f32 %v3700, %v4519
    %v4577 = vmul.f32 %v3702, %v4519
    %v4578 = vmul.f32 %v3705, %v4519
    %v4579 = vmul.f32 %v3707, %v4519
    %v4580 = vmul.f32 %v3710, %v4519
    %v4581 = vmul.f32 %v3712, %v4519
    %v4582 = vmul.f32 %v3715, %v4519
    %v4583 = vmul.f32 %v3717, %v4519
    %v4584 = vmul.f32 %v3720, %v4519
    %v4585 = vmul.f32 %v3722, %v4519
    %v4586 = vmul.f32 %v3725, %v4519
    %v4587 = vmul.f32 %v3727, %v4519
    %v4588 = vmul.f32 %v3730, %v4519
    %v4589 = vmul.f32 %v3732, %v4519
    %v4590 = vmul.f32 %v3735, %v4519
    %v4591 = vmul.f32 %v3737, %v4519
    %v4592 = vmul.f32 %v3740, %v4519
    %v4593 = vmul.f32 %v3742, %v4519
    %v4594 = vmul.f32 %v3745, %v4519
    %v4595 = vmul.f32 %v3747, %v4519
    %v4596 = vmul.f32 %v3750, %v4519
    %v4597 = vmul.f32 %v3752, %v4519
    %v4598 = vmul.f32 %v3755, %v4519
    %v4599 = vmul.f32 %v3757, %v4519
    %v4600 = vmul.f32 %v3760, %v4519
    %v4601 = vmul.f32 %v3762, %v4519
    %v4602 = vmul.f32 %v3765, %v4519
    %v4603 = vmul.f32 %v3767, %v4519
    %v4604 = vmul.f32 %v3770, %v4519
    %v4605 = vmul.f32 %v3772, %v4519
    %v4606 = vmul.f32 %v3775, %v4519
    %v4607 = vmul.f32 %v3777, %v4519
    %v4608 = vmul.f32 %v3780, %v4519
    %v4609 = vmul.f32 %v3782, %v4519
    %v4610 = vmul.f32 %v3785, %v4519
    %v4611 = vmul.f32 %v3787, %v4519
    %v4612 = vmul.f32 %v3790, %v4519
    %v4613 = vmul.f32 %v3792, %v4519
    %v4614 = vmul.f32 %v3795, %v4519
    %v4615 = vmul.f32 %v3797, %v4519
    %v4616 = vmul.f32 %v3800, %v4519
    %v4617 = vmul.f32 %v3802, %v4519
    %v4618 = vmul.f32 %v3805, %v4519
    %v4619 = vmul.f32 %v3807, %v4519
    %v4620 = vmul.f32 %v3810, %v4519
    %v4621 = vmul.f32 %v3812, %v4519
    %v4622 = vmul.f32 %v3815, %v4519
    %v4623 = vmul.f32 %v3817, %v4519
    %v4624 = vmul.f32 %v3820, %v4519
    %v4625 = vmul.f32 %v3822, %v4519
    %v4626 = vmul.f32 %v3825, %v4519
    %v4627 = vmul.f32 %v3827, %v4519
    %v4628 = vmul.f32 %v3830, %v4519
    %v4629 = vmul.f32 %v3832, %v4519
    %v4630 = vmul.f32 %v3835, %v4519
    %v4631 = vmul.f32 %v3837, %v4519
    %v4632 = vmul.f32 %v3840, %v4519
    %v4633 = vmul.f32 %v3842, %v4519
    %v4634 = vmul.f32 %v3845, %v4519
    %v4635 = vmul.f32 %v3847, %v4519
    %v4636 = vmul.f32 %v3850, %v4519
    %v4637 = vmul.f32 %v3852, %v4519
    %v4638 = vmul.f32 %v3855, %v4519
    %v4639 = vmul.f32 %v3857, %v4519
    %v4640 = vmul.f32 %v3860, %v4519
    %v4641 = vmul.f32 %v3862, %v4519
    %v4642 = vmul.f32 %v3865, %v4519
    %v4643 = vmul.f32 %v3867, %v4519
    %v4644 = vperm.slane %v4518, 0
    %v4645 = vadd.f32 %v4520, %v4644
    %v4646 = vadd.f32 %v4521, %v4644
    %v4647 = vadd.f32 %v4522, %v4644
    %v4648 = vadd.f32 %v4523, %v4644
    %v4649 = vadd.f32 %v4524, %v4644
    %v4650 = vadd.f32 %v4525, %v4644
    %v4651 = vadd.f32 %v4526, %v4644
    %v4652 = vadd.f32 %v4527, %v4644
    %v4653 = vadd.f32 %v4528, %v4644
    %v4654 = vadd.f32 %v4529, %v4644
    %v4655 = vadd.f32 %v4530, %v4644
    %v4656 = vadd.f32 %v4531, %v4644
    %v4657 = vadd.f32 %v4532, %v4644
    %v4658 = vadd.f32 %v4533, %v4644
    %v4659 = vadd.f32 %v4534, %v4644
    %v4660 = vadd.f32 %v4535, %v4644
    %v4661 = vadd.f32 %v4536, %v4644
    %v4662 = vadd.f32 %v4537, %v4644
    %v4663 = vadd.f32 %v4538, %v4644
    %v4664 = vadd.f32 %v4539, %v4644
    %v4665 = vadd.f32 %v4540, %v4644
    %v4666 = vadd.f32 %v4541, %v4644
    %v4667 = vadd.f32 %v4542, %v4644
    %v4668 = vadd.f32 %v4543, %v4644
    %v4669 = vadd.f32 %v4544, %v4644
    %v4670 = vadd.f32 %v4545, %v4644
    %v4671 = vadd.f32 %v4546, %v4644
    %v4672 = vadd.f32 %v4547, %v4644
    %v4673 = vadd.f32 %v4548, %v4644
    %v4674 = vadd.f32 %v4549, %v4644
    %v4675 = vadd.f32 %v4550, %v4644
    %v4676 = vadd.f32 %v4551, %v4644
    %v4677 = vadd.f32 %v4552, %v4644
    %v4678 = vadd.f32 %v4553, %v4644
    %v4679 = vadd.f32 %v4554, %v4644
    %v4680 = vadd.f32 %v4555, %v4644
    %v4681 = vadd.f32 %v4556, %v4644
    %v4682 = vadd.f32 %v4557, %v4644
    %v4683 = vadd.f32 %v4558, %v4644
    %v4684 = vadd.f32 %v4559, %v4644
    %v4685 = vadd.f32 %v4560, %v4644
    %v4686 = vadd.f32 %v4561, %v4644
    %v4687 = vadd.f32 %v4562, %v4644
    %v4688 = vadd.f32 %v4563, %v4644
    %v4689 = vadd.f32 %v4564, %v4644
    %v4690 = vadd.f32 %v4565, %v4644
    %v4691 = vadd.f32 %v4566, %v4644
    %v4692 = vadd.f32 %v4567, %v4644
    %v4693 = vadd.f32 %v4568, %v4644
    %v4694 = vadd.f32 %v4569, %v4644
    %v4695 = vadd.f32 %v4570, %v4644
    %v4696 = vadd.f32 %v4571, %v4644
    %v4697 = vadd.f32 %v4572, %v4644
    %v4698 = vadd.f32 %v4573, %v4644
    %v4699 = vadd.f32 %v4574, %v4644
    %v4700 = vadd.f32 %v4575, %v4644
    %v4701 = vadd.f32 %v4576, %v4644
    %v4702 = vadd.f32 %v4577, %v4644
    %v4703 = vadd.f32 %v4578, %v4644
    %v4704 = vadd.f32 %v4579, %v4644
    %v4705 = vadd.f32 %v4580, %v4644
    %v4706 = vadd.f32 %v4581, %v4644
    %v4707 = vadd.f32 %v4582, %v4644
    %v4708 = vadd.f32 %v4583, %v4644
    %v4709 = vadd.f32 %v4584, %v4644
    %v4710 = vadd.f32 %v4585, %v4644
    %v4711 = vadd.f32 %v4586, %v4644
    %v4712 = vadd.f32 %v4587, %v4644
    %v4713 = vadd.f32 %v4588, %v4644
    %v4714 = vadd.f32 %v4589, %v4644
    %v4715 = vadd.f32 %v4590, %v4644
    %v4716 = vadd.f32 %v4591, %v4644
    %v4717 = vadd.f32 %v4592, %v4644
    %v4718 = vadd.f32 %v4593, %v4644
    %v4719 = vadd.f32 %v4594, %v4644
    %v4720 = vadd.f32 %v4595, %v4644
    %v4721 = vadd.f32 %v4596, %v4644
    %v4722 = vadd.f32 %v4597, %v4644
    %v4723 = vadd.f32 %v4598, %v4644
    %v4724 = vadd.f32 %v4599, %v4644
    %v4725 = vadd.f32 %v4600, %v4644
    %v4726 = vadd.f32 %v4601, %v4644
    %v4727 = vadd.f32 %v4602, %v4644
    %v4728 = vadd.f32 %v4603, %v4644
    %v4729 = vadd.f32 %v4604, %v4644
    %v4730 = vadd.f32 %v4605, %v4644
    %v4731 = vadd.f32 %v4606, %v4644
    %v4732 = vadd.f32 %v4607, %v4644
    %v4733 = vadd.f32 %v4608, %v4644
    %v4734 = vadd.f32 %v4609, %v4644
    %v4735 = vadd.f32 %v4610, %v4644
    %v4736 = vadd.f32 %v4611, %v4644
    %v4737 = vadd.f32 %v4612, %v4644
    %v4738 = vadd.f32 %v4613, %v4644
    %v4739 = vadd.f32 %v4614, %v4644
    %v4740 = vadd.f32 %v4615, %v4644
    %v4741 = vadd.f32 %v4616, %v4644
    %v4742 = vadd.f32 %v4617, %v4644
    %v4743 = vadd.f32 %v4618, %v4644
    %v4744 = vadd.f32 %v4619, %v4644
    %v4745 = vadd.f32 %v4620, %v4644
    %v4746 = vadd.f32 %v4621, %v4644
    %v4747 = vadd.f32 %v4622, %v4644
    %v4748 = vadd.f32 %v4623, %v4644
    %v4749 = vadd.f32 %v4624, %v4644
    %v4750 = vadd.f32 %v4625, %v4644
    %v4751 = vadd.f32 %v4626, %v4644
    %v4752 = vadd.f32 %v4627, %v4644
    %v4753 = vadd.f32 %v4628, %v4644
    %v4754 = vadd.f32 %v4629, %v4644
    %v4755 = vadd.f32 %v4630, %v4644
    %v4756 = vadd.f32 %v4631, %v4644
    %v4757 = vadd.f32 %v4632, %v4644
    %v4758 = vadd.f32 %v4633, %v4644
    %v4759 = vadd.f32 %v4634, %v4644
    %v4760 = vadd.f32 %v4635, %v4644
    %v4761 = vadd.f32 %v4636, %v4644
    %v4762 = vadd.f32 %v4637, %v4644
    %v4763 = vadd.f32 %v4638, %v4644
    %v4764 = vadd.f32 %v4639, %v4644
    %v4765 = vadd.f32 %v4640, %v4644
    %v4766 = vadd.f32 %v4641, %v4644
    %v4767 = vadd.f32 %v4642, %v4644
    %v4768 = vadd.f32 %v4643, %v4644
    %v4769 = vmax.f32 %v4645, 0.0
    %v4770 = vmax.f32 %v4646, 0.0
    %v4771 = vmax.f32 %v4647, 0.0
    %v4772 = vmax.f32 %v4648, 0.0
    %v4773 = vmax.f32 %v4649, 0.0
    %v4774 = vmax.f32 %v4650, 0.0
    %v4775 = vmax.f32 %v4651, 0.0
    %v4776 = vmax.f32 %v4652, 0.0
    %v4777 = vmax.f32 %v4653, 0.0
    %v4778 = vmax.f32 %v4654, 0.0
    %v4779 = vmax.f32 %v4655, 0.0
    %v4780 = vmax.f32 %v4656, 0.0
    %v4781 = vmax.f32 %v4657, 0.0
    %v4782 = vmax.f32 %v4658, 0.0
    %v4783 = vmax.f32 %v4659, 0.0
    %v4784 = vmax.f32 %v4660, 0.0
    %v4785 = vmax.f32 %v4661, 0.0
    %v4786 = vmax.f32 %v4662, 0.0
    %v4787 = vmax.f32 %v4663, 0.0
    %v4788 = vmax.f32 %v4664, 0.0
    %v4789 = vmax.f32 %v4665, 0.0
    %v4790 = vmax.f32 %v4666, 0.0
    %v4791 = vmax.f32 %v4667, 0.0
    %v4792 = vmax.f32 %v4668, 0.0
    %v4793 = vmax.f32 %v4669, 0.0
    %v4794 = vmax.f32 %v4670, 0.0
    %v4795 = vmax.f32 %v4671, 0.0
    %v4796 = vmax.f32 %v4672, 0.0
    %v4797 = vmax.f32 %v4673, 0.0
    %v4798 = vmax.f32 %v4674, 0.0
    %v4799 = vmax.f32 %v4675, 0.0
    %v4800 = vmax.f32 %v4676, 0.0
    %v4801 = vmax.f32 %v4677, 0.0
    %v4802 = vmax.f32 %v4678, 0.0
    %v4803 = vmax.f32 %v4679, 0.0
    %v4804 = vmax.f32 %v4680, 0.0
    %v4805 = vmax.f32 %v4681, 0.0
    %v4806 = vmax.f32 %v4682, 0.0
    %v4807 = vmax.f32 %v4683, 0.0
    %v4808 = vmax.f32 %v4684, 0.0
    %v4809 = vmax.f32 %v4685, 0.0
    %v4810 = vmax.f32 %v4686, 0.0
    %v4811 = vmax.f32 %v4687, 0.0
    %v4812 = vmax.f32 %v4688, 0.0
    %v4813 = vmax.f32 %v4689, 0.0
    %v4814 = vmax.f32 %v4690, 0.0
    %v4815 = vmax.f32 %v4691, 0.0
    %v4816 = vmax.f32 %v4692, 0.0
    %v4817 = vmax.f32 %v4693, 0.0
    %v4818 = vmax.f32 %v4694, 0.0
    %v4819 = vmax.f32 %v4695, 0.0
    %v4820 = vmax.f32 %v4696, 0.0
    %v4821 = vmax.f32 %v4697, 0.0
    %v4822 = vmax.f32 %v4698, 0.0
    %v4823 = vmax.f32 %v4699, 0.0
    %v4824 = vmax.f32 %v4700, 0.0
    %v4825 = vmax.f32 %v4701, 0.0
    %v4826 = vmax.f32 %v4702, 0.0
    %v4827 = vmax.f32 %v4703, 0.0
    %v4828 = vmax.f32 %v4704, 0.0
    %v4829 = vmax.f32 %v4705, 0.0
    %v4830 = vmax.f32 %v4706, 0.0
    %v4831 = vmax.f32 %v4707, 0.0
    %v4832 = vmax.f32 %v4708, 0.0
    %v4833 = vmax.f32 %v4709, 0.0
    %v4834 = vmax.f32 %v4710, 0.0
    %v4835 = vmax.f32 %v4711, 0.0
    %v4836 = vmax.f32 %v4712, 0.0
    %v4837 = vmax.f32 %v4713, 0.0
    %v4838 = vmax.f32 %v4714, 0.0
    %v4839 = vmax.f32 %v4715, 0.0
    %v4840 = vmax.f32 %v4716, 0.0
    %v4841 = vmax.f32 %v4717, 0.0
    %v4842 = vmax.f32 %v4718, 0.0
    %v4843 = vmax.f32 %v4719, 0.0
    %v4844 = vmax.f32 %v4720, 0.0
    %v4845 = vmax.f32 %v4721, 0.0
    %v4846 = vmax.f32 %v4722, 0.0
    %v4847 = vmax.f32 %v4723, 0.0
    %v4848 = vmax.f32 %v4724, 0.0
    %v4849 = vmax.f32 %v4725, 0.0
    %v4850 = vmax.f32 %v4726, 0.0
    %v4851 = vmax.f32 %v4727, 0.0
    %v4852 = vmax.f32 %v4728, 0.0
    %v4853 = vmax.f32 %v4729, 0.0
    %v4854 = vmax.f32 %v4730, 0.0
    %v4855 = vmax.f32 %v4731, 0.0
    %v4856 = vmax.f32 %v4732, 0.0
    %v4857 = vmax.f32 %v4733, 0.0
    %v4858 = vmax.f32 %v4734, 0.0
    %v4859 = vmax.f32 %v4735, 0.0
    %v4860 = vmax.f32 %v4736, 0.0
    %v4861 = vmax.f32 %v4737, 0.0
    %v4862 = vmax.f32 %v4738, 0.0
    %v4863 = vmax.f32 %v4739, 0.0
    %v4864 = vmax.f32 %v4740, 0.0
    %v4865 = vmax.f32 %v4741, 0.0
    %v4866 = vmax.f32 %v4742, 0.0
    %v4867 = vmax.f32 %v4743, 0.0
    %v4868 = vmax.f32 %v4744, 0.0
    %v4869 = vmax.f32 %v4745, 0.0
    %v4870 = vmax.f32 %v4746, 0.0
    %v4871 = vmax.f32 %v4747, 0.0
    %v4872 = vmax.f32 %v4748, 0.0
    %v4873 = vmax.f32 %v4749, 0.0
    %v4874 = vmax.f32 %v4750, 0.0
    %v4875 = vmax.f32 %v4751, 0.0
    %v4876 = vmax.f32 %v4752, 0.0
    %v4877 = vmax.f32 %v4753, 0.0
    %v4878 = vmax.f32 %v4754, 0.0
    %v4879 = vmax.f32 %v4755, 0.0
    %v4880 = vmax.f32 %v4756, 0.0
    %v4881 = vmax.f32 %v4757, 0.0
    %v4882 = vmax.f32 %v4758, 0.0
    %v4883 = vmax.f32 %v4759, 0.0
    %v4884 = vmax.f32 %v4760, 0.0
    %v4885 = vmax.f32 %v4761, 0.0
    %v4886 = vmax.f32 %v4762, 0.0
    %v4887 = vmax.f32 %v4763, 0.0
    %v4888 = vmax.f32 %v4764, 0.0
    %v4889 = vmax.f32 %v4765, 0.0
    %v4890 = vmax.f32 %v4766, 0.0
    %v4891 = vmax.f32 %v4767, 0.0
    %v4892 = vmax.f32 %v4768, 0.0
    %v4955 = vrot.slane %v4769, 4
    %v4956 = vrot.slane %v4770, 4
    %v4957 = vrot.slane %v4771, 4
    %v4958 = vrot.slane %v4772, 4
    %v4959 = vrot.slane %v4773, 4
    %v4960 = vrot.slane %v4774, 4
    %v4961 = vrot.slane %v4775, 4
    %v4962 = vrot.slane %v4776, 4
    %v4963 = vrot.slane %v4777, 4
    %v4964 = vrot.slane %v4778, 4
    %v4965 = vrot.slane %v4779, 4
    %v4966 = vrot.slane %v4780, 4
    %v4967 = vrot.slane %v4781, 4
    %v4968 = vrot.slane %v4782, 4
    %v4969 = vrot.slane %v4783, 4
    %v4970 = vrot.slane %v4784, 4
    %v4971 = vrot.slane %v4785, 4
    %v4972 = vrot.slane %v4786, 4
    %v4973 = vrot.slane %v4787, 4
    %v4974 = vrot.slane %v4788, 4
    %v4975 = vrot.slane %v4789, 4
    %v4976 = vrot.slane %v4790, 4
    %v4977 = vrot.slane %v4791, 4
    %v4978 = vrot.slane %v4792, 4
    %v4979 = vrot.slane %v4793, 4
    %v4980 = vrot.slane %v4794, 4
    %v4981 = vrot.slane %v4795, 4
    %v4982 = vrot.slane %v4796, 4
    %v4983 = vrot.slane %v4797, 4
    %v4984 = vrot.slane %v4798, 4
    %v4985 = vrot.slane %v4799, 4
    %v4986 = vrot.slane %v4800, 4
    %v4987 = vrot.slane %v4801, 4
    %v4988 = vrot.slane %v4802, 4
    %v4989 = vrot.slane %v4803, 4
    %v4990 = vrot.slane %v4804, 4
    %v4991 = vrot.slane %v4805, 4
    %v4992 = vrot.slane %v4806, 4
    %v4993 = vrot.slane %v4807, 4
    %v4994 = vrot.slane %v4808, 4
    %v4995 = vrot.slane %v4809, 4
    %v4996 = vrot.slane %v4810, 4
    %v4997 = vrot.slane %v4811, 4
    %v4998 = vrot.slane %v4812, 4
    %v4999 = vrot.slane %v4813, 4
    %v5000 = vrot.slane %v4814, 4
    %v5001 = vrot.slane %v4815, 4
    %v5002 = vrot.slane %v4816, 4
    %v5003 = vrot.slane %v4817, 4
    %v5004 = vrot.slane %v4818, 4
    %v5005 = vrot.slane %v4819, 4
    %v5006 = vrot.slane %v4820, 4
    %v5007 = vrot.slane %v4821, 4
    %v5008 = vrot.slane %v4822, 4
    %v5009 = vrot.slane %v4823, 4
    %v5010 = vrot.slane %v4824, 4
    %v5011 = vrot.slane %v4825, 4
    %v5012 = vrot.slane %v4826, 4
    %v5013 = vrot.slane %v4827, 4
    %v5014 = vrot.slane %v4828, 4
    %v5015 = vrot.slane %v4829, 4
    %v5016 = vrot.slane %v4830, 4
    %vm5079 = vcmask 257024
    %v5080 = vsel %vm5079, %v4769, -inf
    %v5081 = vrot.slane %v5080, 4
    %v5082 = vmax.f32 %v5080, %v5081
    %v5083 = vrot.slane %v5082, 2
    %v5084 = vmax.f32 %v5082, %v5083
    %v5085 = vrot.slane %v5084, 1
    %v5086 = vmax.f32 %v5084, %v5085
    %v5087 = vsel %vm5079, %v4955, -inf
    %v5088 = vrot.slane %v5087, 4
    %v5089 = vmax.f32 %v5087, %v5088
    %v5090 = vrot.slane %v5089, 2
    %v5091 = vmax.f32 %v5089, %v5090
    %v5092 = vrot.slane %v5091, 1
    %v5093 = vmax.f32 %v5091, %v5092
    %v5094 = vsel %vm5079, %v4770, -inf
    %v5095 = vrot.slane %v5094, 4
    %v5096 = vmax.f32 %v5094, %v5095
    %v5097 = vrot.slane %v5096, 2
    %v5098 = vmax.f32 %v5096, %v5097
    %v5099 = vrot.slane %v5098, 1
    %v5100 = vmax.f32 %v5098, %v5099
    %v5101 = vsel %vm5079, %v4956, -inf
    %v5102 = vrot.slane %v5101, 4
    %v5103 = vmax.f32 %v5101, %v5102
    %v5104 = vrot.slane %v5103, 2
    %v5105 = vmax.f32 %v5103, %v5104
    %v5106 = vrot.slane %v5105, 1
    %v5107 = vmax.f32 %v5105, %v5106
    %v5108 = vsel %vm5079, %v4771, -inf
    %v5109 = vrot.slane %v5108, 4
    %v5110 = vmax.f32 %v5108, %v5109
    %v5111 = vrot.slane %v5110, 2
    %v5112 = vmax.f32 %v5110, %v5111
    %v5113 = vrot.slane %v5112, 1
    %v5114 = vmax.f32 %v5112, %v5113
    %v5115 = vsel %vm5079, %v4957, -inf
    %v5116 = vrot.slane %v5115, 4
    %v5117 = vmax.f32 %v5115, %v5116
    %v5118 = vrot.slane %v5117, 2
    %v5119 = vmax.f32 %v5117, %v5118
    %v5120 = vrot.slane %v5119, 1
    %v5121 = vmax.f32 %v5119, %v5120
    %v5122 = vsel %vm5079, %v4772, -inf
    %v5123 = vrot.slane %v5122, 4
    %v5124 = vmax.f32 %v5122, %v5123
    %v5125 = vrot.slane %v5124, 2
    %v5126 = vmax.f32 %v5124, %v5125
    %v5127 = vrot.slane %v5126, 1
    %v5128 = vmax.f32 %v5126, %v5127
    %v5129 = vsel %vm5079, %v4958, -inf
    %v5130 = vrot.slane %v5129, 4
    %v5131 = vmax.f32 %v5129, %v5130
    %v5132 = vrot.slane %v5131, 2
    %v5133 = vmax.f32 %v5131, %v5132
    %v5134 = vrot.slane %v5133, 1
    %v5135 = vmax.f32 %v5133, %v5134
    %v5136 = vsel %vm5079, %v4773, -inf
    %v5137 = vrot.slane %v5136, 4
    %v5138 = vmax.f32 %v5136, %v5137
    %v5139 = vrot.slane %v5138, 2
    %v5140 = vmax.f32 %v5138, %v5139
    %v5141 = vrot.slane %v5140, 1
    %v5142 = vmax.f32 %v5140, %v5141
    %v5143 = vsel %vm5079, %v4959, -inf
    %v5144 = vrot.slane %v5143, 4
    %v5145 = vmax.f32 %v5143, %v5144
    %v5146 = vrot.slane %v5145, 2
    %v5147 = vmax.f32 %v5145, %v5146
    %v5148 = vrot.slane %v5147, 1
    %v5149 = vmax.f32 %v5147, %v5148
    %v5150 = vsel %vm5079, %v4774, -inf
    %v5151 = vrot.slane %v5150, 4
    %v5152 = vmax.f32 %v5150, %v5151
    %v5153 = vrot.slane %v5152, 2
    %v5154 = vmax.f32 %v5152, %v5153
    %v5155 = vrot.slane %v5154, 1
    %v5156 = vmax.f32 %v5154, %v5155
    %v5157 = vsel %vm5079, %v4960, -inf
    %v5158 = vrot.slane %v5157, 4
    %v5159 = vmax.f32 %v5157, %v5158
    %v5160 = vrot.slane %v5159, 2
    %v5161 = vmax.f32 %v5159, %v5160
    %v5162 = vrot.slane %v5161, 1
    %v5163 = vmax.f32 %v5161, %v5162
    %v5164 = vsel %vm5079, %v4775, -inf
    %v5165 = vrot.slane %v5164, 4
    %v5166 = vmax.f32 %v5164, %v5165
    %v5167 = vrot.slane %v5166, 2
    %v5168 = vmax.f32 %v5166, %v5167
    %v5169 = vrot.slane %v5168, 1
    %v5170 = vmax.f32 %v5168, %v5169
    %v5171 = vsel %vm5079, %v4961, -inf
    %v5172 = vrot.slane %v5171, 4
    %v5173 = vmax.f32 %v5171, %v5172
    %v5174 = vrot.slane %v5173, 2
    %v5175 = vmax.f32 %v5173, %v5174
    %v5176 = vrot.slane %v5175, 1
    %v5177 = vmax.f32 %v5175, %v5176
    %v5178 = vsel %vm5079, %v4776, -inf
    %v5179 = vrot.slane %v5178, 4
    %v5180 = vmax.f32 %v5178, %v5179
    %v5181 = vrot.slane %v5180, 2
    %v5182 = vmax.f32 %v5180, %v5181
    %v5183 = vrot.slane %v5182, 1
    %v5184 = vmax.f32 %v5182, %v5183
    %v5185 = vsel %vm5079, %v4962, -inf
    %v5186 = vrot.slane %v5185, 4
    %v5187 = vmax.f32 %v5185, %v5186
    %v5188 = vrot.slane %v5187, 2
    %v5189 = vmax.f32 %v5187, %v5188
    %v5190 = vrot.slane %v5189, 1
    %v5191 = vmax.f32 %v5189, %v5190
    %v5192 = vsel %vm5079, %v4777, -inf
    %v5193 = vrot.slane %v5192, 4
    %v5194 = vmax.f32 %v5192, %v5193
    %v5195 = vrot.slane %v5194, 2
    %v5196 = vmax.f32 %v5194, %v5195
    %v5197 = vrot.slane %v5196, 1
    %v5198 = vmax.f32 %v5196, %v5197
    %v5199 = vsel %vm5079, %v4963, -inf
    %v5200 = vrot.slane %v5199, 4
    %v5201 = vmax.f32 %v5199, %v5200
    %v5202 = vrot.slane %v5201, 2
    %v5203 = vmax.f32 %v5201, %v5202
    %v5204 = vrot.slane %v5203, 1
    %v5205 = vmax.f32 %v5203, %v5204
    %v5206 = vsel %vm5079, %v4778, -inf
    %v5207 = vrot.slane %v5206, 4
    %v5208 = vmax.f32 %v5206, %v5207
    %v5209 = vrot.slane %v5208, 2
    %v5210 = vmax.f32 %v5208, %v5209
    %v5211 = vrot.slane %v5210, 1
    %v5212 = vmax.f32 %v5210, %v5211
    %v5213 = vsel %vm5079, %v4964, -inf
    %v5214 = vrot.slane %v5213, 4
    %v5215 = vmax.f32 %v5213, %v5214
    %v5216 = vrot.slane %v5215, 2
    %v5217 = vmax.f32 %v5215, %v5216
    %v5218 = vrot.slane %v5217, 1
    %v5219 = vmax.f32 %v5217, %v5218
    %v5220 = vsel %vm5079, %v4779, -inf
    %v5221 = vrot.slane %v5220, 4
    %v5222 = vmax.f32 %v5220, %v5221
    %v5223 = vrot.slane %v5222, 2
    %v5224 = vmax.f32 %v5222, %v5223
    %v5225 = vrot.slane %v5224, 1
    %v5226 = vmax.f32 %v5224, %v5225
    %v5227 = vsel %vm5079, %v4965, -inf
    %v5228 = vrot.slane %v5227, 4
    %v5229 = vmax.f32 %v5227, %v5228
    %v5230 = vrot.slane %v5229, 2
    %v5231 = vmax.f32 %v5229, %v5230
    %v5232 = vrot.slane %v5231, 1
    %v5233 = vmax.f32 %v5231, %v5232
    %v5234 = vsel %vm5079, %v4780, -inf
    %v5235 = vrot.slane %v5234, 4
    %v5236 = vmax.f32 %v5234, %v5235
    %v5237 = vrot.slane %v5236, 2
    %v5238 = vmax.f32 %v5236, %v5237
    %v5239 = vrot.slane %v5238, 1
    %v5240 = vmax.f32 %v5238, %v5239
    %v5241 = vsel %vm5079, %v4966, -inf
    %v5242 = vrot.slane %v5241, 4
    %v5243 = vmax.f32 %v5241, %v5242
    %v5244 = vrot.slane %v5243, 2
    %v5245 = vmax.f32 %v5243, %v5244
    %v5246 = vrot.slane %v5245, 1
    %v5247 = vmax.f32 %v5245, %v5246
    %v5248 = vsel %vm5079, %v4781, -inf
    %v5249 = vrot.slane %v5248, 4
    %v5250 = vmax.f32 %v5248, %v5249
    %v5251 = vrot.slane %v5250, 2
    %v5252 = vmax.f32 %v5250, %v5251
    %v5253 = vrot.slane %v5252, 1
    %v5254 = vmax.f32 %v5252, %v5253
    %v5255 = vsel %vm5079, %v4967, -inf
    %v5256 = vrot.slane %v5255, 4
    %v5257 = vmax.f32 %v5255, %v5256
    %v5258 = vrot.slane %v5257, 2
    %v5259 = vmax.f32 %v5257, %v5258
    %v5260 = vrot.slane %v5259, 1
    %v5261 = vmax.f32 %v5259, %v5260
    %v5262 = vsel %vm5079, %v4782, -inf
    %v5263 = vrot.slane %v5262, 4
    %v5264 = vmax.f32 %v5262, %v5263
    %v5265 = vrot.slane %v5264, 2
    %v5266 = vmax.f32 %v5264, %v5265
    %v5267 = vrot.slane %v5266, 1
    %v5268 = vmax.f32 %v5266, %v5267
    %v5269 = vsel %vm5079, %v4968, -inf
    %v5270 = vrot.slane %v5269, 4
    %v5271 = vmax.f32 %v5269, %v5270
    %v5272 = vrot.slane %v5271, 2
    %v5273 = vmax.f32 %v5271, %v5272
    %v5274 = vrot.slane %v5273, 1
    %v5275 = vmax.f32 %v5273, %v5274
    %v5276 = vsel %vm5079, %v4783, -inf
    %v5277 = vrot.slane %v5276, 4
    %v5278 = vmax.f32 %v5276, %v5277
    %v5279 = vrot.slane %v5278, 2
    %v5280 = vmax.f32 %v5278, %v5279
    %v5281 = vrot.slane %v5280, 1
    %v5282 = vmax.f32 %v5280, %v5281
    %v5283 = vsel %vm5079, %v4969, -inf
    %v5284 = vrot.slane %v5283, 4
    %v5285 = vmax.f32 %v5283, %v5284
    %v5286 = vrot.slane %v5285, 2
    %v5287 = vmax.f32 %v5285, %v5286
    %v5288 = vrot.slane %v5287, 1
    %v5289 = vmax.f32 %v5287, %v5288
    %v5290 = vsel %vm5079, %v4784, -inf
    %v5291 = vrot.slane %v5290, 4
    %v5292 = vmax.f32 %v5290, %v5291
    %v5293 = vrot.slane %v5292, 2
    %v5294 = vmax.f32 %v5292, %v5293
    %v5295 = vrot.slane %v5294, 1
    %v5296 = vmax.f32 %v5294, %v5295
    %v5297 = vsel %vm5079, %v4970, -inf
    %v5298 = vrot.slane %v5297, 4
    %v5299 = vmax.f32 %v5297, %v5298
    %v5300 = vrot.slane %v5299, 2
    %v5301 = vmax.f32 %v5299, %v5300
    %v5302 = vrot.slane %v5301, 1
    %v5303 = vmax.f32 %v5301, %v5302
    %v5304 = vsel %vm5079, %v4785, -inf
    %v5305 = vrot.slane %v5304, 4
    %v5306 = vmax.f32 %v5304, %v5305
    %v5307 = vrot.slane %v5306, 2
    %v5308 = vmax.f32 %v5306, %v5307
    %v5309 = vrot.slane %v5308, 1
    %v5310 = vmax.f32 %v5308, %v5309
    %v5311 = vsel %vm5079, %v4971, -inf
    %v5312 = vrot.slane %v5311, 4
    %v5313 = vmax.f32 %v5311, %v5312
    %v5314 = vrot.slane %v5313, 2
    %v5315 = vmax.f32 %v5313, %v5314
    %v5316 = vrot.slane %v5315, 1
    %v5317 = vmax.f32 %v5315, %v5316
    %v5318 = vsel %vm5079, %v4786, -inf
    %v5319 = vrot.slane %v5318, 4
    %v5320 = vmax.f32 %v5318, %v5319
    %v5321 = vrot.slane %v5320, 2
    %v5322 = vmax.f32 %v5320, %v5321
    %v5323 = vrot.slane %v5322, 1
    %v5324 = vmax.f32 %v5322, %v5323
    %v5325 = vsel %vm5079, %v4972, -inf
    %v5326 = vrot.slane %v5325, 4
    %v5327 = vmax.f32 %v5325, %v5326
    %v5328 = vrot.slane %v5327, 2
    %v5329 = vmax.f32 %v5327, %v5328
    %v5330 = vrot.slane %v5329, 1
    %v5331 = vmax.f32 %v5329, %v5330
    %v5332 = vsel %vm5079, %v4787, -inf
    %v5333 = vrot.slane %v5332, 4
    %v5334 = vmax.f32 %v5332, %v5333
    %v5335 = vrot.slane %v5334, 2
    %v5336 = vmax.f32 %v5334, %v5335
    %v5337 = vrot.slane %v5336, 1
    %v5338 = vmax.f32 %v5336, %v5337
    %v5339 = vsel %vm5079, %v4973, -inf
    %v5340 = vrot.slane %v5339, 4
    %v5341 = vmax.f32 %v5339, %v5340
    %v5342 = vrot.slane %v5341, 2
    %v5343 = vmax.f32 %v5341, %v5342
    %v5344 = vrot.slane %v5343, 1
    %v5345 = vmax.f32 %v5343, %v5344
    %v5346 = vsel %vm5079, %v4788, -inf
    %v5347 = vrot.slane %v5346, 4
    %v5348 = vmax.f32 %v5346, %v5347
    %v5349 = vrot.slane %v5348, 2
    %v5350 = vmax.f32 %v5348, %v5349
    %v5351 = vrot.slane %v5350, 1
    %v5352 = vmax.f32 %v5350, %v5351
    %v5353 = vsel %vm5079, %v4974, -inf
    %v5354 = vrot.slane %v5353, 4
    %v5355 = vmax.f32 %v5353, %v5354
    %v5356 = vrot.slane %v5355, 2
    %v5357 = vmax.f32 %v5355, %v5356
    %v5358 = vrot.slane %v5357, 1
    %v5359 = vmax.f32 %v5357, %v5358
    %v5360 = vsel %vm5079, %v4789, -inf
    %v5361 = vrot.slane %v5360, 4
    %v5362 = vmax.f32 %v5360, %v5361
    %v5363 = vrot.slane %v5362, 2
    %v5364 = vmax.f32 %v5362, %v5363
    %v5365 = vrot.slane %v5364, 1
    %v5366 = vmax.f32 %v5364, %v5365
    %v5367 = vsel %vm5079, %v4975, -inf
    %v5368 = vrot.slane %v5367, 4
    %v5369 = vmax.f32 %v5367, %v5368
    %v5370 = vrot.slane %v5369, 2
    %v5371 = vmax.f32 %v5369, %v5370
    %v5372 = vrot.slane %v5371, 1
    %v5373 = vmax.f32 %v5371, %v5372
    %v5374 = vsel %vm5079, %v4790, -inf
    %v5375 = vrot.slane %v5374, 4
    %v5376 = vmax.f32 %v5374, %v5375
    %v5377 = vrot.slane %v5376, 2
    %v5378 = vmax.f32 %v5376, %v5377
    %v5379 = vrot.slane %v5378, 1
    %v5380 = vmax.f32 %v5378, %v5379
    %v5381 = vsel %vm5079, %v4976, -inf
    %v5382 = vrot.slane %v5381, 4
    %v5383 = vmax.f32 %v5381, %v5382
    %v5384 = vrot.slane %v5383, 2
    %v5385 = vmax.f32 %v5383, %v5384
    %v5386 = vrot.slane %v5385, 1
    %v5387 = vmax.f32 %v5385, %v5386
    %v5388 = vsel %vm5079, %v4791, -inf
    %v5389 = vrot.slane %v5388, 4
    %v5390 = vmax.f32 %v5388, %v5389
    %v5391 = vrot.slane %v5390, 2
    %v5392 = vmax.f32 %v5390, %v5391
    %v5393 = vrot.slane %v5392, 1
    %v5394 = vmax.f32 %v5392, %v5393
    %v5395 = vsel %vm5079, %v4977, -inf
    %v5396 = vrot.slane %v5395, 4
    %v5397 = vmax.f32 %v5395, %v5396
    %v5398 = vrot.slane %v5397, 2
    %v5399 = vmax.f32 %v5397, %v5398
    %v5400 = vrot.slane %v5399, 1
    %v5401 = vmax.f32 %v5399, %v5400
    %v5402 = vsel %vm5079, %v4792, -inf
    %v5403 = vrot.slane %v5402, 4
    %v5404 = vmax.f32 %v5402, %v5403
    %v5405 = vrot.slane %v5404, 2
    %v5406 = vmax.f32 %v5404, %v5405
    %v5407 = vrot.slane %v5406, 1
    %v5408 = vmax.f32 %v5406, %v5407
    %v5409 = vsel %vm5079, %v4978, -inf
    %v5410 = vrot.slane %v5409, 4
    %v5411 = vmax.f32 %v5409, %v5410
    %v5412 = vrot.slane %v5411, 2
    %v5413 = vmax.f32 %v5411, %v5412
    %v5414 = vrot.slane %v5413, 1
    %v5415 = vmax.f32 %v5413, %v5414
    %v5416 = vsel %vm5079, %v4793, -inf
    %v5417 = vrot.slane %v5416, 4
    %v5418 = vmax.f32 %v5416, %v5417
    %v5419 = vrot.slane %v5418, 2
    %v5420 = vmax.f32 %v5418, %v5419
    %v5421 = vrot.slane %v5420, 1
    %v5422 = vmax.f32 %v5420, %v5421
    %v5423 = vsel %vm5079, %v4979, -inf
    %v5424 = vrot.slane %v5423, 4
    %v5425 = vmax.f32 %v5423, %v5424
    %v5426 = vrot.slane %v5425, 2
    %v5427 = vmax.f32 %v5425, %v5426
    %v5428 = vrot.slane %v5427, 1
    %v5429 = vmax.f32 %v5427, %v5428
    %v5430 = vsel %vm5079, %v4794, -inf
    %v5431 = vrot.slane %v5430, 4
    %v5432 = vmax.f32 %v5430, %v5431
    %v5433 = vrot.slane %v5432, 2
    %v5434 = vmax.f32 %v5432, %v5433
    %v5435 = vrot.slane %v5434, 1
    %v5436 = vmax.f32 %v5434, %v5435
    %v5437 = vsel %vm5079, %v4980, -inf
    %v5438 = vrot.slane %v5437, 4
    %v5439 = vmax.f32 %v5437, %v5438
    %v5440 = vrot.slane %v5439, 2
    %v5441 = vmax.f32 %v5439, %v5440
    %v5442 = vrot.slane %v5441, 1
    %v5443 = vmax.f32 %v5441, %v5442
    %v5444 = vsel %vm5079, %v4795, -inf
    %v5445 = vrot.slane %v5444, 4
    %v5446 = vmax.f32 %v5444, %v5445
    %v5447 = vrot.slane %v5446, 2
    %v5448 = vmax.f32 %v5446, %v5447
    %v5449 = vrot.slane %v5448, 1
    %v5450 = vmax.f32 %v5448, %v5449
    %v5451 = vsel %vm5079, %v4981, -inf
    %v5452 = vrot.slane %v5451, 4
    %v5453 = vmax.f32 %v5451, %v5452
    %v5454 = vrot.slane %v5453, 2
    %v5455 = vmax.f32 %v5453, %v5454
    %v5456 = vrot.slane %v5455, 1
    %v5457 = vmax.f32 %v5455, %v5456
    %v5458 = vsel %vm5079, %v4796, -inf
    %v5459 = vrot.slane %v5458, 4
    %v5460 = vmax.f32 %v5458, %v5459
    %v5461 = vrot.slane %v5460, 2
    %v5462 = vmax.f32 %v5460, %v5461
    %v5463 = vrot.slane %v5462, 1
    %v5464 = vmax.f32 %v5462, %v5463
    %v5465 = vsel %vm5079, %v4982, -inf
    %v5466 = vrot.slane %v5465, 4
    %v5467 = vmax.f32 %v5465, %v5466
    %v5468 = vrot.slane %v5467, 2
    %v5469 = vmax.f32 %v5467, %v5468
    %v5470 = vrot.slane %v5469, 1
    %v5471 = vmax.f32 %v5469, %v5470
    %v5472 = vsel %vm5079, %v4797, -inf
    %v5473 = vrot.slane %v5472, 4
    %v5474 = vmax.f32 %v5472, %v5473
    %v5475 = vrot.slane %v5474, 2
    %v5476 = vmax.f32 %v5474, %v5475
    %v5477 = vrot.slane %v5476, 1
    %v5478 = vmax.f32 %v5476, %v5477
    %v5479 = vsel %vm5079, %v4983, -inf
    %v5480 = vrot.slane %v5479, 4
    %v5481 = vmax.f32 %v5479, %v5480
    %v5482 = vrot.slane %v5481, 2
    %v5483 = vmax.f32 %v5481, %v5482
    %v5484 = vrot.slane %v5483, 1
    %v5485 = vmax.f32 %v5483, %v5484
    %v5486 = vsel %vm5079, %v4798, -inf
    %v5487 = vrot.slane %v5486, 4
    %v5488 = vmax.f32 %v5486, %v5487
    %v5489 = vrot.slane %v5488, 2
    %v5490 = vmax.f32 %v5488, %v5489
    %v5491 = vrot.slane %v5490, 1
    %v5492 = vmax.f32 %v5490, %v5491
    %v5493 = vsel %vm5079, %v4984, -inf
    %v5494 = vrot.slane %v5493, 4
    %v5495 = vmax.f32 %v5493, %v5494
    %v5496 = vrot.slane %v5495, 2
    %v5497 = vmax.f32 %v5495, %v5496
    %v5498 = vrot.slane %v5497, 1
    %v5499 = vmax.f32 %v5497, %v5498
    %v5500 = vsel %vm5079, %v4799, -inf
    %v5501 = vrot.slane %v5500, 4
    %v5502 = vmax.f32 %v5500, %v5501
    %v5503 = vrot.slane %v5502, 2
    %v5504 = vmax.f32 %v5502, %v5503
    %v5505 = vrot.slane %v5504, 1
    %v5506 = vmax.f32 %v5504, %v5505
    %v5507 = vsel %vm5079, %v4985, -inf
    %v5508 = vrot.slane %v5507, 4
    %v5509 = vmax.f32 %v5507, %v5508
    %v5510 = vrot.slane %v5509, 2
    %v5511 = vmax.f32 %v5509, %v5510
    %v5512 = vrot.slane %v5511, 1
    %v5513 = vmax.f32 %v5511, %v5512
    %v5514 = vsel %vm5079, %v4800, -inf
    %v5515 = vrot.slane %v5514, 4
    %v5516 = vmax.f32 %v5514, %v5515
    %v5517 = vrot.slane %v5516, 2
    %v5518 = vmax.f32 %v5516, %v5517
    %v5519 = vrot.slane %v5518, 1
    %v5520 = vmax.f32 %v5518, %v5519
    %v5521 = vsel %vm5079, %v4986, -inf
    %v5522 = vrot.slane %v5521, 4
    %v5523 = vmax.f32 %v5521, %v5522
    %v5524 = vrot.slane %v5523, 2
    %v5525 = vmax.f32 %v5523, %v5524
    %v5526 = vrot.slane %v5525, 1
    %v5527 = vmax.f32 %v5525, %v5526
    %v5528 = vsel %vm5079, %v4801, -inf
    %v5529 = vrot.slane %v5528, 4
    %v5530 = vmax.f32 %v5528, %v5529
    %v5531 = vrot.slane %v5530, 2
    %v5532 = vmax.f32 %v5530, %v5531
    %v5533 = vrot.slane %v5532, 1
    %v5534 = vmax.f32 %v5532, %v5533
    %v5535 = vsel %vm5079, %v4987, -inf
    %v5536 = vrot.slane %v5535, 4
    %v5537 = vmax.f32 %v5535, %v5536
    %v5538 = vrot.slane %v5537, 2
    %v5539 = vmax.f32 %v5537, %v5538
    %v5540 = vrot.slane %v5539, 1
    %v5541 = vmax.f32 %v5539, %v5540
    %v5542 = vsel %vm5079, %v4802, -inf
    %v5543 = vrot.slane %v5542, 4
    %v5544 = vmax.f32 %v5542, %v5543
    %v5545 = vrot.slane %v5544, 2
    %v5546 = vmax.f32 %v5544, %v5545
    %v5547 = vrot.slane %v5546, 1
    %v5548 = vmax.f32 %v5546, %v5547
    %v5549 = vsel %vm5079, %v4988, -inf
    %v5550 = vrot.slane %v5549, 4
    %v5551 = vmax.f32 %v5549, %v5550
    %v5552 = vrot.slane %v5551, 2
    %v5553 = vmax.f32 %v5551, %v5552
    %v5554 = vrot.slane %v5553, 1
    %v5555 = vmax.f32 %v5553, %v5554
    %v5556 = vsel %vm5079, %v4803, -inf
    %v5557 = vrot.slane %v5556, 4
    %v5558 = vmax.f32 %v5556, %v5557
    %v5559 = vrot.slane %v5558, 2
    %v5560 = vmax.f32 %v5558, %v5559
    %v5561 = vrot.slane %v5560, 1
    %v5562 = vmax.f32 %v5560, %v5561
    %v5563 = vsel %vm5079, %v4989, -inf
    %v5564 = vrot.slane %v5563, 4
    %v5565 = vmax.f32 %v5563, %v5564
    %v5566 = vrot.slane %v5565, 2
    %v5567 = vmax.f32 %v5565, %v5566
    %v5568 = vrot.slane %v5567, 1
    %v5569 = vmax.f32 %v5567, %v5568
    %v5570 = vsel %vm5079, %v4804, -inf
    %v5571 = vrot.slane %v5570, 4
    %v5572 = vmax.f32 %v5570, %v5571
    %v5573 = vrot.slane %v5572, 2
    %v5574 = vmax.f32 %v5572, %v5573
    %v5575 = vrot.slane %v5574, 1
    %v5576 = vmax.f32 %v5574, %v5575
    %v5577 = vsel %vm5079, %v4990, -inf
    %v5578 = vrot.slane %v5577, 4
    %v5579 = vmax.f32 %v5577, %v5578
    %v5580 = vrot.slane %v5579, 2
    %v5581 = vmax.f32 %v5579, %v5580
    %v5582 = vrot.slane %v5581, 1
    %v5583 = vmax.f32 %v5581, %v5582
    %v5584 = vsel %vm5079, %v4805, -inf
    %v5585 = vrot.slane %v5584, 4
    %v5586 = vmax.f32 %v5584, %v5585
    %v5587 = vrot.slane %v5586, 2
    %v5588 = vmax.f32 %v5586, %v5587
    %v5589 = vrot.slane %v5588, 1
    %v5590 = vmax.f32 %v5588, %v5589
    %v5591 = vsel %vm5079, %v4991, -inf
    %v5592 = vrot.slane %v5591, 4
    %v5593 = vmax.f32 %v5591, %v5592
    %v5594 = vrot.slane %v5593, 2
    %v5595 = vmax.f32 %v5593, %v5594
    %v5596 = vrot.slane %v5595, 1
    %v5597 = vmax.f32 %v5595, %v5596
    %v5598 = vsel %vm5079, %v4806, -inf
    %v5599 = vrot.slane %v5598, 4
    %v5600 = vmax.f32 %v5598, %v5599
    %v5601 = vrot.slane %v5600, 2
    %v5602 = vmax.f32 %v5600, %v5601
    %v5603 = vrot.slane %v5602, 1
    %v5604 = vmax.f32 %v5602, %v5603
    %v5605 = vsel %vm5079, %v4992, -inf
    %v5606 = vrot.slane %v5605, 4
    %v5607 = vmax.f32 %v5605, %v5606
    %v5608 = vrot.slane %v5607, 2
    %v5609 = vmax.f32 %v5607, %v5608
    %v5610 = vrot.slane %v5609, 1
    %v5611 = vmax.f32 %v5609, %v5610
    %v5612 = vsel %vm5079, %v4807, -inf
    %v5613 = vrot.slane %v5612, 4
    %v5614 = vmax.f32 %v5612, %v5613
    %v5615 = vrot.slane %v5614, 2
    %v5616 = vmax.f32 %v5614, %v5615
    %v5617 = vrot.slane %v5616, 1
    %v5618 = vmax.f32 %v5616, %v5617
    %v5619 = vsel %vm5079, %v4993, -inf
    %v5620 = vrot.slane %v5619, 4
    %v5621 = vmax.f32 %v5619, %v5620
    %v5622 = vrot.slane %v5621, 2
    %v5623 = vmax.f32 %v5621, %v5622
    %v5624 = vrot.slane %v5623, 1
    %v5625 = vmax.f32 %v5623, %v5624
    %v5626 = vsel %vm5079, %v4808, -inf
    %v5627 = vrot.slane %v5626, 4
    %v5628 = vmax.f32 %v5626, %v5627
    %v5629 = vrot.slane %v5628, 2
    %v5630 = vmax.f32 %v5628, %v5629
    %v5631 = vrot.slane %v5630, 1
    %v5632 = vmax.f32 %v5630, %v5631
    %v5633 = vsel %vm5079, %v4994, -inf
    %v5634 = vrot.slane %v5633, 4
    %v5635 = vmax.f32 %v5633, %v5634
    %v5636 = vrot.slane %v5635, 2
    %v5637 = vmax.f32 %v5635, %v5636
    %v5638 = vrot.slane %v5637, 1
    %v5639 = vmax.f32 %v5637, %v5638
    %v5640 = vsel %vm5079, %v4809, -inf
    %v5641 = vrot.slane %v5640, 4
    %v5642 = vmax.f32 %v5640, %v5641
    %v5643 = vrot.slane %v5642, 2
    %v5644 = vmax.f32 %v5642, %v5643
    %v5645 = vrot.slane %v5644, 1
    %v5646 = vmax.f32 %v5644, %v5645
    %v5647 = vsel %vm5079, %v4995, -inf
    %v5648 = vrot.slane %v5647, 4
    %v5649 = vmax.f32 %v5647, %v5648
    %v5650 = vrot.slane %v5649, 2
    %v5651 = vmax.f32 %v5649, %v5650
    %v5652 = vrot.slane %v5651, 1
    %v5653 = vmax.f32 %v5651, %v5652
    %v5654 = vsel %vm5079, %v4810, -inf
    %v5655 = vrot.slane %v5654, 4
    %v5656 = vmax.f32 %v5654, %v5655
    %v5657 = vrot.slane %v5656, 2
    %v5658 = vmax.f32 %v5656, %v5657
    %v5659 = vrot.slane %v5658, 1
    %v5660 = vmax.f32 %v5658, %v5659
    %v5661 = vsel %vm5079, %v4996, -inf
    %v5662 = vrot.slane %v5661, 4
    %v5663 = vmax.f32 %v5661, %v5662
    %v5664 = vrot.slane %v5663, 2
    %v5665 = vmax.f32 %v5663, %v5664
    %v5666 = vrot.slane %v5665, 1
    %v5667 = vmax.f32 %v5665, %v5666
    %v5668 = vsel %vm5079, %v4811, -inf
    %v5669 = vrot.slane %v5668, 4
    %v5670 = vmax.f32 %v5668, %v5669
    %v5671 = vrot.slane %v5670, 2
    %v5672 = vmax.f32 %v5670, %v5671
    %v5673 = vrot.slane %v5672, 1
    %v5674 = vmax.f32 %v5672, %v5673
    %v5675 = vsel %vm5079, %v4997, -inf
    %v5676 = vrot.slane %v5675, 4
    %v5677 = vmax.f32 %v5675, %v5676
    %v5678 = vrot.slane %v5677, 2
    %v5679 = vmax.f32 %v5677, %v5678
    %v5680 = vrot.slane %v5679, 1
    %v5681 = vmax.f32 %v5679, %v5680
    %v5682 = vsel %vm5079, %v4812, -inf
    %v5683 = vrot.slane %v5682, 4
    %v5684 = vmax.f32 %v5682, %v5683
    %v5685 = vrot.slane %v5684, 2
    %v5686 = vmax.f32 %v5684, %v5685
    %v5687 = vrot.slane %v5686, 1
    %v5688 = vmax.f32 %v5686, %v5687
    %v5689 = vsel %vm5079, %v4998, -inf
    %v5690 = vrot.slane %v5689, 4
    %v5691 = vmax.f32 %v5689, %v5690
    %v5692 = vrot.slane %v5691, 2
    %v5693 = vmax.f32 %v5691, %v5692
    %v5694 = vrot.slane %v5693, 1
    %v5695 = vmax.f32 %v5693, %v5694
    %v5696 = vsel %vm5079, %v4813, -inf
    %v5697 = vrot.slane %v5696, 4
    %v5698 = vmax.f32 %v5696, %v5697
    %v5699 = vrot.slane %v5698, 2
    %v5700 = vmax.f32 %v5698, %v5699
    %v5701 = vrot.slane %v5700, 1
    %v5702 = vmax.f32 %v5700, %v5701
    %v5703 = vsel %vm5079, %v4999, -inf
    %v5704 = vrot.slane %v5703, 4
    %v5705 = vmax.f32 %v5703, %v5704
    %v5706 = vrot.slane %v5705, 2
    %v5707 = vmax.f32 %v5705, %v5706
    %v5708 = vrot.slane %v5707, 1
    %v5709 = vmax.f32 %v5707, %v5708
    %v5710 = vsel %vm5079, %v4814, -inf
    %v5711 = vrot.slane %v5710, 4
    %v5712 = vmax.f32 %v5710, %v5711
    %v5713 = vrot.slane %v5712, 2
    %v5714 = vmax.f32 %v5712, %v5713
    %v5715 = vrot.slane %v5714, 1
    %v5716 = vmax.f32 %v5714, %v5715
    %v5717 = vsel %vm5079, %v5000, -inf
    %v5718 = vrot.slane %v5717, 4
    %v5719 = vmax.f32 %v5717, %v5718
    %v5720 = vrot.slane %v5719, 2
    %v5721 = vmax.f32 %v5719, %v5720
    %v5722 = vrot.slane %v5721, 1
    %v5723 = vmax.f32 %v5721, %v5722
    %v5724 = vsel %vm5079, %v4815, -inf
    %v5725 = vrot.slane %v5724, 4
    %v5726 = vmax.f32 %v5724, %v5725
    %v5727 = vrot.slane %v5726, 2
    %v5728 = vmax.f32 %v5726, %v5727
    %v5729 = vrot.slane %v5728, 1
    %v5730 = vmax.f32 %v5728, %v5729
    %v5731 = vsel %vm5079, %v5001, -inf
    %v5732 = vrot.slane %v5731, 4
    %v5733 = vmax.f32 %v5731, %v5732
    %v5734 = vrot.slane %v5733, 2
    %v5735 = vmax.f32 %v5733, %v5734
    %v5736 = vrot.slane %v5735, 1
    %v5737 = vmax.f32 %v5735, %v5736
    %v5738 = vsel %vm5079, %v4816, -inf
    %v5739 = vrot.slane %v5738, 4
    %v5740 = vmax.f32 %v5738, %v5739
    %v5741 = vrot.slane %v5740, 2
    %v5742 = vmax.f32 %v5740, %v5741
    %v5743 = vrot.slane %v5742, 1
    %v5744 = vmax.f32 %v5742, %v5743
    %v5745 = vsel %vm5079, %v5002, -inf
    %v5746 = vrot.slane %v5745, 4
    %v5747 = vmax.f32 %v5745, %v5746
    %v5748 = vrot.slane %v5747, 2
    %v5749 = vmax.f32 %v5747, %v5748
    %v5750 = vrot.slane %v5749, 1
    %v5751 = vmax.f32 %v5749, %v5750
    %v5752 = vsel %vm5079, %v4817, -inf
    %v5753 = vrot.slane %v5752, 4
    %v5754 = vmax.f32 %v5752, %v5753
    %v5755 = vrot.slane %v5754, 2
    %v5756 = vmax.f32 %v5754, %v5755
    %v5757 = vrot.slane %v5756, 1
    %v5758 = vmax.f32 %v5756, %v5757
    %v5759 = vsel %vm5079, %v5003, -inf
    %v5760 = vrot.slane %v5759, 4
    %v5761 = vmax.f32 %v5759, %v5760
    %v5762 = vrot.slane %v5761, 2
    %v5763 = vmax.f32 %v5761, %v5762
    %v5764 = vrot.slane %v5763, 1
    %v5765 = vmax.f32 %v5763, %v5764
    %v5766 = vsel %vm5079, %v4818, -inf
    %v5767 = vrot.slane %v5766, 4
    %v5768 = vmax.f32 %v5766, %v5767
    %v5769 = vrot.slane %v5768, 2
    %v5770 = vmax.f32 %v5768, %v5769
    %v5771 = vrot.slane %v5770, 1
    %v5772 = vmax.f32 %v5770, %v5771
    %v5773 = vsel %vm5079, %v5004, -inf
    %v5774 = vrot.slane %v5773, 4
    %v5775 = vmax.f32 %v5773, %v5774
    %v5776 = vrot.slane %v5775, 2
    %v5777 = vmax.f32 %v5775, %v5776
    %v5778 = vrot.slane %v5777, 1
    %v5779 = vmax.f32 %v5777, %v5778
    %v5780 = vsel %vm5079, %v4819, -inf
    %v5781 = vrot.slane %v5780, 4
    %v5782 = vmax.f32 %v5780, %v5781
    %v5783 = vrot.slane %v5782, 2
    %v5784 = vmax.f32 %v5782, %v5783
    %v5785 = vrot.slane %v5784, 1
    %v5786 = vmax.f32 %v5784, %v5785
    %v5787 = vsel %vm5079, %v5005, -inf
    %v5788 = vrot.slane %v5787, 4
    %v5789 = vmax.f32 %v5787, %v5788
    %v5790 = vrot.slane %v5789, 2
    %v5791 = vmax.f32 %v5789, %v5790
    %v5792 = vrot.slane %v5791, 1
    %v5793 = vmax.f32 %v5791, %v5792
    %v5794 = vsel %vm5079, %v4820, -inf
    %v5795 = vrot.slane %v5794, 4
    %v5796 = vmax.f32 %v5794, %v5795
    %v5797 = vrot.slane %v5796, 2
    %v5798 = vmax.f32 %v5796, %v5797
    %v5799 = vrot.slane %v5798, 1
    %v5800 = vmax.f32 %v5798, %v5799
    %v5801 = vsel %vm5079, %v5006, -inf
    %v5802 = vrot.slane %v5801, 4
    %v5803 = vmax.f32 %v5801, %v5802
    %v5804 = vrot.slane %v5803, 2
    %v5805 = vmax.f32 %v5803, %v5804
    %v5806 = vrot.slane %v5805, 1
    %v5807 = vmax.f32 %v5805, %v5806
    %v5808 = vsel %vm5079, %v4821, -inf
    %v5809 = vrot.slane %v5808, 4
    %v5810 = vmax.f32 %v5808, %v5809
    %v5811 = vrot.slane %v5810, 2
    %v5812 = vmax.f32 %v5810, %v5811
    %v5813 = vrot.slane %v5812, 1
    %v5814 = vmax.f32 %v5812, %v5813
    %v5815 = vsel %vm5079, %v5007, -inf
    %v5816 = vrot.slane %v5815, 4
    %v5817 = vmax.f32 %v5815, %v5816
    %v5818 = vrot.slane %v5817, 2
    %v5819 = vmax.f32 %v5817, %v5818
    %v5820 = vrot.slane %v5819, 1
    %v5821 = vmax.f32 %v5819, %v5820
    %v5822 = vsel %vm5079, %v4822, -inf
    %v5823 = vrot.slane %v5822, 4
    %v5824 = vmax.f32 %v5822, %v5823
    %v5825 = vrot.slane %v5824, 2
    %v5826 = vmax.f32 %v5824, %v5825
    %v5827 = vrot.slane %v5826, 1
    %v5828 = vmax.f32 %v5826, %v5827
    %v5829 = vsel %vm5079, %v5008, -inf
    %v5830 = vrot.slane %v5829, 4
    %v5831 = vmax.f32 %v5829, %v5830
    %v5832 = vrot.slane %v5831, 2
    %v5833 = vmax.f32 %v5831, %v5832
    %v5834 = vrot.slane %v5833, 1
    %v5835 = vmax.f32 %v5833, %v5834
    %v5836 = vsel %vm5079, %v4823, -inf
    %v5837 = vrot.slane %v5836, 4
    %v5838 = vmax.f32 %v5836, %v5837
    %v5839 = vrot.slane %v5838, 2
    %v5840 = vmax.f32 %v5838, %v5839
    %v5841 = vrot.slane %v5840, 1
    %v5842 = vmax.f32 %v5840, %v5841
    %v5843 = vsel %vm5079, %v5009, -inf
    %v5844 = vrot.slane %v5843, 4
    %v5845 = vmax.f32 %v5843, %v5844
    %v5846 = vrot.slane %v5845, 2
    %v5847 = vmax.f32 %v5845, %v5846
    %v5848 = vrot.slane %v5847, 1
    %v5849 = vmax.f32 %v5847, %v5848
    %v5850 = vsel %vm5079, %v4824, -inf
    %v5851 = vrot.slane %v5850, 4
    %v5852 = vmax.f32 %v5850, %v5851
    %v5853 = vrot.slane %v5852, 2
    %v5854 = vmax.f32 %v5852, %v5853
    %v5855 = vrot.slane %v5854, 1
    %v5856 = vmax.f32 %v5854, %v5855
    %v5857 = vsel %vm5079, %v5010, -inf
    %v5858 = vrot.slane %v5857, 4
    %v5859 = vmax.f32 %v5857, %v5858
    %v5860 = vrot.slane %v5859, 2
    %v5861 = vmax.f32 %v5859, %v5860
    %v5862 = vrot.slane %v5861, 1
    %v5863 = vmax.f32 %v5861, %v5862
    %v5864 = vsel %vm5079, %v4825, -inf
    %v5865 = vrot.slane %v5864, 4
    %v5866 = vmax.f32 %v5864, %v5865
    %v5867 = vrot.slane %v5866, 2
    %v5868 = vmax.f32 %v5866, %v5867
    %v5869 = vrot.slane %v5868, 1
    %v5870 = vmax.f32 %v5868, %v5869
    %v5871 = vsel %vm5079, %v5011, -inf
    %v5872 = vrot.slane %v5871, 4
    %v5873 = vmax.f32 %v5871, %v5872
    %v5874 = vrot.slane %v5873, 2
    %v5875 = vmax.f32 %v5873, %v5874
    %v5876 = vrot.slane %v5875, 1
    %v5877 = vmax.f32 %v5875, %v5876
    %v5878 = vsel %vm5079, %v4826, -inf
    %v5879 = vrot.slane %v5878, 4
    %v5880 = vmax.f32 %v5878, %v5879
    %v5881 = vrot.slane %v5880, 2
    %v5882 = vmax.f32 %v5880, %v5881
    %v5883 = vrot.slane %v5882, 1
    %v5884 = vmax.f32 %v5882, %v5883
    %v5885 = vsel %vm5079, %v5012, -inf
    %v5886 = vrot.slane %v5885, 4
    %v5887 = vmax.f32 %v5885, %v5886
    %v5888 = vrot.slane %v5887, 2
    %v5889 = vmax.f32 %v5887, %v5888
    %v5890 = vrot.slane %v5889, 1
    %v5891 = vmax.f32 %v5889, %v5890
    %v5892 = vsel %vm5079, %v4827, -inf
    %v5893 = vrot.slane %v5892, 4
    %v5894 = vmax.f32 %v5892, %v5893
    %v5895 = vrot.slane %v5894, 2
    %v5896 = vmax.f32 %v5894, %v5895
    %v5897 = vrot.slane %v5896, 1
    %v5898 = vmax.f32 %v5896, %v5897
    %v5899 = vsel %vm5079, %v5013, -inf
    %v5900 = vrot.slane %v5899, 4
    %v5901 = vmax.f32 %v5899, %v5900
    %v5902 = vrot.slane %v5901, 2
    %v5903 = vmax.f32 %v5901, %v5902
    %v5904 = vrot.slane %v5903, 1
    %v5905 = vmax.f32 %v5903, %v5904
    %v5906 = vsel %vm5079, %v4828, -inf
    %v5907 = vrot.slane %v5906, 4
    %v5908 = vmax.f32 %v5906, %v5907
    %v5909 = vrot.slane %v5908, 2
    %v5910 = vmax.f32 %v5908, %v5909
    %v5911 = vrot.slane %v5910, 1
    %v5912 = vmax.f32 %v5910, %v5911
    %v5913 = vsel %vm5079, %v5014, -inf
    %v5914 = vrot.slane %v5913, 4
    %v5915 = vmax.f32 %v5913, %v5914
    %v5916 = vrot.slane %v5915, 2
    %v5917 = vmax.f32 %v5915, %v5916
    %v5918 = vrot.slane %v5917, 1
    %v5919 = vmax.f32 %v5917, %v5918
    %v5920 = vsel %vm5079, %v4829, -inf
    %v5921 = vrot.slane %v5920, 4
    %v5922 = vmax.f32 %v5920, %v5921
    %v5923 = vrot.slane %v5922, 2
    %v5924 = vmax.f32 %v5922, %v5923
    %v5925 = vrot.slane %v5924, 1
    %v5926 = vmax.f32 %v5924, %v5925
    %v5927 = vsel %vm5079, %v5015, -inf
    %v5928 = vrot.slane %v5927, 4
    %v5929 = vmax.f32 %v5927, %v5928
    %v5930 = vrot.slane %v5929, 2
    %v5931 = vmax.f32 %v5929, %v5930
    %v5932 = vrot.slane %v5931, 1
    %v5933 = vmax.f32 %v5931, %v5932
    %v5934 = vsel %vm5079, %v4830, -inf
    %v5935 = vrot.slane %v5934, 4
    %v5936 = vmax.f32 %v5934, %v5935
    %v5937 = vrot.slane %v5936, 2
    %v5938 = vmax.f32 %v5936, %v5937
    %v5939 = vrot.slane %v5938, 1
    %v5940 = vmax.f32 %v5938, %v5939
    %v5941 = vsel %vm5079, %v5016, -inf
    %v5942 = vrot.slane %v5941, 4
    %v5943 = vmax.f32 %v5941, %v5942
    %v5944 = vrot.slane %v5943, 2
    %v5945 = vmax.f32 %v5943, %v5944
    %v5946 = vrot.slane %v5945, 1
    %v5947 = vmax.f32 %v5945, %v5946
    %v6010 = vrot.slane %v4831, 4
    %v6011 = vrot.slane %v4832, 4
    %v6012 = vrot.slane %v4833, 4
    %v6013 = vrot.slane %v4834, 4
    %v6014 = vrot.slane %v4835, 4
    %v6015 = vrot.slane %v4836, 4
    %v6016 = vrot.slane %v4837, 4
    %v6017 = vrot.slane %v4838, 4
    %v6018 = vrot.slane %v4839, 4
    %v6019 = vrot.slane %v4840, 4
    %v6020 = vrot.slane %v4841, 4
    %v6021 = vrot.slane %v4842, 4
    %v6022 = vrot.slane %v4843, 4
    %v6023 = vrot.slane %v4844, 4
    %v6024 = vrot.slane %v4845, 4
    %v6025 = vrot.slane %v4846, 4
    %v6026 = vrot.slane %v4847, 4
    %v6027 = vrot.slane %v4848, 4
    %v6028 = vrot.slane %v4849, 4
    %v6029 = vrot.slane %v4850, 4
    %v6030 = vrot.slane %v4851, 4
    %v6031 = vrot.slane %v4852, 4
    %v6032 = vrot.slane %v4853, 4
    %v6033 = vrot.slane %v4854, 4
    %v6034 = vrot.slane %v4855, 4
    %v6035 = vrot.slane %v4856, 4
    %v6036 = vrot.slane %v4857, 4
    %v6037 = vrot.slane %v4858, 4
    %v6038 = vrot.slane %v4859, 4
    %v6039 = vrot.slane %v4860, 4
    %v6040 = vrot.slane %v4861, 4
    %v6041 = vrot.slane %v4862, 4
    %v6042 = vrot.slane %v4863, 4
    %v6043 = vrot.slane %v4864, 4
    %v6044 = vrot.slane %v4865, 4
    %v6045 = vrot.slane %v4866, 4
    %v6046 = vrot.slane %v4867, 4
    %v6047 = vrot.slane %v4868, 4
    %v6048 = vrot.slane %v4869, 4
    %v6049 = vrot.slane %v4870, 4
    %v6050 = vrot.slane %v4871, 4
    %v6051 = vrot.slane %v4872, 4
    %v6052 = vrot.slane %v4873, 4
    %v6053 = vrot.slane %v4874, 4
    %v6054 = vrot.slane %v4875, 4
    %v6055 = vrot.slane %v4876, 4
    %v6056 = vrot.slane %v4877, 4
    %v6057 = vrot.slane %v4878, 4
    %v6058 = vrot.slane %v4879, 4
    %v6059 = vrot.slane %v4880, 4
    %v6060 = vrot.slane %v4881, 4
    %v6061 = vrot.slane %v4882, 4
    %v6062 = vrot.slane %v4883, 4
    %v6063 = vrot.slane %v4884, 4
    %v6064 = vrot.slane %v4885, 4
    %v6065 = vrot.slane %v4886, 4
    %v6066 = vrot.slane %v4887, 4
    %v6067 = vrot.slane %v4888, 4
    %v6068 = vrot.slane %v4889, 4
    %v6069 = vrot.slane %v4890, 4
    %v6070 = vrot.slane %v4891, 4
    %v6071 = vrot.slane %v4892, 4
    %v6134 = vsel %vm5079, %v4831, -inf
    %v6135 = vrot.slane %v6134, 4
    %v6136 = vmax.f32 %v6134, %v6135
    %v6137 = vrot.slane %v6136, 2
    %v6138 = vmax.f32 %v6136, %v6137
    %v6139 = vrot.slane %v6138, 1
    %v6140 = vmax.f32 %v6138, %v6139
    %v6141 = vsel %vm5079, %v6010, -inf
    %v6142 = vrot.slane %v6141, 4
    %v6143 = vmax.f32 %v6141, %v6142
    %v6144 = vrot.slane %v6143, 2
    %v6145 = vmax.f32 %v6143, %v6144
    %v6146 = vrot.slane %v6145, 1
    %v6147 = vmax.f32 %v6145, %v6146
    %v6148 = vsel %vm5079, %v4832, -inf
    %v6149 = vrot.slane %v6148, 4
    %v6150 = vmax.f32 %v6148, %v6149
    %v6151 = vrot.slane %v6150, 2
    %v6152 = vmax.f32 %v6150, %v6151
    %v6153 = vrot.slane %v6152, 1
    %v6154 = vmax.f32 %v6152, %v6153
    %v6155 = vsel %vm5079, %v6011, -inf
    %v6156 = vrot.slane %v6155, 4
    %v6157 = vmax.f32 %v6155, %v6156
    %v6158 = vrot.slane %v6157, 2
    %v6159 = vmax.f32 %v6157, %v6158
    %v6160 = vrot.slane %v6159, 1
    %v6161 = vmax.f32 %v6159, %v6160
    %v6162 = vsel %vm5079, %v4833, -inf
    %v6163 = vrot.slane %v6162, 4
    %v6164 = vmax.f32 %v6162, %v6163
    %v6165 = vrot.slane %v6164, 2
    %v6166 = vmax.f32 %v6164, %v6165
    %v6167 = vrot.slane %v6166, 1
    %v6168 = vmax.f32 %v6166, %v6167
    %v6169 = vsel %vm5079, %v6012, -inf
    %v6170 = vrot.slane %v6169, 4
    %v6171 = vmax.f32 %v6169, %v6170
    %v6172 = vrot.slane %v6171, 2
    %v6173 = vmax.f32 %v6171, %v6172
    %v6174 = vrot.slane %v6173, 1
    %v6175 = vmax.f32 %v6173, %v6174
    %v6176 = vsel %vm5079, %v4834, -inf
    %v6177 = vrot.slane %v6176, 4
    %v6178 = vmax.f32 %v6176, %v6177
    %v6179 = vrot.slane %v6178, 2
    %v6180 = vmax.f32 %v6178, %v6179
    %v6181 = vrot.slane %v6180, 1
    %v6182 = vmax.f32 %v6180, %v6181
    %v6183 = vsel %vm5079, %v6013, -inf
    %v6184 = vrot.slane %v6183, 4
    %v6185 = vmax.f32 %v6183, %v6184
    %v6186 = vrot.slane %v6185, 2
    %v6187 = vmax.f32 %v6185, %v6186
    %v6188 = vrot.slane %v6187, 1
    %v6189 = vmax.f32 %v6187, %v6188
    %v6190 = vsel %vm5079, %v4835, -inf
    %v6191 = vrot.slane %v6190, 4
    %v6192 = vmax.f32 %v6190, %v6191
    %v6193 = vrot.slane %v6192, 2
    %v6194 = vmax.f32 %v6192, %v6193
    %v6195 = vrot.slane %v6194, 1
    %v6196 = vmax.f32 %v6194, %v6195
    %v6197 = vsel %vm5079, %v6014, -inf
    %v6198 = vrot.slane %v6197, 4
    %v6199 = vmax.f32 %v6197, %v6198
    %v6200 = vrot.slane %v6199, 2
    %v6201 = vmax.f32 %v6199, %v6200
    %v6202 = vrot.slane %v6201, 1
    %v6203 = vmax.f32 %v6201, %v6202
    %v6204 = vsel %vm5079, %v4836, -inf
    %v6205 = vrot.slane %v6204, 4
    %v6206 = vmax.f32 %v6204, %v6205
    %v6207 = vrot.slane %v6206, 2
    %v6208 = vmax.f32 %v6206, %v6207
    %v6209 = vrot.slane %v6208, 1
    %v6210 = vmax.f32 %v6208, %v6209
    %v6211 = vsel %vm5079, %v6015, -inf
    %v6212 = vrot.slane %v6211, 4
    %v6213 = vmax.f32 %v6211, %v6212
    %v6214 = vrot.slane %v6213, 2
    %v6215 = vmax.f32 %v6213, %v6214
    %v6216 = vrot.slane %v6215, 1
    %v6217 = vmax.f32 %v6215, %v6216
    %v6218 = vsel %vm5079, %v4837, -inf
    %v6219 = vrot.slane %v6218, 4
    %v6220 = vmax.f32 %v6218, %v6219
    %v6221 = vrot.slane %v6220, 2
    %v6222 = vmax.f32 %v6220, %v6221
    %v6223 = vrot.slane %v6222, 1
    %v6224 = vmax.f32 %v6222, %v6223
    %v6225 = vsel %vm5079, %v6016, -inf
    %v6226 = vrot.slane %v6225, 4
    %v6227 = vmax.f32 %v6225, %v6226
    %v6228 = vrot.slane %v6227, 2
    %v6229 = vmax.f32 %v6227, %v6228
    %v6230 = vrot.slane %v6229, 1
    %v6231 = vmax.f32 %v6229, %v6230
    %v6232 = vsel %vm5079, %v4838, -inf
    %v6233 = vrot.slane %v6232, 4
    %v6234 = vmax.f32 %v6232, %v6233
    %v6235 = vrot.slane %v6234, 2
    %v6236 = vmax.f32 %v6234, %v6235
    %v6237 = vrot.slane %v6236, 1
    %v6238 = vmax.f32 %v6236, %v6237
    %v6239 = vsel %vm5079, %v6017, -inf
    %v6240 = vrot.slane %v6239, 4
    %v6241 = vmax.f32 %v6239, %v6240
    %v6242 = vrot.slane %v6241, 2
    %v6243 = vmax.f32 %v6241, %v6242
    %v6244 = vrot.slane %v6243, 1
    %v6245 = vmax.f32 %v6243, %v6244
    %v6246 = vsel %vm5079, %v4839, -inf
    %v6247 = vrot.slane %v6246, 4
    %v6248 = vmax.f32 %v6246, %v6247
    %v6249 = vrot.slane %v6248, 2
    %v6250 = vmax.f32 %v6248, %v6249
    %v6251 = vrot.slane %v6250, 1
    %v6252 = vmax.f32 %v6250, %v6251
    %v6253 = vsel %vm5079, %v6018, -inf
    %v6254 = vrot.slane %v6253, 4
    %v6255 = vmax.f32 %v6253, %v6254
    %v6256 = vrot.slane %v6255, 2
    %v6257 = vmax.f32 %v6255, %v6256
    %v6258 = vrot.slane %v6257, 1
    %v6259 = vmax.f32 %v6257, %v6258
    %v6260 = vsel %vm5079, %v4840, -inf
    %v6261 = vrot.slane %v6260, 4
    %v6262 = vmax.f32 %v6260, %v6261
    %v6263 = vrot.slane %v6262, 2
    %v6264 = vmax.f32 %v6262, %v6263
    %v6265 = vrot.slane %v6264, 1
    %v6266 = vmax.f32 %v6264, %v6265
    %v6267 = vsel %vm5079, %v6019, -inf
    %v6268 = vrot.slane %v6267, 4
    %v6269 = vmax.f32 %v6267, %v6268
    %v6270 = vrot.slane %v6269, 2
    %v6271 = vmax.f32 %v6269, %v6270
    %v6272 = vrot.slane %v6271, 1
    %v6273 = vmax.f32 %v6271, %v6272
    %v6274 = vsel %vm5079, %v4841, -inf
    %v6275 = vrot.slane %v6274, 4
    %v6276 = vmax.f32 %v6274, %v6275
    %v6277 = vrot.slane %v6276, 2
    %v6278 = vmax.f32 %v6276, %v6277
    %v6279 = vrot.slane %v6278, 1
    %v6280 = vmax.f32 %v6278, %v6279
    %v6281 = vsel %vm5079, %v6020, -inf
    %v6282 = vrot.slane %v6281, 4
    %v6283 = vmax.f32 %v6281, %v6282
    %v6284 = vrot.slane %v6283, 2
    %v6285 = vmax.f32 %v6283, %v6284
    %v6286 = vrot.slane %v6285, 1
    %v6287 = vmax.f32 %v6285, %v6286
    %v6288 = vsel %vm5079, %v4842, -inf
    %v6289 = vrot.slane %v6288, 4
    %v6290 = vmax.f32 %v6288, %v6289
    %v6291 = vrot.slane %v6290, 2
    %v6292 = vmax.f32 %v6290, %v6291
    %v6293 = vrot.slane %v6292, 1
    %v6294 = vmax.f32 %v6292, %v6293
    %v6295 = vsel %vm5079, %v6021, -inf
    %v6296 = vrot.slane %v6295, 4
    %v6297 = vmax.f32 %v6295, %v6296
    %v6298 = vrot.slane %v6297, 2
    %v6299 = vmax.f32 %v6297, %v6298
    %v6300 = vrot.slane %v6299, 1
    %v6301 = vmax.f32 %v6299, %v6300
    %v6302 = vsel %vm5079, %v4843, -inf
    %v6303 = vrot.slane %v6302, 4
    %v6304 = vmax.f32 %v6302, %v6303
    %v6305 = vrot.slane %v6304, 2
    %v6306 = vmax.f32 %v6304, %v6305
    %v6307 = vrot.slane %v6306, 1
    %v6308 = vmax.f32 %v6306, %v6307
    %v6309 = vsel %vm5079, %v6022, -inf
    %v6310 = vrot.slane %v6309, 4
    %v6311 = vmax.f32 %v6309, %v6310
    %v6312 = vrot.slane %v6311, 2
    %v6313 = vmax.f32 %v6311, %v6312
    %v6314 = vrot.slane %v6313, 1
    %v6315 = vmax.f32 %v6313, %v6314
    %v6316 = vsel %vm5079, %v4844, -inf
    %v6317 = vrot.slane %v6316, 4
    %v6318 = vmax.f32 %v6316, %v6317
    %v6319 = vrot.slane %v6318, 2
    %v6320 = vmax.f32 %v6318, %v6319
    %v6321 = vrot.slane %v6320, 1
    %v6322 = vmax.f32 %v6320, %v6321
    %v6323 = vsel %vm5079, %v6023, -inf
    %v6324 = vrot.slane %v6323, 4
    %v6325 = vmax.f32 %v6323, %v6324
    %v6326 = vrot.slane %v6325, 2
    %v6327 = vmax.f32 %v6325, %v6326
    %v6328 = vrot.slane %v6327, 1
    %v6329 = vmax.f32 %v6327, %v6328
    %v6330 = vsel %vm5079, %v4845, -inf
    %v6331 = vrot.slane %v6330, 4
    %v6332 = vmax.f32 %v6330, %v6331
    %v6333 = vrot.slane %v6332, 2
    %v6334 = vmax.f32 %v6332, %v6333
    %v6335 = vrot.slane %v6334, 1
    %v6336 = vmax.f32 %v6334, %v6335
    %v6337 = vsel %vm5079, %v6024, -inf
    %v6338 = vrot.slane %v6337, 4
    %v6339 = vmax.f32 %v6337, %v6338
    %v6340 = vrot.slane %v6339, 2
    %v6341 = vmax.f32 %v6339, %v6340
    %v6342 = vrot.slane %v6341, 1
    %v6343 = vmax.f32 %v6341, %v6342
    %v6344 = vsel %vm5079, %v4846, -inf
    %v6345 = vrot.slane %v6344, 4
    %v6346 = vmax.f32 %v6344, %v6345
    %v6347 = vrot.slane %v6346, 2
    %v6348 = vmax.f32 %v6346, %v6347
    %v6349 = vrot.slane %v6348, 1
    %v6350 = vmax.f32 %v6348, %v6349
    %v6351 = vsel %vm5079, %v6025, -inf
    %v6352 = vrot.slane %v6351, 4
    %v6353 = vmax.f32 %v6351, %v6352
    %v6354 = vrot.slane %v6353, 2
    %v6355 = vmax.f32 %v6353, %v6354
    %v6356 = vrot.slane %v6355, 1
    %v6357 = vmax.f32 %v6355, %v6356
    %v6358 = vsel %vm5079, %v4847, -inf
    %v6359 = vrot.slane %v6358, 4
    %v6360 = vmax.f32 %v6358, %v6359
    %v6361 = vrot.slane %v6360, 2
    %v6362 = vmax.f32 %v6360, %v6361
    %v6363 = vrot.slane %v6362, 1
    %v6364 = vmax.f32 %v6362, %v6363
    %v6365 = vsel %vm5079, %v6026, -inf
    %v6366 = vrot.slane %v6365, 4
    %v6367 = vmax.f32 %v6365, %v6366
    %v6368 = vrot.slane %v6367, 2
    %v6369 = vmax.f32 %v6367, %v6368
    %v6370 = vrot.slane %v6369, 1
    %v6371 = vmax.f32 %v6369, %v6370
    %v6372 = vsel %vm5079, %v4848, -inf
    %v6373 = vrot.slane %v6372, 4
    %v6374 = vmax.f32 %v6372, %v6373
    %v6375 = vrot.slane %v6374, 2
    %v6376 = vmax.f32 %v6374, %v6375
    %v6377 = vrot.slane %v6376, 1
    %v6378 = vmax.f32 %v6376, %v6377
    %v6379 = vsel %vm5079, %v6027, -inf
    %v6380 = vrot.slane %v6379, 4
    %v6381 = vmax.f32 %v6379, %v6380
    %v6382 = vrot.slane %v6381, 2
    %v6383 = vmax.f32 %v6381, %v6382
    %v6384 = vrot.slane %v6383, 1
    %v6385 = vmax.f32 %v6383, %v6384
    %v6386 = vsel %vm5079, %v4849, -inf
    %v6387 = vrot.slane %v6386, 4
    %v6388 = vmax.f32 %v6386, %v6387
    %v6389 = vrot.slane %v6388, 2
    %v6390 = vmax.f32 %v6388, %v6389
    %v6391 = vrot.slane %v6390, 1
    %v6392 = vmax.f32 %v6390, %v6391
    %v6393 = vsel %vm5079, %v6028, -inf
    %v6394 = vrot.slane %v6393, 4
    %v6395 = vmax.f32 %v6393, %v6394
    %v6396 = vrot.slane %v6395, 2
    %v6397 = vmax.f32 %v6395, %v6396
    %v6398 = vrot.slane %v6397, 1
    %v6399 = vmax.f32 %v6397, %v6398
    %v6400 = vsel %vm5079, %v4850, -inf
    %v6401 = vrot.slane %v6400, 4
    %v6402 = vmax.f32 %v6400, %v6401
    %v6403 = vrot.slane %v6402, 2
    %v6404 = vmax.f32 %v6402, %v6403
    %v6405 = vrot.slane %v6404, 1
    %v6406 = vmax.f32 %v6404, %v6405
    %v6407 = vsel %vm5079, %v6029, -inf
    %v6408 = vrot.slane %v6407, 4
    %v6409 = vmax.f32 %v6407, %v6408
    %v6410 = vrot.slane %v6409, 2
    %v6411 = vmax.f32 %v6409, %v6410
    %v6412 = vrot.slane %v6411, 1
    %v6413 = vmax.f32 %v6411, %v6412
    %v6414 = vsel %vm5079, %v4851, -inf
    %v6415 = vrot.slane %v6414, 4
    %v6416 = vmax.f32 %v6414, %v6415
    %v6417 = vrot.slane %v6416, 2
    %v6418 = vmax.f32 %v6416, %v6417
    %v6419 = vrot.slane %v6418, 1
    %v6420 = vmax.f32 %v6418, %v6419
    %v6421 = vsel %vm5079, %v6030, -inf
    %v6422 = vrot.slane %v6421, 4
    %v6423 = vmax.f32 %v6421, %v6422
    %v6424 = vrot.slane %v6423, 2
    %v6425 = vmax.f32 %v6423, %v6424
    %v6426 = vrot.slane %v6425, 1
    %v6427 = vmax.f32 %v6425, %v6426
    %v6428 = vsel %vm5079, %v4852, -inf
    %v6429 = vrot.slane %v6428, 4
    %v6430 = vmax.f32 %v6428, %v6429
    %v6431 = vrot.slane %v6430, 2
    %v6432 = vmax.f32 %v6430, %v6431
    %v6433 = vrot.slane %v6432, 1
    %v6434 = vmax.f32 %v6432, %v6433
    %v6435 = vsel %vm5079, %v6031, -inf
    %v6436 = vrot.slane %v6435, 4
    %v6437 = vmax.f32 %v6435, %v6436
    %v6438 = vrot.slane %v6437, 2
    %v6439 = vmax.f32 %v6437, %v6438
    %v6440 = vrot.slane %v6439, 1
    %v6441 = vmax.f32 %v6439, %v6440
    %v6442 = vsel %vm5079, %v4853, -inf
    %v6443 = vrot.slane %v6442, 4
    %v6444 = vmax.f32 %v6442, %v6443
    %v6445 = vrot.slane %v6444, 2
    %v6446 = vmax.f32 %v6444, %v6445
    %v6447 = vrot.slane %v6446, 1
    %v6448 = vmax.f32 %v6446, %v6447
    %v6449 = vsel %vm5079, %v6032, -inf
    %v6450 = vrot.slane %v6449, 4
    %v6451 = vmax.f32 %v6449, %v6450
    %v6452 = vrot.slane %v6451, 2
    %v6453 = vmax.f32 %v6451, %v6452
    %v6454 = vrot.slane %v6453, 1
    %v6455 = vmax.f32 %v6453, %v6454
    %v6456 = vsel %vm5079, %v4854, -inf
    %v6457 = vrot.slane %v6456, 4
    %v6458 = vmax.f32 %v6456, %v6457
    %v6459 = vrot.slane %v6458, 2
    %v6460 = vmax.f32 %v6458, %v6459
    %v6461 = vrot.slane %v6460, 1
    %v6462 = vmax.f32 %v6460, %v6461
    %v6463 = vsel %vm5079, %v6033, -inf
    %v6464 = vrot.slane %v6463, 4
    %v6465 = vmax.f32 %v6463, %v6464
    %v6466 = vrot.slane %v6465, 2
    %v6467 = vmax.f32 %v6465, %v6466
    %v6468 = vrot.slane %v6467, 1
    %v6469 = vmax.f32 %v6467, %v6468
    %v6470 = vsel %vm5079, %v4855, -inf
    %v6471 = vrot.slane %v6470, 4
    %v6472 = vmax.f32 %v6470, %v6471
    %v6473 = vrot.slane %v6472, 2
    %v6474 = vmax.f32 %v6472, %v6473
    %v6475 = vrot.slane %v6474, 1
    %v6476 = vmax.f32 %v6474, %v6475
    %v6477 = vsel %vm5079, %v6034, -inf
    %v6478 = vrot.slane %v6477, 4
    %v6479 = vmax.f32 %v6477, %v6478
    %v6480 = vrot.slane %v6479, 2
    %v6481 = vmax.f32 %v6479, %v6480
    %v6482 = vrot.slane %v6481, 1
    %v6483 = vmax.f32 %v6481, %v6482
    %v6484 = vsel %vm5079, %v4856, -inf
    %v6485 = vrot.slane %v6484, 4
    %v6486 = vmax.f32 %v6484, %v6485
    %v6487 = vrot.slane %v6486, 2
    %v6488 = vmax.f32 %v6486, %v6487
    %v6489 = vrot.slane %v6488, 1
    %v6490 = vmax.f32 %v6488, %v6489
    %v6491 = vsel %vm5079, %v6035, -inf
    %v6492 = vrot.slane %v6491, 4
    %v6493 = vmax.f32 %v6491, %v6492
    %v6494 = vrot.slane %v6493, 2
    %v6495 = vmax.f32 %v6493, %v6494
    %v6496 = vrot.slane %v6495, 1
    %v6497 = vmax.f32 %v6495, %v6496
    %v6498 = vsel %vm5079, %v4857, -inf
    %v6499 = vrot.slane %v6498, 4
    %v6500 = vmax.f32 %v6498, %v6499
    %v6501 = vrot.slane %v6500, 2
    %v6502 = vmax.f32 %v6500, %v6501
    %v6503 = vrot.slane %v6502, 1
    %v6504 = vmax.f32 %v6502, %v6503
    %v6505 = vsel %vm5079, %v6036, -inf
    %v6506 = vrot.slane %v6505, 4
    %v6507 = vmax.f32 %v6505, %v6506
    %v6508 = vrot.slane %v6507, 2
    %v6509 = vmax.f32 %v6507, %v6508
    %v6510 = vrot.slane %v6509, 1
    %v6511 = vmax.f32 %v6509, %v6510
    %v6512 = vsel %vm5079, %v4858, -inf
    %v6513 = vrot.slane %v6512, 4
    %v6514 = vmax.f32 %v6512, %v6513
    %v6515 = vrot.slane %v6514, 2
    %v6516 = vmax.f32 %v6514, %v6515
    %v6517 = vrot.slane %v6516, 1
    %v6518 = vmax.f32 %v6516, %v6517
    %v6519 = vsel %vm5079, %v6037, -inf
    %v6520 = vrot.slane %v6519, 4
    %v6521 = vmax.f32 %v6519, %v6520
    %v6522 = vrot.slane %v6521, 2
    %v6523 = vmax.f32 %v6521, %v6522
    %v6524 = vrot.slane %v6523, 1
    %v6525 = vmax.f32 %v6523, %v6524
    %v6526 = vsel %vm5079, %v4859, -inf
    %v6527 = vrot.slane %v6526, 4
    %v6528 = vmax.f32 %v6526, %v6527
    %v6529 = vrot.slane %v6528, 2
    %v6530 = vmax.f32 %v6528, %v6529
    %v6531 = vrot.slane %v6530, 1
    %v6532 = vmax.f32 %v6530, %v6531
    %v6533 = vsel %vm5079, %v6038, -inf
    %v6534 = vrot.slane %v6533, 4
    %v6535 = vmax.f32 %v6533, %v6534
    %v6536 = vrot.slane %v6535, 2
    %v6537 = vmax.f32 %v6535, %v6536
    %v6538 = vrot.slane %v6537, 1
    %v6539 = vmax.f32 %v6537, %v6538
    %v6540 = vsel %vm5079, %v4860, -inf
    %v6541 = vrot.slane %v6540, 4
    %v6542 = vmax.f32 %v6540, %v6541
    %v6543 = vrot.slane %v6542, 2
    %v6544 = vmax.f32 %v6542, %v6543
    %v6545 = vrot.slane %v6544, 1
    %v6546 = vmax.f32 %v6544, %v6545
    %v6547 = vsel %vm5079, %v6039, -inf
    %v6548 = vrot.slane %v6547, 4
    %v6549 = vmax.f32 %v6547, %v6548
    %v6550 = vrot.slane %v6549, 2
    %v6551 = vmax.f32 %v6549, %v6550
    %v6552 = vrot.slane %v6551, 1
    %v6553 = vmax.f32 %v6551, %v6552
    %v6554 = vsel %vm5079, %v4861, -inf
    %v6555 = vrot.slane %v6554, 4
    %v6556 = vmax.f32 %v6554, %v6555
    %v6557 = vrot.slane %v6556, 2
    %v6558 = vmax.f32 %v6556, %v6557
    %v6559 = vrot.slane %v6558, 1
    %v6560 = vmax.f32 %v6558, %v6559
    %v6561 = vsel %vm5079, %v6040, -inf
    %v6562 = vrot.slane %v6561, 4
    %v6563 = vmax.f32 %v6561, %v6562
    %v6564 = vrot.slane %v6563, 2
    %v6565 = vmax.f32 %v6563, %v6564
    %v6566 = vrot.slane %v6565, 1
    %v6567 = vmax.f32 %v6565, %v6566
    %v6568 = vsel %vm5079, %v4862, -inf
    %v6569 = vrot.slane %v6568, 4
    %v6570 = vmax.f32 %v6568, %v6569
    %v6571 = vrot.slane %v6570, 2
    %v6572 = vmax.f32 %v6570, %v6571
    %v6573 = vrot.slane %v6572, 1
    %v6574 = vmax.f32 %v6572, %v6573
    %v6575 = vsel %vm5079, %v6041, -inf
    %v6576 = vrot.slane %v6575, 4
    %v6577 = vmax.f32 %v6575, %v6576
    %v6578 = vrot.slane %v6577, 2
    %v6579 = vmax.f32 %v6577, %v6578
    %v6580 = vrot.slane %v6579, 1
    %v6581 = vmax.f32 %v6579, %v6580
    %v6582 = vsel %vm5079, %v4863, -inf
    %v6583 = vrot.slane %v6582, 4
    %v6584 = vmax.f32 %v6582, %v6583
    %v6585 = vrot.slane %v6584, 2
    %v6586 = vmax.f32 %v6584, %v6585
    %v6587 = vrot.slane %v6586, 1
    %v6588 = vmax.f32 %v6586, %v6587
    %v6589 = vsel %vm5079, %v6042, -inf
    %v6590 = vrot.slane %v6589, 4
    %v6591 = vmax.f32 %v6589, %v6590
    %v6592 = vrot.slane %v6591, 2
    %v6593 = vmax.f32 %v6591, %v6592
    %v6594 = vrot.slane %v6593, 1
    %v6595 = vmax.f32 %v6593, %v6594
    %v6596 = vsel %vm5079, %v4864, -inf
    %v6597 = vrot.slane %v6596, 4
    %v6598 = vmax.f32 %v6596, %v6597
    %v6599 = vrot.slane %v6598, 2
    %v6600 = vmax.f32 %v6598, %v6599
    %v6601 = vrot.slane %v6600, 1
    %v6602 = vmax.f32 %v6600, %v6601
    %v6603 = vsel %vm5079, %v6043, -inf
    %v6604 = vrot.slane %v6603, 4
    %v6605 = vmax.f32 %v6603, %v6604
    %v6606 = vrot.slane %v6605, 2
    %v6607 = vmax.f32 %v6605, %v6606
    %v6608 = vrot.slane %v6607, 1
    %v6609 = vmax.f32 %v6607, %v6608
    %v6610 = vsel %vm5079, %v4865, -inf
    %v6611 = vrot.slane %v6610, 4
    %v6612 = vmax.f32 %v6610, %v6611
    %v6613 = vrot.slane %v6612, 2
    %v6614 = vmax.f32 %v6612, %v6613
    %v6615 = vrot.slane %v6614, 1
    %v6616 = vmax.f32 %v6614, %v6615
    %v6617 = vsel %vm5079, %v6044, -inf
    %v6618 = vrot.slane %v6617, 4
    %v6619 = vmax.f32 %v6617, %v6618
    %v6620 = vrot.slane %v6619, 2
    %v6621 = vmax.f32 %v6619, %v6620
    %v6622 = vrot.slane %v6621, 1
    %v6623 = vmax.f32 %v6621, %v6622
    %v6624 = vsel %vm5079, %v4866, -inf
    %v6625 = vrot.slane %v6624, 4
    %v6626 = vmax.f32 %v6624, %v6625
    %v6627 = vrot.slane %v6626, 2
    %v6628 = vmax.f32 %v6626, %v6627
    %v6629 = vrot.slane %v6628, 1
    %v6630 = vmax.f32 %v6628, %v6629
    %v6631 = vsel %vm5079, %v6045, -inf
    %v6632 = vrot.slane %v6631, 4
    %v6633 = vmax.f32 %v6631, %v6632
    %v6634 = vrot.slane %v6633, 2
    %v6635 = vmax.f32 %v6633, %v6634
    %v6636 = vrot.slane %v6635, 1
    %v6637 = vmax.f32 %v6635, %v6636
    %v6638 = vsel %vm5079, %v4867, -inf
    %v6639 = vrot.slane %v6638, 4
    %v6640 = vmax.f32 %v6638, %v6639
    %v6641 = vrot.slane %v6640, 2
    %v6642 = vmax.f32 %v6640, %v6641
    %v6643 = vrot.slane %v6642, 1
    %v6644 = vmax.f32 %v6642, %v6643
    %v6645 = vsel %vm5079, %v6046, -inf
    %v6646 = vrot.slane %v6645, 4
    %v6647 = vmax.f32 %v6645, %v6646
    %v6648 = vrot.slane %v6647, 2
    %v6649 = vmax.f32 %v6647, %v6648
    %v6650 = vrot.slane %v6649, 1
    %v6651 = vmax.f32 %v6649, %v6650
    %v6652 = vsel %vm5079, %v4868, -inf
    %v6653 = vrot.slane %v6652, 4
    %v6654 = vmax.f32 %v6652, %v6653
    %v6655 = vrot.slane %v6654, 2
    %v6656 = vmax.f32 %v6654, %v6655
    %v6657 = vrot.slane %v6656, 1
    %v6658 = vmax.f32 %v6656, %v6657
    %v6659 = vsel %vm5079, %v6047, -inf
    %v6660 = vrot.slane %v6659, 4
    %v6661 = vmax.f32 %v6659, %v6660
    %v6662 = vrot.slane %v6661, 2
    %v6663 = vmax.f32 %v6661, %v6662
    %v6664 = vrot.slane %v6663, 1
    %v6665 = vmax.f32 %v6663, %v6664
    %v6666 = vsel %vm5079, %v4869, -inf
    %v6667 = vrot.slane %v6666, 4
    %v6668 = vmax.f32 %v6666, %v6667
    %v6669 = vrot.slane %v6668, 2
    %v6670 = vmax.f32 %v6668, %v6669
    %v6671 = vrot.slane %v6670, 1
    %v6672 = vmax.f32 %v6670, %v6671
    %v6673 = vsel %vm5079, %v6048, -inf
    %v6674 = vrot.slane %v6673, 4
    %v6675 = vmax.f32 %v6673, %v6674
    %v6676 = vrot.slane %v6675, 2
    %v6677 = vmax.f32 %v6675, %v6676
    %v6678 = vrot.slane %v6677, 1
    %v6679 = vmax.f32 %v6677, %v6678
    %v6680 = vsel %vm5079, %v4870, -inf
    %v6681 = vrot.slane %v6680, 4
    %v6682 = vmax.f32 %v6680, %v6681
    %v6683 = vrot.slane %v6682, 2
    %v6684 = vmax.f32 %v6682, %v6683
    %v6685 = vrot.slane %v6684, 1
    %v6686 = vmax.f32 %v6684, %v6685
    %v6687 = vsel %vm5079, %v6049, -inf
    %v6688 = vrot.slane %v6687, 4
    %v6689 = vmax.f32 %v6687, %v6688
    %v6690 = vrot.slane %v6689, 2
    %v6691 = vmax.f32 %v6689, %v6690
    %v6692 = vrot.slane %v6691, 1
    %v6693 = vmax.f32 %v6691, %v6692
    %v6694 = vsel %vm5079, %v4871, -inf
    %v6695 = vrot.slane %v6694, 4
    %v6696 = vmax.f32 %v6694, %v6695
    %v6697 = vrot.slane %v6696, 2
    %v6698 = vmax.f32 %v6696, %v6697
    %v6699 = vrot.slane %v6698, 1
    %v6700 = vmax.f32 %v6698, %v6699
    %v6701 = vsel %vm5079, %v6050, -inf
    %v6702 = vrot.slane %v6701, 4
    %v6703 = vmax.f32 %v6701, %v6702
    %v6704 = vrot.slane %v6703, 2
    %v6705 = vmax.f32 %v6703, %v6704
    %v6706 = vrot.slane %v6705, 1
    %v6707 = vmax.f32 %v6705, %v6706
    %v6708 = vsel %vm5079, %v4872, -inf
    %v6709 = vrot.slane %v6708, 4
    %v6710 = vmax.f32 %v6708, %v6709
    %v6711 = vrot.slane %v6710, 2
    %v6712 = vmax.f32 %v6710, %v6711
    %v6713 = vrot.slane %v6712, 1
    %v6714 = vmax.f32 %v6712, %v6713
    %v6715 = vsel %vm5079, %v6051, -inf
    %v6716 = vrot.slane %v6715, 4
    %v6717 = vmax.f32 %v6715, %v6716
    %v6718 = vrot.slane %v6717, 2
    %v6719 = vmax.f32 %v6717, %v6718
    %v6720 = vrot.slane %v6719, 1
    %v6721 = vmax.f32 %v6719, %v6720
    %v6722 = vsel %vm5079, %v4873, -inf
    %v6723 = vrot.slane %v6722, 4
    %v6724 = vmax.f32 %v6722, %v6723
    %v6725 = vrot.slane %v6724, 2
    %v6726 = vmax.f32 %v6724, %v6725
    %v6727 = vrot.slane %v6726, 1
    %v6728 = vmax.f32 %v6726, %v6727
    %v6729 = vsel %vm5079, %v6052, -inf
    %v6730 = vrot.slane %v6729, 4
    %v6731 = vmax.f32 %v6729, %v6730
    %v6732 = vrot.slane %v6731, 2
    %v6733 = vmax.f32 %v6731, %v6732
    %v6734 = vrot.slane %v6733, 1
    %v6735 = vmax.f32 %v6733, %v6734
    %v6736 = vsel %vm5079, %v4874, -inf
    %v6737 = vrot.slane %v6736, 4
    %v6738 = vmax.f32 %v6736, %v6737
    %v6739 = vrot.slane %v6738, 2
    %v6740 = vmax.f32 %v6738, %v6739
    %v6741 = vrot.slane %v6740, 1
    %v6742 = vmax.f32 %v6740, %v6741
    %v6743 = vsel %vm5079, %v6053, -inf
    %v6744 = vrot.slane %v6743, 4
    %v6745 = vmax.f32 %v6743, %v6744
    %v6746 = vrot.slane %v6745, 2
    %v6747 = vmax.f32 %v6745, %v6746
    %v6748 = vrot.slane %v6747, 1
    %v6749 = vmax.f32 %v6747, %v6748
    %v6750 = vsel %vm5079, %v4875, -inf
    %v6751 = vrot.slane %v6750, 4
    %v6752 = vmax.f32 %v6750, %v6751
    %v6753 = vrot.slane %v6752, 2
    %v6754 = vmax.f32 %v6752, %v6753
    %v6755 = vrot.slane %v6754, 1
    %v6756 = vmax.f32 %v6754, %v6755
    %v6757 = vsel %vm5079, %v6054, -inf
    %v6758 = vrot.slane %v6757, 4
    %v6759 = vmax.f32 %v6757, %v6758
    %v6760 = vrot.slane %v6759, 2
    %v6761 = vmax.f32 %v6759, %v6760
    %v6762 = vrot.slane %v6761, 1
    %v6763 = vmax.f32 %v6761, %v6762
    %v6764 = vsel %vm5079, %v4876, -inf
    %v6765 = vrot.slane %v6764, 4
    %v6766 = vmax.f32 %v6764, %v6765
    %v6767 = vrot.slane %v6766, 2
    %v6768 = vmax.f32 %v6766, %v6767
    %v6769 = vrot.slane %v6768, 1
    %v6770 = vmax.f32 %v6768, %v6769
    %v6771 = vsel %vm5079, %v6055, -inf
    %v6772 = vrot.slane %v6771, 4
    %v6773 = vmax.f32 %v6771, %v6772
    %v6774 = vrot.slane %v6773, 2
    %v6775 = vmax.f32 %v6773, %v6774
    %v6776 = vrot.slane %v6775, 1
    %v6777 = vmax.f32 %v6775, %v6776
    %v6778 = vsel %vm5079, %v4877, -inf
    %v6779 = vrot.slane %v6778, 4
    %v6780 = vmax.f32 %v6778, %v6779
    %v6781 = vrot.slane %v6780, 2
    %v6782 = vmax.f32 %v6780, %v6781
    %v6783 = vrot.slane %v6782, 1
    %v6784 = vmax.f32 %v6782, %v6783
    %v6785 = vsel %vm5079, %v6056, -inf
    %v6786 = vrot.slane %v6785, 4
    %v6787 = vmax.f32 %v6785, %v6786
    %v6788 = vrot.slane %v6787, 2
    %v6789 = vmax.f32 %v6787, %v6788
    %v6790 = vrot.slane %v6789, 1
    %v6791 = vmax.f32 %v6789, %v6790
    %v6792 = vsel %vm5079, %v4878, -inf
    %v6793 = vrot.slane %v6792, 4
    %v6794 = vmax.f32 %v6792, %v6793
    %v6795 = vrot.slane %v6794, 2
    %v6796 = vmax.f32 %v6794, %v6795
    %v6797 = vrot.slane %v6796, 1
    %v6798 = vmax.f32 %v6796, %v6797
    %v6799 = vsel %vm5079, %v6057, -inf
    %v6800 = vrot.slane %v6799, 4
    %v6801 = vmax.f32 %v6799, %v6800
    %v6802 = vrot.slane %v6801, 2
    %v6803 = vmax.f32 %v6801, %v6802
    %v6804 = vrot.slane %v6803, 1
    %v6805 = vmax.f32 %v6803, %v6804
    %v6806 = vsel %vm5079, %v4879, -inf
    %v6807 = vrot.slane %v6806, 4
    %v6808 = vmax.f32 %v6806, %v6807
    %v6809 = vrot.slane %v6808, 2
    %v6810 = vmax.f32 %v6808, %v6809
    %v6811 = vrot.slane %v6810, 1
    %v6812 = vmax.f32 %v6810, %v6811
    %v6813 = vsel %vm5079, %v6058, -inf
    %v6814 = vrot.slane %v6813, 4
    %v6815 = vmax.f32 %v6813, %v6814
    %v6816 = vrot.slane %v6815, 2
    %v6817 = vmax.f32 %v6815, %v6816
    %v6818 = vrot.slane %v6817, 1
    %v6819 = vmax.f32 %v6817, %v6818
    %v6820 = vsel %vm5079, %v4880, -inf
    %v6821 = vrot.slane %v6820, 4
    %v6822 = vmax.f32 %v6820, %v6821
    %v6823 = vrot.slane %v6822, 2
    %v6824 = vmax.f32 %v6822, %v6823
    %v6825 = vrot.slane %v6824, 1
    %v6826 = vmax.f32 %v6824, %v6825
    %v6827 = vsel %vm5079, %v6059, -inf
    %v6828 = vrot.slane %v6827, 4
    %v6829 = vmax.f32 %v6827, %v6828
    %v6830 = vrot.slane %v6829, 2
    %v6831 = vmax.f32 %v6829, %v6830
    %v6832 = vrot.slane %v6831, 1
    %v6833 = vmax.f32 %v6831, %v6832
    %v6834 = vsel %vm5079, %v4881, -inf
    %v6835 = vrot.slane %v6834, 4
    %v6836 = vmax.f32 %v6834, %v6835
    %v6837 = vrot.slane %v6836, 2
    %v6838 = vmax.f32 %v6836, %v6837
    %v6839 = vrot.slane %v6838, 1
    %v6840 = vmax.f32 %v6838, %v6839
    %v6841 = vsel %vm5079, %v6060, -inf
    %v6842 = vrot.slane %v6841, 4
    %v6843 = vmax.f32 %v6841, %v6842
    %v6844 = vrot.slane %v6843, 2
    %v6845 = vmax.f32 %v6843, %v6844
    %v6846 = vrot.slane %v6845, 1
    %v6847 = vmax.f32 %v6845, %v6846
    %v6848 = vsel %vm5079, %v4882, -inf
    %v6849 = vrot.slane %v6848, 4
    %v6850 = vmax.f32 %v6848, %v6849
    %v6851 = vrot.slane %v6850, 2
    %v6852 = vmax.f32 %v6850, %v6851
    %v6853 = vrot.slane %v6852, 1
    %v6854 = vmax.f32 %v6852, %v6853
    %v6855 = vsel %vm5079, %v6061, -inf
    %v6856 = vrot.slane %v6855, 4
    %v6857 = vmax.f32 %v6855, %v6856
    %v6858 = vrot.slane %v6857, 2
    %v6859 = vmax.f32 %v6857, %v6858
    %v6860 = vrot.slane %v6859, 1
    %v6861 = vmax.f32 %v6859, %v6860
    %v6862 = vsel %vm5079, %v4883, -inf
    %v6863 = vrot.slane %v6862, 4
    %v6864 = vmax.f32 %v6862, %v6863
    %v6865 = vrot.slane %v6864, 2
    %v6866 = vmax.f32 %v6864, %v6865
    %v6867 = vrot.slane %v6866, 1
    %v6868 = vmax.f32 %v6866, %v6867
    %v6869 = vsel %vm5079, %v6062, -inf
    %v6870 = vrot.slane %v6869, 4
    %v6871 = vmax.f32 %v6869, %v6870
    %v6872 = vrot.slane %v6871, 2
    %v6873 = vmax.f32 %v6871, %v6872
    %v6874 = vrot.slane %v6873, 1
    %v6875 = vmax.f32 %v6873, %v6874
    %v6876 = vsel %vm5079, %v4884, -inf
    %v6877 = vrot.slane %v6876, 4
    %v6878 = vmax.f32 %v6876, %v6877
    %v6879 = vrot.slane %v6878, 2
    %v6880 = vmax.f32 %v6878, %v6879
    %v6881 = vrot.slane %v6880, 1
    %v6882 = vmax.f32 %v6880, %v6881
    %v6883 = vsel %vm5079, %v6063, -inf
    %v6884 = vrot.slane %v6883, 4
    %v6885 = vmax.f32 %v6883, %v6884
    %v6886 = vrot.slane %v6885, 2
    %v6887 = vmax.f32 %v6885, %v6886
    %v6888 = vrot.slane %v6887, 1
    %v6889 = vmax.f32 %v6887, %v6888
    %v6890 = vsel %vm5079, %v4885, -inf
    %v6891 = vrot.slane %v6890, 4
    %v6892 = vmax.f32 %v6890, %v6891
    %v6893 = vrot.slane %v6892, 2
    %v6894 = vmax.f32 %v6892, %v6893
    %v6895 = vrot.slane %v6894, 1
    %v6896 = vmax.f32 %v6894, %v6895
    %v6897 = vsel %vm5079, %v6064, -inf
    %v6898 = vrot.slane %v6897, 4
    %v6899 = vmax.f32 %v6897, %v6898
    %v6900 = vrot.slane %v6899, 2
    %v6901 = vmax.f32 %v6899, %v6900
    %v6902 = vrot.slane %v6901, 1
    %v6903 = vmax.f32 %v6901, %v6902
    %v6904 = vsel %vm5079, %v4886, -inf
    %v6905 = vrot.slane %v6904, 4
    %v6906 = vmax.f32 %v6904, %v6905
    %v6907 = vrot.slane %v6906, 2
    %v6908 = vmax.f32 %v6906, %v6907
    %v6909 = vrot.slane %v6908, 1
    %v6910 = vmax.f32 %v6908, %v6909
    %v6911 = vsel %vm5079, %v6065, -inf
    %v6912 = vrot.slane %v6911, 4
    %v6913 = vmax.f32 %v6911, %v6912
    %v6914 = vrot.slane %v6913, 2
    %v6915 = vmax.f32 %v6913, %v6914
    %v6916 = vrot.slane %v6915, 1
    %v6917 = vmax.f32 %v6915, %v6916
    %v6918 = vsel %vm5079, %v4887, -inf
    %v6919 = vrot.slane %v6918, 4
    %v6920 = vmax.f32 %v6918, %v6919
    %v6921 = vrot.slane %v6920, 2
    %v6922 = vmax.f32 %v6920, %v6921
    %v6923 = vrot.slane %v6922, 1
    %v6924 = vmax.f32 %v6922, %v6923
    %v6925 = vsel %vm5079, %v6066, -inf
    %v6926 = vrot.slane %v6925, 4
    %v6927 = vmax.f32 %v6925, %v6926
    %v6928 = vrot.slane %v6927, 2
    %v6929 = vmax.f32 %v6927, %v6928
    %v6930 = vrot.slane %v6929, 1
    %v6931 = vmax.f32 %v6929, %v6930
    %v6932 = vsel %vm5079, %v4888, -inf
    %v6933 = vrot.slane %v6932, 4
    %v6934 = vmax.f32 %v6932, %v6933
    %v6935 = vrot.slane %v6934, 2
    %v6936 = vmax.f32 %v6934, %v6935
    %v6937 = vrot.slane %v6936, 1
    %v6938 = vmax.f32 %v6936, %v6937
    %v6939 = vsel %vm5079, %v6067, -inf
    %v6940 = vrot.slane %v6939, 4
    %v6941 = vmax.f32 %v6939, %v6940
    %v6942 = vrot.slane %v6941, 2
    %v6943 = vmax.f32 %v6941, %v6942
    %v6944 = vrot.slane %v6943, 1
    %v6945 = vmax.f32 %v6943, %v6944
    %v6946 = vsel %vm5079, %v4889, -inf
    %v6947 = vrot.slane %v6946, 4
    %v6948 = vmax.f32 %v6946, %v6947
    %v6949 = vrot.slane %v6948, 2
    %v6950 = vmax.f32 %v6948, %v6949
    %v6951 = vrot.slane %v6950, 1
    %v6952 = vmax.f32 %v6950, %v6951
    %v6953 = vsel %vm5079, %v6068, -inf
    %v6954 = vrot.slane %v6953, 4
    %v6955 = vmax.f32 %v6953, %v6954
    %v6956 = vrot.slane %v6955, 2
    %v6957 = vmax.f32 %v6955, %v6956
    %v6958 = vrot.slane %v6957, 1
    %v6959 = vmax.f32 %v6957, %v6958
    %v6960 = vsel %vm5079, %v4890, -inf
    %v6961 = vrot.slane %v6960, 4
    %v6962 = vmax.f32 %v6960, %v6961
    %v6963 = vrot.slane %v6962, 2
    %v6964 = vmax.f32 %v6962, %v6963
    %v6965 = vrot.slane %v6964, 1
    %v6966 = vmax.f32 %v6964, %v6965
    %v6967 = vsel %vm5079, %v6069, -inf
    %v6968 = vrot.slane %v6967, 4
    %v6969 = vmax.f32 %v6967, %v6968
    %v6970 = vrot.slane %v6969, 2
    %v6971 = vmax.f32 %v6969, %v6970
    %v6972 = vrot.slane %v6971, 1
    %v6973 = vmax.f32 %v6971, %v6972
    %v6974 = vsel %vm5079, %v4891, -inf
    %v6975 = vrot.slane %v6974, 4
    %v6976 = vmax.f32 %v6974, %v6975
    %v6977 = vrot.slane %v6976, 2
    %v6978 = vmax.f32 %v6976, %v6977
    %v6979 = vrot.slane %v6978, 1
    %v6980 = vmax.f32 %v6978, %v6979
    %v6981 = vsel %vm5079, %v6070, -inf
    %v6982 = vrot.slane %v6981, 4
    %v6983 = vmax.f32 %v6981, %v6982
    %v6984 = vrot.slane %v6983, 2
    %v6985 = vmax.f32 %v6983, %v6984
    %v6986 = vrot.slane %v6985, 1
    %v6987 = vmax.f32 %v6985, %v6986
    %v6988 = vsel %vm5079, %v4892, -inf
    %v6989 = vrot.slane %v6988, 4
    %v6990 = vmax.f32 %v6988, %v6989
    %v6991 = vrot.slane %v6990, 2
    %v6992 = vmax.f32 %v6990, %v6991
    %v6993 = vrot.slane %v6992, 1
    %v6994 = vmax.f32 %v6992, %v6993
    %v6995 = vsel %vm5079, %v6071, -inf
    %v6996 = vrot.slane %v6995, 4
    %v6997 = vmax.f32 %v6995, %v6996
    %v6998 = vrot.slane %v6997, 2
    %v6999 = vmax.f32 %v6997, %v6998
    %v7000 = vrot.slane %v6999, 1
    %v7001 = vmax.f32 %v6999, %v7000
    %vm7124 = vcmask 1041409
    %v7125 = vsel %vm7124, %v5093, %v5086
    %vm7126 = vcmask 1042434
    %v7127 = vsel %vm7126, %v5100, %v7125
    %vm7128 = vcmask 1043459
    %v7129 = vsel %vm7128, %v5107, %v7127
    %vm7130 = vcmask 1044484
    %v7131 = vsel %vm7130, %v5114, %v7129
    %vm7132 = vcmask 1045509
    %v7133 = vsel %vm7132, %v5121, %v7131
    %vm7134 = vcmask 1046534
    %v7135 = vsel %vm7134, %v5128, %v7133
    %vm7136 = vcmask 1047559
    %v7137 = vsel %vm7136, %v5135, %v7135
    %v7138 = vsel %vm7124, %v5149, %v5142
    %v7139 = vsel %vm7126, %v5156, %v7138
    %v7140 = vsel %vm7128, %v5163, %v7139
    %v7141 = vsel %vm7130, %v5170, %v7140
    %v7142 = vsel %vm7132, %v5177, %v7141
    %v7143 = vsel %vm7134, %v5184, %v7142
    %v7144 = vsel %vm7136, %v5191, %v7143
    %v7145 = vsel %vm7124, %v5205, %v5198
    %v7146 = vsel %vm7126, %v5212, %v7145
    %v7147 = vsel %vm7128, %v5219, %v7146
    %v7148 = vsel %vm7130, %v5226, %v7147
    %v7149 = vsel %vm7132, %v5233, %v7148
    %v7150 = vsel %vm7134, %v5240, %v7149
    %v7151 = vsel %vm7136, %v5247, %v7150
    %v7152 = vsel %vm7124, %v5261, %v5254
    %v7153 = vsel %vm7126, %v5268, %v7152
    %v7154 = vsel %vm7128, %v5275, %v7153
    %v7155 = vsel %vm7130, %v5282, %v7154
    %v7156 = vsel %vm7132, %v5289, %v7155
    %v7157 = vsel %vm7134, %v5296, %v7156
    %v7158 = vsel %vm7136, %v5303, %v7157
    %v7159 = vsel %vm7124, %v5317, %v5310
    %v7160 = vsel %vm7126, %v5324, %v7159
    %v7161 = vsel %vm7128, %v5331, %v7160
    %v7162 = vsel %vm7130, %v5338, %v7161
    %v7163 = vsel %vm7132, %v5345, %v7162
    %v7164 = vsel %vm7134, %v5352, %v7163
    %v7165 = vsel %vm7136, %v5359, %v7164
    %v7166 = vsel %vm7124, %v5373, %v5366
    %v7167 = vsel %vm7126, %v5380, %v7166
    %v7168 = vsel %vm7128, %v5387, %v7167
    %v7169 = vsel %vm7130, %v5394, %v7168
    %v7170 = vsel %vm7132, %v5401, %v7169
    %v7171 = vsel %vm7134, %v5408, %v7170
    %v7172 = vsel %vm7136, %v5415, %v7171
    %v7173 = vsel %vm7124, %v5429, %v5422
    %v7174 = vsel %vm7126, %v5436, %v7173
    %v7175 = vsel %vm7128, %v5443, %v7174
    %v7176 = vsel %vm7130, %v5450, %v7175
    %v7177 = vsel %vm7132, %v5457, %v7176
    %v7178 = vsel %vm7134, %v5464, %v7177
    %v7179 = vsel %vm7136, %v5471, %v7178
    %v7180 = vsel %vm7124, %v5485, %v5478
    %v7181 = vsel %vm7126, %v5492, %v7180
    %v7182 = vsel %vm7128, %v5499, %v7181
    %v7183 = vsel %vm7130, %v5506, %v7182
    %v7184 = vsel %vm7132, %v5513, %v7183
    %v7185 = vsel %vm7134, %v5520, %v7184
    %v7186 = vsel %vm7136, %v5527, %v7185
    %v7187 = vsel %vm7124, %v5541, %v5534
    %v7188 = vsel %vm7126, %v5548, %v7187
    %v7189 = vsel %vm7128, %v5555, %v7188
    %v7190 = vsel %vm7130, %v5562, %v7189
    %v7191 = vsel %vm7132, %v5569, %v7190
    %v7192 = vsel %vm7134, %v5576, %v7191
    %v7193 = vsel %vm7136, %v5583, %v7192
    %v7194 = vsel %vm7124, %v5597, %v5590
    %v7195 = vsel %vm7126, %v5604, %v7194
    %v7196 = vsel %vm7128, %v5611, %v7195
    %v7197 = vsel %vm7130, %v5618, %v7196
    %v7198 = vsel %vm7132, %v5625, %v7197
    %v7199 = vsel %vm7134, %v5632, %v7198
    %v7200 = vsel %vm7136, %v5639, %v7199
    %v7201 = vsel %vm7124, %v5653, %v5646
    %v7202 = vsel %vm7126, %v5660, %v7201
    %v7203 = vsel %vm7128, %v5667, %v7202
    %v7204 = vsel %vm7130, %v5674, %v7203
    %v7205 = vsel %vm7132, %v5681, %v7204
    %v7206 = vsel %vm7134, %v5688, %v7205
    %v7207 = vsel %vm7136, %v5695, %v7206
    %v7208 = vsel %vm7124, %v5709, %v5702
    %v7209 = vsel %vm7126, %v5716, %v7208
    %v7210 = vsel %vm7128, %v5723, %v7209
    %v7211 = vsel %vm7130, %v5730, %v7210
    %v7212 = vsel %vm7132, %v5737, %v7211
    %v7213 = vsel %vm7134, %v5744, %v7212
    %v7214 = vsel %vm7136, %v5751, %v7213
    %v7215 = vsel %vm7124, %v5765, %v5758
    %v7216 = vsel %vm7126, %v5772, %v7215
    %v7217 = vsel %vm7128, %v5779, %v7216
    %v7218 = vsel %vm7130, %v5786, %v7217
    %v7219 = vsel %vm7132, %v5793, %v7218
    %v7220 = vsel %vm7134, %v5800, %v7219
    %v7221 = vsel %vm7136, %v5807, %v7220
    %v7222 = vsel %vm7124, %v5821, %v5814
    %v7223 = vsel %vm7126, %v5828, %v7222
    %v7224 = vsel %vm7128, %v5835, %v7223
    %v7225 = vsel %vm7130, %v5842, %v7224
    %v7226 = vsel %vm7132, %v5849, %v7225
    %v7227 = vsel %vm7134, %v5856, %v7226
    %v7228 = vsel %vm7136, %v5863, %v7227
    %v7229 = vsel %vm7124, %v5877, %v5870
    %v7230 = vsel %vm7126, %v5884, %v7229
    %v7231 = vsel %vm7128, %v5891, %v7230
    %v7232 = vsel %vm7130, %v5898, %v7231
    %v7233 = vsel %vm7132, %v5905, %v7232
    %v7234 = vsel %vm7134, %v5912, %v7233
    %v7235 = vsel %vm7136, %v5919, %v7234
    %v7236 = vsel %vm7124, %v5933, %v5926
    %v7254 = vsel %vm7124, %v5100, %v5093
    %v7255 = vsel %vm7126, %v5107, %v7254
    %v7256 = vsel %vm7128, %v5114, %v7255
    %v7257 = vsel %vm7130, %v5121, %v7256
    %v7258 = vsel %vm7132, %v5128, %v7257
    %v7259 = vsel %vm7134, %v5135, %v7258
    %v7260 = vsel %vm7136, %v5142, %v7259
    %v7261 = vsel %vm7124, %v5156, %v5149
    %v7262 = vsel %vm7126, %v5163, %v7261
    %v7263 = vsel %vm7128, %v5170, %v7262
    %v7264 = vsel %vm7130, %v5177, %v7263
    %v7265 = vsel %vm7132, %v5184, %v7264
    %v7266 = vsel %vm7134, %v5191, %v7265
    %v7267 = vsel %vm7136, %v5198, %v7266
    %v7268 = vsel %vm7124, %v5212, %v5205
    %v7269 = vsel %vm7126, %v5219, %v7268
    %v7270 = vsel %vm7128, %v5226, %v7269
    %v7271 = vsel %vm7130, %v5233, %v7270
    %v7272 = vsel %vm7132, %v5240, %v7271
    %v7273 = vsel %vm7134, %v5247, %v7272
    %v7274 = vsel %vm7136, %v5254, %v7273
    %v7275 = vsel %vm7124, %v5268, %v5261
    %v7276 = vsel %vm7126, %v5275, %v7275
    %v7277 = vsel %vm7128, %v5282, %v7276
    %v7278 = vsel %vm7130, %v5289, %v7277
    %v7279 = vsel %vm7132, %v5296, %v7278
    %v7280 = vsel %vm7134, %v5303, %v7279
    %v7281 = vsel %vm7136, %v5310, %v7280
    %v7282 = vsel %vm7124, %v5324, %v5317
    %v7283 = vsel %vm7126, %v5331, %v7282
    %v7284 = vsel %vm7128, %v5338, %v7283
    %v7285 = vsel %vm7130, %v5345, %v7284
    %v7286 = vsel %vm7132, %v5352, %v7285
    %v7287 = vsel %vm7134, %v5359, %v7286
    %v7288 = vsel %vm7136, %v5366, %v7287
    %v7289 = vsel %vm7124, %v5380, %v5373
    %v7290 = vsel %vm7126, %v5387, %v7289
    %v7291 = vsel %vm7128, %v5394, %v7290
    %v7292 = vsel %vm7130, %v5401, %v7291
    %v7293 = vsel %vm7132, %v5408, %v7292
    %v7294 = vsel %vm7134, %v5415, %v7293
    %v7295 = vsel %vm7136, %v5422, %v7294
    %v7296 = vsel %vm7124, %v5436, %v5429
    %v7297 = vsel %vm7126, %v5443, %v7296
    %v7298 = vsel %vm7128, %v5450, %v7297
    %v7299 = vsel %vm7130, %v5457, %v7298
    %v7300 = vsel %vm7132, %v5464, %v7299
    %v7301 = vsel %vm7134, %v5471, %v7300
    %v7302 = vsel %vm7136, %v5478, %v7301
    %v7303 = vsel %vm7124, %v5492, %v5485
    %v7304 = vsel %vm7126, %v5499, %v7303
    %v7305 = vsel %vm7128, %v5506, %v7304
    %v7306 = vsel %vm7130, %v5513, %v7305
    %v7307 = vsel %vm7132, %v5520, %v7306
    %v7308 = vsel %vm7134, %v5527, %v7307
    %v7309 = vsel %vm7136, %v5534, %v7308
    %v7310 = vsel %vm7124, %v5548, %v5541
    %v7311 = vsel %vm7126, %v5555, %v7310
    %v7312 = vsel %vm7128, %v5562, %v7311
    %v7313 = vsel %vm7130, %v5569, %v7312
    %v7314 = vsel %vm7132, %v5576, %v7313
    %v7315 = vsel %vm7134, %v5583, %v7314
    %v7316 = vsel %vm7136, %v5590, %v7315
    %v7317 = vsel %vm7124, %v5604, %v5597
    %v7318 = vsel %vm7126, %v5611, %v7317
    %v7319 = vsel %vm7128, %v5618, %v7318
    %v7320 = vsel %vm7130, %v5625, %v7319
    %v7321 = vsel %vm7132, %v5632, %v7320
    %v7322 = vsel %vm7134, %v5639, %v7321
    %v7323 = vsel %vm7136, %v5646, %v7322
    %v7324 = vsel %vm7124, %v5660, %v5653
    %v7325 = vsel %vm7126, %v5667, %v7324
    %v7326 = vsel %vm7128, %v5674, %v7325
    %v7327 = vsel %vm7130, %v5681, %v7326
    %v7328 = vsel %vm7132, %v5688, %v7327
    %v7329 = vsel %vm7134, %v5695, %v7328
    %v7330 = vsel %vm7136, %v5702, %v7329
    %v7331 = vsel %vm7124, %v5716, %v5709
    %v7332 = vsel %vm7126, %v5723, %v7331
    %v7333 = vsel %vm7128, %v5730, %v7332
    %v7334 = vsel %vm7130, %v5737, %v7333
    %v7335 = vsel %vm7132, %v5744, %v7334
    %v7336 = vsel %vm7134, %v5751, %v7335
    %v7337 = vsel %vm7136, %v5758, %v7336
    %v7338 = vsel %vm7124, %v5772, %v5765
    %v7339 = vsel %vm7126, %v5779, %v7338
    %v7340 = vsel %vm7128, %v5786, %v7339
    %v7341 = vsel %vm7130, %v5793, %v7340
    %v7342 = vsel %vm7132, %v5800, %v7341
    %v7343 = vsel %vm7134, %v5807, %v7342
    %v7344 = vsel %vm7136, %v5814, %v7343
    %v7345 = vsel %vm7124, %v5828, %v5821
    %v7346 = vsel %vm7126, %v5835, %v7345
    %v7347 = vsel %vm7128, %v5842, %v7346
    %v7348 = vsel %vm7130, %v5849, %v7347
    %v7349 = vsel %vm7132, %v5856, %v7348
    %v7350 = vsel %vm7134, %v5863, %v7349
    %v7351 = vsel %vm7136, %v5870, %v7350
    %v7352 = vsel %vm7124, %v5884, %v5877
    %v7353 = vsel %vm7126, %v5891, %v7352
    %v7354 = vsel %vm7128, %v5898, %v7353
    %v7355 = vsel %vm7130, %v5905, %v7354
    %v7356 = vsel %vm7132, %v5912, %v7355
    %v7357 = vsel %vm7134, %v5919, %v7356
    %v7358 = vsel %vm7136, %v5926, %v7357
    %v7359 = vsel %vm7124, %v5940, %v5933
    %7360 = vrot.lane.b32.xlu0 %v7260, 32
    %v7361 = vpop.permute.xlu0 %7360
    %7362 = vrot.lane.b32.xlu0 %v7267, 32
    %v7363 = vpop.permute.xlu0 %7362
    %7364 = vrot.lane.b32.xlu0 %v7274, 32
    %v7365 = vpop.permute.xlu0 %7364
    %7366 = vrot.lane.b32.xlu0 %v7281, 32
    %v7367 = vpop.permute.xlu0 %7366
    %7368 = vrot.lane.b32.xlu0 %v7288, 32
    %v7369 = vpop.permute.xlu0 %7368
    %7370 = vrot.lane.b32.xlu0 %v7295, 32
    %v7371 = vpop.permute.xlu0 %7370
    %7372 = vrot.lane.b32.xlu0 %v7302, 32
    %v7373 = vpop.permute.xlu0 %7372
    %7374 = vrot.lane.b32.xlu0 %v7309, 32
    %v7375 = vpop.permute.xlu0 %7374
    %7376 = vrot.lane.b32.xlu0 %v7316, 32
    %v7377 = vpop.permute.xlu0 %7376
    %7378 = vrot.lane.b32.xlu0 %v7323, 32
    %v7379 = vpop.permute.xlu0 %7378
    %7380 = vrot.lane.b32.xlu0 %v7330, 32
    %v7381 = vpop.permute.xlu0 %7380
    %7382 = vrot.lane.b32.xlu0 %v7337, 32
    %v7383 = vpop.permute.xlu0 %7382
    %7384 = vrot.lane.b32.xlu0 %v7344, 32
    %v7385 = vpop.permute.xlu0 %7384
    %7386 = vrot.lane.b32.xlu0 %v7351, 32
    %v7387 = vpop.permute.xlu0 %7386
    %7388 = vrot.lane.b32.xlu0 %v7358, 32
    %v7389 = vpop.permute.xlu0 %7388
    %7390 = vrot.lane.b32.xlu0 %v7359, 32
    %v7391 = vpop.permute.xlu0 %7390
    %v7409 = vsel %vm7124, %v5107, %v5100
    %v7410 = vsel %vm7126, %v5114, %v7409
    %v7411 = vsel %vm7128, %v5121, %v7410
    %v7412 = vsel %vm7130, %v5128, %v7411
    %v7413 = vsel %vm7132, %v5135, %v7412
    %v7414 = vsel %vm7134, %v5142, %v7413
    %v7415 = vsel %vm7136, %v5149, %v7414
    %v7416 = vsel %vm7124, %v5163, %v5156
    %v7417 = vsel %vm7126, %v5170, %v7416
    %v7418 = vsel %vm7128, %v5177, %v7417
    %v7419 = vsel %vm7130, %v5184, %v7418
    %v7420 = vsel %vm7132, %v5191, %v7419
    %v7421 = vsel %vm7134, %v5198, %v7420
    %v7422 = vsel %vm7136, %v5205, %v7421
    %v7423 = vsel %vm7124, %v5219, %v5212
    %v7424 = vsel %vm7126, %v5226, %v7423
    %v7425 = vsel %vm7128, %v5233, %v7424
    %v7426 = vsel %vm7130, %v5240, %v7425
    %v7427 = vsel %vm7132, %v5247, %v7426
    %v7428 = vsel %vm7134, %v5254, %v7427
    %v7429 = vsel %vm7136, %v5261, %v7428
    %v7430 = vsel %vm7124, %v5275, %v5268
    %v7431 = vsel %vm7126, %v5282, %v7430
    %v7432 = vsel %vm7128, %v5289, %v7431
    %v7433 = vsel %vm7130, %v5296, %v7432
    %v7434 = vsel %vm7132, %v5303, %v7433
    %v7435 = vsel %vm7134, %v5310, %v7434
    %v7436 = vsel %vm7136, %v5317, %v7435
    %v7437 = vsel %vm7124, %v5331, %v5324
    %v7438 = vsel %vm7126, %v5338, %v7437
    %v7439 = vsel %vm7128, %v5345, %v7438
    %v7440 = vsel %vm7130, %v5352, %v7439
    %v7441 = vsel %vm7132, %v5359, %v7440
    %v7442 = vsel %vm7134, %v5366, %v7441
    %v7443 = vsel %vm7136, %v5373, %v7442
    %v7444 = vsel %vm7124, %v5387, %v5380
    %v7445 = vsel %vm7126, %v5394, %v7444
    %v7446 = vsel %vm7128, %v5401, %v7445
    %v7447 = vsel %vm7130, %v5408, %v7446
    %v7448 = vsel %vm7132, %v5415, %v7447
    %v7449 = vsel %vm7134, %v5422, %v7448
    %v7450 = vsel %vm7136, %v5429, %v7449
    %v7451 = vsel %vm7124, %v5443, %v5436
    %v7452 = vsel %vm7126, %v5450, %v7451
    %v7453 = vsel %vm7128, %v5457, %v7452
    %v7454 = vsel %vm7130, %v5464, %v7453
    %v7455 = vsel %vm7132, %v5471, %v7454
    %v7456 = vsel %vm7134, %v5478, %v7455
    %v7457 = vsel %vm7136, %v5485, %v7456
    %v7458 = vsel %vm7124, %v5499, %v5492
    %v7459 = vsel %vm7126, %v5506, %v7458
    %v7460 = vsel %vm7128, %v5513, %v7459
    %v7461 = vsel %vm7130, %v5520, %v7460
    %v7462 = vsel %vm7132, %v5527, %v7461
    %v7463 = vsel %vm7134, %v5534, %v7462
    %v7464 = vsel %vm7136, %v5541, %v7463
    %v7465 = vsel %vm7124, %v5555, %v5548
    %v7466 = vsel %vm7126, %v5562, %v7465
    %v7467 = vsel %vm7128, %v5569, %v7466
    %v7468 = vsel %vm7130, %v5576, %v7467
    %v7469 = vsel %vm7132, %v5583, %v7468
    %v7470 = vsel %vm7134, %v5590, %v7469
    %v7471 = vsel %vm7136, %v5597, %v7470
    %v7472 = vsel %vm7124, %v5611, %v5604
    %v7473 = vsel %vm7126, %v5618, %v7472
    %v7474 = vsel %vm7128, %v5625, %v7473
    %v7475 = vsel %vm7130, %v5632, %v7474
    %v7476 = vsel %vm7132, %v5639, %v7475
    %v7477 = vsel %vm7134, %v5646, %v7476
    %v7478 = vsel %vm7136, %v5653, %v7477
    %v7479 = vsel %vm7124, %v5667, %v5660
    %v7480 = vsel %vm7126, %v5674, %v7479
    %v7481 = vsel %vm7128, %v5681, %v7480
    %v7482 = vsel %vm7130, %v5688, %v7481
    %v7483 = vsel %vm7132, %v5695, %v7482
    %v7484 = vsel %vm7134, %v5702, %v7483
    %v7485 = vsel %vm7136, %v5709, %v7484
    %v7486 = vsel %vm7124, %v5723, %v5716
    %v7487 = vsel %vm7126, %v5730, %v7486
    %v7488 = vsel %vm7128, %v5737, %v7487
    %v7489 = vsel %vm7130, %v5744, %v7488
    %v7490 = vsel %vm7132, %v5751, %v7489
    %v7491 = vsel %vm7134, %v5758, %v7490
    %v7492 = vsel %vm7136, %v5765, %v7491
    %v7493 = vsel %vm7124, %v5779, %v5772
    %v7494 = vsel %vm7126, %v5786, %v7493
    %v7495 = vsel %vm7128, %v5793, %v7494
    %v7496 = vsel %vm7130, %v5800, %v7495
    %v7497 = vsel %vm7132, %v5807, %v7496
    %v7498 = vsel %vm7134, %v5814, %v7497
    %v7499 = vsel %vm7136, %v5821, %v7498
    %v7500 = vsel %vm7124, %v5835, %v5828
    %v7501 = vsel %vm7126, %v5842, %v7500
    %v7502 = vsel %vm7128, %v5849, %v7501
    %v7503 = vsel %vm7130, %v5856, %v7502
    %v7504 = vsel %vm7132, %v5863, %v7503
    %v7505 = vsel %vm7134, %v5870, %v7504
    %v7506 = vsel %vm7136, %v5877, %v7505
    %v7507 = vsel %vm7124, %v5891, %v5884
    %v7508 = vsel %vm7126, %v5898, %v7507
    %v7509 = vsel %vm7128, %v5905, %v7508
    %v7510 = vsel %vm7130, %v5912, %v7509
    %v7511 = vsel %vm7132, %v5919, %v7510
    %v7512 = vsel %vm7134, %v5926, %v7511
    %v7513 = vsel %vm7136, %v5933, %v7512
    %v7514 = vsel %vm7124, %v5947, %v5940
    %7515 = vrot.lane.b32.xlu0 %v7415, 64
    %v7516 = vpop.permute.xlu0 %7515
    %7517 = vrot.lane.b32.xlu0 %v7422, 64
    %v7518 = vpop.permute.xlu0 %7517
    %7519 = vrot.lane.b32.xlu0 %v7429, 64
    %v7520 = vpop.permute.xlu0 %7519
    %7521 = vrot.lane.b32.xlu0 %v7436, 64
    %v7522 = vpop.permute.xlu0 %7521
    %7523 = vrot.lane.b32.xlu0 %v7443, 64
    %v7524 = vpop.permute.xlu0 %7523
    %7525 = vrot.lane.b32.xlu0 %v7450, 64
    %v7526 = vpop.permute.xlu0 %7525
    %7527 = vrot.lane.b32.xlu0 %v7457, 64
    %v7528 = vpop.permute.xlu0 %7527
    %7529 = vrot.lane.b32.xlu0 %v7464, 64
    %v7530 = vpop.permute.xlu0 %7529
    %7531 = vrot.lane.b32.xlu0 %v7471, 64
    %v7532 = vpop.permute.xlu0 %7531
    %7533 = vrot.lane.b32.xlu0 %v7478, 64
    %v7534 = vpop.permute.xlu0 %7533
    %7535 = vrot.lane.b32.xlu0 %v7485, 64
    %v7536 = vpop.permute.xlu0 %7535
    %7537 = vrot.lane.b32.xlu0 %v7492, 64
    %v7538 = vpop.permute.xlu0 %7537
    %7539 = vrot.lane.b32.xlu0 %v7499, 64
    %v7540 = vpop.permute.xlu0 %7539
    %7541 = vrot.lane.b32.xlu0 %v7506, 64
    %v7542 = vpop.permute.xlu0 %7541
    %7543 = vrot.lane.b32.xlu0 %v7513, 64
    %v7544 = vpop.permute.xlu0 %7543
    %7545 = vrot.lane.b32.xlu0 %v7514, 64
    %v7546 = vpop.permute.xlu0 %7545
    %v7563 = vsel %vm1453, %v7137, %v7361
    %v7564 = vsel %vm1453, %v7144, %v7363
    %v7565 = vsel %vm1453, %v7151, %v7365
    %v7566 = vsel %vm1453, %v7158, %v7367
    %v7567 = vsel %vm1453, %v7165, %v7369
    %v7568 = vsel %vm1453, %v7172, %v7371
    %v7569 = vsel %vm1453, %v7179, %v7373
    %v7570 = vsel %vm1453, %v7186, %v7375
    %v7571 = vsel %vm1453, %v7193, %v7377
    %v7572 = vsel %vm1453, %v7200, %v7379
    %v7573 = vsel %vm1453, %v7207, %v7381
    %v7574 = vsel %vm1453, %v7214, %v7383
    %v7575 = vsel %vm1453, %v7221, %v7385
    %v7576 = vsel %vm1453, %v7228, %v7387
    %v7577 = vsel %vm1453, %v7235, %v7389
    %v7578 = vsel %vm1453, %v7236, %v7391
    %v7579 = vsel %vm1579, %v7563, %v7516
    %v7580 = vsel %vm1579, %v7564, %v7518
    %v7581 = vsel %vm1579, %v7565, %v7520
    %v7582 = vsel %vm1579, %v7566, %v7522
    %v7583 = vsel %vm1579, %v7567, %v7524
    %v7584 = vsel %vm1579, %v7568, %v7526
    %v7585 = vsel %vm1579, %v7569, %v7528
    %v7586 = vsel %vm1579, %v7570, %v7530
    %v7587 = vsel %vm1579, %v7571, %v7532
    %v7588 = vsel %vm1579, %v7572, %v7534
    %v7589 = vsel %vm1579, %v7573, %v7536
    %v7590 = vsel %vm1579, %v7574, %v7538
    %v7591 = vsel %vm1579, %v7575, %v7540
    %v7592 = vsel %vm1579, %v7576, %v7542
    %v7593 = vsel %vm1579, %v7577, %v7544
    %v7594 = vsel %vm1579, %v7578, %v7546
    %v7717 = vsel %vm7124, %v6147, %v6140
    %v7718 = vsel %vm7126, %v6154, %v7717
    %v7719 = vsel %vm7128, %v6161, %v7718
    %v7720 = vsel %vm7130, %v6168, %v7719
    %v7721 = vsel %vm7132, %v6175, %v7720
    %v7722 = vsel %vm7134, %v6182, %v7721
    %v7723 = vsel %vm7136, %v6189, %v7722
    %v7724 = vsel %vm7124, %v6203, %v6196
    %v7725 = vsel %vm7126, %v6210, %v7724
    %v7726 = vsel %vm7128, %v6217, %v7725
    %v7727 = vsel %vm7130, %v6224, %v7726
    %v7728 = vsel %vm7132, %v6231, %v7727
    %v7729 = vsel %vm7134, %v6238, %v7728
    %v7730 = vsel %vm7136, %v6245, %v7729
    %v7731 = vsel %vm7124, %v6259, %v6252
    %v7732 = vsel %vm7126, %v6266, %v7731
    %v7733 = vsel %vm7128, %v6273, %v7732
    %v7734 = vsel %vm7130, %v6280, %v7733
    %v7735 = vsel %vm7132, %v6287, %v7734
    %v7736 = vsel %vm7134, %v6294, %v7735
    %v7737 = vsel %vm7136, %v6301, %v7736
    %v7738 = vsel %vm7124, %v6315, %v6308
    %v7739 = vsel %vm7126, %v6322, %v7738
    %v7740 = vsel %vm7128, %v6329, %v7739
    %v7741 = vsel %vm7130, %v6336, %v7740
    %v7742 = vsel %vm7132, %v6343, %v7741
    %v7743 = vsel %vm7134, %v6350, %v7742
    %v7744 = vsel %vm7136, %v6357, %v7743
    %v7745 = vsel %vm7124, %v6371, %v6364
    %v7746 = vsel %vm7126, %v6378, %v7745
    %v7747 = vsel %vm7128, %v6385, %v7746
    %v7748 = vsel %vm7130, %v6392, %v7747
    %v7749 = vsel %vm7132, %v6399, %v7748
    %v7750 = vsel %vm7134, %v6406, %v7749
    %v7751 = vsel %vm7136, %v6413, %v7750
    %v7752 = vsel %vm7124, %v6427, %v6420
    %v7753 = vsel %vm7126, %v6434, %v7752
    %v7754 = vsel %vm7128, %v6441, %v7753
    %v7755 = vsel %vm7130, %v6448, %v7754
    %v7756 = vsel %vm7132, %v6455, %v7755
    %v7757 = vsel %vm7134, %v6462, %v7756
    %v7758 = vsel %vm7136, %v6469, %v7757
    %v7759 = vsel %vm7124, %v6483, %v6476
    %v7760 = vsel %vm7126, %v6490, %v7759
    %v7761 = vsel %vm7128, %v6497, %v7760
    %v7762 = vsel %vm7130, %v6504, %v7761
    %v7763 = vsel %vm7132, %v6511, %v7762
    %v7764 = vsel %vm7134, %v6518, %v7763
    %v7765 = vsel %vm7136, %v6525, %v7764
    %v7766 = vsel %vm7124, %v6539, %v6532
    %v7767 = vsel %vm7126, %v6546, %v7766
    %v7768 = vsel %vm7128, %v6553, %v7767
    %v7769 = vsel %vm7130, %v6560, %v7768
    %v7770 = vsel %vm7132, %v6567, %v7769
    %v7771 = vsel %vm7134, %v6574, %v7770
    %v7772 = vsel %vm7136, %v6581, %v7771
    %v7773 = vsel %vm7124, %v6595, %v6588
    %v7774 = vsel %vm7126, %v6602, %v7773
    %v7775 = vsel %vm7128, %v6609, %v7774
    %v7776 = vsel %vm7130, %v6616, %v7775
    %v7777 = vsel %vm7132, %v6623, %v7776
    %v7778 = vsel %vm7134, %v6630, %v7777
    %v7779 = vsel %vm7136, %v6637, %v7778
    %v7780 = vsel %vm7124, %v6651, %v6644
    %v7781 = vsel %vm7126, %v6658, %v7780
    %v7782 = vsel %vm7128, %v6665, %v7781
    %v7783 = vsel %vm7130, %v6672, %v7782
    %v7784 = vsel %vm7132, %v6679, %v7783
    %v7785 = vsel %vm7134, %v6686, %v7784
    %v7786 = vsel %vm7136, %v6693, %v7785
    %v7787 = vsel %vm7124, %v6707, %v6700
    %v7788 = vsel %vm7126, %v6714, %v7787
    %v7789 = vsel %vm7128, %v6721, %v7788
    %v7790 = vsel %vm7130, %v6728, %v7789
    %v7791 = vsel %vm7132, %v6735, %v7790
    %v7792 = vsel %vm7134, %v6742, %v7791
    %v7793 = vsel %vm7136, %v6749, %v7792
    %v7794 = vsel %vm7124, %v6763, %v6756
    %v7795 = vsel %vm7126, %v6770, %v7794
    %v7796 = vsel %vm7128, %v6777, %v7795
    %v7797 = vsel %vm7130, %v6784, %v7796
    %v7798 = vsel %vm7132, %v6791, %v7797
    %v7799 = vsel %vm7134, %v6798, %v7798
    %v7800 = vsel %vm7136, %v6805, %v7799
    %v7801 = vsel %vm7124, %v6819, %v6812
    %v7802 = vsel %vm7126, %v6826, %v7801
    %v7803 = vsel %vm7128, %v6833, %v7802
    %v7804 = vsel %vm7130, %v6840, %v7803
    %v7805 = vsel %vm7132, %v6847, %v7804
    %v7806 = vsel %vm7134, %v6854, %v7805
    %v7807 = vsel %vm7136, %v6861, %v7806
    %v7808 = vsel %vm7124, %v6875, %v6868
    %v7809 = vsel %vm7126, %v6882, %v7808
    %v7810 = vsel %vm7128, %v6889, %v7809
    %v7811 = vsel %vm7130, %v6896, %v7810
    %v7812 = vsel %vm7132, %v6903, %v7811
    %v7813 = vsel %vm7134, %v6910, %v7812
    %v7814 = vsel %vm7136, %v6917, %v7813
    %v7815 = vsel %vm7124, %v6931, %v6924
    %v7816 = vsel %vm7126, %v6938, %v7815
    %v7817 = vsel %vm7128, %v6945, %v7816
    %v7818 = vsel %vm7130, %v6952, %v7817
    %v7819 = vsel %vm7132, %v6959, %v7818
    %v7820 = vsel %vm7134, %v6966, %v7819
    %v7821 = vsel %vm7136, %v6973, %v7820
    %v7822 = vsel %vm7124, %v6987, %v6980
    %v7840 = vsel %vm7124, %v6154, %v6147
    %v7841 = vsel %vm7126, %v6161, %v7840
    %v7842 = vsel %vm7128, %v6168, %v7841
    %v7843 = vsel %vm7130, %v6175, %v7842
    %v7844 = vsel %vm7132, %v6182, %v7843
    %v7845 = vsel %vm7134, %v6189, %v7844
    %v7846 = vsel %vm7136, %v6196, %v7845
    %v7847 = vsel %vm7124, %v6210, %v6203
    %v7848 = vsel %vm7126, %v6217, %v7847
    %v7849 = vsel %vm7128, %v6224, %v7848
    %v7850 = vsel %vm7130, %v6231, %v7849
    %v7851 = vsel %vm7132, %v6238, %v7850
    %v7852 = vsel %vm7134, %v6245, %v7851
    %v7853 = vsel %vm7136, %v6252, %v7852
    %v7854 = vsel %vm7124, %v6266, %v6259
    %v7855 = vsel %vm7126, %v6273, %v7854
    %v7856 = vsel %vm7128, %v6280, %v7855
    %v7857 = vsel %vm7130, %v6287, %v7856
    %v7858 = vsel %vm7132, %v6294, %v7857
    %v7859 = vsel %vm7134, %v6301, %v7858
    %v7860 = vsel %vm7136, %v6308, %v7859
    %v7861 = vsel %vm7124, %v6322, %v6315
    %v7862 = vsel %vm7126, %v6329, %v7861
    %v7863 = vsel %vm7128, %v6336, %v7862
    %v7864 = vsel %vm7130, %v6343, %v7863
    %v7865 = vsel %vm7132, %v6350, %v7864
    %v7866 = vsel %vm7134, %v6357, %v7865
    %v7867 = vsel %vm7136, %v6364, %v7866
    %v7868 = vsel %vm7124, %v6378, %v6371
    %v7869 = vsel %vm7126, %v6385, %v7868
    %v7870 = vsel %vm7128, %v6392, %v7869
    %v7871 = vsel %vm7130, %v6399, %v7870
    %v7872 = vsel %vm7132, %v6406, %v7871
    %v7873 = vsel %vm7134, %v6413, %v7872
    %v7874 = vsel %vm7136, %v6420, %v7873
    %v7875 = vsel %vm7124, %v6434, %v6427
    %v7876 = vsel %vm7126, %v6441, %v7875
    %v7877 = vsel %vm7128, %v6448, %v7876
    %v7878 = vsel %vm7130, %v6455, %v7877
    %v7879 = vsel %vm7132, %v6462, %v7878
    %v7880 = vsel %vm7134, %v6469, %v7879
    %v7881 = vsel %vm7136, %v6476, %v7880
    %v7882 = vsel %vm7124, %v6490, %v6483
    %v7883 = vsel %vm7126, %v6497, %v7882
    %v7884 = vsel %vm7128, %v6504, %v7883
    %v7885 = vsel %vm7130, %v6511, %v7884
    %v7886 = vsel %vm7132, %v6518, %v7885
    %v7887 = vsel %vm7134, %v6525, %v7886
    %v7888 = vsel %vm7136, %v6532, %v7887
    %v7889 = vsel %vm7124, %v6546, %v6539
    %v7890 = vsel %vm7126, %v6553, %v7889
    %v7891 = vsel %vm7128, %v6560, %v7890
    %v7892 = vsel %vm7130, %v6567, %v7891
    %v7893 = vsel %vm7132, %v6574, %v7892
    %v7894 = vsel %vm7134, %v6581, %v7893
    %v7895 = vsel %vm7136, %v6588, %v7894
    %v7896 = vsel %vm7124, %v6602, %v6595
    %v7897 = vsel %vm7126, %v6609, %v7896
    %v7898 = vsel %vm7128, %v6616, %v7897
    %v7899 = vsel %vm7130, %v6623, %v7898
    %v7900 = vsel %vm7132, %v6630, %v7899
    %v7901 = vsel %vm7134, %v6637, %v7900
    %v7902 = vsel %vm7136, %v6644, %v7901
    %v7903 = vsel %vm7124, %v6658, %v6651
    %v7904 = vsel %vm7126, %v6665, %v7903
    %v7905 = vsel %vm7128, %v6672, %v7904
    %v7906 = vsel %vm7130, %v6679, %v7905
    %v7907 = vsel %vm7132, %v6686, %v7906
    %v7908 = vsel %vm7134, %v6693, %v7907
    %v7909 = vsel %vm7136, %v6700, %v7908
    %v7910 = vsel %vm7124, %v6714, %v6707
    %v7911 = vsel %vm7126, %v6721, %v7910
    %v7912 = vsel %vm7128, %v6728, %v7911
    %v7913 = vsel %vm7130, %v6735, %v7912
    %v7914 = vsel %vm7132, %v6742, %v7913
    %v7915 = vsel %vm7134, %v6749, %v7914
    %v7916 = vsel %vm7136, %v6756, %v7915
    %v7917 = vsel %vm7124, %v6770, %v6763
    %v7918 = vsel %vm7126, %v6777, %v7917
    %v7919 = vsel %vm7128, %v6784, %v7918
    %v7920 = vsel %vm7130, %v6791, %v7919
    %v7921 = vsel %vm7132, %v6798, %v7920
    %v7922 = vsel %vm7134, %v6805, %v7921
    %v7923 = vsel %vm7136, %v6812, %v7922
    %v7924 = vsel %vm7124, %v6826, %v6819
    %v7925 = vsel %vm7126, %v6833, %v7924
    %v7926 = vsel %vm7128, %v6840, %v7925
    %v7927 = vsel %vm7130, %v6847, %v7926
    %v7928 = vsel %vm7132, %v6854, %v7927
    %v7929 = vsel %vm7134, %v6861, %v7928
    %v7930 = vsel %vm7136, %v6868, %v7929
    %v7931 = vsel %vm7124, %v6882, %v6875
    %v7932 = vsel %vm7126, %v6889, %v7931
    %v7933 = vsel %vm7128, %v6896, %v7932
    %v7934 = vsel %vm7130, %v6903, %v7933
    %v7935 = vsel %vm7132, %v6910, %v7934
    %v7936 = vsel %vm7134, %v6917, %v7935
    %v7937 = vsel %vm7136, %v6924, %v7936
    %v7938 = vsel %vm7124, %v6938, %v6931
    %v7939 = vsel %vm7126, %v6945, %v7938
    %v7940 = vsel %vm7128, %v6952, %v7939
    %v7941 = vsel %vm7130, %v6959, %v7940
    %v7942 = vsel %vm7132, %v6966, %v7941
    %v7943 = vsel %vm7134, %v6973, %v7942
    %v7944 = vsel %vm7136, %v6980, %v7943
    %v7945 = vsel %vm7124, %v6994, %v6987
    %7946 = vrot.lane.b32.xlu0 %v7846, 32
    %v7947 = vpop.permute.xlu0 %7946
    %7948 = vrot.lane.b32.xlu0 %v7853, 32
    %v7949 = vpop.permute.xlu0 %7948
    %7950 = vrot.lane.b32.xlu0 %v7860, 32
    %v7951 = vpop.permute.xlu0 %7950
    %7952 = vrot.lane.b32.xlu0 %v7867, 32
    %v7953 = vpop.permute.xlu0 %7952
    %7954 = vrot.lane.b32.xlu0 %v7874, 32
    %v7955 = vpop.permute.xlu0 %7954
    %7956 = vrot.lane.b32.xlu0 %v7881, 32
    %v7957 = vpop.permute.xlu0 %7956
    %7958 = vrot.lane.b32.xlu0 %v7888, 32
    %v7959 = vpop.permute.xlu0 %7958
    %7960 = vrot.lane.b32.xlu0 %v7895, 32
    %v7961 = vpop.permute.xlu0 %7960
    %7962 = vrot.lane.b32.xlu0 %v7902, 32
    %v7963 = vpop.permute.xlu0 %7962
    %7964 = vrot.lane.b32.xlu0 %v7909, 32
    %v7965 = vpop.permute.xlu0 %7964
    %7966 = vrot.lane.b32.xlu0 %v7916, 32
    %v7967 = vpop.permute.xlu0 %7966
    %7968 = vrot.lane.b32.xlu0 %v7923, 32
    %v7969 = vpop.permute.xlu0 %7968
    %7970 = vrot.lane.b32.xlu0 %v7930, 32
    %v7971 = vpop.permute.xlu0 %7970
    %7972 = vrot.lane.b32.xlu0 %v7937, 32
    %v7973 = vpop.permute.xlu0 %7972
    %7974 = vrot.lane.b32.xlu0 %v7944, 32
    %v7975 = vpop.permute.xlu0 %7974
    %7976 = vrot.lane.b32.xlu0 %v7945, 32
    %v7977 = vpop.permute.xlu0 %7976
    %v7995 = vsel %vm7124, %v6161, %v6154
    %v7996 = vsel %vm7126, %v6168, %v7995
    %v7997 = vsel %vm7128, %v6175, %v7996
    %v7998 = vsel %vm7130, %v6182, %v7997
    %v7999 = vsel %vm7132, %v6189, %v7998
    %v8000 = vsel %vm7134, %v6196, %v7999
    %v8001 = vsel %vm7136, %v6203, %v8000
    %v8002 = vsel %vm7124, %v6217, %v6210
    %v8003 = vsel %vm7126, %v6224, %v8002
    %v8004 = vsel %vm7128, %v6231, %v8003
    %v8005 = vsel %vm7130, %v6238, %v8004
    %v8006 = vsel %vm7132, %v6245, %v8005
    %v8007 = vsel %vm7134, %v6252, %v8006
    %v8008 = vsel %vm7136, %v6259, %v8007
    %v8009 = vsel %vm7124, %v6273, %v6266
    %v8010 = vsel %vm7126, %v6280, %v8009
    %v8011 = vsel %vm7128, %v6287, %v8010
    %v8012 = vsel %vm7130, %v6294, %v8011
    %v8013 = vsel %vm7132, %v6301, %v8012
    %v8014 = vsel %vm7134, %v6308, %v8013
    %v8015 = vsel %vm7136, %v6315, %v8014
    %v8016 = vsel %vm7124, %v6329, %v6322
    %v8017 = vsel %vm7126, %v6336, %v8016
    %v8018 = vsel %vm7128, %v6343, %v8017
    %v8019 = vsel %vm7130, %v6350, %v8018
    %v8020 = vsel %vm7132, %v6357, %v8019
    %v8021 = vsel %vm7134, %v6364, %v8020
    %v8022 = vsel %vm7136, %v6371, %v8021
    %v8023 = vsel %vm7124, %v6385, %v6378
    %v8024 = vsel %vm7126, %v6392, %v8023
    %v8025 = vsel %vm7128, %v6399, %v8024
    %v8026 = vsel %vm7130, %v6406, %v8025
    %v8027 = vsel %vm7132, %v6413, %v8026
    %v8028 = vsel %vm7134, %v6420, %v8027
    %v8029 = vsel %vm7136, %v6427, %v8028
    %v8030 = vsel %vm7124, %v6441, %v6434
    %v8031 = vsel %vm7126, %v6448, %v8030
    %v8032 = vsel %vm7128, %v6455, %v8031
    %v8033 = vsel %vm7130, %v6462, %v8032
    %v8034 = vsel %vm7132, %v6469, %v8033
    %v8035 = vsel %vm7134, %v6476, %v8034
    %v8036 = vsel %vm7136, %v6483, %v8035
    %v8037 = vsel %vm7124, %v6497, %v6490
    %v8038 = vsel %vm7126, %v6504, %v8037
    %v8039 = vsel %vm7128, %v6511, %v8038
    %v8040 = vsel %vm7130, %v6518, %v8039
    %v8041 = vsel %vm7132, %v6525, %v8040
    %v8042 = vsel %vm7134, %v6532, %v8041
    %v8043 = vsel %vm7136, %v6539, %v8042
    %v8044 = vsel %vm7124, %v6553, %v6546
    %v8045 = vsel %vm7126, %v6560, %v8044
    %v8046 = vsel %vm7128, %v6567, %v8045
    %v8047 = vsel %vm7130, %v6574, %v8046
    %v8048 = vsel %vm7132, %v6581, %v8047
    %v8049 = vsel %vm7134, %v6588, %v8048
    %v8050 = vsel %vm7136, %v6595, %v8049
    %v8051 = vsel %vm7124, %v6609, %v6602
    %v8052 = vsel %vm7126, %v6616, %v8051
    %v8053 = vsel %vm7128, %v6623, %v8052
    %v8054 = vsel %vm7130, %v6630, %v8053
    %v8055 = vsel %vm7132, %v6637, %v8054
    %v8056 = vsel %vm7134, %v6644, %v8055
    %v8057 = vsel %vm7136, %v6651, %v8056
    %v8058 = vsel %vm7124, %v6665, %v6658
    %v8059 = vsel %vm7126, %v6672, %v8058
    %v8060 = vsel %vm7128, %v6679, %v8059
    %v8061 = vsel %vm7130, %v6686, %v8060
    %v8062 = vsel %vm7132, %v6693, %v8061
    %v8063 = vsel %vm7134, %v6700, %v8062
    %v8064 = vsel %vm7136, %v6707, %v8063
    %v8065 = vsel %vm7124, %v6721, %v6714
    %v8066 = vsel %vm7126, %v6728, %v8065
    %v8067 = vsel %vm7128, %v6735, %v8066
    %v8068 = vsel %vm7130, %v6742, %v8067
    %v8069 = vsel %vm7132, %v6749, %v8068
    %v8070 = vsel %vm7134, %v6756, %v8069
    %v8071 = vsel %vm7136, %v6763, %v8070
    %v8072 = vsel %vm7124, %v6777, %v6770
    %v8073 = vsel %vm7126, %v6784, %v8072
    %v8074 = vsel %vm7128, %v6791, %v8073
    %v8075 = vsel %vm7130, %v6798, %v8074
    %v8076 = vsel %vm7132, %v6805, %v8075
    %v8077 = vsel %vm7134, %v6812, %v8076
    %v8078 = vsel %vm7136, %v6819, %v8077
    %v8079 = vsel %vm7124, %v6833, %v6826
    %v8080 = vsel %vm7126, %v6840, %v8079
    %v8081 = vsel %vm7128, %v6847, %v8080
    %v8082 = vsel %vm7130, %v6854, %v8081
    %v8083 = vsel %vm7132, %v6861, %v8082
    %v8084 = vsel %vm7134, %v6868, %v8083
    %v8085 = vsel %vm7136, %v6875, %v8084
    %v8086 = vsel %vm7124, %v6889, %v6882
    %v8087 = vsel %vm7126, %v6896, %v8086
    %v8088 = vsel %vm7128, %v6903, %v8087
    %v8089 = vsel %vm7130, %v6910, %v8088
    %v8090 = vsel %vm7132, %v6917, %v8089
    %v8091 = vsel %vm7134, %v6924, %v8090
    %v8092 = vsel %vm7136, %v6931, %v8091
    %v8093 = vsel %vm7124, %v6945, %v6938
    %v8094 = vsel %vm7126, %v6952, %v8093
    %v8095 = vsel %vm7128, %v6959, %v8094
    %v8096 = vsel %vm7130, %v6966, %v8095
    %v8097 = vsel %vm7132, %v6973, %v8096
    %v8098 = vsel %vm7134, %v6980, %v8097
    %v8099 = vsel %vm7136, %v6987, %v8098
    %v8100 = vsel %vm7124, %v7001, %v6994
    %8101 = vrot.lane.b32.xlu0 %v8001, 64
    %v8102 = vpop.permute.xlu0 %8101
    %8103 = vrot.lane.b32.xlu0 %v8008, 64
    %v8104 = vpop.permute.xlu0 %8103
    %8105 = vrot.lane.b32.xlu0 %v8015, 64
    %v8106 = vpop.permute.xlu0 %8105
    %8107 = vrot.lane.b32.xlu0 %v8022, 64
    %v8108 = vpop.permute.xlu0 %8107
    %8109 = vrot.lane.b32.xlu0 %v8029, 64
    %v8110 = vpop.permute.xlu0 %8109
    %8111 = vrot.lane.b32.xlu0 %v8036, 64
    %v8112 = vpop.permute.xlu0 %8111
    %8113 = vrot.lane.b32.xlu0 %v8043, 64
    %v8114 = vpop.permute.xlu0 %8113
    %8115 = vrot.lane.b32.xlu0 %v8050, 64
    %v8116 = vpop.permute.xlu0 %8115
    %8117 = vrot.lane.b32.xlu0 %v8057, 64
    %v8118 = vpop.permute.xlu0 %8117
    %8119 = vrot.lane.b32.xlu0 %v8064, 64
    %v8120 = vpop.permute.xlu0 %8119
    %8121 = vrot.lane.b32.xlu0 %v8071, 64
    %v8122 = vpop.permute.xlu0 %8121
    %8123 = vrot.lane.b32.xlu0 %v8078, 64
    %v8124 = vpop.permute.xlu0 %8123
    %8125 = vrot.lane.b32.xlu0 %v8085, 64
    %v8126 = vpop.permute.xlu0 %8125
    %8127 = vrot.lane.b32.xlu0 %v8092, 64
    %v8128 = vpop.permute.xlu0 %8127
    %8129 = vrot.lane.b32.xlu0 %v8099, 64
    %v8130 = vpop.permute.xlu0 %8129
    %8131 = vrot.lane.b32.xlu0 %v8100, 64
    %v8132 = vpop.permute.xlu0 %8131
    %v8149 = vsel %vm1453, %v7723, %v7947
    %v8150 = vsel %vm1453, %v7730, %v7949
    %v8151 = vsel %vm1453, %v7737, %v7951
    %v8152 = vsel %vm1453, %v7744, %v7953
    %v8153 = vsel %vm1453, %v7751, %v7955
    %v8154 = vsel %vm1453, %v7758, %v7957
    %v8155 = vsel %vm1453, %v7765, %v7959
    %v8156 = vsel %vm1453, %v7772, %v7961
    %v8157 = vsel %vm1453, %v7779, %v7963
    %v8158 = vsel %vm1453, %v7786, %v7965
    %v8159 = vsel %vm1453, %v7793, %v7967
    %v8160 = vsel %vm1453, %v7800, %v7969
    %v8161 = vsel %vm1453, %v7807, %v7971
    %v8162 = vsel %vm1453, %v7814, %v7973
    %v8163 = vsel %vm1453, %v7821, %v7975
    %v8164 = vsel %vm1453, %v7822, %v7977
    %v8165 = vsel %vm1579, %v8149, %v8102
    %v8166 = vsel %vm1579, %v8150, %v8104
    %v8167 = vsel %vm1579, %v8151, %v8106
    %v8168 = vsel %vm1579, %v8152, %v8108
    %v8169 = vsel %vm1579, %v8153, %v8110
    %v8170 = vsel %vm1579, %v8154, %v8112
    %v8171 = vsel %vm1579, %v8155, %v8114
    %v8172 = vsel %vm1579, %v8156, %v8116
    %v8173 = vsel %vm1579, %v8157, %v8118
    %v8174 = vsel %vm1579, %v8158, %v8120
    %v8175 = vsel %vm1579, %v8159, %v8122
    %v8176 = vsel %vm1579, %v8160, %v8124
    %v8177 = vsel %vm1579, %v8161, %v8126
    %v8178 = vsel %vm1579, %v8162, %v8128
    %v8179 = vsel %vm1579, %v8163, %v8130
    %v8180 = vsel %vm1579, %v8164, %v8132
    %vm8197 = vcmask 1041408
    %v8198 = vrot.slane %v8165, 6
    %v8199 = vrot.slane %v8166, 6
    %v8200 = vsel %vm8197, %v8198, %v8199
    %v8201 = vrot.slane %v8167, 6
    %v8202 = vsel %vm8197, %v8199, %v8201
    %v8203 = vrot.slane %v8168, 6
    %v8204 = vsel %vm8197, %v8201, %v8203
    %v8205 = vrot.slane %v8169, 6
    %v8206 = vsel %vm8197, %v8203, %v8205
    %v8207 = vrot.slane %v8170, 6
    %v8208 = vsel %vm8197, %v8205, %v8207
    %v8209 = vrot.slane %v8171, 6
    %v8210 = vsel %vm8197, %v8207, %v8209
    %v8211 = vrot.slane %v8172, 6
    %v8212 = vsel %vm8197, %v8209, %v8211
    %v8213 = vrot.slane %v8173, 6
    %v8214 = vsel %vm8197, %v8211, %v8213
    %v8215 = vrot.slane %v8174, 6
    %v8216 = vsel %vm8197, %v8213, %v8215
    %v8217 = vrot.slane %v8175, 6
    %v8218 = vsel %vm8197, %v8215, %v8217
    %v8219 = vrot.slane %v8176, 6
    %v8220 = vsel %vm8197, %v8217, %v8219
    %v8221 = vrot.slane %v8177, 6
    %v8222 = vsel %vm8197, %v8219, %v8221
    %v8223 = vrot.slane %v8178, 6
    %v8224 = vsel %vm8197, %v8221, %v8223
    %v8225 = vrot.slane %v8179, 6
    %v8226 = vsel %vm8197, %v8223, %v8225
    %v8227 = vrot.slane %v8180, 6
    %v8228 = vsel %vm8197, %v8225, %v8227
    %v8245 = vsel %vm8197, %v7594, %v8198
    %v8246 = vpack.c.bf16 %v7580, %v7579
    %v8247 = vpack.c.bf16 %v7582, %v7581
    %v8248 = vpack.c.bf16 %v7584, %v7583
    %v8249 = vpack.c.bf16 %v7586, %v7585
    %v8250 = vpack.c.bf16 %v7588, %v7587
    %v8251 = vpack.c.bf16 %v7590, %v7589
    %v8252 = vpack.c.bf16 %v7592, %v7591
    %v8253 = vpack.c.bf16 %v8245, %v7593
    %v8254 = vpack.c.bf16 %v8202, %v8200
    %v8255 = vpack.c.bf16 %v8206, %v8204
    %v8256 = vpack.c.bf16 %v8210, %v8208
    %v8257 = vpack.c.bf16 %v8214, %v8212
    %v8258 = vpack.c.bf16 %v8218, %v8216
    %v8259 = vpack.c.bf16 %v8222, %v8220
    %v8260 = vpack.c.bf16 %v8226, %v8224
    %v8261 = vpack.c.bf16 %v8228, %v8228
    %v8262 = vld [vmem:[%s1 + $0x28] sm:$0xf]
    %v8263 = vld [vmem:[%s1 + $0x2c] sm:$0xf]
    %v8264 = vld [vmem:[%s1 + $0x30] sm:$0xf]
    %v8265 = vld [vmem:[%s1 + $0x34] sm:$0xf]
    %v8266 = vld [vmem:[%s1 + $0x38] sm:$0xf]
    %v8267 = vld [vmem:[%s1 + $0x3c] sm:$0xf]
    %v8268 = vld [vmem:[%s1 + $0x40] sm:$0xf]
    %v8269 = vld [vmem:[%s1 + $0x44] sm:$0xf]
    %v8270 = vld [vmem:[%s1 + $0x48] sm:$0xf]
    %v8271 = vld [vmem:[%s1 + $0x4c] sm:$0xf]
    %v8272 = vld [vmem:[%s1 + $0x50] sm:$0xf]
    %v8273 = vld [vmem:[%s1 + $0x54] sm:$0xf]
    %v8286 = vunpack.c.l.b16 %v8262
    %v8287 = vunpack.c.l.b16 %v8263
    %v8288 = vunpack.c.l.b16 %v8264
    %v8289 = vunpack.c.l.b16 %v8265
    %v8290 = vunpack.c.l.b16 %v8266
    %v8291 = vunpack.c.l.b16 %v8267
    %v8292 = vunpack.c.l.b16 %v8268
    %v8293 = vunpack.c.l.b16 %v8269
    %v8294 = vunpack.c.l.b16 %v8270
    %v8295 = vunpack.c.l.b16 %v8271
    %v8296 = vunpack.c.l.b16 %v8272
    %v8297 = vunpack.c.l.b16 %v8273
    %v8298 = vpack.c.b16 %v8287, %v8286
    %v8299 = vpack.c.b16 %v8289, %v8288
    %v8300 = vpack.c.b16 %v8291, %v8290
    %v8301 = vpack.c.b16 %v8293, %v8292
    %v8302 = vpack.c.b16 %v8295, %v8294
    %v8303 = vpack.c.b16 %v8297, %v8296
    %vm8310 = vcmask 785408
    %v8312 = vsel %vm8310, %v8246, 0
    %v8315 = vsel %vm8310, %v8247, 0
    %v8318 = vsel %vm8310, %v8248, 0
    %v8321 = vsel %vm8310, %v8249, 0
    %v8324 = vsel %vm8310, %v8250, 0
    %v8327 = vsel %vm8310, %v8251, 0
    %v8330 = vsel %vm8310, %v8252, 0
    %v8333 = vsel %vm8310, %v8253, 0
    %v8336 = vsel %vm8310, %v8254, 0
    %v8339 = vsel %vm8310, %v8255, 0
    %v8342 = vsel %vm8310, %v8256, 0
    %v8345 = vsel %vm8310, %v8257, 0
    %v8348 = vsel %vm8310, %v8258, 0
    %v8351 = vsel %vm8310, %v8259, 0
    %v8354 = vsel %vm8310, %v8260, 0
    %v8357 = vsel %vm8310, %v8261, 0
    %8359 = vmatpush.bf16.msra.mxu0 0
    %8360 = vmatpush.bf16.msra.mxu0 0
    %8361 = vmatpush.bf16.msra.mxu0 %v8303
    %8362 = vmatpush.bf16.msra.mxu0 %v8302
    %8363 = vmatpush.bf16.msra.mxu0 %v8301
    %8364 = vmatpush.bf16.msra.mxu0 %v8300
    %8365 = vmatpush.bf16.msra.mxu0 %v8299
    %8366 = vmatpush.bf16.msra.mxu0 %v8298
    %8367 = vmatmul.bf16.gmra.mxu0 %v8312
    %v8368 = vpop.f32.mrf.mxu0
    %v8369 = vadd.f32 0.0, %v8368
    %v8370 = vpop.f32.mrf.mxu0
    %v8371 = vadd.f32 0.0, %v8370
    %8372 = vmatmul.bf16.gmra.mxu0 %v8315
    %v8373 = vpop.f32.mrf.mxu0
    %v8374 = vadd.f32 0.0, %v8373
    %v8375 = vpop.f32.mrf.mxu0
    %v8376 = vadd.f32 0.0, %v8375
    %8377 = vmatmul.bf16.gmra.mxu0 %v8318
    %v8378 = vpop.f32.mrf.mxu0
    %v8379 = vadd.f32 0.0, %v8378
    %v8380 = vpop.f32.mrf.mxu0
    %v8381 = vadd.f32 0.0, %v8380
    %8382 = vmatmul.bf16.gmra.mxu0 %v8321
    %v8383 = vpop.f32.mrf.mxu0
    %v8384 = vadd.f32 0.0, %v8383
    %v8385 = vpop.f32.mrf.mxu0
    %v8386 = vadd.f32 0.0, %v8385
    %8387 = vmatmul.bf16.gmra.mxu0 %v8324
    %v8388 = vpop.f32.mrf.mxu0
    %v8389 = vadd.f32 0.0, %v8388
    %v8390 = vpop.f32.mrf.mxu0
    %v8391 = vadd.f32 0.0, %v8390
    %8392 = vmatmul.bf16.gmra.mxu0 %v8327
    %v8393 = vpop.f32.mrf.mxu0
    %v8394 = vadd.f32 0.0, %v8393
    %v8395 = vpop.f32.mrf.mxu0
    %v8396 = vadd.f32 0.0, %v8395
    %8397 = vmatmul.bf16.gmra.mxu0 %v8330
    %v8398 = vpop.f32.mrf.mxu0
    %v8399 = vadd.f32 0.0, %v8398
    %v8400 = vpop.f32.mrf.mxu0
    %v8401 = vadd.f32 0.0, %v8400
    %8402 = vmatmul.bf16.gmra.mxu0 %v8333
    %v8403 = vpop.f32.mrf.mxu0
    %v8404 = vadd.f32 0.0, %v8403
    %v8405 = vpop.f32.mrf.mxu0
    %v8406 = vadd.f32 0.0, %v8405
    %8407 = vmatmul.bf16.gmra.mxu0 %v8336
    %v8408 = vpop.f32.mrf.mxu0
    %v8409 = vadd.f32 0.0, %v8408
    %v8410 = vpop.f32.mrf.mxu0
    %v8411 = vadd.f32 0.0, %v8410
    %8412 = vmatmul.bf16.gmra.mxu0 %v8339
    %v8413 = vpop.f32.mrf.mxu0
    %v8414 = vadd.f32 0.0, %v8413
    %v8415 = vpop.f32.mrf.mxu0
    %v8416 = vadd.f32 0.0, %v8415
    %8417 = vmatmul.bf16.gmra.mxu0 %v8342
    %v8418 = vpop.f32.mrf.mxu0
    %v8419 = vadd.f32 0.0, %v8418
    %v8420 = vpop.f32.mrf.mxu0
    %v8421 = vadd.f32 0.0, %v8420
    %8422 = vmatmul.bf16.gmra.mxu0 %v8345
    %v8423 = vpop.f32.mrf.mxu0
    %v8424 = vadd.f32 0.0, %v8423
    %v8425 = vpop.f32.mrf.mxu0
    %v8426 = vadd.f32 0.0, %v8425
    %8427 = vmatmul.bf16.gmra.mxu0 %v8348
    %v8428 = vpop.f32.mrf.mxu0
    %v8429 = vadd.f32 0.0, %v8428
    %v8430 = vpop.f32.mrf.mxu0
    %v8431 = vadd.f32 0.0, %v8430
    %8432 = vmatmul.bf16.gmra.mxu0 %v8351
    %v8433 = vpop.f32.mrf.mxu0
    %v8434 = vadd.f32 0.0, %v8433
    %v8435 = vpop.f32.mrf.mxu0
    %v8436 = vadd.f32 0.0, %v8435
    %8437 = vmatmul.bf16.gmra.mxu0 %v8354
    %v8438 = vpop.f32.mrf.mxu0
    %v8439 = vadd.f32 0.0, %v8438
    %v8440 = vpop.f32.mrf.mxu0
    %v8441 = vadd.f32 0.0, %v8440
    %8442 = vmatmul.bf16.gmra.mxu0 %v8357
    %v8443 = vpop.f32.mrf.mxu0
    %v8444 = vadd.f32 0.0, %v8443
    %v8445 = vpop.f32.mrf.mxu0
    %8446 = vdwg.mxu0
    %v8447 = vsel %vm1453, %v8369, 0.0
    %v8448 = vsel %vm1453, %v8371, 0.0
    %v8449 = vadd.f32 %v8447, %v8448
    %v8450 = vsel %vm1453, %v8374, 0.0
    %v8451 = vadd.f32 %v8449, %v8450
    %v8452 = vsel %vm1453, %v8376, 0.0
    %v8453 = vadd.f32 %v8451, %v8452
    %v8454 = vsel %vm1453, %v8379, 0.0
    %v8455 = vadd.f32 %v8453, %v8454
    %v8456 = vsel %vm1453, %v8381, 0.0
    %v8457 = vadd.f32 %v8455, %v8456
    %v8458 = vsel %vm1453, %v8384, 0.0
    %v8459 = vadd.f32 %v8457, %v8458
    %v8460 = vsel %vm1453, %v8386, 0.0
    %v8461 = vadd.f32 %v8459, %v8460
    %v8462 = vsel %vm1453, %v8389, 0.0
    %v8463 = vadd.f32 %v8461, %v8462
    %v8464 = vsel %vm1453, %v8391, 0.0
    %v8465 = vadd.f32 %v8463, %v8464
    %v8466 = vsel %vm1453, %v8394, 0.0
    %v8467 = vadd.f32 %v8465, %v8466
    %v8468 = vsel %vm1453, %v8396, 0.0
    %v8469 = vadd.f32 %v8467, %v8468
    %v8470 = vsel %vm1453, %v8399, 0.0
    %v8471 = vadd.f32 %v8469, %v8470
    %v8472 = vsel %vm1453, %v8401, 0.0
    %v8473 = vadd.f32 %v8471, %v8472
    %v8474 = vsel %vm1453, %v8404, 0.0
    %v8475 = vadd.f32 %v8473, %v8474
    %v8476 = vsel %vm1453, %v8406, 0.0
    %v8477 = vadd.f32 %v8475, %v8476
    %v8478 = vsel %vm1453, %v8409, 0.0
    %v8479 = vadd.f32 %v8477, %v8478
    %v8480 = vsel %vm1453, %v8411, 0.0
    %v8481 = vadd.f32 %v8479, %v8480
    %v8482 = vsel %vm1453, %v8414, 0.0
    %v8483 = vadd.f32 %v8481, %v8482
    %v8484 = vsel %vm1453, %v8416, 0.0
    %v8485 = vadd.f32 %v8483, %v8484
    %v8486 = vsel %vm1453, %v8419, 0.0
    %v8487 = vadd.f32 %v8485, %v8486
    %v8488 = vsel %vm1453, %v8421, 0.0
    %v8489 = vadd.f32 %v8487, %v8488
    %v8490 = vsel %vm1453, %v8424, 0.0
    %v8491 = vadd.f32 %v8489, %v8490
    %v8492 = vsel %vm1453, %v8426, 0.0
    %v8493 = vadd.f32 %v8491, %v8492
    %v8494 = vsel %vm1453, %v8429, 0.0
    %v8495 = vadd.f32 %v8493, %v8494
    %v8496 = vsel %vm1453, %v8431, 0.0
    %v8497 = vadd.f32 %v8495, %v8496
    %v8498 = vsel %vm1453, %v8434, 0.0
    %v8499 = vadd.f32 %v8497, %v8498
    %v8500 = vsel %vm1453, %v8436, 0.0
    %v8501 = vadd.f32 %v8499, %v8500
    %v8502 = vsel %vm1453, %v8439, 0.0
    %v8503 = vadd.f32 %v8501, %v8502
    %v8504 = vsel %vm1453, %v8441, 0.0
    %v8505 = vadd.f32 %v8503, %v8504
    %v8506 = vsel %vm5079, %v8444, 0.0
    %v8507 = vadd.f32 %v8505, %v8506
    %v8508 = vrot.slane %v8507, 4
    %v8509 = vadd.f32 %v8507, %v8508
    %v8510 = vrot.slane %v8509, 2
    %v8511 = vadd.f32 %v8509, %v8510
    %v8512 = vrot.slane %v8511, 1
    %v8513 = vadd.f32 %v8511, %v8512
    %v8514 = vmul.f32 %v8513, 0.0040983604
    %v8515 = vmul.f32 %v8369, %v8369
    %v8516 = vmul.f32 %v8371, %v8371
    %v8517 = vmul.f32 %v8374, %v8374
    %v8518 = vmul.f32 %v8376, %v8376
    %v8519 = vmul.f32 %v8379, %v8379
    %v8520 = vmul.f32 %v8381, %v8381
    %v8521 = vmul.f32 %v8384, %v8384
    %v8522 = vmul.f32 %v8386, %v8386
    %v8523 = vmul.f32 %v8389, %v8389
    %v8524 = vmul.f32 %v8391, %v8391
    %v8525 = vmul.f32 %v8394, %v8394
    %v8526 = vmul.f32 %v8396, %v8396
    %v8527 = vmul.f32 %v8399, %v8399
    %v8528 = vmul.f32 %v8401, %v8401
    %v8529 = vmul.f32 %v8404, %v8404
    %v8530 = vmul.f32 %v8406, %v8406
    %v8531 = vmul.f32 %v8409, %v8409
    %v8532 = vmul.f32 %v8411, %v8411
    %v8533 = vmul.f32 %v8414, %v8414
    %v8534 = vmul.f32 %v8416, %v8416
    %v8535 = vmul.f32 %v8419, %v8419
    %v8536 = vmul.f32 %v8421, %v8421
    %v8537 = vmul.f32 %v8424, %v8424
    %v8538 = vmul.f32 %v8426, %v8426
    %v8539 = vmul.f32 %v8429, %v8429
    %v8540 = vmul.f32 %v8431, %v8431
    %v8541 = vmul.f32 %v8434, %v8434
    %v8542 = vmul.f32 %v8436, %v8436
    %v8543 = vmul.f32 %v8439, %v8439
    %v8544 = vmul.f32 %v8441, %v8441
    %v8545 = vmul.f32 %v8444, %v8444
    %v8546 = vsel %vm1453, %v8515, 0.0
    %v8547 = vsel %vm1453, %v8516, 0.0
    %v8548 = vadd.f32 %v8546, %v8547
    %v8549 = vsel %vm1453, %v8517, 0.0
    %v8550 = vadd.f32 %v8548, %v8549
    %v8551 = vsel %vm1453, %v8518, 0.0
    %v8552 = vadd.f32 %v8550, %v8551
    %v8553 = vsel %vm1453, %v8519, 0.0
    %v8554 = vadd.f32 %v8552, %v8553
    %v8555 = vsel %vm1453, %v8520, 0.0
    %v8556 = vadd.f32 %v8554, %v8555
    %v8557 = vsel %vm1453, %v8521, 0.0
    %v8558 = vadd.f32 %v8556, %v8557
    %v8559 = vsel %vm1453, %v8522, 0.0
    %v8560 = vadd.f32 %v8558, %v8559
    %v8561 = vsel %vm1453, %v8523, 0.0
    %v8562 = vadd.f32 %v8560, %v8561
    %v8563 = vsel %vm1453, %v8524, 0.0
    %v8564 = vadd.f32 %v8562, %v8563
    %v8565 = vsel %vm1453, %v8525, 0.0
    %v8566 = vadd.f32 %v8564, %v8565
    %v8567 = vsel %vm1453, %v8526, 0.0
    %v8568 = vadd.f32 %v8566, %v8567
    %v8569 = vsel %vm1453, %v8527, 0.0
    %v8570 = vadd.f32 %v8568, %v8569
    %v8571 = vsel %vm1453, %v8528, 0.0
    %v8572 = vadd.f32 %v8570, %v8571
    %v8573 = vsel %vm1453, %v8529, 0.0
    %v8574 = vadd.f32 %v8572, %v8573
    %v8575 = vsel %vm1453, %v8530, 0.0
    %v8576 = vadd.f32 %v8574, %v8575
    %v8577 = vsel %vm1453, %v8531, 0.0
    %v8578 = vadd.f32 %v8576, %v8577
    %v8579 = vsel %vm1453, %v8532, 0.0
    %v8580 = vadd.f32 %v8578, %v8579
    %v8581 = vsel %vm1453, %v8533, 0.0
    %v8582 = vadd.f32 %v8580, %v8581
    %v8583 = vsel %vm1453, %v8534, 0.0
    %v8584 = vadd.f32 %v8582, %v8583
    %v8585 = vsel %vm1453, %v8535, 0.0
    %v8586 = vadd.f32 %v8584, %v8585
    %v8587 = vsel %vm1453, %v8536, 0.0
    %v8588 = vadd.f32 %v8586, %v8587
    %v8589 = vsel %vm1453, %v8537, 0.0
    %v8590 = vadd.f32 %v8588, %v8589
    %v8591 = vsel %vm1453, %v8538, 0.0
    %v8592 = vadd.f32 %v8590, %v8591
    %v8593 = vsel %vm1453, %v8539, 0.0
    %v8594 = vadd.f32 %v8592, %v8593
    %v8595 = vsel %vm1453, %v8540, 0.0
    %v8596 = vadd.f32 %v8594, %v8595
    %v8597 = vsel %vm1453, %v8541, 0.0
    %v8598 = vadd.f32 %v8596, %v8597
    %v8599 = vsel %vm1453, %v8542, 0.0
    %v8600 = vadd.f32 %v8598, %v8599
    %v8601 = vsel %vm1453, %v8543, 0.0
    %v8602 = vadd.f32 %v8600, %v8601
    %v8603 = vsel %vm1453, %v8544, 0.0
    %v8604 = vadd.f32 %v8602, %v8603
    %v8605 = vsel %vm5079, %v8545, 0.0
    %v8606 = vadd.f32 %v8604, %v8605
    %v8607 = vrot.slane %v8606, 4
    %v8608 = vadd.f32 %v8606, %v8607
    %v8609 = vrot.slane %v8608, 2
    %v8610 = vadd.f32 %v8608, %v8609
    %v8611 = vrot.slane %v8610, 1
    %v8612 = vadd.f32 %v8610, %v8611
    %v8613 = vmul.f32 %v8612, 0.0040983604
    %v8614 = vmul.f32 %v8514, %v8514
    %v8615 = vsub.f32 %v8613, %v8614
    %v8616 = vld [vmem:[%s2 + $0x2] sm:$0x1]
    %v8617 = vld [vmem:[%s2 + $0x3] sm:$0x1]
    %v8618 = vadd.f32 %v8615, 1e-05
    %v8619 = vrsqrt.pop %v8618
    %v8620 = vmul.f32 %v8619, %v8618
    %v8621 = vmul.f32 %v8620, %v8619
    %v8622 = vmul.f32 0.5, %v8621
    %v8623 = vsub.f32 1.5, %v8622
    %v8624 = vmul.f32 %v8619, %v8623
    %vm8625 = vweird.f32 %v8618
    %vm8626 = vweird.f32 %v8619
    %vm8627 = vmor %vm8625, %vm8626
    %v8628 = vsel %vm8627, %v8619, %v8624
    %v8629 = vmul.f32 %v8616, %v8628
    %v8630 = vmul.f32 %v8514, %v8629
    %v8631 = vsub.f32 %v8617, %v8630
    %v8632 = vperm.slane %v8629, 0
    %v8633 = vmul.f32 %v8369, %v8632
    %v8634 = vmul.f32 %v8371, %v8632
    %v8635 = vmul.f32 %v8374, %v8632
    %v8636 = vmul.f32 %v8376, %v8632
    %v8637 = vmul.f32 %v8379, %v8632
    %v8638 = vmul.f32 %v8381, %v8632
    %v8639 = vmul.f32 %v8384, %v8632
    %v8640 = vmul.f32 %v8386, %v8632
    %v8641 = vmul.f32 %v8389, %v8632
    %v8642 = vmul.f32 %v8391, %v8632
    %v8643 = vmul.f32 %v8394, %v8632
    %v8644 = vmul.f32 %v8396, %v8632
    %v8645 = vmul.f32 %v8399, %v8632
    %v8646 = vmul.f32 %v8401, %v8632
    %v8647 = vmul.f32 %v8404, %v8632
    %v8648 = vmul.f32 %v8406, %v8632
    %v8649 = vmul.f32 %v8409, %v8632
    %v8650 = vmul.f32 %v8411, %v8632
    %v8651 = vmul.f32 %v8414, %v8632
    %v8652 = vmul.f32 %v8416, %v8632
    %v8653 = vmul.f32 %v8419, %v8632
    %v8654 = vmul.f32 %v8421, %v8632
    %v8655 = vmul.f32 %v8424, %v8632
    %v8656 = vmul.f32 %v8426, %v8632
    %v8657 = vmul.f32 %v8429, %v8632
    %v8658 = vmul.f32 %v8431, %v8632
    %v8659 = vmul.f32 %v8434, %v8632
    %v8660 = vmul.f32 %v8436, %v8632
    %v8661 = vmul.f32 %v8439, %v8632
    %v8662 = vmul.f32 %v8441, %v8632
    %v8663 = vmul.f32 %v8444, %v8632
    %v8664 = vperm.slane %v8631, 0
    %v8665 = vadd.f32 %v8633, %v8664
    %v8666 = vadd.f32 %v8634, %v8664
    %v8667 = vadd.f32 %v8635, %v8664
    %v8668 = vadd.f32 %v8636, %v8664
    %v8669 = vadd.f32 %v8637, %v8664
    %v8670 = vadd.f32 %v8638, %v8664
    %v8671 = vadd.f32 %v8639, %v8664
    %v8672 = vadd.f32 %v8640, %v8664
    %v8673 = vadd.f32 %v8641, %v8664
    %v8674 = vadd.f32 %v8642, %v8664
    %v8675 = vadd.f32 %v8643, %v8664
    %v8676 = vadd.f32 %v8644, %v8664
    %v8677 = vadd.f32 %v8645, %v8664
    %v8678 = vadd.f32 %v8646, %v8664
    %v8679 = vadd.f32 %v8647, %v8664
    %v8680 = vadd.f32 %v8648, %v8664
    %v8681 = vadd.f32 %v8649, %v8664
    %v8682 = vadd.f32 %v8650, %v8664
    %v8683 = vadd.f32 %v8651, %v8664
    %v8684 = vadd.f32 %v8652, %v8664
    %v8685 = vadd.f32 %v8653, %v8664
    %v8686 = vadd.f32 %v8654, %v8664
    %v8687 = vadd.f32 %v8655, %v8664
    %v8688 = vadd.f32 %v8656, %v8664
    %v8689 = vadd.f32 %v8657, %v8664
    %v8690 = vadd.f32 %v8658, %v8664
    %v8691 = vadd.f32 %v8659, %v8664
    %v8692 = vadd.f32 %v8660, %v8664
    %v8693 = vadd.f32 %v8661, %v8664
    %v8694 = vadd.f32 %v8662, %v8664
    %v8695 = vadd.f32 %v8663, %v8664
    %v8696 = vmax.f32 %v8665, 0.0
    %v8697 = vmax.f32 %v8666, 0.0
    %v8698 = vmax.f32 %v8667, 0.0
    %v8699 = vmax.f32 %v8668, 0.0
    %v8700 = vmax.f32 %v8669, 0.0
    %v8701 = vmax.f32 %v8670, 0.0
    %v8702 = vmax.f32 %v8671, 0.0
    %v8703 = vmax.f32 %v8672, 0.0
    %v8704 = vmax.f32 %v8673, 0.0
    %v8705 = vmax.f32 %v8674, 0.0
    %v8706 = vmax.f32 %v8675, 0.0
    %v8707 = vmax.f32 %v8676, 0.0
    %v8708 = vmax.f32 %v8677, 0.0
    %v8709 = vmax.f32 %v8678, 0.0
    %v8710 = vmax.f32 %v8679, 0.0
    %v8711 = vmax.f32 %v8680, 0.0
    %v8712 = vmax.f32 %v8681, 0.0
    %v8713 = vmax.f32 %v8682, 0.0
    %v8714 = vmax.f32 %v8683, 0.0
    %v8715 = vmax.f32 %v8684, 0.0
    %v8716 = vmax.f32 %v8685, 0.0
    %v8717 = vmax.f32 %v8686, 0.0
    %v8718 = vmax.f32 %v8687, 0.0
    %v8719 = vmax.f32 %v8688, 0.0
    %v8720 = vmax.f32 %v8689, 0.0
    %v8721 = vmax.f32 %v8690, 0.0
    %v8722 = vmax.f32 %v8691, 0.0
    %v8723 = vmax.f32 %v8692, 0.0
    %v8724 = vmax.f32 %v8693, 0.0
    %v8725 = vmax.f32 %v8694, 0.0
    %v8726 = vmax.f32 %v8695, 0.0
    %v8742 = vrot.slane %v8696, 4
    %v8743 = vrot.slane %v8697, 4
    %v8744 = vrot.slane %v8698, 4
    %v8745 = vrot.slane %v8699, 4
    %v8746 = vrot.slane %v8700, 4
    %v8747 = vrot.slane %v8701, 4
    %v8748 = vrot.slane %v8702, 4
    %v8749 = vrot.slane %v8703, 4
    %v8750 = vrot.slane %v8704, 4
    %v8751 = vrot.slane %v8705, 4
    %v8752 = vrot.slane %v8706, 4
    %v8753 = vrot.slane %v8707, 4
    %v8754 = vrot.slane %v8708, 4
    %v8755 = vrot.slane %v8709, 4
    %v8756 = vrot.slane %v8710, 4
    %v8772 = vsel %vm5079, %v8696, -inf
    %v8773 = vrot.slane %v8772, 4
    %v8774 = vmax.f32 %v8772, %v8773
    %v8775 = vrot.slane %v8774, 2
    %v8776 = vmax.f32 %v8774, %v8775
    %v8777 = vrot.slane %v8776, 1
    %v8778 = vmax.f32 %v8776, %v8777
    %v8779 = vsel %vm5079, %v8742, -inf
    %v8780 = vrot.slane %v8779, 4
    %v8781 = vmax.f32 %v8779, %v8780
    %v8782 = vrot.slane %v8781, 2
    %v8783 = vmax.f32 %v8781, %v8782
    %v8784 = vrot.slane %v8783, 1
    %v8785 = vmax.f32 %v8783, %v8784
    %v8786 = vsel %vm5079, %v8697, -inf
    %v8787 = vrot.slane %v8786, 4
    %v8788 = vmax.f32 %v8786, %v8787
    %v8789 = vrot.slane %v8788, 2
    %v8790 = vmax.f32 %v8788, %v8789
    %v8791 = vrot.slane %v8790, 1
    %v8792 = vmax.f32 %v8790, %v8791
    %v8793 = vsel %vm5079, %v8743, -inf
    %v8794 = vrot.slane %v8793, 4
    %v8795 = vmax.f32 %v8793, %v8794
    %v8796 = vrot.slane %v8795, 2
    %v8797 = vmax.f32 %v8795, %v8796
    %v8798 = vrot.slane %v8797, 1
    %v8799 = vmax.f32 %v8797, %v8798
    %v8800 = vsel %vm5079, %v8698, -inf
    %v8801 = vrot.slane %v8800, 4
    %v8802 = vmax.f32 %v8800, %v8801
    %v8803 = vrot.slane %v8802, 2
    %v8804 = vmax.f32 %v8802, %v8803
    %v8805 = vrot.slane %v8804, 1
    %v8806 = vmax.f32 %v8804, %v8805
    %v8807 = vsel %vm5079, %v8744, -inf
    %v8808 = vrot.slane %v8807, 4
    %v8809 = vmax.f32 %v8807, %v8808
    %v8810 = vrot.slane %v8809, 2
    %v8811 = vmax.f32 %v8809, %v8810
    %v8812 = vrot.slane %v8811, 1
    %v8813 = vmax.f32 %v8811, %v8812
    %v8814 = vsel %vm5079, %v8699, -inf
    %v8815 = vrot.slane %v8814, 4
    %v8816 = vmax.f32 %v8814, %v8815
    %v8817 = vrot.slane %v8816, 2
    %v8818 = vmax.f32 %v8816, %v8817
    %v8819 = vrot.slane %v8818, 1
    %v8820 = vmax.f32 %v8818, %v8819
    %v8821 = vsel %vm5079, %v8745, -inf
    %v8822 = vrot.slane %v8821, 4
    %v8823 = vmax.f32 %v8821, %v8822
    %v8824 = vrot.slane %v8823, 2
    %v8825 = vmax.f32 %v8823, %v8824
    %v8826 = vrot.slane %v8825, 1
    %v8827 = vmax.f32 %v8825, %v8826
    %v8828 = vsel %vm5079, %v8700, -inf
    %v8829 = vrot.slane %v8828, 4
    %v8830 = vmax.f32 %v8828, %v8829
    %v8831 = vrot.slane %v8830, 2
    %v8832 = vmax.f32 %v8830, %v8831
    %v8833 = vrot.slane %v8832, 1
    %v8834 = vmax.f32 %v8832, %v8833
    %v8835 = vsel %vm5079, %v8746, -inf
    %v8836 = vrot.slane %v8835, 4
    %v8837 = vmax.f32 %v8835, %v8836
    %v8838 = vrot.slane %v8837, 2
    %v8839 = vmax.f32 %v8837, %v8838
    %v8840 = vrot.slane %v8839, 1
    %v8841 = vmax.f32 %v8839, %v8840
    %v8842 = vsel %vm5079, %v8701, -inf
    %v8843 = vrot.slane %v8842, 4
    %v8844 = vmax.f32 %v8842, %v8843
    %v8845 = vrot.slane %v8844, 2
    %v8846 = vmax.f32 %v8844, %v8845
    %v8847 = vrot.slane %v8846, 1
    %v8848 = vmax.f32 %v8846, %v8847
    %v8849 = vsel %vm5079, %v8747, -inf
    %v8850 = vrot.slane %v8849, 4
    %v8851 = vmax.f32 %v8849, %v8850
    %v8852 = vrot.slane %v8851, 2
    %v8853 = vmax.f32 %v8851, %v8852
    %v8854 = vrot.slane %v8853, 1
    %v8855 = vmax.f32 %v8853, %v8854
    %v8856 = vsel %vm5079, %v8702, -inf
    %v8857 = vrot.slane %v8856, 4
    %v8858 = vmax.f32 %v8856, %v8857
    %v8859 = vrot.slane %v8858, 2
    %v8860 = vmax.f32 %v8858, %v8859
    %v8861 = vrot.slane %v8860, 1
    %v8862 = vmax.f32 %v8860, %v8861
    %v8863 = vsel %vm5079, %v8748, -inf
    %v8864 = vrot.slane %v8863, 4
    %v8865 = vmax.f32 %v8863, %v8864
    %v8866 = vrot.slane %v8865, 2
    %v8867 = vmax.f32 %v8865, %v8866
    %v8868 = vrot.slane %v8867, 1
    %v8869 = vmax.f32 %v8867, %v8868
    %v8870 = vsel %vm5079, %v8703, -inf
    %v8871 = vrot.slane %v8870, 4
    %v8872 = vmax.f32 %v8870, %v8871
    %v8873 = vrot.slane %v8872, 2
    %v8874 = vmax.f32 %v8872, %v8873
    %v8875 = vrot.slane %v8874, 1
    %v8876 = vmax.f32 %v8874, %v8875
    %v8877 = vsel %vm5079, %v8749, -inf
    %v8878 = vrot.slane %v8877, 4
    %v8879 = vmax.f32 %v8877, %v8878
    %v8880 = vrot.slane %v8879, 2
    %v8881 = vmax.f32 %v8879, %v8880
    %v8882 = vrot.slane %v8881, 1
    %v8883 = vmax.f32 %v8881, %v8882
    %v8884 = vsel %vm5079, %v8704, -inf
    %v8885 = vrot.slane %v8884, 4
    %v8886 = vmax.f32 %v8884, %v8885
    %v8887 = vrot.slane %v8886, 2
    %v8888 = vmax.f32 %v8886, %v8887
    %v8889 = vrot.slane %v8888, 1
    %v8890 = vmax.f32 %v8888, %v8889
    %v8891 = vsel %vm5079, %v8750, -inf
    %v8892 = vrot.slane %v8891, 4
    %v8893 = vmax.f32 %v8891, %v8892
    %v8894 = vrot.slane %v8893, 2
    %v8895 = vmax.f32 %v8893, %v8894
    %v8896 = vrot.slane %v8895, 1
    %v8897 = vmax.f32 %v8895, %v8896
    %v8898 = vsel %vm5079, %v8705, -inf
    %v8899 = vrot.slane %v8898, 4
    %v8900 = vmax.f32 %v8898, %v8899
    %v8901 = vrot.slane %v8900, 2
    %v8902 = vmax.f32 %v8900, %v8901
    %v8903 = vrot.slane %v8902, 1
    %v8904 = vmax.f32 %v8902, %v8903
    %v8905 = vsel %vm5079, %v8751, -inf
    %v8906 = vrot.slane %v8905, 4
    %v8907 = vmax.f32 %v8905, %v8906
    %v8908 = vrot.slane %v8907, 2
    %v8909 = vmax.f32 %v8907, %v8908
    %v8910 = vrot.slane %v8909, 1
    %v8911 = vmax.f32 %v8909, %v8910
    %v8912 = vsel %vm5079, %v8706, -inf
    %v8913 = vrot.slane %v8912, 4
    %v8914 = vmax.f32 %v8912, %v8913
    %v8915 = vrot.slane %v8914, 2
    %v8916 = vmax.f32 %v8914, %v8915
    %v8917 = vrot.slane %v8916, 1
    %v8918 = vmax.f32 %v8916, %v8917
    %v8919 = vsel %vm5079, %v8752, -inf
    %v8920 = vrot.slane %v8919, 4
    %v8921 = vmax.f32 %v8919, %v8920
    %v8922 = vrot.slane %v8921, 2
    %v8923 = vmax.f32 %v8921, %v8922
    %v8924 = vrot.slane %v8923, 1
    %v8925 = vmax.f32 %v8923, %v8924
    %v8926 = vsel %vm5079, %v8707, -inf
    %v8927 = vrot.slane %v8926, 4
    %v8928 = vmax.f32 %v8926, %v8927
    %v8929 = vrot.slane %v8928, 2
    %v8930 = vmax.f32 %v8928, %v8929
    %v8931 = vrot.slane %v8930, 1
    %v8932 = vmax.f32 %v8930, %v8931
    %v8933 = vsel %vm5079, %v8753, -inf
    %v8934 = vrot.slane %v8933, 4
    %v8935 = vmax.f32 %v8933, %v8934
    %v8936 = vrot.slane %v8935, 2
    %v8937 = vmax.f32 %v8935, %v8936
    %v8938 = vrot.slane %v8937, 1
    %v8939 = vmax.f32 %v8937, %v8938
    %v8940 = vsel %vm5079, %v8708, -inf
    %v8941 = vrot.slane %v8940, 4
    %v8942 = vmax.f32 %v8940, %v8941
    %v8943 = vrot.slane %v8942, 2
    %v8944 = vmax.f32 %v8942, %v8943
    %v8945 = vrot.slane %v8944, 1
    %v8946 = vmax.f32 %v8944, %v8945
    %v8947 = vsel %vm5079, %v8754, -inf
    %v8948 = vrot.slane %v8947, 4
    %v8949 = vmax.f32 %v8947, %v8948
    %v8950 = vrot.slane %v8949, 2
    %v8951 = vmax.f32 %v8949, %v8950
    %v8952 = vrot.slane %v8951, 1
    %v8953 = vmax.f32 %v8951, %v8952
    %v8954 = vsel %vm5079, %v8709, -inf
    %v8955 = vrot.slane %v8954, 4
    %v8956 = vmax.f32 %v8954, %v8955
    %v8957 = vrot.slane %v8956, 2
    %v8958 = vmax.f32 %v8956, %v8957
    %v8959 = vrot.slane %v8958, 1
    %v8960 = vmax.f32 %v8958, %v8959
    %v8961 = vsel %vm5079, %v8755, -inf
    %v8962 = vrot.slane %v8961, 4
    %v8963 = vmax.f32 %v8961, %v8962
    %v8964 = vrot.slane %v8963, 2
    %v8965 = vmax.f32 %v8963, %v8964
    %v8966 = vrot.slane %v8965, 1
    %v8967 = vmax.f32 %v8965, %v8966
    %v8968 = vsel %vm5079, %v8710, -inf
    %v8969 = vrot.slane %v8968, 4
    %v8970 = vmax.f32 %v8968, %v8969
    %v8971 = vrot.slane %v8970, 2
    %v8972 = vmax.f32 %v8970, %v8971
    %v8973 = vrot.slane %v8972, 1
    %v8974 = vmax.f32 %v8972, %v8973
    %v8975 = vsel %vm5079, %v8756, -inf
    %v8976 = vrot.slane %v8975, 4
    %v8977 = vmax.f32 %v8975, %v8976
    %v8978 = vrot.slane %v8977, 2
    %v8979 = vmax.f32 %v8977, %v8978
    %v8980 = vrot.slane %v8979, 1
    %v8981 = vmax.f32 %v8979, %v8980
    %v8998 = vrot.slane %v8711, 4
    %v8999 = vrot.slane %v8712, 4
    %v9000 = vrot.slane %v8713, 4
    %v9001 = vrot.slane %v8714, 4
    %v9002 = vrot.slane %v8715, 4
    %v9003 = vrot.slane %v8716, 4
    %v9004 = vrot.slane %v8717, 4
    %v9005 = vrot.slane %v8718, 4
    %v9006 = vrot.slane %v8719, 4
    %v9007 = vrot.slane %v8720, 4
    %v9008 = vrot.slane %v8721, 4
    %v9009 = vrot.slane %v8722, 4
    %v9010 = vrot.slane %v8723, 4
    %v9011 = vrot.slane %v8724, 4
    %v9012 = vrot.slane %v8725, 4
    %vm9013 = vcmask 1045508
    %vm9014 = vmor %vm8197, %vm9013
    %v9015 = vrot.slane %v8711, 6
    %v9016 = vrot.slane %v9015, 4
    %v9017 = vrot.slane %v8998, 6
    %v9018 = vsel %vm9014, %v9016, %v9017
    %v9019 = vrot.slane %v9017, 4
    %v9020 = vrot.slane %v8712, 6
    %v9021 = vsel %vm9014, %v9019, %v9020
    %v9022 = vrot.slane %v9020, 4
    %v9023 = vrot.slane %v8999, 6
    %v9024 = vsel %vm9014, %v9022, %v9023
    %v9025 = vrot.slane %v9023, 4
    %v9026 = vrot.slane %v8713, 6
    %v9027 = vsel %vm9014, %v9025, %v9026
    %v9028 = vrot.slane %v9026, 4
    %v9029 = vrot.slane %v9000, 6
    %v9030 = vsel %vm9014, %v9028, %v9029
    %v9031 = vrot.slane %v9029, 4
    %v9032 = vrot.slane %v8714, 6
    %v9033 = vsel %vm9014, %v9031, %v9032
    %v9034 = vrot.slane %v9032, 4
    %v9035 = vrot.slane %v9001, 6
    %v9036 = vsel %vm9014, %v9034, %v9035
    %v9037 = vrot.slane %v9035, 4
    %v9038 = vrot.slane %v8715, 6
    %v9039 = vsel %vm9014, %v9037, %v9038
    %v9040 = vrot.slane %v9038, 4
    %v9041 = vrot.slane %v9002, 6
    %v9042 = vsel %vm9014, %v9040, %v9041
    %v9043 = vrot.slane %v9041, 4
    %v9044 = vrot.slane %v8716, 6
    %v9045 = vsel %vm9014, %v9043, %v9044
    %v9046 = vrot.slane %v9044, 4
    %v9047 = vrot.slane %v9003, 6
    %v9048 = vsel %vm9014, %v9046, %v9047
    %v9049 = vrot.slane %v9047, 4
    %v9050 = vrot.slane %v8717, 6
    %v9051 = vsel %vm9014, %v9049, %v9050
    %v9052 = vrot.slane %v9050, 4
    %v9053 = vrot.slane %v9004, 6
    %v9054 = vsel %vm9014, %v9052, %v9053
    %v9055 = vrot.slane %v9053, 4
    %v9056 = vrot.slane %v8718, 6
    %v9057 = vsel %vm9014, %v9055, %v9056
    %v9058 = vrot.slane %v9056, 4
    %v9059 = vrot.slane %v9005, 6
    %v9060 = vsel %vm9014, %v9058, %v9059
    %v9061 = vrot.slane %v9059, 4
    %v9062 = vrot.slane %v8719, 6
    %v9063 = vsel %vm9014, %v9061, %v9062
    %v9064 = vrot.slane %v9062, 4
    %v9065 = vrot.slane %v9006, 6
    %v9066 = vsel %vm9014, %v9064, %v9065
    %v9067 = vrot.slane %v9065, 4
    %v9068 = vrot.slane %v8720, 6
    %v9069 = vsel %vm9014, %v9067, %v9068
    %v9070 = vrot.slane %v9068, 4
    %v9071 = vrot.slane %v9007, 6
    %v9072 = vsel %vm9014, %v9070, %v9071
    %v9073 = vrot.slane %v9071, 4
    %v9074 = vrot.slane %v8721, 6
    %v9075 = vsel %vm9014, %v9073, %v9074
    %v9076 = vrot.slane %v9074, 4
    %v9077 = vrot.slane %v9008, 6
    %v9078 = vsel %vm9014, %v9076, %v9077
    %v9079 = vrot.slane %v9077, 4
    %v9080 = vrot.slane %v8722, 6
    %v9081 = vsel %vm9014, %v9079, %v9080
    %v9082 = vrot.slane %v9080, 4
    %v9083 = vrot.slane %v9009, 6
    %v9084 = vsel %vm9014, %v9082, %v9083
    %v9085 = vrot.slane %v9083, 4
    %v9086 = vrot.slane %v8723, 6
    %v9087 = vsel %vm9014, %v9085, %v9086
    %v9088 = vrot.slane %v9086, 4
    %v9089 = vrot.slane %v9010, 6
    %v9090 = vsel %vm9014, %v9088, %v9089
    %v9091 = vrot.slane %v9089, 4
    %v9092 = vrot.slane %v8724, 6
    %v9093 = vsel %vm9014, %v9091, %v9092
    %v9094 = vrot.slane %v9092, 4
    %v9095 = vrot.slane %v9011, 6
    %v9096 = vsel %vm9014, %v9094, %v9095
    %v9097 = vrot.slane %v9095, 4
    %v9098 = vrot.slane %v8725, 6
    %v9099 = vsel %vm9014, %v9097, %v9098
    %v9100 = vrot.slane %v9098, 4
    %v9101 = vrot.slane %v9012, 6
    %v9102 = vsel %vm9014, %v9100, %v9101
    %v9103 = vrot.slane %v9101, 4
    %v9104 = vrot.slane %v8726, 6
    %v9105 = vsel %vm9014, %v9103, %v9104
    %v9136 = vsel %vm5079, %v9018, -inf
    %v9137 = vrot.slane %v9136, 4
    %v9138 = vmax.f32 %v9136, %v9137
    %v9139 = vrot.slane %v9138, 2
    %v9140 = vmax.f32 %v9138, %v9139
    %v9141 = vrot.slane %v9140, 1
    %v9142 = vmax.f32 %v9140, %v9141
    %v9143 = vsel %vm5079, %v9021, -inf
    %v9144 = vrot.slane %v9143, 4
    %v9145 = vmax.f32 %v9143, %v9144
    %v9146 = vrot.slane %v9145, 2
    %v9147 = vmax.f32 %v9145, %v9146
    %v9148 = vrot.slane %v9147, 1
    %v9149 = vmax.f32 %v9147, %v9148
    %v9150 = vsel %vm5079, %v9024, -inf
    %v9151 = vrot.slane %v9150, 4
    %v9152 = vmax.f32 %v9150, %v9151
    %v9153 = vrot.slane %v9152, 2
    %v9154 = vmax.f32 %v9152, %v9153
    %v9155 = vrot.slane %v9154, 1
    %v9156 = vmax.f32 %v9154, %v9155
    %v9157 = vsel %vm5079, %v9027, -inf
    %v9158 = vrot.slane %v9157, 4
    %v9159 = vmax.f32 %v9157, %v9158
    %v9160 = vrot.slane %v9159, 2
    %v9161 = vmax.f32 %v9159, %v9160
    %v9162 = vrot.slane %v9161, 1
    %v9163 = vmax.f32 %v9161, %v9162
    %v9164 = vsel %vm5079, %v9030, -inf
    %v9165 = vrot.slane %v9164, 4
    %v9166 = vmax.f32 %v9164, %v9165
    %v9167 = vrot.slane %v9166, 2
    %v9168 = vmax.f32 %v9166, %v9167
    %v9169 = vrot.slane %v9168, 1
    %v9170 = vmax.f32 %v9168, %v9169
    %v9171 = vsel %vm5079, %v9033, -inf
    %v9172 = vrot.slane %v9171, 4
    %v9173 = vmax.f32 %v9171, %v9172
    %v9174 = vrot.slane %v9173, 2
    %v9175 = vmax.f32 %v9173, %v9174
    %v9176 = vrot.slane %v9175, 1
    %v9177 = vmax.f32 %v9175, %v9176
    %v9178 = vsel %vm5079, %v9036, -inf
    %v9179 = vrot.slane %v9178, 4
    %v9180 = vmax.f32 %v9178, %v9179
    %v9181 = vrot.slane %v9180, 2
    %v9182 = vmax.f32 %v9180, %v9181
    %v9183 = vrot.slane %v9182, 1
    %v9184 = vmax.f32 %v9182, %v9183
    %v9185 = vsel %vm5079, %v9039, -inf
    %v9186 = vrot.slane %v9185, 4
    %v9187 = vmax.f32 %v9185, %v9186
    %v9188 = vrot.slane %v9187, 2
    %v9189 = vmax.f32 %v9187, %v9188
    %v9190 = vrot.slane %v9189, 1
    %v9191 = vmax.f32 %v9189, %v9190
    %v9192 = vsel %vm5079, %v9042, -inf
    %v9193 = vrot.slane %v9192, 4
    %v9194 = vmax.f32 %v9192, %v9193
    %v9195 = vrot.slane %v9194, 2
    %v9196 = vmax.f32 %v9194, %v9195
    %v9197 = vrot.slane %v9196, 1
    %v9198 = vmax.f32 %v9196, %v9197
    %v9199 = vsel %vm5079, %v9045, -inf
    %v9200 = vrot.slane %v9199, 4
    %v9201 = vmax.f32 %v9199, %v9200
    %v9202 = vrot.slane %v9201, 2
    %v9203 = vmax.f32 %v9201, %v9202
    %v9204 = vrot.slane %v9203, 1
    %v9205 = vmax.f32 %v9203, %v9204
    %v9206 = vsel %vm5079, %v9048, -inf
    %v9207 = vrot.slane %v9206, 4
    %v9208 = vmax.f32 %v9206, %v9207
    %v9209 = vrot.slane %v9208, 2
    %v9210 = vmax.f32 %v9208, %v9209
    %v9211 = vrot.slane %v9210, 1
    %v9212 = vmax.f32 %v9210, %v9211
    %v9213 = vsel %vm5079, %v9051, -inf
    %v9214 = vrot.slane %v9213, 4
    %v9215 = vmax.f32 %v9213, %v9214
    %v9216 = vrot.slane %v9215, 2
    %v9217 = vmax.f32 %v9215, %v9216
    %v9218 = vrot.slane %v9217, 1
    %v9219 = vmax.f32 %v9217, %v9218
    %v9220 = vsel %vm5079, %v9054, -inf
    %v9221 = vrot.slane %v9220, 4
    %v9222 = vmax.f32 %v9220, %v9221
    %v9223 = vrot.slane %v9222, 2
    %v9224 = vmax.f32 %v9222, %v9223
    %v9225 = vrot.slane %v9224, 1
    %v9226 = vmax.f32 %v9224, %v9225
    %v9227 = vsel %vm5079, %v9057, -inf
    %v9228 = vrot.slane %v9227, 4
    %v9229 = vmax.f32 %v9227, %v9228
    %v9230 = vrot.slane %v9229, 2
    %v9231 = vmax.f32 %v9229, %v9230
    %v9232 = vrot.slane %v9231, 1
    %v9233 = vmax.f32 %v9231, %v9232
    %v9234 = vsel %vm5079, %v9060, -inf
    %v9235 = vrot.slane %v9234, 4
    %v9236 = vmax.f32 %v9234, %v9235
    %v9237 = vrot.slane %v9236, 2
    %v9238 = vmax.f32 %v9236, %v9237
    %v9239 = vrot.slane %v9238, 1
    %v9240 = vmax.f32 %v9238, %v9239
    %v9241 = vsel %vm5079, %v9063, -inf
    %v9242 = vrot.slane %v9241, 4
    %v9243 = vmax.f32 %v9241, %v9242
    %v9244 = vrot.slane %v9243, 2
    %v9245 = vmax.f32 %v9243, %v9244
    %v9246 = vrot.slane %v9245, 1
    %v9247 = vmax.f32 %v9245, %v9246
    %v9248 = vsel %vm5079, %v9066, -inf
    %v9249 = vrot.slane %v9248, 4
    %v9250 = vmax.f32 %v9248, %v9249
    %v9251 = vrot.slane %v9250, 2
    %v9252 = vmax.f32 %v9250, %v9251
    %v9253 = vrot.slane %v9252, 1
    %v9254 = vmax.f32 %v9252, %v9253
    %v9255 = vsel %vm5079, %v9069, -inf
    %v9256 = vrot.slane %v9255, 4
    %v9257 = vmax.f32 %v9255, %v9256
    %v9258 = vrot.slane %v9257, 2
    %v9259 = vmax.f32 %v9257, %v9258
    %v9260 = vrot.slane %v9259, 1
    %v9261 = vmax.f32 %v9259, %v9260
    %v9262 = vsel %vm5079, %v9072, -inf
    %v9263 = vrot.slane %v9262, 4
    %v9264 = vmax.f32 %v9262, %v9263
    %v9265 = vrot.slane %v9264, 2
    %v9266 = vmax.f32 %v9264, %v9265
    %v9267 = vrot.slane %v9266, 1
    %v9268 = vmax.f32 %v9266, %v9267
    %v9269 = vsel %vm5079, %v9075, -inf
    %v9270 = vrot.slane %v9269, 4
    %v9271 = vmax.f32 %v9269, %v9270
    %v9272 = vrot.slane %v9271, 2
    %v9273 = vmax.f32 %v9271, %v9272
    %v9274 = vrot.slane %v9273, 1
    %v9275 = vmax.f32 %v9273, %v9274
    %v9276 = vsel %vm5079, %v9078, -inf
    %v9277 = vrot.slane %v9276, 4
    %v9278 = vmax.f32 %v9276, %v9277
    %v9279 = vrot.slane %v9278, 2
    %v9280 = vmax.f32 %v9278, %v9279
    %v9281 = vrot.slane %v9280, 1
    %v9282 = vmax.f32 %v9280, %v9281
    %v9283 = vsel %vm5079, %v9081, -inf
    %v9284 = vrot.slane %v9283, 4
    %v9285 = vmax.f32 %v9283, %v9284
    %v9286 = vrot.slane %v9285, 2
    %v9287 = vmax.f32 %v9285, %v9286
    %v9288 = vrot.slane %v9287, 1
    %v9289 = vmax.f32 %v9287, %v9288
    %v9290 = vsel %vm5079, %v9084, -inf
    %v9291 = vrot.slane %v9290, 4
    %v9292 = vmax.f32 %v9290, %v9291
    %v9293 = vrot.slane %v9292, 2
    %v9294 = vmax.f32 %v9292, %v9293
    %v9295 = vrot.slane %v9294, 1
    %v9296 = vmax.f32 %v9294, %v9295
    %v9297 = vsel %vm5079, %v9087, -inf
    %v9298 = vrot.slane %v9297, 4
    %v9299 = vmax.f32 %v9297, %v9298
    %v9300 = vrot.slane %v9299, 2
    %v9301 = vmax.f32 %v9299, %v9300
    %v9302 = vrot.slane %v9301, 1
    %v9303 = vmax.f32 %v9301, %v9302
    %v9304 = vsel %vm5079, %v9090, -inf
    %v9305 = vrot.slane %v9304, 4
    %v9306 = vmax.f32 %v9304, %v9305
    %v9307 = vrot.slane %v9306, 2
    %v9308 = vmax.f32 %v9306, %v9307
    %v9309 = vrot.slane %v9308, 1
    %v9310 = vmax.f32 %v9308, %v9309
    %v9311 = vsel %vm5079, %v9093, -inf
    %v9312 = vrot.slane %v9311, 4
    %v9313 = vmax.f32 %v9311, %v9312
    %v9314 = vrot.slane %v9313, 2
    %v9315 = vmax.f32 %v9313, %v9314
    %v9316 = vrot.slane %v9315, 1
    %v9317 = vmax.f32 %v9315, %v9316
    %v9318 = vsel %vm5079, %v9096, -inf
    %v9319 = vrot.slane %v9318, 4
    %v9320 = vmax.f32 %v9318, %v9319
    %v9321 = vrot.slane %v9320, 2
    %v9322 = vmax.f32 %v9320, %v9321
    %v9323 = vrot.slane %v9322, 1
    %v9324 = vmax.f32 %v9322, %v9323
    %v9325 = vsel %vm5079, %v9099, -inf
    %v9326 = vrot.slane %v9325, 4
    %v9327 = vmax.f32 %v9325, %v9326
    %v9328 = vrot.slane %v9327, 2
    %v9329 = vmax.f32 %v9327, %v9328
    %v9330 = vrot.slane %v9329, 1
    %v9331 = vmax.f32 %v9329, %v9330
    %v9332 = vsel %vm5079, %v9102, -inf
    %v9333 = vrot.slane %v9332, 4
    %v9334 = vmax.f32 %v9332, %v9333
    %v9335 = vrot.slane %v9334, 2
    %v9336 = vmax.f32 %v9334, %v9335
    %v9337 = vrot.slane %v9336, 1
    %v9338 = vmax.f32 %v9336, %v9337
    %v9339 = vsel %vm5079, %v9105, -inf
    %v9340 = vrot.slane %v9339, 4
    %v9341 = vmax.f32 %v9339, %v9340
    %v9342 = vrot.slane %v9341, 2
    %v9343 = vmax.f32 %v9341, %v9342
    %v9344 = vrot.slane %v9343, 1
    %v9345 = vmax.f32 %v9343, %v9344
    %v9374 = vsel %vm7124, %v8785, %v8778
    %v9375 = vsel %vm7126, %v8792, %v9374
    %v9376 = vsel %vm7128, %v8799, %v9375
    %v9377 = vsel %vm7130, %v8806, %v9376
    %v9378 = vsel %vm7132, %v8813, %v9377
    %v9379 = vsel %vm7134, %v8820, %v9378
    %v9380 = vsel %vm7136, %v8827, %v9379
    %v9381 = vsel %vm7124, %v8841, %v8834
    %v9382 = vsel %vm7126, %v8848, %v9381
    %v9383 = vsel %vm7128, %v8855, %v9382
    %v9384 = vsel %vm7130, %v8862, %v9383
    %v9385 = vsel %vm7132, %v8869, %v9384
    %v9386 = vsel %vm7134, %v8876, %v9385
    %v9387 = vsel %vm7136, %v8883, %v9386
    %v9388 = vsel %vm7124, %v8897, %v8890
    %v9389 = vsel %vm7126, %v8904, %v9388
    %v9390 = vsel %vm7128, %v8911, %v9389
    %v9391 = vsel %vm7130, %v8918, %v9390
    %v9392 = vsel %vm7132, %v8925, %v9391
    %v9393 = vsel %vm7134, %v8932, %v9392
    %v9394 = vsel %vm7136, %v8939, %v9393
    %v9395 = vsel %vm7124, %v8953, %v8946
    %v9396 = vsel %vm7126, %v8960, %v9395
    %v9397 = vsel %vm7128, %v8967, %v9396
    %v9403 = vsel %vm7124, %v8792, %v8785
    %v9404 = vsel %vm7126, %v8799, %v9403
    %v9405 = vsel %vm7128, %v8806, %v9404
    %v9406 = vsel %vm7130, %v8813, %v9405
    %v9407 = vsel %vm7132, %v8820, %v9406
    %v9408 = vsel %vm7134, %v8827, %v9407
    %v9409 = vsel %vm7136, %v8834, %v9408
    %v9410 = vsel %vm7124, %v8848, %v8841
    %v9411 = vsel %vm7126, %v8855, %v9410
    %v9412 = vsel %vm7128, %v8862, %v9411
    %v9413 = vsel %vm7130, %v8869, %v9412
    %v9414 = vsel %vm7132, %v8876, %v9413
    %v9415 = vsel %vm7134, %v8883, %v9414
    %v9416 = vsel %vm7136, %v8890, %v9415
    %v9417 = vsel %vm7124, %v8904, %v8897
    %v9418 = vsel %vm7126, %v8911, %v9417
    %v9419 = vsel %vm7128, %v8918, %v9418
    %v9420 = vsel %vm7130, %v8925, %v9419
    %v9421 = vsel %vm7132, %v8932, %v9420
    %v9422 = vsel %vm7134, %v8939, %v9421
    %v9423 = vsel %vm7136, %v8946, %v9422
    %v9424 = vsel %vm7124, %v8960, %v8953
    %v9425 = vsel %vm7126, %v8967, %v9424
    %v9426 = vsel %vm7128, %v8974, %v9425
    %9427 = vrot.lane.b32.xlu0 %v9409, 32
    %v9428 = vpop.permute.xlu0 %9427
    %9429 = vrot.lane.b32.xlu0 %v9416, 32
    %v9430 = vpop.permute.xlu0 %9429
    %9431 = vrot.lane.b32.xlu0 %v9423, 32
    %v9432 = vpop.permute.xlu0 %9431
    %9433 = vrot.lane.b32.xlu0 %v9426, 32
    %v9434 = vpop.permute.xlu0 %9433
    %v9440 = vsel %vm7124, %v8799, %v8792
    %v9441 = vsel %vm7126, %v8806, %v9440
    %v9442 = vsel %vm7128, %v8813, %v9441
    %v9443 = vsel %vm7130, %v8820, %v9442
    %v9444 = vsel %vm7132, %v8827, %v9443
    %v9445 = vsel %vm7134, %v8834, %v9444
    %v9446 = vsel %vm7136, %v8841, %v9445
    %v9447 = vsel %vm7124, %v8855, %v8848
    %v9448 = vsel %vm7126, %v8862, %v9447
    %v9449 = vsel %vm7128, %v8869, %v9448
    %v9450 = vsel %vm7130, %v8876, %v9449
    %v9451 = vsel %vm7132, %v8883, %v9450
    %v9452 = vsel %vm7134, %v8890, %v9451
    %v9453 = vsel %vm7136, %v8897, %v9452
    %v9454 = vsel %vm7124, %v8911, %v8904
    %v9455 = vsel %vm7126, %v8918, %v9454
    %v9456 = vsel %vm7128, %v8925, %v9455
    %v9457 = vsel %vm7130, %v8932, %v9456
    %v9458 = vsel %vm7132, %v8939, %v9457
    %v9459 = vsel %vm7134, %v8946, %v9458
    %v9460 = vsel %vm7136, %v8953, %v9459
    %v9461 = vsel %vm7124, %v8967, %v8960
    %v9462 = vsel %vm7126, %v8974, %v9461
    %v9463 = vsel %vm7128, %v8981, %v9462
    %9464 = vrot.lane.b32.xlu0 %v9446, 64
    %v9465 = vpop.permute.xlu0 %9464
    %9466 = vrot.lane.b32.xlu0 %v9453, 64
    %v9467 = vpop.permute.xlu0 %9466
    %9468 = vrot.lane.b32.xlu0 %v9460, 64
    %v9469 = vpop.permute.xlu0 %9468
    %9470 = vrot.lane.b32.xlu0 %v9463, 64
    %v9471 = vpop.permute.xlu0 %9470
    %v9476 = vsel %vm1453, %v9380, %v9428
    %v9477 = vsel %vm1453, %v9387, %v9430
    %v9478 = vsel %vm1453, %v9394, %v9432
    %v9479 = vsel %vm1453, %v9397, %v9434
    %v9480 = vsel %vm1579, %v9476, %v9465
    %v9481 = vsel %vm1579, %v9477, %v9467
    %v9482 = vsel %vm1579, %v9478, %v9469
    %v9483 = vsel %vm1579, %v9479, %v9471
    %v9512 = vsel %vm7124, %v9149, %v9142
    %v9513 = vsel %vm7126, %v9156, %v9512
    %v9514 = vsel %vm7128, %v9163, %v9513
    %v9515 = vsel %vm7130, %v9170, %v9514
    %v9516 = vsel %vm7132, %v9177, %v9515
    %v9517 = vsel %vm7134, %v9184, %v9516
    %v9518 = vsel %vm7136, %v9191, %v9517
    %v9519 = vsel %vm7124, %v9205, %v9198
    %v9520 = vsel %vm7126, %v9212, %v9519
    %v9521 = vsel %vm7128, %v9219, %v9520
    %v9522 = vsel %vm7130, %v9226, %v9521
    %v9523 = vsel %vm7132, %v9233, %v9522
    %v9524 = vsel %vm7134, %v9240, %v9523
    %v9525 = vsel %vm7136, %v9247, %v9524
    %v9526 = vsel %vm7124, %v9261, %v9254
    %v9527 = vsel %vm7126, %v9268, %v9526
    %v9528 = vsel %vm7128, %v9275, %v9527
    %v9529 = vsel %vm7130, %v9282, %v9528
    %v9530 = vsel %vm7132, %v9289, %v9529
    %v9531 = vsel %vm7134, %v9296, %v9530
    %v9532 = vsel %vm7136, %v9303, %v9531
    %v9533 = vsel %vm7124, %v9317, %v9310
    %v9534 = vsel %vm7126, %v9324, %v9533
    %v9535 = vsel %vm7128, %v9331, %v9534
    %v9541 = vsel %vm7124, %v9156, %v9149
    %v9542 = vsel %vm7126, %v9163, %v9541
    %v9543 = vsel %vm7128, %v9170, %v9542
    %v9544 = vsel %vm7130, %v9177, %v9543
    %v9545 = vsel %vm7132, %v9184, %v9544
    %v9546 = vsel %vm7134, %v9191, %v9545
    %v9547 = vsel %vm7136, %v9198, %v9546
    %v9548 = vsel %vm7124, %v9212, %v9205
    %v9549 = vsel %vm7126, %v9219, %v9548
    %v9550 = vsel %vm7128, %v9226, %v9549
    %v9551 = vsel %vm7130, %v9233, %v9550
    %v9552 = vsel %vm7132, %v9240, %v9551
    %v9553 = vsel %vm7134, %v9247, %v9552
    %v9554 = vsel %vm7136, %v9254, %v9553
    %v9555 = vsel %vm7124, %v9268, %v9261
    %v9556 = vsel %vm7126, %v9275, %v9555
    %v9557 = vsel %vm7128, %v9282, %v9556
    %v9558 = vsel %vm7130, %v9289, %v9557
    %v9559 = vsel %vm7132, %v9296, %v9558
    %v9560 = vsel %vm7134, %v9303, %v9559
    %v9561 = vsel %vm7136, %v9310, %v9560
    %v9562 = vsel %vm7124, %v9324, %v9317
    %v9563 = vsel %vm7126, %v9331, %v9562
    %v9564 = vsel %vm7128, %v9338, %v9563
    %9565 = vrot.lane.b32.xlu0 %v9547, 32
    %v9566 = vpop.permute.xlu0 %9565
    %9567 = vrot.lane.b32.xlu0 %v9554, 32
    %v9568 = vpop.permute.xlu0 %9567
    %9569 = vrot.lane.b32.xlu0 %v9561, 32
    %v9570 = vpop.permute.xlu0 %9569
    %9571 = vrot.lane.b32.xlu0 %v9564, 32
    %v9572 = vpop.permute.xlu0 %9571
    %v9578 = vsel %vm7124, %v9163, %v9156
    %v9579 = vsel %vm7126, %v9170, %v9578
    %v9580 = vsel %vm7128, %v9177, %v9579
    %v9581 = vsel %vm7130, %v9184, %v9580
    %v9582 = vsel %vm7132, %v9191, %v9581
    %v9583 = vsel %vm7134, %v9198, %v9582
    %v9584 = vsel %vm7136, %v9205, %v9583
    %v9585 = vsel %vm7124, %v9219, %v9212
    %v9586 = vsel %vm7126, %v9226, %v9585
    %v9587 = vsel %vm7128, %v9233, %v9586
    %v9588 = vsel %vm7130, %v9240, %v9587
    %v9589 = vsel %vm7132, %v9247, %v9588
    %v9590 = vsel %vm7134, %v9254, %v9589
    %v9591 = vsel %vm7136, %v9261, %v9590
    %v9592 = vsel %vm7124, %v9275, %v9268
    %v9593 = vsel %vm7126, %v9282, %v9592
    %v9594 = vsel %vm7128, %v9289, %v9593
    %v9595 = vsel %vm7130, %v9296, %v9594
    %v9596 = vsel %vm7132, %v9303, %v9595
    %v9597 = vsel %vm7134, %v9310, %v9596
    %v9598 = vsel %vm7136, %v9317, %v9597
    %v9599 = vsel %vm7124, %v9331, %v9324
    %v9600 = vsel %vm7126, %v9338, %v9599
    %v9601 = vsel %vm7128, %v9345, %v9600
    %9602 = vrot.lane.b32.xlu0 %v9584, 64
    %v9603 = vpop.permute.xlu0 %9602
    %9604 = vrot.lane.b32.xlu0 %v9591, 64
    %v9605 = vpop.permute.xlu0 %9604
    %9606 = vrot.lane.b32.xlu0 %v9598, 64
    %v9607 = vpop.permute.xlu0 %9606
    %9608 = vrot.lane.b32.xlu0 %v9601, 64
    %v9609 = vpop.permute.xlu0 %9608
    %v9614 = vsel %vm1453, %v9518, %v9566
    %v9615 = vsel %vm1453, %v9525, %v9568
    %v9616 = vsel %vm1453, %v9532, %v9570
    %v9617 = vsel %vm1453, %v9535, %v9572
    %v9618 = vsel %vm1579, %v9614, %v9603
    %v9619 = vsel %vm1579, %v9615, %v9605
    %v9620 = vsel %vm1579, %v9616, %v9607
    %v9621 = vsel %vm1579, %v9617, %v9609
    %v9626 = vrot.slane %v9618, 4
    %v9627 = vrot.slane %v9619, 4
    %v9628 = vsel %vm1078, %v9626, %v9627
    %v9629 = vrot.slane %v9620, 4
    %v9630 = vsel %vm1078, %v9627, %v9629
    %v9631 = vrot.slane %v9621, 4
    %v9632 = vsel %vm1078, %v9629, %v9631
    %v9637 = vsel %vm1078, %v9483, %v9626
    %v9638 = vpack.c.bf16 %v9481, %v9480
    %v9639 = vpack.c.bf16 %v9637, %v9482
    %v9640 = vpack.c.bf16 %v9630, %v9628
    %v9641 = vpack.c.bf16 %v9632, %v9632
    %v9642 = vld [vmem:[%s1 + $0x58] sm:$0xf]
    %v9643 = vld [vmem:[%s1 + $0x5c] sm:$0xf]
    %v9644 = vld [vmem:[%s1 + $0x60] sm:$0xf]
    %v9645 = vld [vmem:[%s1 + $0x64] sm:$0xf]
    %v9646 = vld [vmem:[%s1 + $0x68] sm:$0xf]
    %v9647 = vld [vmem:[%s1 + $0x6c] sm:$0xf]
    %v9648 = vld [vmem:[%s1 + $0x70] sm:$0xf]
    %v9649 = vld [vmem:[%s1 + $0x74] sm:$0xf]
    %v9650 = vld [vmem:[%s1 + $0x78] sm:$0xf]
    %v9651 = vld [vmem:[%s1 + $0x7c] sm:$0xf]
    %v9652 = vld [vmem:[%s1 + $0x80] sm:$0xf]
    %v9653 = vld [vmem:[%s1 + $0x84] sm:$0xf]
    %v9666 = vunpack.c.l.b16 %v9642
    %v9667 = vunpack.c.l.b16 %v9643
    %v9668 = vunpack.c.l.b16 %v9644
    %v9669 = vunpack.c.l.b16 %v9645
    %v9670 = vunpack.c.l.b16 %v9646
    %v9671 = vunpack.c.l.b16 %v9647
    %v9672 = vunpack.c.l.b16 %v9648
    %v9673 = vunpack.c.l.b16 %v9649
    %v9674 = vunpack.c.l.b16 %v9650
    %v9675 = vunpack.c.l.b16 %v9651
    %v9676 = vunpack.c.l.b16 %v9652
    %v9677 = vunpack.c.l.b16 %v9653
    %v9678 = vpack.c.b16 %v9667, %v9666
    %v9679 = vpack.c.b16 %v9669, %v9668
    %v9680 = vpack.c.b16 %v9671, %v9670
    %v9681 = vpack.c.b16 %v9673, %v9672
    %v9682 = vpack.c.b16 %v9675, %v9674
    %v9683 = vpack.c.b16 %v9677, %v9676
    %v9691 = vsel %vm8310, %v9638, 0
    %v9694 = vsel %vm8310, %v9639, 0
    %v9697 = vsel %vm8310, %v9640, 0
    %v9700 = vsel %vm8310, %v9641, 0
    %9702 = vmatpush.bf16.msra.mxu0 0
    %9703 = vmatpush.bf16.msra.mxu0 0
    %9704 = vmatpush.bf16.msra.mxu0 %v9683
    %9705 = vmatpush.bf16.msra.mxu0 %v9682
    %9706 = vmatpush.bf16.msra.mxu0 %v9681
    %9707 = vmatpush.bf16.msra.mxu0 %v9680
    %9708 = vmatpush.bf16.msra.mxu0 %v9679
    %9709 = vmatpush.bf16.msra.mxu0 %v9678
    %9710 = vmatmul.bf16.gmra.mxu0 %v9691
    %v9711 = vpop.f32.mrf.mxu0
    %v9712 = vadd.f32 0.0, %v9711
    %v9713 = vpop.f32.mrf.mxu0
    %v9714 = vadd.f32 0.0, %v9713
    %9715 = vmatmul.bf16.gmra.mxu0 %v9694
    %v9716 = vpop.f32.mrf.mxu0
    %v9717 = vadd.f32 0.0, %v9716
    %v9718 = vpop.f32.mrf.mxu0
    %v9719 = vadd.f32 0.0, %v9718
    %9720 = vmatmul.bf16.gmra.mxu0 %v9697
    %v9721 = vpop.f32.mrf.mxu0
    %v9722 = vadd.f32 0.0, %v9721
    %v9723 = vpop.f32.mrf.mxu0
    %v9724 = vadd.f32 0.0, %v9723
    %9725 = vmatmul.bf16.gmra.mxu0 %v9700
    %v9726 = vpop.f32.mrf.mxu0
    %v9727 = vadd.f32 0.0, %v9726
    %v9728 = vpop.f32.mrf.mxu0
    %9729 = vdwg.mxu0
    %v9730 = vsel %vm1579, %v9712, 0.0
    %v9731 = vsel %vm1579, %v9714, 0.0
    %v9732 = vadd.f32 %v9730, %v9731
    %v9733 = vsel %vm1579, %v9717, 0.0
    %v9734 = vadd.f32 %v9732, %v9733
    %v9735 = vsel %vm1579, %v9719, 0.0
    %v9736 = vadd.f32 %v9734, %v9735
    %v9737 = vsel %vm1579, %v9722, 0.0
    %v9738 = vadd.f32 %v9736, %v9737
    %v9739 = vsel %vm1579, %v9724, 0.0
    %v9740 = vadd.f32 %v9738, %v9739
    %v9741 = vsel %vm1579, %v9727, 0.0
    %v9742 = vadd.f32 %v9740, %v9741
    %v9743 = vrot.slane %v9742, 4
    %v9744 = vadd.f32 %v9742, %v9743
    %v9745 = vrot.slane %v9744, 2
    %v9746 = vadd.f32 %v9744, %v9745
    %v9747 = vrot.slane %v9746, 1
    %v9748 = vadd.f32 %v9746, %v9747
    %v9749 = vmul.f32 %v9748, 0.017857144
    %v9750 = vmul.f32 %v9712, %v9712
    %v9751 = vmul.f32 %v9714, %v9714
    %v9752 = vmul.f32 %v9717, %v9717
    %v9753 = vmul.f32 %v9719, %v9719
    %v9754 = vmul.f32 %v9722, %v9722
    %v9755 = vmul.f32 %v9724, %v9724
    %v9756 = vmul.f32 %v9727, %v9727
    %v9757 = vsel %vm1579, %v9750, 0.0
    %v9758 = vsel %vm1579, %v9751, 0.0
    %v9759 = vadd.f32 %v9757, %v9758
    %v9760 = vsel %vm1579, %v9752, 0.0
    %v9761 = vadd.f32 %v9759, %v9760
    %v9762 = vsel %vm1579, %v9753, 0.0
    %v9763 = vadd.f32 %v9761, %v9762
    %v9764 = vsel %vm1579, %v9754, 0.0
    %v9765 = vadd.f32 %v9763, %v9764
    %v9766 = vsel %vm1579, %v9755, 0.0
    %v9767 = vadd.f32 %v9765, %v9766
    %v9768 = vsel %vm1579, %v9756, 0.0
    %v9769 = vadd.f32 %v9767, %v9768
    %v9770 = vrot.slane %v9769, 4
    %v9771 = vadd.f32 %v9769, %v9770
    %v9772 = vrot.slane %v9771, 2
    %v9773 = vadd.f32 %v9771, %v9772
    %v9774 = vrot.slane %v9773, 1
    %v9775 = vadd.f32 %v9773, %v9774
    %v9776 = vmul.f32 %v9775, 0.017857144
    %v9777 = vmul.f32 %v9749, %v9749
    %v9778 = vsub.f32 %v9776, %v9777
    %v9779 = vld [vmem:[%s2 + $0x4] sm:$0x1]
    %v9780 = vld [vmem:[%s2 + $0x5] sm:$0x1]
    %v9781 = vadd.f32 %v9778, 1e-05
    %v9782 = vrsqrt.pop %v9781
    %v9783 = vmul.f32 %v9782, %v9781
    %v9784 = vmul.f32 %v9783, %v9782
    %v9785 = vmul.f32 0.5, %v9784
    %v9786 = vsub.f32 1.5, %v9785
    %v9787 = vmul.f32 %v9782, %v9786
    %vm9788 = vweird.f32 %v9781
    %vm9789 = vweird.f32 %v9782
    %vm9790 = vmor %vm9788, %vm9789
    %v9791 = vsel %vm9790, %v9782, %v9787
    %v9792 = vmul.f32 %v9779, %v9791
    %v9793 = vmul.f32 %v9749, %v9792
    %v9794 = vsub.f32 %v9780, %v9793
    %v9795 = vperm.slane %v9792, 0
    %v9796 = vmul.f32 %v9712, %v9795
    %v9797 = vmul.f32 %v9714, %v9795
    %v9798 = vmul.f32 %v9717, %v9795
    %v9799 = vmul.f32 %v9719, %v9795
    %v9800 = vmul.f32 %v9722, %v9795
    %v9801 = vmul.f32 %v9724, %v9795
    %v9802 = vmul.f32 %v9727, %v9795
    %v9803 = vperm.slane %v9794, 0
    %v9804 = vadd.f32 %v9796, %v9803
    %v9805 = vadd.f32 %v9797, %v9803
    %v9806 = vadd.f32 %v9798, %v9803
    %v9807 = vadd.f32 %v9799, %v9803
    %v9808 = vadd.f32 %v9800, %v9803
    %v9809 = vadd.f32 %v9801, %v9803
    %v9810 = vadd.f32 %v9802, %v9803
    %v9811 = vmax.f32 %v9804, 0.0
    %v9812 = vmax.f32 %v9805, 0.0
    %v9813 = vmax.f32 %v9806, 0.0
    %v9814 = vmax.f32 %v9807, 0.0
    %v9815 = vmax.f32 %v9808, 0.0
    %v9816 = vmax.f32 %v9809, 0.0
    %v9817 = vmax.f32 %v9810, 0.0
    %v9821 = vrot.slane %v9811, 4
    %v9822 = vrot.slane %v9812, 4
    %v9823 = vrot.slane %v9813, 4
    %vm9827 = vcmask 519168
    %v9828 = vsel %vm9827, %v9811, -inf
    %v9829 = vrot.slane %v9828, 4
    %v9830 = vmax.f32 %v9828, %v9829
    %v9831 = vrot.slane %v9830, 2
    %v9832 = vmax.f32 %v9830, %v9831
    %v9833 = vrot.slane %v9832, 1
    %v9834 = vmax.f32 %v9832, %v9833
    %v9835 = vsel %vm9827, %v9821, -inf
    %v9836 = vrot.slane %v9835, 4
    %v9837 = vmax.f32 %v9835, %v9836
    %v9838 = vrot.slane %v9837, 2
    %v9839 = vmax.f32 %v9837, %v9838
    %v9840 = vrot.slane %v9839, 1
    %v9841 = vmax.f32 %v9839, %v9840
    %v9842 = vsel %vm9827, %v9812, -inf
    %v9843 = vrot.slane %v9842, 4
    %v9844 = vmax.f32 %v9842, %v9843
    %v9845 = vrot.slane %v9844, 2
    %v9846 = vmax.f32 %v9844, %v9845
    %v9847 = vrot.slane %v9846, 1
    %v9848 = vmax.f32 %v9846, %v9847
    %v9849 = vsel %vm9827, %v9822, -inf
    %v9850 = vrot.slane %v9849, 4
    %v9851 = vmax.f32 %v9849, %v9850
    %v9852 = vrot.slane %v9851, 2
    %v9853 = vmax.f32 %v9851, %v9852
    %v9854 = vrot.slane %v9853, 1
    %v9855 = vmax.f32 %v9853, %v9854
    %v9856 = vsel %vm9827, %v9813, -inf
    %v9857 = vrot.slane %v9856, 4
    %v9858 = vmax.f32 %v9856, %v9857
    %v9859 = vrot.slane %v9858, 2
    %v9860 = vmax.f32 %v9858, %v9859
    %v9861 = vrot.slane %v9860, 1
    %v9862 = vmax.f32 %v9860, %v9861
    %v9863 = vsel %vm9827, %v9823, -inf
    %v9864 = vrot.slane %v9863, 4
    %v9865 = vmax.f32 %v9863, %v9864
    %v9866 = vrot.slane %v9865, 2
    %v9867 = vmax.f32 %v9865, %v9866
    %v9868 = vrot.slane %v9867, 1
    %v9869 = vmax.f32 %v9867, %v9868
    %v9870 = vsel %vm9827, %v9814, -inf
    %v9871 = vrot.slane %v9870, 4
    %v9872 = vmax.f32 %v9870, %v9871
    %v9873 = vrot.slane %v9872, 2
    %v9874 = vmax.f32 %v9872, %v9873
    %v9875 = vrot.slane %v9874, 1
    %v9876 = vmax.f32 %v9874, %v9875
    %9881 = vst.sshfl [vmem:[#allocation1] sm:$0xff pattern:$0x75316420] %v9814
    %9882 = vst.sshfl [vmem:[#allocation1 + $0x10] sm:$0xff pattern:$0x75316420] %v9815
    %9883 = vst.sshfl [vmem:[#allocation1 + $0x20] sm:$0xff pattern:$0x75316420] %v9816
    %9884 = vst.sshfl [vmem:[#allocation1 + $0x30] sm:$0xff pattern:$0x75316420] %v9817
    %s9885 = scalar_lea.vmem [#allocation1], 1
    %v9886 = vld [vmem:[%s9885] ss:$2 sm:$0xff]
    %s9887 = scalar_lea.vmem [#allocation1], 16
    %v9888 = vld [vmem:[%s9887] ss:$2 sm:$0xff]
    %s9889 = scalar_lea.vmem [#allocation1], 17
    %v9890 = vld [vmem:[%s9889] ss:$2 sm:$0xff]
    %s9891 = scalar_lea.vmem [#allocation1], 32
    %v9892 = vld [vmem:[%s9891] ss:$2 sm:$0xff]
    %s9893 = scalar_lea.vmem [#allocation1], 33
    %v9894 = vld [vmem:[%s9893] ss:$2 sm:$0xff]
    %s9895 = scalar_lea.vmem [#allocation1], 48
    %v9896 = vld [vmem:[%s9895] ss:$2 sm:$0xff]
    %s9897 = scalar_lea.vmem [#allocation1], 49
    %v9898 = vld [vmem:[%s9897] ss:$2 sm:$0xff]
    %v9906 = vsel %vm9827, %v9886, -inf
    %v9907 = vrot.slane %v9906, 4
    %v9908 = vmax.f32 %v9906, %v9907
    %v9909 = vrot.slane %v9908, 2
    %v9910 = vmax.f32 %v9908, %v9909
    %v9911 = vrot.slane %v9910, 1
    %v9912 = vmax.f32 %v9910, %v9911
    %v9913 = vsel %vm9827, %v9888, -inf
    %v9914 = vrot.slane %v9913, 4
    %v9915 = vmax.f32 %v9913, %v9914
    %v9916 = vrot.slane %v9915, 2
    %v9917 = vmax.f32 %v9915, %v9916
    %v9918 = vrot.slane %v9917, 1
    %v9919 = vmax.f32 %v9917, %v9918
    %v9920 = vsel %vm9827, %v9890, -inf
    %v9921 = vrot.slane %v9920, 4
    %v9922 = vmax.f32 %v9920, %v9921
    %v9923 = vrot.slane %v9922, 2
    %v9924 = vmax.f32 %v9922, %v9923
    %v9925 = vrot.slane %v9924, 1
    %v9926 = vmax.f32 %v9924, %v9925
    %v9927 = vsel %vm9827, %v9892, -inf
    %v9928 = vrot.slane %v9927, 4
    %v9929 = vmax.f32 %v9927, %v9928
    %v9930 = vrot.slane %v9929, 2
    %v9931 = vmax.f32 %v9929, %v9930
    %v9932 = vrot.slane %v9931, 1
    %v9933 = vmax.f32 %v9931, %v9932
    %v9934 = vsel %vm9827, %v9894, -inf
    %v9935 = vrot.slane %v9934, 4
    %v9936 = vmax.f32 %v9934, %v9935
    %v9937 = vrot.slane %v9936, 2
    %v9938 = vmax.f32 %v9936, %v9937
    %v9939 = vrot.slane %v9938, 1
    %v9940 = vmax.f32 %v9938, %v9939
    %v9941 = vsel %vm9827, %v9896, -inf
    %v9942 = vrot.slane %v9941, 4
    %v9943 = vmax.f32 %v9941, %v9942
    %v9944 = vrot.slane %v9943, 2
    %v9945 = vmax.f32 %v9943, %v9944
    %v9946 = vrot.slane %v9945, 1
    %v9947 = vmax.f32 %v9945, %v9946
    %v9948 = vsel %vm9827, %v9898, -inf
    %v9949 = vrot.slane %v9948, 4
    %v9950 = vmax.f32 %v9948, %v9949
    %v9951 = vrot.slane %v9950, 2
    %v9952 = vmax.f32 %v9950, %v9951
    %v9953 = vrot.slane %v9952, 1
    %v9954 = vmax.f32 %v9952, %v9953
    %v9960 = vsel %vm7124, %v9841, %v9834
    %v9961 = vsel %vm7126, %v9848, %v9960
    %v9962 = vsel %vm7128, %v9855, %v9961
    %v9963 = vsel %vm7130, %v9862, %v9962
    %v9966 = vsel %vm7124, %v9848, %v9841
    %v9967 = vsel %vm7126, %v9855, %v9966
    %v9968 = vsel %vm7128, %v9862, %v9967
    %v9969 = vsel %vm7130, %v9869, %v9968
    %9970 = vrot.lane.b32.xlu0 %v9969, 64
    %v9971 = vpop.permute.xlu0 %9970
    %v9974 = vsel %vm7124, %v9855, %v9848
    %v9975 = vsel %vm7126, %v9862, %v9974
    %v9976 = vsel %vm7128, %v9869, %v9975
    %v9977 = vsel %vm7130, %v9876, %v9976
    %v9979 = vsel %vm1579, %v9963, %v9971
    %v9985 = vsel %vm7124, %v9919, %v9912
    %v9986 = vsel %vm7126, %v9926, %v9985
    %v9987 = vsel %vm7128, %v9933, %v9986
    %v9988 = vsel %vm7130, %v9940, %v9987
    %v9991 = vsel %vm7124, %v9926, %v9919
    %v9992 = vsel %vm7126, %v9933, %v9991
    %v9993 = vsel %vm7128, %v9940, %v9992
    %v9994 = vsel %vm7130, %v9947, %v9993
    %9995 = vrot.lane.b32.xlu0 %v9994, 64
    %v9996 = vpop.permute.xlu0 %9995
    %v9999 = vsel %vm7124, %v9933, %v9926
    %v10000 = vsel %vm7126, %v9940, %v9999
    %v10001 = vsel %vm7128, %v9947, %v10000
    %v10002 = vsel %vm7130, %v9954, %v10001
    %v10003 = vsel %vm1579, %v9988, %v9996
    %v10005 = vrot.slane %v10003, 3
    %v10006 = vrot.slane %v10002, 3
    %v10009 = vsel %vm766, %v9979, %v10005
    %v10010 = vsel %vm766, %v9977, %v10006
    %v10011 = vpack.c.bf16 %v10005, %v10009
    %v10012 = vpack.c.bf16 %v10006, %v10010
    %v10013 = vld [vmem:[%s1 + $0x88] sm:$0xf]
    %v10014 = vld [vmem:[%s1 + $0x8c] sm:$0xf]
    %v10015 = vld [vmem:[%s1 + $0x90] sm:$0xf]
    %v10016 = vld [vmem:[%s1 + $0x94] sm:$0xf]
    %v10017 = vld [vmem:[%s1 + $0x98] sm:$0xf]
    %v10018 = vld [vmem:[%s1 + $0x9c] sm:$0xf]
    %v10019 = vld [vmem:[%s1 + $0xa0] sm:$0xf]
    %v10020 = vld [vmem:[%s1 + $0xa4] sm:$0xf]
    %v10021 = vld [vmem:[%s1 + $0xa8] sm:$0xf]
    %v10022 = vld [vmem:[%s1 + $0xac] sm:$0xf]
    %v10023 = vld [vmem:[%s1 + $0xb0] sm:$0xf]
    %v10024 = vld [vmem:[%s1 + $0xb4] sm:$0xf]
    %v10025 = vld [vmem:[%s1 + $0xb8] sm:$0xf]
    %v10026 = vld [vmem:[%s1 + $0xbc] sm:$0xf]
    %v10027 = vld [vmem:[%s1 + $0xc0] sm:$0xf]
    %v10028 = vld [vmem:[%s1 + $0xc4] sm:$0xf]
    %v10029 = vld [vmem:[%s1 + $0xc8] sm:$0xf]
    %v10030 = vld [vmem:[%s1 + $0xcc] sm:$0xf]
    %v10031 = vld [vmem:[%s1 + $0xd0] sm:$0xf]
    %v10032 = vld [vmem:[%s1 + $0xd4] sm:$0xf]
    %v10033 = vld [vmem:[%s1 + $0xd8] sm:$0xf]
    %v10034 = vld [vmem:[%s1 + $0xdc] sm:$0xf]
    %v10035 = vld [vmem:[%s1 + $0xe0] sm:$0xf]
    %v10036 = vld [vmem:[%s1 + $0xe4] sm:$0xf]
    %v10061 = vunpack.c.l.b16 %v10013
    %v10062 = vunpack.c.l.b16 %v10014
    %v10063 = vunpack.c.l.b16 %v10015
    %v10064 = vunpack.c.l.b16 %v10016
    %v10065 = vunpack.c.l.b16 %v10017
    %v10066 = vunpack.c.l.b16 %v10018
    %v10067 = vunpack.c.l.b16 %v10019
    %v10068 = vunpack.c.l.b16 %v10020
    %v10069 = vunpack.c.l.b16 %v10021
    %v10070 = vunpack.c.l.b16 %v10022
    %v10071 = vunpack.c.l.b16 %v10023
    %v10072 = vunpack.c.l.b16 %v10024
    %v10073 = vunpack.c.l.b16 %v10025
    %v10074 = vunpack.c.l.b16 %v10026
    %v10075 = vunpack.c.l.b16 %v10027
    %v10076 = vunpack.c.l.b16 %v10028
    %v10077 = vunpack.c.l.b16 %v10029
    %v10078 = vunpack.c.l.b16 %v10030
    %v10079 = vunpack.c.l.b16 %v10031
    %v10080 = vunpack.c.l.b16 %v10032
    %v10081 = vunpack.c.l.b16 %v10033
    %v10082 = vunpack.c.l.b16 %v10034
    %v10083 = vunpack.c.l.b16 %v10035
    %v10084 = vunpack.c.l.b16 %v10036
    %v10085 = vpack.c.b16 %v10062, %v10061
    %v10086 = vpack.c.b16 %v10064, %v10063
    %v10087 = vpack.c.b16 %v10066, %v10065
    %v10088 = vpack.c.b16 %v10068, %v10067
    %v10089 = vpack.c.b16 %v10070, %v10069
    %v10090 = vpack.c.b16 %v10072, %v10071
    %v10091 = vpack.c.b16 %v10074, %v10073
    %v10092 = vpack.c.b16 %v10076, %v10075
    %v10093 = vpack.c.b16 %v10078, %v10077
    %v10094 = vpack.c.b16 %v10080, %v10079
    %v10095 = vpack.c.b16 %v10082, %v10081
    %v10096 = vpack.c.b16 %v10084, %v10083
    %v10110 = vsel %vm1579, %v10012, 0
    %10112 = vmatpush.bf16.msra.mxu0 %v10092
    %10113 = vmatpush.bf16.msra.mxu0 %v10091
    %10114 = vmatpush.bf16.msra.mxu0 %v10090
    %10115 = vmatpush.bf16.msra.mxu0 %v10089
    %10116 = vmatpush.bf16.msra.mxu0 %v10088
    %10117 = vmatpush.bf16.msra.mxu0 %v10087
    %10118 = vmatpush.bf16.msra.mxu0 %v10086
    %10119 = vmatpush.bf16.msra.mxu0 %v10085
    %10120 = vmatmul.bf16.gmra.mxu0 %v10011
    %v10121 = vpop.f32.mrf.mxu0
    %v10122 = vadd.f32 0.0, %v10121
    %v10123 = vpop.f32.mrf.mxu0
    %v10124 = vadd.f32 0.0, %v10123
    %10125 = vdwg.mxu0
    %10126 = vmatpush.bf16.msra.mxu0 0
    %10127 = vmatpush.bf16.msra.mxu0 0
    %10128 = vmatpush.bf16.msra.mxu0 0
    %10129 = vmatpush.bf16.msra.mxu0 0
    %10130 = vmatpush.bf16.msra.mxu0 %v10096
    %10131 = vmatpush.bf16.msra.mxu0 %v10095
    %10132 = vmatpush.bf16.msra.mxu0 %v10094
    %10133 = vmatpush.bf16.msra.mxu0 %v10093
    %10134 = vmatmul.bf16.gmra.mxu0 %v10110
    %v10135 = vpop.f32.mrf.mxu0
    %v10136 = vadd.f32 %v10122, %v10135
    %v10137 = vpop.f32.mrf.mxu0
    %v10138 = vadd.f32 %v10124, %v10137
    %10139 = vdwg.mxu0
    %v10140 = vsel %vm1579, %v10136, 0.0
    %vm10141 = vcmask 517120
    %v10142 = vsel %vm10141, %v10138, 0.0
    %v10143 = vadd.f32 %v10140, %v10142
    %v10144 = vrot.slane %v10143, 4
    %v10145 = vadd.f32 %v10143, %v10144
    %v10146 = vrot.slane %v10145, 2
    %v10147 = vadd.f32 %v10145, %v10146
    %v10148 = vrot.slane %v10147, 1
    %v10149 = vadd.f32 %v10147, %v10148
    %v10150 = vmul.f32 %v10149, 0.1
    %v10151 = vmul.f32 %v10136, %v10136
    %v10152 = vmul.f32 %v10138, %v10138
    %v10153 = vsel %vm1579, %v10151, 0.0
    %v10154 = vsel %vm10141, %v10152, 0.0
    %v10155 = vadd.f32 %v10153, %v10154
    %v10156 = vrot.slane %v10155, 4
    %v10157 = vadd.f32 %v10155, %v10156
    %v10158 = vrot.slane %v10157, 2
    %v10159 = vadd.f32 %v10157, %v10158
    %v10160 = vrot.slane %v10159, 1
    %v10161 = vadd.f32 %v10159, %v10160
    %v10162 = vmul.f32 %v10161, 0.1
    %v10163 = vmul.f32 %v10150, %v10150
    %v10164 = vsub.f32 %v10162, %v10163
    %v10165 = vld [vmem:[%s2 + $0x6] sm:$0x1]
    %v10166 = vld [vmem:[%s2 + $0x7] sm:$0x1]
    %v10167 = vadd.f32 %v10164, 1e-05
    %v10168 = vrsqrt.pop %v10167
    %v10169 = vmul.f32 %v10168, %v10167
    %v10170 = vmul.f32 %v10169, %v10168
    %v10171 = vmul.f32 0.5, %v10170
    %v10172 = vsub.f32 1.5, %v10171
    %v10173 = vmul.f32 %v10168, %v10172
    %vm10174 = vweird.f32 %v10167
    %vm10175 = vweird.f32 %v10168
    %vm10176 = vmor %vm10174, %vm10175
    %v10177 = vsel %vm10176, %v10168, %v10173
    %v10178 = vmul.f32 %v10165, %v10177
    %v10179 = vmul.f32 %v10150, %v10178
    %v10180 = vsub.f32 %v10166, %v10179
    %v10181 = vperm.slane %v10178, 0
    %v10182 = vmul.f32 %v10136, %v10181
    %v10183 = vmul.f32 %v10138, %v10181
    %v10184 = vperm.slane %v10180, 0
    %v10185 = vadd.f32 %v10182, %v10184
    %v10186 = vadd.f32 %v10183, %v10184
    %v10187 = vmax.f32 %v10185, 0.0
    %v10188 = vmax.f32 %v10186, 0.0
    %v10189 = vsel %vm9827, %v10187, -inf
    %v10190 = vrot.slane %v10189, 4
    %v10191 = vmax.f32 %v10189, %v10190
    %v10192 = vrot.slane %v10191, 2
    %v10193 = vmax.f32 %v10191, %v10192
    %v10194 = vrot.slane %v10193, 1
    %v10195 = vmax.f32 %v10193, %v10194
    %vm10196 = vcmask 523269
    %v10197 = vsel %vm10196, %v10187, -inf
    %vm10198 = vcmask 516096
    %v10199 = vsel %vm10198, %v10188, -inf
    %v10200 = vmax.f32 %v10197, %v10199
    %v10201 = vrot.slane %v10200, 4
    %v10202 = vmax.f32 %v10200, %v10201
    %v10203 = vrot.slane %v10202, 2
    %v10204 = vmax.f32 %v10202, %v10203
    %v10205 = vrot.slane %v10204, 1
    %v10206 = vmax.f32 %v10204, %v10205
    %vm10207 = vcmask 1040384
    %v10208 = vsel %vm10207, %v10195, %v10206
    %v10209 = vpack.c.bf16 %v10208, %v10208
    %v10210 = vld [vmem:[%s1 + $0xe8] sm:$0xf]
    %v10211 = vld [vmem:[%s1 + $0xec] sm:$0xf]
    %v10212 = vld [vmem:[%s1 + $0xf0] sm:$0xf]
    %v10213 = vld [vmem:[%s1 + $0xf4] sm:$0xf]
    %v10214 = vld [vmem:[%s1 + $0xf8] sm:$0xf]
    %v10215 = vld [vmem:[%s1 + $0xfc] sm:$0xf]
    %v10216 = vld [vmem:[%s1 + $0x100] sm:$0xf]
    %v10217 = vld [vmem:[%s1 + $0x104] sm:$0xf]
    %v10218 = vld [vmem:[%s2 + $0x8] sm:$0x1]
    %v10219 = vperm.slane %v10218, 0
    %v10228 = vunpack.c.l.b16 %v10210
    %v10229 = vunpack.c.l.b16 %v10211
    %v10230 = vunpack.c.l.b16 %v10212
    %v10231 = vunpack.c.l.b16 %v10213
    %v10232 = vunpack.c.l.b16 %v10214
    %v10233 = vunpack.c.l.b16 %v10215
    %v10234 = vunpack.c.l.b16 %v10216
    %v10235 = vunpack.c.l.b16 %v10217
    %v10236 = vpack.c.b16 %v10229, %v10228
    %v10237 = vpack.c.b16 %v10231, %v10230
    %v10238 = vpack.c.b16 %v10233, %v10232
    %v10239 = vpack.c.b16 %v10235, %v10234
    %v10245 = vsel %vm1579, %v10209, 0
    %10247 = vmatpush.bf16.msra.mxu0 0
    %10248 = vmatpush.bf16.msra.mxu0 0
    %10249 = vmatpush.bf16.msra.mxu0 0
    %10250 = vmatpush.bf16.msra.mxu0 0
    %10251 = vmatpush.bf16.msra.mxu0 %v10239
    %10252 = vmatpush.bf16.msra.mxu0 %v10238
    %10253 = vmatpush.bf16.msra.mxu0 %v10237
    %10254 = vmatpush.bf16.msra.mxu0 %v10236
    %10255 = vmatmul.bf16.gmra.mxu0 %v10245
    %v10256 = vpop.f32.mrf.mxu0
    %v10257 = vadd.f32 %v10219, %v10256
    %v10258 = vpop.f32.mrf.mxu0
    %10259 = vdwg.mxu0
    %vm10260 = vcmask 279552
    %10261 = vst.msk [vmem:[#allocation2] sm:$0x3] %vm10260, %v10257
    // Predicated region
    $region14: #{audio_tcn_forward.1} parent=1 // pred_check
      _
    $region15: #{audio_tcn_forward.1} parent=1 // pred_check_branch
      %10263 = sbr.rel (0) target = $region17
    $region16: #{audio_tcn_forward.1} parent=1 // pred_region
      %10265 = vsyncadd [#allocation3], 0
      %s10267 = sshll.u32 [#allocation2], 4
      %s10268 = int_to_ptr.vmem [resolvable:$true] %s10267
      %s10269 = sshll.u32 %s3, 4
      %s10270 = int_to_ptr.hbm [resolvable:$true] %s10269
      %10272 = dma.vmem_to_hbm [thread:$0]  %s10268, 32, %s10270, [#allocation3]
    $region17: #{audio_tcn_forward.1} parent=1 // pred_fallthru
      _
    // Predicated region
    $region18: #{audio_tcn_forward.1} parent=1 // pred_check
      _
    $region19: #{audio_tcn_forward.1} parent=1 // pred_check_branch
      %10274 = sbr.rel (0) target = $region21
    $region20: #{audio_tcn_forward.1} parent=1 // pred_region
      %10276 = dma.done [#allocation3], 32
    $region21: #{audio_tcn_forward.1} parent=1 // pred_fallthru
      _
    %10277 = vsyncpa [#allocation3], 1

</llo_original>
